<compile_context>
chip_gen: v6e
topology: v6e:2x2x1
jax: 0.10.0
libtpu: 0.0.40
codegen_flags: <defaults>
</compile_context>

<pallas_src>
import math
from functools import partial

import jax
import jax.numpy as jnp
import numpy as np
from jax.experimental import pallas as pl
from jax.experimental.pallas import tpu as pltpu

LN_EPS = 1e-6
_VMEM_LIMIT = 48 * 1024 * 1024   # v7x-safe default; raise to ~96 MiB on v5e/v6e


def _round_up(x, m):
    return ((x + m - 1) // m) * m


def _layernorm_f32(y, gamma, beta):
    mu = jnp.mean(y, axis=-1, keepdims=True)
    d = y - mu
    var = jnp.mean(d * d, axis=-1, keepdims=True)
    return d * jax.lax.rsqrt(var + LN_EPS) * gamma + beta


def _erf_f32(x):
    # Abramowitz & Stegun 7.1.26 (max abs err ~1.5e-7).  Uses only primitives
    # guaranteed to lower in Mosaic (abs/exp/mul/add/div/select).
    a1, a2, a3 = 0.254829592, -0.284496736, 1.421413741
    a4, a5, p = -1.453152027, 1.061405429, 0.3275911
    ax = jnp.abs(x)
    t = 1.0 / (1.0 + p * ax)
    poly = ((((a5 * t + a4) * t + a3) * t + a2) * t + a1) * t
    y = 1.0 - poly * jnp.exp(-ax * ax)
    return jnp.where(x < 0, -y, y)


def _gelu_exact_f32(x):
    # matches PyTorch F.gelu (approximate='none') to ~1e-7
    return 0.5 * x * (1.0 + _erf_f32(x * (1.0 / math.sqrt(2.0))))


# --------------------------------------------------------------------------
# Fused kernel: q_proj_1 + ln_q_1, K/V MLP + LN, MHA in-proj, per-window
# online-softmax cross attention (1 query x KS keys), out-proj.
# --------------------------------------------------------------------------
def _token_packer_kernel(
        xq_ref, kv_ref,
        wq1_ref, gq_ref, bql_ref,
        wk1_ref, bk1_ref, wk2_ref, bk2_ref, gk_ref, bkl_ref,
        wv1_ref, bv1_ref, wv2_ref, bv2_ref, gv_ref, bvl_ref,
        mwq_ref, mbq_ref, mwk_ref, mbk_ref, mwv_ref, mbv_ref, mwo_ref, mbo_ref,
        o_ref, *, num_heads, ks):
    f32, bf16 = jnp.float32, jnp.bfloat16
    E = mwq_ref.shape[1]
    hd = E // num_heads
    scale = 1.0 / math.sqrt(hd)

    # ---- Q path: q_proj_1 (bias-free) + ln_q_1 + MHA q in-projection --------
    yq = jnp.dot(xq_ref[...], wq1_ref[...], preferred_element_type=f32)
    query = _layernorm_f32(yq, gq_ref[...], bql_ref[...]).astype(bf16)
    q_in = jnp.dot(query, mwq_ref[...], preferred_element_type=f32) + mbq_ref[...]

    def kv_step(p):
        """K/V MLP + LN + MHA in-proj for within-window position p.

        Returns per-head scores (list of (T,1), already scaled) and the
        f32 (T,E) value projection."""
        xk = kv_ref[p]                                           # (T, C) bf16
        hk = jnp.dot(xk, wk1_ref[...], preferred_element_type=f32) + bk1_ref[...]
        hk = _gelu_exact_f32(hk).astype(bf16)
        yk = jnp.dot(hk, wk2_ref[...], preferred_element_type=f32) + bk2_ref[...]
        key = _layernorm_f32(yk, gk_ref[...], bkl_ref[...]).astype(bf16)

        hv = jnp.dot(xk, wv1_ref[...], preferred_element_type=f32) + bv1_ref[...]
        hv = _gelu_exact_f32(hv).astype(bf16)
        yv = jnp.dot(hv, wv2_ref[...], preferred_element_type=f32) + bv2_ref[...]
        val = _layernorm_f32(yv, gv_ref[...], bvl_ref[...]).astype(bf16)

        k_in = jnp.dot(key, mwk_ref[...], preferred_element_type=f32) + mbk_ref[...]
        v_in = jnp.dot(val, mwv_ref[...], preferred_element_type=f32) + mbv_ref[...]

        # Per-head score: f32 cross-lane sum over the head's 128-lane slice.
        # (Replaces the old f32 (q*k) @ G matmul -> no MXU, full f32 accuracy.)
        qk = q_in * k_in
        s = [jnp.sum(qk[:, h * hd:(h + 1) * hd], axis=-1, keepdims=True) * scale
             for h in range(num_heads)]
        return s, v_in

    # ---- online softmax over the ks = scale_factor**2 positions -------------
    s0, v0 = kv_step(0)
    m = list(s0)                                                  # (T,1) per head
    den = [jnp.ones_like(s0[h]) for h in range(num_heads)]
    acc = [v0[:, h * hd:(h + 1) * hd] for h in range(num_heads)]  # (T,hd) f32
    for p in range(1, ks):                                        # static unroll
        sp, vp = kv_step(p)
        for h in range(num_heads):
            m_new = jnp.maximum(m[h], sp[h])
            alpha = jnp.exp(m[h] - m_new)
            e = jnp.exp(sp[h] - m_new)
            den[h] = den[h] * alpha + e
            acc[h] = acc[h] * alpha + vp[:, h * hd:(h + 1) * hd] * e
            m[h] = m_new

    # ---- normalize + MHA out-projection (per-head K slabs, no concat) -------
    out = mbo_ref[...].astype(f32)                                # (1,E) -> bcast
    for h in range(num_heads):
        inv = pl.reciprocal(den[h], approx=True)                  # EUP
        ctx_h = (acc[h] * inv).astype(bf16)                       # (T, hd)
        out = out + jnp.dot(ctx_h, mwo_ref[h * hd:(h + 1) * hd, :],
                            preferred_element_type=f32)
    o_ref[...] = out.astype(o_ref.dtype)


# --------------------------------------------------------------------------
# Forward wrapper
# --------------------------------------------------------------------------
def token_packer_forward(x, x_feat, params, *, num_heads, scale_factor,
                         tile_b=256, vmem_limit_bytes=_VMEM_LIMIT,
                         out_dtype=jnp.float32):
    """x: (N, Lq, kv_dim) queries; x_feat: (N, Lkv, kv_dim) features.

    tile_b=256 / 48 MiB is a v7x-safe default; on v5e/v6e (128 MiB VMEM) use
    tile_b=512-1024 and vmem_limit_bytes~96 MiB.  Set out_dtype=bf16 if the
    consumer accepts it (halves output writeback)."""
    N, Lq, C = x.shape
    _, Lkv, _ = x_feat.shape
    E = params["wq"].shape[1]
    s = scale_factor
    KS = s * s
    H = num_heads
    assert E % H == 0
    hd = E // H
    # TODO(synk): add a fallback score path for head_dim not a multiple of 128
    #             (the per-head lane-slice reductions assume vreg alignment).
    assert hd % 128 == 0, "per-head slicing assumes head_dim % 128 == 0"

    h = w = int(round(math.sqrt(Lkv)))
    assert h * w == Lkv and h % s == 0 and Lq == (h // s) * (w // s)

    f32, bf16 = jnp.float32, jnp.bfloat16
    b16 = lambda a: a.astype(bf16)
    vec = lambda name: params[name].reshape(1, E).astype(f32)

    B = N * Lq
    # clamp tile_b, keep it a multiple of 8, and make sure the grid has >= 2
    # steps so v7x's two TensorCores both get work on the parallel axis.
    tile_b = max(8, _round_up(min(tile_b, _round_up(B, 8)), 8))
    while tile_b > 8 and pl.cdiv(B, tile_b) < 2:
        tile_b = _round_up(tile_b // 2, 8)
    B_pad = _round_up(B, tile_b)

    # query rows already in (n, window) order -> no transposes on Q or output
    q_rows = b16(x).reshape(B, C)
    if B_pad != B:
        q_rows = jnp.pad(q_rows, ((0, B_pad - B), (0, 0)))

    # single bf16, kv_dim-wide regroup of x_feat into window order:
    # kv[p1*s+p2, n*Lq + (hi*(w//s)+wj), :] = x_feat[n, hi*s+p1, wj*s+p2, :]
    # TODO(synk): absorb this strided gather into the kernel via manual DMA.
    kv = b16(x_feat).reshape(N, h // s, s, w // s, s, C)
    kv = jnp.transpose(kv, (2, 4, 0, 1, 3, 5)).reshape(KS, B, C)
    if B_pad != B:
        kv = jnp.pad(kv, ((0, 0), (0, B_pad - B), (0, 0)))

    mat_ce = pl.BlockSpec((C, E), lambda i: (0, 0))
    mat_ee = pl.BlockSpec((E, E), lambda i: (0, 0))
    vec_e = pl.BlockSpec((1, E), lambda i: (0, 0))
    # TODO(synk): pipeline_mode=pl.Buffered(1) on the constant-index weight
    #             specs (or K-dim weight tiling) to halve weight VMEM on v7x.
    out_pad = pl.pallas_call(
        partial(_token_packer_kernel, num_heads=H, ks=KS),
        out_shape=jax.ShapeDtypeStruct((B_pad, E), out_dtype),
        grid=(pl.cdiv(B_pad, tile_b),),
        in_specs=[
            pl.BlockSpec((tile_b, C), lambda i: (i, 0)),           # raw Q rows
            pl.BlockSpec((KS, tile_b, C), lambda i: (0, i, 0)),    # window KV rows
            mat_ce, vec_e, vec_e,                                  # q_proj_1, ln_q
            mat_ce, vec_e, mat_ee, vec_e, vec_e, vec_e,            # K MLP + ln_k
            mat_ce, vec_e, mat_ee, vec_e, vec_e, vec_e,            # V MLP + ln_v
            mat_ee, vec_e, mat_ee, vec_e,                          # MHA Wq, Wk
            mat_ee, vec_e, mat_ee, vec_e,                          # MHA Wv, Wo
        ],
        out_specs=pl.BlockSpec((tile_b, E), lambda i: (i, 0)),
        compiler_params=pltpu.CompilerParams(
            dimension_semantics=("parallel",),
            vmem_limit_bytes=vmem_limit_bytes),
    )(q_rows, kv,
      b16(params["wq"]), vec("ln_q_w"), vec("ln_q_b"),
      b16(params["wk1"]), vec("bk1"), b16(params["wk2"]), vec("bk2"),
      vec("ln_k_w"), vec("ln_k_b"),
      b16(params["wv1"]), vec("bv1"), b16(params["wv2"]), vec("bv2"),
      vec("ln_v_w"), vec("ln_v_b"),
      b16(params["mha_wq"]), vec("mha_bq"), b16(params["mha_wk"]), vec("mha_bk"),
      b16(params["mha_wv"]), vec("mha_bv"), b16(params["mha_wo"]), vec("mha_bo"))

    return out_pad[:B].reshape(N, Lq, E)


# --------------------------------------------------------------------------
# Pure-JAX reference (mirrors the PyTorch module, same bf16 quantisation
# points as the Pallas path; f32 math with explicit HIGHEST matmul precision).
# --------------------------------------------------------------------------
_HIGH = jax.lax.Precision.HIGHEST


def divide_feature(x, kernel_size, token_num, N, c):
    h = w = int(round(math.sqrt(token_num)))
    k = kernel_size
    r = x.reshape(h // k, k, w, N, c)
    r = jnp.transpose(r, (0, 2, 1, 3, 4))
    r = r.reshape(h // k, w // k, k, k, N, c)
    r = jnp.transpose(r, (0, 1, 3, 2, 4, 5))
    r = r.reshape(h // k, w // k, k * k, N, c)
    r = jnp.transpose(r, (2, 0, 1, 3, 4)).reshape(k * k, -1, c)
    return r


def reference_forward(x, x_feat, params, *, num_heads, scale_factor):
    f32 = jnp.float32
    q8 = lambda a: a.astype(jnp.bfloat16).astype(f32)       # quantise, f32 math
    mm = lambda a, b: jnp.matmul(a, b, precision=_HIGH)

    def ln(y, g, b):
        mu = y.mean(-1, keepdims=True)
        var = ((y - mu) ** 2).mean(-1, keepdims=True)
        return (y - mu) / jnp.sqrt(var + LN_EPS) * g + b

    N, Lq, _ = x.shape
    _, Lkv, _ = x_feat.shape
    E = params["wq"].shape[1]
    xq, xf = q8(x), q8(x_feat)

    query = q8(ln(mm(xq, q8(params["wq"])), params["ln_q_w"], params["ln_q_b"]))
    kh = q8(jax.nn.gelu(mm(xf, q8(params["wk1"])) + params["bk1"],
                        approximate=False))
    key = q8(ln(mm(kh, q8(params["wk2"])) + params["bk2"],
                params["ln_k_w"], params["ln_k_b"]))
    vh = q8(jax.nn.gelu(mm(xf, q8(params["wv1"])) + params["bv1"],
                        approximate=False))
    value = q8(ln(mm(vh, q8(params["wv2"])) + params["bv2"],
                  params["ln_v_w"], params["ln_v_b"]))

    query = jnp.transpose(query, (1, 0, 2))
    key = jnp.transpose(key, (1, 0, 2))
    value = jnp.transpose(value, (1, 0, 2))
    q2d = divide_feature(query, 1, Lq, N, E)[0]
    k3d = jnp.transpose(divide_feature(key, scale_factor, Lkv, N, E), (1, 0, 2))
    v3d = jnp.transpose(divide_feature(value, scale_factor, Lkv, N, E), (1, 0, 2))

    hd = E // num_heads
    B, KS, _ = k3d.shape
    q_in = (mm(q2d, q8(params["mha_wq"])) + params["mha_bq"]) / math.sqrt(hd)
    k_in = mm(k3d, q8(params["mha_wk"])) + params["mha_bk"]
    v_in = mm(v3d, q8(params["mha_wv"])) + params["mha_bv"]
    qh = q_in.reshape(B, num_heads, hd)
    kh_ = k_in.reshape(B, KS, num_heads, hd)
    vh_ = v_in.reshape(B, KS, num_heads, hd)
    scores = jnp.einsum("bhd,bshd->bhs", qh, kh_, precision=_HIGH)
    p = jax.nn.softmax(scores, axis=-1)
    ctx = jnp.einsum("bhs,bshd->bhd", p, vh_, precision=_HIGH).reshape(B, E)
    out2d = mm(q8(ctx), q8(params["mha_wo"])) + params["mha_bo"]
    return jnp.transpose(out2d.reshape(Lq, N, E), (1, 0, 2))


# --------------------------------------------------------------------------
# Deterministic parameter init (trunc_normal_(std=0.02) ~ normal*0.02 here)
# --------------------------------------------------------------------------
def init_params(key, kv_dim, E):
    ks = jax.random.split(key, 9)
    std = 0.02
    w = lambda k, s: jax.random.normal(k, s, jnp.float32) * std
    z = lambda: jnp.zeros((E,), jnp.float32)
    o = lambda: jnp.ones((E,), jnp.float32)
    return dict(
        wq=w(ks[0], (kv_dim, E)),
        wk1=w(ks[1], (kv_dim, E)), bk1=z(), wk2=w(ks[2], (E, E)), bk2=z(),
        wv1=w(ks[3], (kv_dim, E)), bv1=z(), wv2=w(ks[4], (E, E)), bv2=z(),
        ln_q_w=o(), ln_q_b=z(),
        ln_k_w=o(), ln_k_b=z(),
        ln_v_w=o(), ln_v_b=z(),
        mha_wq=w(ks[5], (E, E)), mha_bq=z(),
        mha_wk=w(ks[6], (E, E)), mha_bk=z(),
        mha_wv=w(ks[7], (E, E)), mha_bv=z(),
        mha_wo=w(ks[8], (E, E)), mha_bo=z(),
    )


if __name__ == "__main__":
    # Small config consistent with TokenPacker's forward semantics.
    # head_dim = 128 matches the module default ratio (embed_dim // 128 heads).
    N = 2
    kv_dim = 128
    embed_dim = 256
    num_heads = 2                                   # head_dim = 128
    scale_factor = 2
    grid_hw = 6                                     # x_feat is a 6x6 token grid
    token_num = grid_hw * grid_hw                   # 36
    num_queries = (grid_hw // scale_factor) ** 2    # 9

    key = jax.random.PRNGKey(0)
    kx, kf_, kp = jax.random.split(key, 3)
    x = jax.random.normal(kx, (N, num_queries, kv_dim), jnp.float32)
    x_feat = jax.random.normal(kf_, (N, token_num, kv_dim), jnp.float32)
    params = init_params(kp, kv_dim, embed_dim)

    # tile_b=16 -> 2 grid steps (even, exercises the row-padding path:
    # B = 18 -> B_pad = 32); production sizes use the default tile_b.
    out = token_packer_forward(x, x_feat, params,
                               num_heads=num_heads, scale_factor=scale_factor,
                               tile_b=16)
    out = jax.block_until_ready(out)

    ref = reference_forward(x, x_feat, params,
                            num_heads=num_heads, scale_factor=scale_factor)
    assert out.shape == (N, num_queries, embed_dim)
    np.testing.assert_allclose(np.asarray(out), np.asarray(ref),
                               rtol=2e-3, atol=2e-3)
    print("KERNEL_OK")
</pallas_src>

<mosaic_0001>
module attributes {stable_mosaic.version = 11 : i64} {
  func.func @_token_packer_kernel(%arg0: i32, %arg1: memref<16x128xbf16, #tpu.memory_space<vmem>>, %arg2: memref<4x16x128xbf16, #tpu.memory_space<vmem>>, %arg3: memref<128x256xbf16, #tpu.memory_space<vmem>>, %arg4: memref<1x256xf32, #tpu.memory_space<vmem>>, %arg5: memref<1x256xf32, #tpu.memory_space<vmem>>, %arg6: memref<128x256xbf16, #tpu.memory_space<vmem>>, %arg7: memref<1x256xf32, #tpu.memory_space<vmem>>, %arg8: memref<256x256xbf16, #tpu.memory_space<vmem>>, %arg9: memref<1x256xf32, #tpu.memory_space<vmem>>, %arg10: memref<1x256xf32, #tpu.memory_space<vmem>>, %arg11: memref<1x256xf32, #tpu.memory_space<vmem>>, %arg12: memref<128x256xbf16, #tpu.memory_space<vmem>>, %arg13: memref<1x256xf32, #tpu.memory_space<vmem>>, %arg14: memref<256x256xbf16, #tpu.memory_space<vmem>>, %arg15: memref<1x256xf32, #tpu.memory_space<vmem>>, %arg16: memref<1x256xf32, #tpu.memory_space<vmem>>, %arg17: memref<1x256xf32, #tpu.memory_space<vmem>>, %arg18: memref<256x256xbf16, #tpu.memory_space<vmem>>, %arg19: memref<1x256xf32, #tpu.memory_space<vmem>>, %arg20: memref<256x256xbf16, #tpu.memory_space<vmem>>, %arg21: memref<1x256xf32, #tpu.memory_space<vmem>>, %arg22: memref<256x256xbf16, #tpu.memory_space<vmem>>, %arg23: memref<1x256xf32, #tpu.memory_space<vmem>>, %arg24: memref<256x256xbf16, #tpu.memory_space<vmem>>, %arg25: memref<1x256xf32, #tpu.memory_space<vmem>>, %arg26: memref<16x256xf32, #tpu.memory_space<vmem>>) attributes {dimension_semantics = [#tpu.dimension_semantics<parallel>], iteration_bounds = array<i64: 2>, scalar_prefetch = 0 : i64, scratch_operands = 0 : i64, tpu.core_type = #tpu.core_type<tc>, window_params = [{transform_indices = @transform_0, window_bounds = array<i64: 16, 128>}, {transform_indices = @transform_1, window_bounds = array<i64: 4, 16, 128>}, {pipeline_mode = #tpu.pipeline_mode<synchronous>, transform_indices = @transform_2, window_bounds = array<i64: 128, 256>}, {pipeline_mode = #tpu.pipeline_mode<synchronous>, transform_indices = @transform_3, window_bounds = array<i64: 1, 256>}, {pipeline_mode = #tpu.pipeline_mode<synchronous>, transform_indices = @transform_4, window_bounds = array<i64: 1, 256>}, {pipeline_mode = #tpu.pipeline_mode<synchronous>, transform_indices = @transform_5, window_bounds = array<i64: 128, 256>}, {pipeline_mode = #tpu.pipeline_mode<synchronous>, transform_indices = @transform_6, window_bounds = array<i64: 1, 256>}, {pipeline_mode = #tpu.pipeline_mode<synchronous>, transform_indices = @transform_7, window_bounds = array<i64: 256, 256>}, {pipeline_mode = #tpu.pipeline_mode<synchronous>, transform_indices = @transform_8, window_bounds = array<i64: 1, 256>}, {pipeline_mode = #tpu.pipeline_mode<synchronous>, transform_indices = @transform_9, window_bounds = array<i64: 1, 256>}, {pipeline_mode = #tpu.pipeline_mode<synchronous>, transform_indices = @transform_10, window_bounds = array<i64: 1, 256>}, {pipeline_mode = #tpu.pipeline_mode<synchronous>, transform_indices = @transform_11, window_bounds = array<i64: 128, 256>}, {pipeline_mode = #tpu.pipeline_mode<synchronous>, transform_indices = @transform_12, window_bounds = array<i64: 1, 256>}, {pipeline_mode = #tpu.pipeline_mode<synchronous>, transform_indices = @transform_13, window_bounds = array<i64: 256, 256>}, {pipeline_mode = #tpu.pipeline_mode<synchronous>, transform_indices = @transform_14, window_bounds = array<i64: 1, 256>}, {pipeline_mode = #tpu.pipeline_mode<synchronous>, transform_indices = @transform_15, window_bounds = array<i64: 1, 256>}, {pipeline_mode = #tpu.pipeline_mode<synchronous>, transform_indices = @transform_16, window_bounds = array<i64: 1, 256>}, {pipeline_mode = #tpu.pipeline_mode<synchronous>, transform_indices = @transform_17, window_bounds = array<i64: 256, 256>}, {pipeline_mode = #tpu.pipeline_mode<synchronous>, transform_indices = @transform_18, window_bounds = array<i64: 1, 256>}, {pipeline_mode = #tpu.pipeline_mode<synchronous>, transform_indices = @transform_19, window_bounds = array<i64: 256, 256>}, {pipeline_mode = #tpu.pipeline_mode<synchronous>, transform_indices = @transform_20, window_bounds = array<i64: 1, 256>}, {pipeline_mode = #tpu.pipeline_mode<synchronous>, transform_indices = @transform_21, window_bounds = array<i64: 256, 256>}, {pipeline_mode = #tpu.pipeline_mode<synchronous>, transform_indices = @transform_22, window_bounds = array<i64: 1, 256>}, {pipeline_mode = #tpu.pipeline_mode<synchronous>, transform_indices = @transform_23, window_bounds = array<i64: 256, 256>}, {pipeline_mode = #tpu.pipeline_mode<synchronous>, transform_indices = @transform_24, window_bounds = array<i64: 1, 256>}, {transform_indices = @transform_25, window_bounds = array<i64: 16, 256>}]} {
    %c0 = arith.constant 0 : index
    %c0_0 = arith.constant 0 : index
    %0 = vector.load %arg1[%c0, %c0_0] : memref<16x128xbf16, #tpu.memory_space<vmem>>, vector<16x128xbf16>
    %c0_1 = arith.constant 0 : index
    %c0_2 = arith.constant 0 : index
    %1 = vector.load %arg3[%c0_1, %c0_2] : memref<128x256xbf16, #tpu.memory_space<vmem>>, vector<128x256xbf16>
    %cst = arith.constant dense<0.000000e+00> : vector<16x256xf32>
    %2 = tpu.matmul %0, %1, %cst {dimension_numbers = #tpu.dot_dimension_numbers<[1], [0], [0], [1], [0, 0, 1, 1], [], []>} : vector<16x128xbf16>, vector<128x256xbf16>, vector<16x256xf32> -> vector<16x256xf32>
    %c0_3 = arith.constant 0 : index
    %c0_4 = arith.constant 0 : index
    %3 = vector.load %arg4[%c0_3, %c0_4] : memref<1x256xf32, #tpu.memory_space<vmem>>, vector<1x256xf32>
    %c0_5 = arith.constant 0 : index
    %c0_6 = arith.constant 0 : index
    %4 = vector.load %arg5[%c0_5, %c0_6] : memref<1x256xf32, #tpu.memory_space<vmem>>, vector<1x256xf32>
    %cst_7 = arith.constant dense<0.000000e+00> : vector<16xf32>
    %5 = vector.multi_reduction <add>, %2, %cst_7 [1] : vector<16x256xf32> to vector<16xf32>
    %6 = vector.shape_cast %5 : vector<16xf32> to vector<16x1xf32>
    %cst_8 = arith.constant 2.560000e+02 : f32
    %7 = vector.broadcast %cst_8 : f32 to vector<16x1xf32>
    %8 = arith.divf %6, %7 : vector<16x1xf32>
    %9 = vector.broadcast %8 : vector<16x1xf32> to vector<16x256xf32>
    %10 = arith.subf %2, %9 : vector<16x256xf32>
    %11 = arith.mulf %10, %10 : vector<16x256xf32>
    %cst_9 = arith.constant dense<0.000000e+00> : vector<16xf32>
    %12 = vector.multi_reduction <add>, %11, %cst_9 [1] : vector<16x256xf32> to vector<16xf32>
    %13 = vector.shape_cast %12 : vector<16xf32> to vector<16x1xf32>
    %cst_10 = arith.constant 2.560000e+02 : f32
    %14 = vector.broadcast %cst_10 : f32 to vector<16x1xf32>
    %15 = arith.divf %13, %14 : vector<16x1xf32>
    %cst_11 = arith.constant 9.99999997E-7 : f32
    %16 = vector.broadcast %cst_11 : f32 to vector<16x1xf32>
    %17 = arith.addf %15, %16 : vector<16x1xf32>
    %18 = math.rsqrt %17 : vector<16x1xf32>
    %19 = vector.broadcast %18 : vector<16x1xf32> to vector<16x256xf32>
    %20 = arith.mulf %10, %19 : vector<16x256xf32>
    %21 = vector.broadcast %3 : vector<1x256xf32> to vector<16x256xf32>
    %22 = arith.mulf %20, %21 : vector<16x256xf32>
    %23 = vector.broadcast %4 : vector<1x256xf32> to vector<16x256xf32>
    %24 = arith.addf %22, %23 : vector<16x256xf32>
    %25 = arith.truncf %24 : vector<16x256xf32> to vector<16x256xbf16>
    %c0_12 = arith.constant 0 : index
    %c0_13 = arith.constant 0 : index
    %26 = vector.load %arg18[%c0_12, %c0_13] : memref<256x256xbf16, #tpu.memory_space<vmem>>, vector<256x256xbf16>
    %cst_14 = arith.constant dense<0.000000e+00> : vector<16x256xf32>
    %27 = tpu.matmul %25, %26, %cst_14 {dimension_numbers = #tpu.dot_dimension_numbers<[1], [0], [0], [1], [0, 0, 1, 1], [], []>} : vector<16x256xbf16>, vector<256x256xbf16>, vector<16x256xf32> -> vector<16x256xf32>
    %c0_15 = arith.constant 0 : index
    %c0_16 = arith.constant 0 : index
    %28 = vector.load %arg19[%c0_15, %c0_16] : memref<1x256xf32, #tpu.memory_space<vmem>>, vector<1x256xf32>
    %29 = vector.broadcast %28 : vector<1x256xf32> to vector<16x256xf32>
    %30 = arith.addf %27, %29 : vector<16x256xf32>
    %c0_17 = arith.constant 0 : index
    %c0_18 = arith.constant 0 : index
    %c0_19 = arith.constant 0 : index
    %31 = vector.load %arg2[%c0_17, %c0_18, %c0_19] : memref<4x16x128xbf16, #tpu.memory_space<vmem>>, vector<1x16x128xbf16>
    %32 = vector.shape_cast %31 : vector<1x16x128xbf16> to vector<16x128xbf16>
    %c0_20 = arith.constant 0 : index
    %c0_21 = arith.constant 0 : index
    %33 = vector.load %arg6[%c0_20, %c0_21] : memref<128x256xbf16, #tpu.memory_space<vmem>>, vector<128x256xbf16>
    %cst_22 = arith.constant dense<0.000000e+00> : vector<16x256xf32>
    %34 = tpu.matmul %32, %33, %cst_22 {dimension_numbers = #tpu.dot_dimension_numbers<[1], [0], [0], [1], [0, 0, 1, 1], [], []>} : vector<16x128xbf16>, vector<128x256xbf16>, vector<16x256xf32> -> vector<16x256xf32>
    %c0_23 = arith.constant 0 : index
    %c0_24 = arith.constant 0 : index
    %35 = vector.load %arg7[%c0_23, %c0_24] : memref<1x256xf32, #tpu.memory_space<vmem>>, vector<1x256xf32>
    %36 = vector.broadcast %35 : vector<1x256xf32> to vector<16x256xf32>
    %37 = arith.addf %34, %36 : vector<16x256xf32>
    %cst_25 = arith.constant 5.000000e-01 : f32
    %38 = vector.broadcast %cst_25 : f32 to vector<16x256xf32>
    %39 = arith.mulf %38, %37 : vector<16x256xf32>
    %cst_26 = arith.constant 0.707106769 : f32
    %40 = vector.broadcast %cst_26 : f32 to vector<16x256xf32>
    %41 = arith.mulf %37, %40 : vector<16x256xf32>
    %42 = math.absf %41 : vector<16x256xf32>
    %cst_27 = arith.constant 0.327591091 : f32
    %43 = vector.broadcast %cst_27 : f32 to vector<16x256xf32>
    %44 = arith.mulf %43, %42 : vector<16x256xf32>
    %cst_28 = arith.constant 1.000000e+00 : f32
    %45 = vector.broadcast %cst_28 : f32 to vector<16x256xf32>
    %46 = arith.addf %45, %44 : vector<16x256xf32>
    %cst_29 = arith.constant 1.000000e+00 : f32
    %47 = vector.broadcast %cst_29 : f32 to vector<16x256xf32>
    %48 = arith.divf %47, %46 : vector<16x256xf32>
    %cst_30 = arith.constant 1.06140542 : f32
    %49 = vector.broadcast %cst_30 : f32 to vector<16x256xf32>
    %50 = arith.mulf %49, %48 : vector<16x256xf32>
    %cst_31 = arith.constant -1.45315206 : f32
    %51 = vector.broadcast %cst_31 : f32 to vector<16x256xf32>
    %52 = arith.addf %50, %51 : vector<16x256xf32>
    %53 = arith.mulf %52, %48 : vector<16x256xf32>
    %cst_32 = arith.constant 1.42141378 : f32
    %54 = vector.broadcast %cst_32 : f32 to vector<16x256xf32>
    %55 = arith.addf %53, %54 : vector<16x256xf32>
    %56 = arith.mulf %55, %48 : vector<16x256xf32>
    %cst_33 = arith.constant -0.284496725 : f32
    %57 = vector.broadcast %cst_33 : f32 to vector<16x256xf32>
    %58 = arith.addf %56, %57 : vector<16x256xf32>
    %59 = arith.mulf %58, %48 : vector<16x256xf32>
    %cst_34 = arith.constant 0.254829586 : f32
    %60 = vector.broadcast %cst_34 : f32 to vector<16x256xf32>
    %61 = arith.addf %59, %60 : vector<16x256xf32>
    %62 = arith.mulf %61, %48 : vector<16x256xf32>
    %cst_35 = arith.constant 0.000000e+00 : f32
    %63 = vector.broadcast %cst_35 : f32 to vector<16x256xf32>
    %64 = arith.subf %63, %42 : vector<16x256xf32>
    %65 = arith.mulf %64, %42 : vector<16x256xf32>
    %66 = math.exp %65 : vector<16x256xf32>
    %67 = arith.mulf %62, %66 : vector<16x256xf32>
    %cst_36 = arith.constant 1.000000e+00 : f32
    %68 = vector.broadcast %cst_36 : f32 to vector<16x256xf32>
    %69 = arith.subf %68, %67 : vector<16x256xf32>
    %cst_37 = arith.constant 0.000000e+00 : f32
    %70 = vector.broadcast %cst_37 : f32 to vector<16x256xf32>
    %71 = arith.cmpf olt, %41, %70 : vector<16x256xf32>
    %cst_38 = arith.constant 0.000000e+00 : f32
    %72 = vector.broadcast %cst_38 : f32 to vector<16x256xf32>
    %73 = arith.subf %72, %69 : vector<16x256xf32>
    %74 = arith.select %71, %73, %69 : vector<16x256xi1>, vector<16x256xf32>
    %cst_39 = arith.constant 1.000000e+00 : f32
    %75 = vector.broadcast %cst_39 : f32 to vector<16x256xf32>
    %76 = arith.addf %75, %74 : vector<16x256xf32>
    %77 = arith.mulf %39, %76 : vector<16x256xf32>
    %78 = arith.truncf %77 : vector<16x256xf32> to vector<16x256xbf16>
    %c0_40 = arith.constant 0 : index
    %c0_41 = arith.constant 0 : index
    %79 = vector.load %arg8[%c0_40, %c0_41] : memref<256x256xbf16, #tpu.memory_space<vmem>>, vector<256x256xbf16>
    %cst_42 = arith.constant dense<0.000000e+00> : vector<16x256xf32>
    %80 = tpu.matmul %78, %79, %cst_42 {dimension_numbers = #tpu.dot_dimension_numbers<[1], [0], [0], [1], [0, 0, 1, 1], [], []>} : vector<16x256xbf16>, vector<256x256xbf16>, vector<16x256xf32> -> vector<16x256xf32>
    %c0_43 = arith.constant 0 : index
    %c0_44 = arith.constant 0 : index
    %81 = vector.load %arg9[%c0_43, %c0_44] : memref<1x256xf32, #tpu.memory_space<vmem>>, vector<1x256xf32>
    %82 = vector.broadcast %81 : vector<1x256xf32> to vector<16x256xf32>
    %83 = arith.addf %80, %82 : vector<16x256xf32>
    %c0_45 = arith.constant 0 : index
    %c0_46 = arith.constant 0 : index
    %84 = vector.load %arg10[%c0_45, %c0_46] : memref<1x256xf32, #tpu.memory_space<vmem>>, vector<1x256xf32>
    %c0_47 = arith.constant 0 : index
    %c0_48 = arith.constant 0 : index
    %85 = vector.load %arg11[%c0_47, %c0_48] : memref<1x256xf32, #tpu.memory_space<vmem>>, vector<1x256xf32>
    %cst_49 = arith.constant dense<0.000000e+00> : vector<16xf32>
    %86 = vector.multi_reduction <add>, %83, %cst_49 [1] : vector<16x256xf32> to vector<16xf32>
    %87 = vector.shape_cast %86 : vector<16xf32> to vector<16x1xf32>
    %cst_50 = arith.constant 2.560000e+02 : f32
    %88 = vector.broadcast %cst_50 : f32 to vector<16x1xf32>
    %89 = arith.divf %87, %88 : vector<16x1xf32>
    %90 = vector.broadcast %89 : vector<16x1xf32> to vector<16x256xf32>
    %91 = arith.subf %83, %90 : vector<16x256xf32>
    %92 = arith.mulf %91, %91 : vector<16x256xf32>
    %cst_51 = arith.constant dense<0.000000e+00> : vector<16xf32>
    %93 = vector.multi_reduction <add>, %92, %cst_51 [1] : vector<16x256xf32> to vector<16xf32>
    %94 = vector.shape_cast %93 : vector<16xf32> to vector<16x1xf32>
    %cst_52 = arith.constant 2.560000e+02 : f32
    %95 = vector.broadcast %cst_52 : f32 to vector<16x1xf32>
    %96 = arith.divf %94, %95 : vector<16x1xf32>
    %cst_53 = arith.constant 9.99999997E-7 : f32
    %97 = vector.broadcast %cst_53 : f32 to vector<16x1xf32>
    %98 = arith.addf %96, %97 : vector<16x1xf32>
    %99 = math.rsqrt %98 : vector<16x1xf32>
    %100 = vector.broadcast %99 : vector<16x1xf32> to vector<16x256xf32>
    %101 = arith.mulf %91, %100 : vector<16x256xf32>
    %102 = vector.broadcast %84 : vector<1x256xf32> to vector<16x256xf32>
    %103 = arith.mulf %101, %102 : vector<16x256xf32>
    %104 = vector.broadcast %85 : vector<1x256xf32> to vector<16x256xf32>
    %105 = arith.addf %103, %104 : vector<16x256xf32>
    %106 = arith.truncf %105 : vector<16x256xf32> to vector<16x256xbf16>
    %c0_54 = arith.constant 0 : index
    %c0_55 = arith.constant 0 : index
    %107 = vector.load %arg12[%c0_54, %c0_55] : memref<128x256xbf16, #tpu.memory_space<vmem>>, vector<128x256xbf16>
    %cst_56 = arith.constant dense<0.000000e+00> : vector<16x256xf32>
    %108 = tpu.matmul %32, %107, %cst_56 {dimension_numbers = #tpu.dot_dimension_numbers<[1], [0], [0], [1], [0, 0, 1, 1], [], []>} : vector<16x128xbf16>, vector<128x256xbf16>, vector<16x256xf32> -> vector<16x256xf32>
    %c0_57 = arith.constant 0 : index
    %c0_58 = arith.constant 0 : index
    %109 = vector.load %arg13[%c0_57, %c0_58] : memref<1x256xf32, #tpu.memory_space<vmem>>, vector<1x256xf32>
    %110 = vector.broadcast %109 : vector<1x256xf32> to vector<16x256xf32>
    %111 = arith.addf %108, %110 : vector<16x256xf32>
    %cst_59 = arith.constant 5.000000e-01 : f32
    %112 = vector.broadcast %cst_59 : f32 to vector<16x256xf32>
    %113 = arith.mulf %112, %111 : vector<16x256xf32>
    %cst_60 = arith.constant 0.707106769 : f32
    %114 = vector.broadcast %cst_60 : f32 to vector<16x256xf32>
    %115 = arith.mulf %111, %114 : vector<16x256xf32>
    %116 = math.absf %115 : vector<16x256xf32>
    %cst_61 = arith.constant 0.327591091 : f32
    %117 = vector.broadcast %cst_61 : f32 to vector<16x256xf32>
    %118 = arith.mulf %117, %116 : vector<16x256xf32>
    %cst_62 = arith.constant 1.000000e+00 : f32
    %119 = vector.broadcast %cst_62 : f32 to vector<16x256xf32>
    %120 = arith.addf %119, %118 : vector<16x256xf32>
    %cst_63 = arith.constant 1.000000e+00 : f32
    %121 = vector.broadcast %cst_63 : f32 to vector<16x256xf32>
    %122 = arith.divf %121, %120 : vector<16x256xf32>
    %cst_64 = arith.constant 1.06140542 : f32
    %123 = vector.broadcast %cst_64 : f32 to vector<16x256xf32>
    %124 = arith.mulf %123, %122 : vector<16x256xf32>
    %cst_65 = arith.constant -1.45315206 : f32
    %125 = vector.broadcast %cst_65 : f32 to vector<16x256xf32>
    %126 = arith.addf %124, %125 : vector<16x256xf32>
    %127 = arith.mulf %126, %122 : vector<16x256xf32>
    %cst_66 = arith.constant 1.42141378 : f32
    %128 = vector.broadcast %cst_66 : f32 to vector<16x256xf32>
    %129 = arith.addf %127, %128 : vector<16x256xf32>
    %130 = arith.mulf %129, %122 : vector<16x256xf32>
    %cst_67 = arith.constant -0.284496725 : f32
    %131 = vector.broadcast %cst_67 : f32 to vector<16x256xf32>
    %132 = arith.addf %130, %131 : vector<16x256xf32>
    %133 = arith.mulf %132, %122 : vector<16x256xf32>
    %cst_68 = arith.constant 0.254829586 : f32
    %134 = vector.broadcast %cst_68 : f32 to vector<16x256xf32>
    %135 = arith.addf %133, %134 : vector<16x256xf32>
    %136 = arith.mulf %135, %122 : vector<16x256xf32>
    %cst_69 = arith.constant 0.000000e+00 : f32
    %137 = vector.broadcast %cst_69 : f32 to vector<16x256xf32>
    %138 = arith.subf %137, %116 : vector<16x256xf32>
    %139 = arith.mulf %138, %116 : vector<16x256xf32>
    %140 = math.exp %139 : vector<16x256xf32>
    %141 = arith.mulf %136, %140 : vector<16x256xf32>
    %cst_70 = arith.constant 1.000000e+00 : f32
    %142 = vector.broadcast %cst_70 : f32 to vector<16x256xf32>
    %143 = arith.subf %142, %141 : vector<16x256xf32>
    %cst_71 = arith.constant 0.000000e+00 : f32
    %144 = vector.broadcast %cst_71 : f32 to vector<16x256xf32>
    %145 = arith.cmpf olt, %115, %144 : vector<16x256xf32>
    %cst_72 = arith.constant 0.000000e+00 : f32
    %146 = vector.broadcast %cst_72 : f32 to vector<16x256xf32>
    %147 = arith.subf %146, %143 : vector<16x256xf32>
    %148 = arith.select %145, %147, %143 : vector<16x256xi1>, vector<16x256xf32>
    %cst_73 = arith.constant 1.000000e+00 : f32
    %149 = vector.broadcast %cst_73 : f32 to vector<16x256xf32>
    %150 = arith.addf %149, %148 : vector<16x256xf32>
    %151 = arith.mulf %113, %150 : vector<16x256xf32>
    %152 = arith.truncf %151 : vector<16x256xf32> to vector<16x256xbf16>
    %c0_74 = arith.constant 0 : index
    %c0_75 = arith.constant 0 : index
    %153 = vector.load %arg14[%c0_74, %c0_75] : memref<256x256xbf16, #tpu.memory_space<vmem>>, vector<256x256xbf16>
    %cst_76 = arith.constant dense<0.000000e+00> : vector<16x256xf32>
    %154 = tpu.matmul %152, %153, %cst_76 {dimension_numbers = #tpu.dot_dimension_numbers<[1], [0], [0], [1], [0, 0, 1, 1], [], []>} : vector<16x256xbf16>, vector<256x256xbf16>, vector<16x256xf32> -> vector<16x256xf32>
    %c0_77 = arith.constant 0 : index
    %c0_78 = arith.constant 0 : index
    %155 = vector.load %arg15[%c0_77, %c0_78] : memref<1x256xf32, #tpu.memory_space<vmem>>, vector<1x256xf32>
    %156 = vector.broadcast %155 : vector<1x256xf32> to vector<16x256xf32>
    %157 = arith.addf %154, %156 : vector<16x256xf32>
    %c0_79 = arith.constant 0 : index
    %c0_80 = arith.constant 0 : index
    %158 = vector.load %arg16[%c0_79, %c0_80] : memref<1x256xf32, #tpu.memory_space<vmem>>, vector<1x256xf32>
    %c0_81 = arith.constant 0 : index
    %c0_82 = arith.constant 0 : index
    %159 = vector.load %arg17[%c0_81, %c0_82] : memref<1x256xf32, #tpu.memory_space<vmem>>, vector<1x256xf32>
    %cst_83 = arith.constant dense<0.000000e+00> : vector<16xf32>
    %160 = vector.multi_reduction <add>, %157, %cst_83 [1] : vector<16x256xf32> to vector<16xf32>
    %161 = vector.shape_cast %160 : vector<16xf32> to vector<16x1xf32>
    %cst_84 = arith.constant 2.560000e+02 : f32
    %162 = vector.broadcast %cst_84 : f32 to vector<16x1xf32>
    %163 = arith.divf %161, %162 : vector<16x1xf32>
    %164 = vector.broadcast %163 : vector<16x1xf32> to vector<16x256xf32>
    %165 = arith.subf %157, %164 : vector<16x256xf32>
    %166 = arith.mulf %165, %165 : vector<16x256xf32>
    %cst_85 = arith.constant dense<0.000000e+00> : vector<16xf32>
    %167 = vector.multi_reduction <add>, %166, %cst_85 [1] : vector<16x256xf32> to vector<16xf32>
    %168 = vector.shape_cast %167 : vector<16xf32> to vector<16x1xf32>
    %cst_86 = arith.constant 2.560000e+02 : f32
    %169 = vector.broadcast %cst_86 : f32 to vector<16x1xf32>
    %170 = arith.divf %168, %169 : vector<16x1xf32>
    %cst_87 = arith.constant 9.99999997E-7 : f32
    %171 = vector.broadcast %cst_87 : f32 to vector<16x1xf32>
    %172 = arith.addf %170, %171 : vector<16x1xf32>
    %173 = math.rsqrt %172 : vector<16x1xf32>
    %174 = vector.broadcast %173 : vector<16x1xf32> to vector<16x256xf32>
    %175 = arith.mulf %165, %174 : vector<16x256xf32>
    %176 = vector.broadcast %158 : vector<1x256xf32> to vector<16x256xf32>
    %177 = arith.mulf %175, %176 : vector<16x256xf32>
    %178 = vector.broadcast %159 : vector<1x256xf32> to vector<16x256xf32>
    %179 = arith.addf %177, %178 : vector<16x256xf32>
    %180 = arith.truncf %179 : vector<16x256xf32> to vector<16x256xbf16>
    %c0_88 = arith.constant 0 : index
    %c0_89 = arith.constant 0 : index
    %181 = vector.load %arg20[%c0_88, %c0_89] : memref<256x256xbf16, #tpu.memory_space<vmem>>, vector<256x256xbf16>
    %cst_90 = arith.constant dense<0.000000e+00> : vector<16x256xf32>
    %182 = tpu.matmul %106, %181, %cst_90 {dimension_numbers = #tpu.dot_dimension_numbers<[1], [0], [0], [1], [0, 0, 1, 1], [], []>} : vector<16x256xbf16>, vector<256x256xbf16>, vector<16x256xf32> -> vector<16x256xf32>
    %c0_91 = arith.constant 0 : index
    %c0_92 = arith.constant 0 : index
    %183 = vector.load %arg21[%c0_91, %c0_92] : memref<1x256xf32, #tpu.memory_space<vmem>>, vector<1x256xf32>
    %184 = vector.broadcast %183 : vector<1x256xf32> to vector<16x256xf32>
    %185 = arith.addf %182, %184 : vector<16x256xf32>
    %c0_93 = arith.constant 0 : index
    %c0_94 = arith.constant 0 : index
    %186 = vector.load %arg22[%c0_93, %c0_94] : memref<256x256xbf16, #tpu.memory_space<vmem>>, vector<256x256xbf16>
    %cst_95 = arith.constant dense<0.000000e+00> : vector<16x256xf32>
    %187 = tpu.matmul %180, %186, %cst_95 {dimension_numbers = #tpu.dot_dimension_numbers<[1], [0], [0], [1], [0, 0, 1, 1], [], []>} : vector<16x256xbf16>, vector<256x256xbf16>, vector<16x256xf32> -> vector<16x256xf32>
    %c0_96 = arith.constant 0 : index
    %c0_97 = arith.constant 0 : index
    %188 = vector.load %arg23[%c0_96, %c0_97] : memref<1x256xf32, #tpu.memory_space<vmem>>, vector<1x256xf32>
    %189 = vector.broadcast %188 : vector<1x256xf32> to vector<16x256xf32>
    %190 = arith.addf %187, %189 : vector<16x256xf32>
    %191 = arith.mulf %30, %185 : vector<16x256xf32>
    %192 = vector.extract_strided_slice %191 {offsets = [0, 0], sizes = [16, 128], strides = [1, 1]} : vector<16x256xf32> to vector<16x128xf32>
    %cst_98 = arith.constant dense<0.000000e+00> : vector<16xf32>
    %193 = vector.multi_reduction <add>, %192, %cst_98 [1] : vector<16x128xf32> to vector<16xf32>
    %194 = vector.shape_cast %193 : vector<16xf32> to vector<16x1xf32>
    %cst_99 = arith.constant 0.0883883461 : f32
    %195 = vector.broadcast %cst_99 : f32 to vector<16x1xf32>
    %196 = arith.mulf %194, %195 : vector<16x1xf32>
    %197 = vector.extract_strided_slice %191 {offsets = [0, 128], sizes = [16, 128], strides = [1, 1]} : vector<16x256xf32> to vector<16x128xf32>
    %cst_100 = arith.constant dense<0.000000e+00> : vector<16xf32>
    %198 = vector.multi_reduction <add>, %197, %cst_100 [1] : vector<16x128xf32> to vector<16xf32>
    %199 = vector.shape_cast %198 : vector<16xf32> to vector<16x1xf32>
    %cst_101 = arith.constant 0.0883883461 : f32
    %200 = vector.broadcast %cst_101 : f32 to vector<16x1xf32>
    %201 = arith.mulf %199, %200 : vector<16x1xf32>
    %cst_102 = arith.constant 1.000000e+00 : f32
    %202 = vector.broadcast %cst_102 : f32 to vector<16x1xf32>
    %cst_103 = arith.constant 1.000000e+00 : f32
    %203 = vector.broadcast %cst_103 : f32 to vector<16x1xf32>
    %204 = vector.extract_strided_slice %190 {offsets = [0, 0], sizes = [16, 128], strides = [1, 1]} : vector<16x256xf32> to vector<16x128xf32>
    %205 = vector.extract_strided_slice %190 {offsets = [0, 128], sizes = [16, 128], strides = [1, 1]} : vector<16x256xf32> to vector<16x128xf32>
    %c1 = arith.constant 1 : index
    %c0_104 = arith.constant 0 : index
    %c0_105 = arith.constant 0 : index
    %206 = vector.load %arg2[%c1, %c0_104, %c0_105] : memref<4x16x128xbf16, #tpu.memory_space<vmem>>, vector<1x16x128xbf16>
    %207 = vector.shape_cast %206 : vector<1x16x128xbf16> to vector<16x128xbf16>
    %c0_106 = arith.constant 0 : index
    %c0_107 = arith.constant 0 : index
    %208 = vector.load %arg6[%c0_106, %c0_107] : memref<128x256xbf16, #tpu.memory_space<vmem>>, vector<128x256xbf16>
    %cst_108 = arith.constant dense<0.000000e+00> : vector<16x256xf32>
    %209 = tpu.matmul %207, %208, %cst_108 {dimension_numbers = #tpu.dot_dimension_numbers<[1], [0], [0], [1], [0, 0, 1, 1], [], []>} : vector<16x128xbf16>, vector<128x256xbf16>, vector<16x256xf32> -> vector<16x256xf32>
    %c0_109 = arith.constant 0 : index
    %c0_110 = arith.constant 0 : index
    %210 = vector.load %arg7[%c0_109, %c0_110] : memref<1x256xf32, #tpu.memory_space<vmem>>, vector<1x256xf32>
    %211 = vector.broadcast %210 : vector<1x256xf32> to vector<16x256xf32>
    %212 = arith.addf %209, %211 : vector<16x256xf32>
    %cst_111 = arith.constant 5.000000e-01 : f32
    %213 = vector.broadcast %cst_111 : f32 to vector<16x256xf32>
    %214 = arith.mulf %213, %212 : vector<16x256xf32>
    %cst_112 = arith.constant 0.707106769 : f32
    %215 = vector.broadcast %cst_112 : f32 to vector<16x256xf32>
    %216 = arith.mulf %212, %215 : vector<16x256xf32>
    %217 = math.absf %216 : vector<16x256xf32>
    %cst_113 = arith.constant 0.327591091 : f32
    %218 = vector.broadcast %cst_113 : f32 to vector<16x256xf32>
    %219 = arith.mulf %218, %217 : vector<16x256xf32>
    %cst_114 = arith.constant 1.000000e+00 : f32
    %220 = vector.broadcast %cst_114 : f32 to vector<16x256xf32>
    %221 = arith.addf %220, %219 : vector<16x256xf32>
    %cst_115 = arith.constant 1.000000e+00 : f32
    %222 = vector.broadcast %cst_115 : f32 to vector<16x256xf32>
    %223 = arith.divf %222, %221 : vector<16x256xf32>
    %cst_116 = arith.constant 1.06140542 : f32
    %224 = vector.broadcast %cst_116 : f32 to vector<16x256xf32>
    %225 = arith.mulf %224, %223 : vector<16x256xf32>
    %cst_117 = arith.constant -1.45315206 : f32
    %226 = vector.broadcast %cst_117 : f32 to vector<16x256xf32>
    %227 = arith.addf %225, %226 : vector<16x256xf32>
    %228 = arith.mulf %227, %223 : vector<16x256xf32>
    %cst_118 = arith.constant 1.42141378 : f32
    %229 = vector.broadcast %cst_118 : f32 to vector<16x256xf32>
    %230 = arith.addf %228, %229 : vector<16x256xf32>
    %231 = arith.mulf %230, %223 : vector<16x256xf32>
    %cst_119 = arith.constant -0.284496725 : f32
    %232 = vector.broadcast %cst_119 : f32 to vector<16x256xf32>
    %233 = arith.addf %231, %232 : vector<16x256xf32>
    %234 = arith.mulf %233, %223 : vector<16x256xf32>
    %cst_120 = arith.constant 0.254829586 : f32
    %235 = vector.broadcast %cst_120 : f32 to vector<16x256xf32>
    %236 = arith.addf %234, %235 : vector<16x256xf32>
    %237 = arith.mulf %236, %223 : vector<16x256xf32>
    %cst_121 = arith.constant 0.000000e+00 : f32
    %238 = vector.broadcast %cst_121 : f32 to vector<16x256xf32>
    %239 = arith.subf %238, %217 : vector<16x256xf32>
    %240 = arith.mulf %239, %217 : vector<16x256xf32>
    %241 = math.exp %240 : vector<16x256xf32>
    %242 = arith.mulf %237, %241 : vector<16x256xf32>
    %cst_122 = arith.constant 1.000000e+00 : f32
    %243 = vector.broadcast %cst_122 : f32 to vector<16x256xf32>
    %244 = arith.subf %243, %242 : vector<16x256xf32>
    %cst_123 = arith.constant 0.000000e+00 : f32
    %245 = vector.broadcast %cst_123 : f32 to vector<16x256xf32>
    %246 = arith.cmpf olt, %216, %245 : vector<16x256xf32>
    %cst_124 = arith.constant 0.000000e+00 : f32
    %247 = vector.broadcast %cst_124 : f32 to vector<16x256xf32>
    %248 = arith.subf %247, %244 : vector<16x256xf32>
    %249 = arith.select %246, %248, %244 : vector<16x256xi1>, vector<16x256xf32>
    %cst_125 = arith.constant 1.000000e+00 : f32
    %250 = vector.broadcast %cst_125 : f32 to vector<16x256xf32>
    %251 = arith.addf %250, %249 : vector<16x256xf32>
    %252 = arith.mulf %214, %251 : vector<16x256xf32>
    %253 = arith.truncf %252 : vector<16x256xf32> to vector<16x256xbf16>
    %c0_126 = arith.constant 0 : index
    %c0_127 = arith.constant 0 : index
    %254 = vector.load %arg8[%c0_126, %c0_127] : memref<256x256xbf16, #tpu.memory_space<vmem>>, vector<256x256xbf16>
    %cst_128 = arith.constant dense<0.000000e+00> : vector<16x256xf32>
    %255 = tpu.matmul %253, %254, %cst_128 {dimension_numbers = #tpu.dot_dimension_numbers<[1], [0], [0], [1], [0, 0, 1, 1], [], []>} : vector<16x256xbf16>, vector<256x256xbf16>, vector<16x256xf32> -> vector<16x256xf32>
    %c0_129 = arith.constant 0 : index
    %c0_130 = arith.constant 0 : index
    %256 = vector.load %arg9[%c0_129, %c0_130] : memref<1x256xf32, #tpu.memory_space<vmem>>, vector<1x256xf32>
    %257 = vector.broadcast %256 : vector<1x256xf32> to vector<16x256xf32>
    %258 = arith.addf %255, %257 : vector<16x256xf32>
    %c0_131 = arith.constant 0 : index
    %c0_132 = arith.constant 0 : index
    %259 = vector.load %arg10[%c0_131, %c0_132] : memref<1x256xf32, #tpu.memory_space<vmem>>, vector<1x256xf32>
    %c0_133 = arith.constant 0 : index
    %c0_134 = arith.constant 0 : index
    %260 = vector.load %arg11[%c0_133, %c0_134] : memref<1x256xf32, #tpu.memory_space<vmem>>, vector<1x256xf32>
    %cst_135 = arith.constant dense<0.000000e+00> : vector<16xf32>
    %261 = vector.multi_reduction <add>, %258, %cst_135 [1] : vector<16x256xf32> to vector<16xf32>
    %262 = vector.shape_cast %261 : vector<16xf32> to vector<16x1xf32>
    %cst_136 = arith.constant 2.560000e+02 : f32
    %263 = vector.broadcast %cst_136 : f32 to vector<16x1xf32>
    %264 = arith.divf %262, %263 : vector<16x1xf32>
    %265 = vector.broadcast %264 : vector<16x1xf32> to vector<16x256xf32>
    %266 = arith.subf %258, %265 : vector<16x256xf32>
    %267 = arith.mulf %266, %266 : vector<16x256xf32>
    %cst_137 = arith.constant dense<0.000000e+00> : vector<16xf32>
    %268 = vector.multi_reduction <add>, %267, %cst_137 [1] : vector<16x256xf32> to vector<16xf32>
    %269 = vector.shape_cast %268 : vector<16xf32> to vector<16x1xf32>
    %cst_138 = arith.constant 2.560000e+02 : f32
    %270 = vector.broadcast %cst_138 : f32 to vector<16x1xf32>
    %271 = arith.divf %269, %270 : vector<16x1xf32>
    %cst_139 = arith.constant 9.99999997E-7 : f32
    %272 = vector.broadcast %cst_139 : f32 to vector<16x1xf32>
    %273 = arith.addf %271, %272 : vector<16x1xf32>
    %274 = math.rsqrt %273 : vector<16x1xf32>
    %275 = vector.broadcast %274 : vector<16x1xf32> to vector<16x256xf32>
    %276 = arith.mulf %266, %275 : vector<16x256xf32>
    %277 = vector.broadcast %259 : vector<1x256xf32> to vector<16x256xf32>
    %278 = arith.mulf %276, %277 : vector<16x256xf32>
    %279 = vector.broadcast %260 : vector<1x256xf32> to vector<16x256xf32>
    %280 = arith.addf %278, %279 : vector<16x256xf32>
    %281 = arith.truncf %280 : vector<16x256xf32> to vector<16x256xbf16>
    %c0_140 = arith.constant 0 : index
    %c0_141 = arith.constant 0 : index
    %282 = vector.load %arg12[%c0_140, %c0_141] : memref<128x256xbf16, #tpu.memory_space<vmem>>, vector<128x256xbf16>
    %cst_142 = arith.constant dense<0.000000e+00> : vector<16x256xf32>
    %283 = tpu.matmul %207, %282, %cst_142 {dimension_numbers = #tpu.dot_dimension_numbers<[1], [0], [0], [1], [0, 0, 1, 1], [], []>} : vector<16x128xbf16>, vector<128x256xbf16>, vector<16x256xf32> -> vector<16x256xf32>
    %c0_143 = arith.constant 0 : index
    %c0_144 = arith.constant 0 : index
    %284 = vector.load %arg13[%c0_143, %c0_144] : memref<1x256xf32, #tpu.memory_space<vmem>>, vector<1x256xf32>
    %285 = vector.broadcast %284 : vector<1x256xf32> to vector<16x256xf32>
    %286 = arith.addf %283, %285 : vector<16x256xf32>
    %cst_145 = arith.constant 5.000000e-01 : f32
    %287 = vector.broadcast %cst_145 : f32 to vector<16x256xf32>
    %288 = arith.mulf %287, %286 : vector<16x256xf32>
    %cst_146 = arith.constant 0.707106769 : f32
    %289 = vector.broadcast %cst_146 : f32 to vector<16x256xf32>
    %290 = arith.mulf %286, %289 : vector<16x256xf32>
    %291 = math.absf %290 : vector<16x256xf32>
    %cst_147 = arith.constant 0.327591091 : f32
    %292 = vector.broadcast %cst_147 : f32 to vector<16x256xf32>
    %293 = arith.mulf %292, %291 : vector<16x256xf32>
    %cst_148 = arith.constant 1.000000e+00 : f32
    %294 = vector.broadcast %cst_148 : f32 to vector<16x256xf32>
    %295 = arith.addf %294, %293 : vector<16x256xf32>
    %cst_149 = arith.constant 1.000000e+00 : f32
    %296 = vector.broadcast %cst_149 : f32 to vector<16x256xf32>
    %297 = arith.divf %296, %295 : vector<16x256xf32>
    %cst_150 = arith.constant 1.06140542 : f32
    %298 = vector.broadcast %cst_150 : f32 to vector<16x256xf32>
    %299 = arith.mulf %298, %297 : vector<16x256xf32>
    %cst_151 = arith.constant -1.45315206 : f32
    %300 = vector.broadcast %cst_151 : f32 to vector<16x256xf32>
    %301 = arith.addf %299, %300 : vector<16x256xf32>
    %302 = arith.mulf %301, %297 : vector<16x256xf32>
    %cst_152 = arith.constant 1.42141378 : f32
    %303 = vector.broadcast %cst_152 : f32 to vector<16x256xf32>
    %304 = arith.addf %302, %303 : vector<16x256xf32>
    %305 = arith.mulf %304, %297 : vector<16x256xf32>
    %cst_153 = arith.constant -0.284496725 : f32
    %306 = vector.broadcast %cst_153 : f32 to vector<16x256xf32>
    %307 = arith.addf %305, %306 : vector<16x256xf32>
    %308 = arith.mulf %307, %297 : vector<16x256xf32>
    %cst_154 = arith.constant 0.254829586 : f32
    %309 = vector.broadcast %cst_154 : f32 to vector<16x256xf32>
    %310 = arith.addf %308, %309 : vector<16x256xf32>
    %311 = arith.mulf %310, %297 : vector<16x256xf32>
    %cst_155 = arith.constant 0.000000e+00 : f32
    %312 = vector.broadcast %cst_155 : f32 to vector<16x256xf32>
    %313 = arith.subf %312, %291 : vector<16x256xf32>
    %314 = arith.mulf %313, %291 : vector<16x256xf32>
    %315 = math.exp %314 : vector<16x256xf32>
    %316 = arith.mulf %311, %315 : vector<16x256xf32>
    %cst_156 = arith.constant 1.000000e+00 : f32
    %317 = vector.broadcast %cst_156 : f32 to vector<16x256xf32>
    %318 = arith.subf %317, %316 : vector<16x256xf32>
    %cst_157 = arith.constant 0.000000e+00 : f32
    %319 = vector.broadcast %cst_157 : f32 to vector<16x256xf32>
    %320 = arith.cmpf olt, %290, %319 : vector<16x256xf32>
    %cst_158 = arith.constant 0.000000e+00 : f32
    %321 = vector.broadcast %cst_158 : f32 to vector<16x256xf32>
    %322 = arith.subf %321, %318 : vector<16x256xf32>
    %323 = arith.select %320, %322, %318 : vector<16x256xi1>, vector<16x256xf32>
    %cst_159 = arith.constant 1.000000e+00 : f32
    %324 = vector.broadcast %cst_159 : f32 to vector<16x256xf32>
    %325 = arith.addf %324, %323 : vector<16x256xf32>
    %326 = arith.mulf %288, %325 : vector<16x256xf32>
    %327 = arith.truncf %326 : vector<16x256xf32> to vector<16x256xbf16>
    %c0_160 = arith.constant 0 : index
    %c0_161 = arith.constant 0 : index
    %328 = vector.load %arg14[%c0_160, %c0_161] : memref<256x256xbf16, #tpu.memory_space<vmem>>, vector<256x256xbf16>
    %cst_162 = arith.constant dense<0.000000e+00> : vector<16x256xf32>
    %329 = tpu.matmul %327, %328, %cst_162 {dimension_numbers = #tpu.dot_dimension_numbers<[1], [0], [0], [1], [0, 0, 1, 1], [], []>} : vector<16x256xbf16>, vector<256x256xbf16>, vector<16x256xf32> -> vector<16x256xf32>
    %c0_163 = arith.constant 0 : index
    %c0_164 = arith.constant 0 : index
    %330 = vector.load %arg15[%c0_163, %c0_164] : memref<1x256xf32, #tpu.memory_space<vmem>>, vector<1x256xf32>
    %331 = vector.broadcast %330 : vector<1x256xf32> to vector<16x256xf32>
    %332 = arith.addf %329, %331 : vector<16x256xf32>
    %c0_165 = arith.constant 0 : index
    %c0_166 = arith.constant 0 : index
    %333 = vector.load %arg16[%c0_165, %c0_166] : memref<1x256xf32, #tpu.memory_space<vmem>>, vector<1x256xf32>
    %c0_167 = arith.constant 0 : index
    %c0_168 = arith.constant 0 : index
    %334 = vector.load %arg17[%c0_167, %c0_168] : memref<1x256xf32, #tpu.memory_space<vmem>>, vector<1x256xf32>
    %cst_169 = arith.constant dense<0.000000e+00> : vector<16xf32>
    %335 = vector.multi_reduction <add>, %332, %cst_169 [1] : vector<16x256xf32> to vector<16xf32>
    %336 = vector.shape_cast %335 : vector<16xf32> to vector<16x1xf32>
    %cst_170 = arith.constant 2.560000e+02 : f32
    %337 = vector.broadcast %cst_170 : f32 to vector<16x1xf32>
    %338 = arith.divf %336, %337 : vector<16x1xf32>
    %339 = vector.broadcast %338 : vector<16x1xf32> to vector<16x256xf32>
    %340 = arith.subf %332, %339 : vector<16x256xf32>
    %341 = arith.mulf %340, %340 : vector<16x256xf32>
    %cst_171 = arith.constant dense<0.000000e+00> : vector<16xf32>
    %342 = vector.multi_reduction <add>, %341, %cst_171 [1] : vector<16x256xf32> to vector<16xf32>
    %343 = vector.shape_cast %342 : vector<16xf32> to vector<16x1xf32>
    %cst_172 = arith.constant 2.560000e+02 : f32
    %344 = vector.broadcast %cst_172 : f32 to vector<16x1xf32>
    %345 = arith.divf %343, %344 : vector<16x1xf32>
    %cst_173 = arith.constant 9.99999997E-7 : f32
    %346 = vector.broadcast %cst_173 : f32 to vector<16x1xf32>
    %347 = arith.addf %345, %346 : vector<16x1xf32>
    %348 = math.rsqrt %347 : vector<16x1xf32>
    %349 = vector.broadcast %348 : vector<16x1xf32> to vector<16x256xf32>
    %350 = arith.mulf %340, %349 : vector<16x256xf32>
    %351 = vector.broadcast %333 : vector<1x256xf32> to vector<16x256xf32>
    %352 = arith.mulf %350, %351 : vector<16x256xf32>
    %353 = vector.broadcast %334 : vector<1x256xf32> to vector<16x256xf32>
    %354 = arith.addf %352, %353 : vector<16x256xf32>
    %355 = arith.truncf %354 : vector<16x256xf32> to vector<16x256xbf16>
    %c0_174 = arith.constant 0 : index
    %c0_175 = arith.constant 0 : index
    %356 = vector.load %arg20[%c0_174, %c0_175] : memref<256x256xbf16, #tpu.memory_space<vmem>>, vector<256x256xbf16>
    %cst_176 = arith.constant dense<0.000000e+00> : vector<16x256xf32>
    %357 = tpu.matmul %281, %356, %cst_176 {dimension_numbers = #tpu.dot_dimension_numbers<[1], [0], [0], [1], [0, 0, 1, 1], [], []>} : vector<16x256xbf16>, vector<256x256xbf16>, vector<16x256xf32> -> vector<16x256xf32>
    %c0_177 = arith.constant 0 : index
    %c0_178 = arith.constant 0 : index
    %358 = vector.load %arg21[%c0_177, %c0_178] : memref<1x256xf32, #tpu.memory_space<vmem>>, vector<1x256xf32>
    %359 = vector.broadcast %358 : vector<1x256xf32> to vector<16x256xf32>
    %360 = arith.addf %357, %359 : vector<16x256xf32>
    %c0_179 = arith.constant 0 : index
    %c0_180 = arith.constant 0 : index
    %361 = vector.load %arg22[%c0_179, %c0_180] : memref<256x256xbf16, #tpu.memory_space<vmem>>, vector<256x256xbf16>
    %cst_181 = arith.constant dense<0.000000e+00> : vector<16x256xf32>
    %362 = tpu.matmul %355, %361, %cst_181 {dimension_numbers = #tpu.dot_dimension_numbers<[1], [0], [0], [1], [0, 0, 1, 1], [], []>} : vector<16x256xbf16>, vector<256x256xbf16>, vector<16x256xf32> -> vector<16x256xf32>
    %c0_182 = arith.constant 0 : index
    %c0_183 = arith.constant 0 : index
    %363 = vector.load %arg23[%c0_182, %c0_183] : memref<1x256xf32, #tpu.memory_space<vmem>>, vector<1x256xf32>
    %364 = vector.broadcast %363 : vector<1x256xf32> to vector<16x256xf32>
    %365 = arith.addf %362, %364 : vector<16x256xf32>
    %366 = arith.mulf %30, %360 : vector<16x256xf32>
    %367 = vector.extract_strided_slice %366 {offsets = [0, 0], sizes = [16, 128], strides = [1, 1]} : vector<16x256xf32> to vector<16x128xf32>
    %cst_184 = arith.constant dense<0.000000e+00> : vector<16xf32>
    %368 = vector.multi_reduction <add>, %367, %cst_184 [1] : vector<16x128xf32> to vector<16xf32>
    %369 = vector.shape_cast %368 : vector<16xf32> to vector<16x1xf32>
    %cst_185 = arith.constant 0.0883883461 : f32
    %370 = vector.broadcast %cst_185 : f32 to vector<16x1xf32>
    %371 = arith.mulf %369, %370 : vector<16x1xf32>
    %372 = vector.extract_strided_slice %366 {offsets = [0, 128], sizes = [16, 128], strides = [1, 1]} : vector<16x256xf32> to vector<16x128xf32>
    %cst_186 = arith.constant dense<0.000000e+00> : vector<16xf32>
    %373 = vector.multi_reduction <add>, %372, %cst_186 [1] : vector<16x128xf32> to vector<16xf32>
    %374 = vector.shape_cast %373 : vector<16xf32> to vector<16x1xf32>
    %cst_187 = arith.constant 0.0883883461 : f32
    %375 = vector.broadcast %cst_187 : f32 to vector<16x1xf32>
    %376 = arith.mulf %374, %375 : vector<16x1xf32>
    %377 = arith.maximumf %196, %371 : vector<16x1xf32>
    %378 = arith.subf %196, %377 : vector<16x1xf32>
    %379 = math.exp %378 : vector<16x1xf32>
    %380 = arith.subf %371, %377 : vector<16x1xf32>
    %381 = math.exp %380 : vector<16x1xf32>
    %382 = arith.mulf %202, %379 : vector<16x1xf32>
    %383 = arith.addf %382, %381 : vector<16x1xf32>
    %384 = vector.broadcast %379 : vector<16x1xf32> to vector<16x128xf32>
    %385 = arith.mulf %204, %384 : vector<16x128xf32>
    %386 = vector.extract_strided_slice %365 {offsets = [0, 0], sizes = [16, 128], strides = [1, 1]} : vector<16x256xf32> to vector<16x128xf32>
    %387 = vector.broadcast %381 : vector<16x1xf32> to vector<16x128xf32>
    %388 = arith.mulf %386, %387 : vector<16x128xf32>
    %389 = arith.addf %385, %388 : vector<16x128xf32>
    %390 = arith.maximumf %201, %376 : vector<16x1xf32>
    %391 = arith.subf %201, %390 : vector<16x1xf32>
    %392 = math.exp %391 : vector<16x1xf32>
    %393 = arith.subf %376, %390 : vector<16x1xf32>
    %394 = math.exp %393 : vector<16x1xf32>
    %395 = arith.mulf %203, %392 : vector<16x1xf32>
    %396 = arith.addf %395, %394 : vector<16x1xf32>
    %397 = vector.broadcast %392 : vector<16x1xf32> to vector<16x128xf32>
    %398 = arith.mulf %205, %397 : vector<16x128xf32>
    %399 = vector.extract_strided_slice %365 {offsets = [0, 128], sizes = [16, 128], strides = [1, 1]} : vector<16x256xf32> to vector<16x128xf32>
    %400 = vector.broadcast %394 : vector<16x1xf32> to vector<16x128xf32>
    %401 = arith.mulf %399, %400 : vector<16x128xf32>
    %402 = arith.addf %398, %401 : vector<16x128xf32>
    %c2 = arith.constant 2 : index
    %c0_188 = arith.constant 0 : index
    %c0_189 = arith.constant 0 : index
    %403 = vector.load %arg2[%c2, %c0_188, %c0_189] : memref<4x16x128xbf16, #tpu.memory_space<vmem>>, vector<1x16x128xbf16>
    %404 = vector.shape_cast %403 : vector<1x16x128xbf16> to vector<16x128xbf16>
    %c0_190 = arith.constant 0 : index
    %c0_191 = arith.constant 0 : index
    %405 = vector.load %arg6[%c0_190, %c0_191] : memref<128x256xbf16, #tpu.memory_space<vmem>>, vector<128x256xbf16>
    %cst_192 = arith.constant dense<0.000000e+00> : vector<16x256xf32>
    %406 = tpu.matmul %404, %405, %cst_192 {dimension_numbers = #tpu.dot_dimension_numbers<[1], [0], [0], [1], [0, 0, 1, 1], [], []>} : vector<16x128xbf16>, vector<128x256xbf16>, vector<16x256xf32> -> vector<16x256xf32>
    %c0_193 = arith.constant 0 : index
    %c0_194 = arith.constant 0 : index
    %407 = vector.load %arg7[%c0_193, %c0_194] : memref<1x256xf32, #tpu.memory_space<vmem>>, vector<1x256xf32>
    %408 = vector.broadcast %407 : vector<1x256xf32> to vector<16x256xf32>
    %409 = arith.addf %406, %408 : vector<16x256xf32>
    %cst_195 = arith.constant 5.000000e-01 : f32
    %410 = vector.broadcast %cst_195 : f32 to vector<16x256xf32>
    %411 = arith.mulf %410, %409 : vector<16x256xf32>
    %cst_196 = arith.constant 0.707106769 : f32
    %412 = vector.broadcast %cst_196 : f32 to vector<16x256xf32>
    %413 = arith.mulf %409, %412 : vector<16x256xf32>
    %414 = math.absf %413 : vector<16x256xf32>
    %cst_197 = arith.constant 0.327591091 : f32
    %415 = vector.broadcast %cst_197 : f32 to vector<16x256xf32>
    %416 = arith.mulf %415, %414 : vector<16x256xf32>
    %cst_198 = arith.constant 1.000000e+00 : f32
    %417 = vector.broadcast %cst_198 : f32 to vector<16x256xf32>
    %418 = arith.addf %417, %416 : vector<16x256xf32>
    %cst_199 = arith.constant 1.000000e+00 : f32
    %419 = vector.broadcast %cst_199 : f32 to vector<16x256xf32>
    %420 = arith.divf %419, %418 : vector<16x256xf32>
    %cst_200 = arith.constant 1.06140542 : f32
    %421 = vector.broadcast %cst_200 : f32 to vector<16x256xf32>
    %422 = arith.mulf %421, %420 : vector<16x256xf32>
    %cst_201 = arith.constant -1.45315206 : f32
    %423 = vector.broadcast %cst_201 : f32 to vector<16x256xf32>
    %424 = arith.addf %422, %423 : vector<16x256xf32>
    %425 = arith.mulf %424, %420 : vector<16x256xf32>
    %cst_202 = arith.constant 1.42141378 : f32
    %426 = vector.broadcast %cst_202 : f32 to vector<16x256xf32>
    %427 = arith.addf %425, %426 : vector<16x256xf32>
    %428 = arith.mulf %427, %420 : vector<16x256xf32>
    %cst_203 = arith.constant -0.284496725 : f32
    %429 = vector.broadcast %cst_203 : f32 to vector<16x256xf32>
    %430 = arith.addf %428, %429 : vector<16x256xf32>
    %431 = arith.mulf %430, %420 : vector<16x256xf32>
    %cst_204 = arith.constant 0.254829586 : f32
    %432 = vector.broadcast %cst_204 : f32 to vector<16x256xf32>
    %433 = arith.addf %431, %432 : vector<16x256xf32>
    %434 = arith.mulf %433, %420 : vector<16x256xf32>
    %cst_205 = arith.constant 0.000000e+00 : f32
    %435 = vector.broadcast %cst_205 : f32 to vector<16x256xf32>
    %436 = arith.subf %435, %414 : vector<16x256xf32>
    %437 = arith.mulf %436, %414 : vector<16x256xf32>
    %438 = math.exp %437 : vector<16x256xf32>
    %439 = arith.mulf %434, %438 : vector<16x256xf32>
    %cst_206 = arith.constant 1.000000e+00 : f32
    %440 = vector.broadcast %cst_206 : f32 to vector<16x256xf32>
    %441 = arith.subf %440, %439 : vector<16x256xf32>
    %cst_207 = arith.constant 0.000000e+00 : f32
    %442 = vector.broadcast %cst_207 : f32 to vector<16x256xf32>
    %443 = arith.cmpf olt, %413, %442 : vector<16x256xf32>
    %cst_208 = arith.constant 0.000000e+00 : f32
    %444 = vector.broadcast %cst_208 : f32 to vector<16x256xf32>
    %445 = arith.subf %444, %441 : vector<16x256xf32>
    %446 = arith.select %443, %445, %441 : vector<16x256xi1>, vector<16x256xf32>
    %cst_209 = arith.constant 1.000000e+00 : f32
    %447 = vector.broadcast %cst_209 : f32 to vector<16x256xf32>
    %448 = arith.addf %447, %446 : vector<16x256xf32>
    %449 = arith.mulf %411, %448 : vector<16x256xf32>
    %450 = arith.truncf %449 : vector<16x256xf32> to vector<16x256xbf16>
    %c0_210 = arith.constant 0 : index
    %c0_211 = arith.constant 0 : index
    %451 = vector.load %arg8[%c0_210, %c0_211] : memref<256x256xbf16, #tpu.memory_space<vmem>>, vector<256x256xbf16>
    %cst_212 = arith.constant dense<0.000000e+00> : vector<16x256xf32>
    %452 = tpu.matmul %450, %451, %cst_212 {dimension_numbers = #tpu.dot_dimension_numbers<[1], [0], [0], [1], [0, 0, 1, 1], [], []>} : vector<16x256xbf16>, vector<256x256xbf16>, vector<16x256xf32> -> vector<16x256xf32>
    %c0_213 = arith.constant 0 : index
    %c0_214 = arith.constant 0 : index
    %453 = vector.load %arg9[%c0_213, %c0_214] : memref<1x256xf32, #tpu.memory_space<vmem>>, vector<1x256xf32>
    %454 = vector.broadcast %453 : vector<1x256xf32> to vector<16x256xf32>
    %455 = arith.addf %452, %454 : vector<16x256xf32>
    %c0_215 = arith.constant 0 : index
    %c0_216 = arith.constant 0 : index
    %456 = vector.load %arg10[%c0_215, %c0_216] : memref<1x256xf32, #tpu.memory_space<vmem>>, vector<1x256xf32>
    %c0_217 = arith.constant 0 : index
    %c0_218 = arith.constant 0 : index
    %457 = vector.load %arg11[%c0_217, %c0_218] : memref<1x256xf32, #tpu.memory_space<vmem>>, vector<1x256xf32>
    %cst_219 = arith.constant dense<0.000000e+00> : vector<16xf32>
    %458 = vector.multi_reduction <add>, %455, %cst_219 [1] : vector<16x256xf32> to vector<16xf32>
    %459 = vector.shape_cast %458 : vector<16xf32> to vector<16x1xf32>
    %cst_220 = arith.constant 2.560000e+02 : f32
    %460 = vector.broadcast %cst_220 : f32 to vector<16x1xf32>
    %461 = arith.divf %459, %460 : vector<16x1xf32>
    %462 = vector.broadcast %461 : vector<16x1xf32> to vector<16x256xf32>
    %463 = arith.subf %455, %462 : vector<16x256xf32>
    %464 = arith.mulf %463, %463 : vector<16x256xf32>
    %cst_221 = arith.constant dense<0.000000e+00> : vector<16xf32>
    %465 = vector.multi_reduction <add>, %464, %cst_221 [1] : vector<16x256xf32> to vector<16xf32>
    %466 = vector.shape_cast %465 : vector<16xf32> to vector<16x1xf32>
    %cst_222 = arith.constant 2.560000e+02 : f32
    %467 = vector.broadcast %cst_222 : f32 to vector<16x1xf32>
    %468 = arith.divf %466, %467 : vector<16x1xf32>
    %cst_223 = arith.constant 9.99999997E-7 : f32
    %469 = vector.broadcast %cst_223 : f32 to vector<16x1xf32>
    %470 = arith.addf %468, %469 : vector<16x1xf32>
    %471 = math.rsqrt %470 : vector<16x1xf32>
    %472 = vector.broadcast %471 : vector<16x1xf32> to vector<16x256xf32>
    %473 = arith.mulf %463, %472 : vector<16x256xf32>
    %474 = vector.broadcast %456 : vector<1x256xf32> to vector<16x256xf32>
    %475 = arith.mulf %473, %474 : vector<16x256xf32>
    %476 = vector.broadcast %457 : vector<1x256xf32> to vector<16x256xf32>
    %477 = arith.addf %475, %476 : vector<16x256xf32>
    %478 = arith.truncf %477 : vector<16x256xf32> to vector<16x256xbf16>
    %c0_224 = arith.constant 0 : index
    %c0_225 = arith.constant 0 : index
    %479 = vector.load %arg12[%c0_224, %c0_225] : memref<128x256xbf16, #tpu.memory_space<vmem>>, vector<128x256xbf16>
    %cst_226 = arith.constant dense<0.000000e+00> : vector<16x256xf32>
    %480 = tpu.matmul %404, %479, %cst_226 {dimension_numbers = #tpu.dot_dimension_numbers<[1], [0], [0], [1], [0, 0, 1, 1], [], []>} : vector<16x128xbf16>, vector<128x256xbf16>, vector<16x256xf32> -> vector<16x256xf32>
    %c0_227 = arith.constant 0 : index
    %c0_228 = arith.constant 0 : index
    %481 = vector.load %arg13[%c0_227, %c0_228] : memref<1x256xf32, #tpu.memory_space<vmem>>, vector<1x256xf32>
    %482 = vector.broadcast %481 : vector<1x256xf32> to vector<16x256xf32>
    %483 = arith.addf %480, %482 : vector<16x256xf32>
    %cst_229 = arith.constant 5.000000e-01 : f32
    %484 = vector.broadcast %cst_229 : f32 to vector<16x256xf32>
    %485 = arith.mulf %484, %483 : vector<16x256xf32>
    %cst_230 = arith.constant 0.707106769 : f32
    %486 = vector.broadcast %cst_230 : f32 to vector<16x256xf32>
    %487 = arith.mulf %483, %486 : vector<16x256xf32>
    %488 = math.absf %487 : vector<16x256xf32>
    %cst_231 = arith.constant 0.327591091 : f32
    %489 = vector.broadcast %cst_231 : f32 to vector<16x256xf32>
    %490 = arith.mulf %489, %488 : vector<16x256xf32>
    %cst_232 = arith.constant 1.000000e+00 : f32
    %491 = vector.broadcast %cst_232 : f32 to vector<16x256xf32>
    %492 = arith.addf %491, %490 : vector<16x256xf32>
    %cst_233 = arith.constant 1.000000e+00 : f32
    %493 = vector.broadcast %cst_233 : f32 to vector<16x256xf32>
    %494 = arith.divf %493, %492 : vector<16x256xf32>
    %cst_234 = arith.constant 1.06140542 : f32
    %495 = vector.broadcast %cst_234 : f32 to vector<16x256xf32>
    %496 = arith.mulf %495, %494 : vector<16x256xf32>
    %cst_235 = arith.constant -1.45315206 : f32
    %497 = vector.broadcast %cst_235 : f32 to vector<16x256xf32>
    %498 = arith.addf %496, %497 : vector<16x256xf32>
    %499 = arith.mulf %498, %494 : vector<16x256xf32>
    %cst_236 = arith.constant 1.42141378 : f32
    %500 = vector.broadcast %cst_236 : f32 to vector<16x256xf32>
    %501 = arith.addf %499, %500 : vector<16x256xf32>
    %502 = arith.mulf %501, %494 : vector<16x256xf32>
    %cst_237 = arith.constant -0.284496725 : f32
    %503 = vector.broadcast %cst_237 : f32 to vector<16x256xf32>
    %504 = arith.addf %502, %503 : vector<16x256xf32>
    %505 = arith.mulf %504, %494 : vector<16x256xf32>
    %cst_238 = arith.constant 0.254829586 : f32
    %506 = vector.broadcast %cst_238 : f32 to vector<16x256xf32>
    %507 = arith.addf %505, %506 : vector<16x256xf32>
    %508 = arith.mulf %507, %494 : vector<16x256xf32>
    %cst_239 = arith.constant 0.000000e+00 : f32
    %509 = vector.broadcast %cst_239 : f32 to vector<16x256xf32>
    %510 = arith.subf %509, %488 : vector<16x256xf32>
    %511 = arith.mulf %510, %488 : vector<16x256xf32>
    %512 = math.exp %511 : vector<16x256xf32>
    %513 = arith.mulf %508, %512 : vector<16x256xf32>
    %cst_240 = arith.constant 1.000000e+00 : f32
    %514 = vector.broadcast %cst_240 : f32 to vector<16x256xf32>
    %515 = arith.subf %514, %513 : vector<16x256xf32>
    %cst_241 = arith.constant 0.000000e+00 : f32
    %516 = vector.broadcast %cst_241 : f32 to vector<16x256xf32>
    %517 = arith.cmpf olt, %487, %516 : vector<16x256xf32>
    %cst_242 = arith.constant 0.000000e+00 : f32
    %518 = vector.broadcast %cst_242 : f32 to vector<16x256xf32>
    %519 = arith.subf %518, %515 : vector<16x256xf32>
    %520 = arith.select %517, %519, %515 : vector<16x256xi1>, vector<16x256xf32>
    %cst_243 = arith.constant 1.000000e+00 : f32
    %521 = vector.broadcast %cst_243 : f32 to vector<16x256xf32>
    %522 = arith.addf %521, %520 : vector<16x256xf32>
    %523 = arith.mulf %485, %522 : vector<16x256xf32>
    %524 = arith.truncf %523 : vector<16x256xf32> to vector<16x256xbf16>
    %c0_244 = arith.constant 0 : index
    %c0_245 = arith.constant 0 : index
    %525 = vector.load %arg14[%c0_244, %c0_245] : memref<256x256xbf16, #tpu.memory_space<vmem>>, vector<256x256xbf16>
    %cst_246 = arith.constant dense<0.000000e+00> : vector<16x256xf32>
    %526 = tpu.matmul %524, %525, %cst_246 {dimension_numbers = #tpu.dot_dimension_numbers<[1], [0], [0], [1], [0, 0, 1, 1], [], []>} : vector<16x256xbf16>, vector<256x256xbf16>, vector<16x256xf32> -> vector<16x256xf32>
    %c0_247 = arith.constant 0 : index
    %c0_248 = arith.constant 0 : index
    %527 = vector.load %arg15[%c0_247, %c0_248] : memref<1x256xf32, #tpu.memory_space<vmem>>, vector<1x256xf32>
    %528 = vector.broadcast %527 : vector<1x256xf32> to vector<16x256xf32>
    %529 = arith.addf %526, %528 : vector<16x256xf32>
    %c0_249 = arith.constant 0 : index
    %c0_250 = arith.constant 0 : index
    %530 = vector.load %arg16[%c0_249, %c0_250] : memref<1x256xf32, #tpu.memory_space<vmem>>, vector<1x256xf32>
    %c0_251 = arith.constant 0 : index
    %c0_252 = arith.constant 0 : index
    %531 = vector.load %arg17[%c0_251, %c0_252] : memref<1x256xf32, #tpu.memory_space<vmem>>, vector<1x256xf32>
    %cst_253 = arith.constant dense<0.000000e+00> : vector<16xf32>
    %532 = vector.multi_reduction <add>, %529, %cst_253 [1] : vector<16x256xf32> to vector<16xf32>
    %533 = vector.shape_cast %532 : vector<16xf32> to vector<16x1xf32>
    %cst_254 = arith.constant 2.560000e+02 : f32
    %534 = vector.broadcast %cst_254 : f32 to vector<16x1xf32>
    %535 = arith.divf %533, %534 : vector<16x1xf32>
    %536 = vector.broadcast %535 : vector<16x1xf32> to vector<16x256xf32>
    %537 = arith.subf %529, %536 : vector<16x256xf32>
    %538 = arith.mulf %537, %537 : vector<16x256xf32>
    %cst_255 = arith.constant dense<0.000000e+00> : vector<16xf32>
    %539 = vector.multi_reduction <add>, %538, %cst_255 [1] : vector<16x256xf32> to vector<16xf32>
    %540 = vector.shape_cast %539 : vector<16xf32> to vector<16x1xf32>
    %cst_256 = arith.constant 2.560000e+02 : f32
    %541 = vector.broadcast %cst_256 : f32 to vector<16x1xf32>
    %542 = arith.divf %540, %541 : vector<16x1xf32>
    %cst_257 = arith.constant 9.99999997E-7 : f32
    %543 = vector.broadcast %cst_257 : f32 to vector<16x1xf32>
    %544 = arith.addf %542, %543 : vector<16x1xf32>
    %545 = math.rsqrt %544 : vector<16x1xf32>
    %546 = vector.broadcast %545 : vector<16x1xf32> to vector<16x256xf32>
    %547 = arith.mulf %537, %546 : vector<16x256xf32>
    %548 = vector.broadcast %530 : vector<1x256xf32> to vector<16x256xf32>
    %549 = arith.mulf %547, %548 : vector<16x256xf32>
    %550 = vector.broadcast %531 : vector<1x256xf32> to vector<16x256xf32>
    %551 = arith.addf %549, %550 : vector<16x256xf32>
    %552 = arith.truncf %551 : vector<16x256xf32> to vector<16x256xbf16>
    %c0_258 = arith.constant 0 : index
    %c0_259 = arith.constant 0 : index
    %553 = vector.load %arg20[%c0_258, %c0_259] : memref<256x256xbf16, #tpu.memory_space<vmem>>, vector<256x256xbf16>
    %cst_260 = arith.constant dense<0.000000e+00> : vector<16x256xf32>
    %554 = tpu.matmul %478, %553, %cst_260 {dimension_numbers = #tpu.dot_dimension_numbers<[1], [0], [0], [1], [0, 0, 1, 1], [], []>} : vector<16x256xbf16>, vector<256x256xbf16>, vector<16x256xf32> -> vector<16x256xf32>
    %c0_261 = arith.constant 0 : index
    %c0_262 = arith.constant 0 : index
    %555 = vector.load %arg21[%c0_261, %c0_262] : memref<1x256xf32, #tpu.memory_space<vmem>>, vector<1x256xf32>
    %556 = vector.broadcast %555 : vector<1x256xf32> to vector<16x256xf32>
    %557 = arith.addf %554, %556 : vector<16x256xf32>
    %c0_263 = arith.constant 0 : index
    %c0_264 = arith.constant 0 : index
    %558 = vector.load %arg22[%c0_263, %c0_264] : memref<256x256xbf16, #tpu.memory_space<vmem>>, vector<256x256xbf16>
    %cst_265 = arith.constant dense<0.000000e+00> : vector<16x256xf32>
    %559 = tpu.matmul %552, %558, %cst_265 {dimension_numbers = #tpu.dot_dimension_numbers<[1], [0], [0], [1], [0, 0, 1, 1], [], []>} : vector<16x256xbf16>, vector<256x256xbf16>, vector<16x256xf32> -> vector<16x256xf32>
    %c0_266 = arith.constant 0 : index
    %c0_267 = arith.constant 0 : index
    %560 = vector.load %arg23[%c0_266, %c0_267] : memref<1x256xf32, #tpu.memory_space<vmem>>, vector<1x256xf32>
    %561 = vector.broadcast %560 : vector<1x256xf32> to vector<16x256xf32>
    %562 = arith.addf %559, %561 : vector<16x256xf32>
    %563 = arith.mulf %30, %557 : vector<16x256xf32>
    %564 = vector.extract_strided_slice %563 {offsets = [0, 0], sizes = [16, 128], strides = [1, 1]} : vector<16x256xf32> to vector<16x128xf32>
    %cst_268 = arith.constant dense<0.000000e+00> : vector<16xf32>
    %565 = vector.multi_reduction <add>, %564, %cst_268 [1] : vector<16x128xf32> to vector<16xf32>
    %566 = vector.shape_cast %565 : vector<16xf32> to vector<16x1xf32>
    %cst_269 = arith.constant 0.0883883461 : f32
    %567 = vector.broadcast %cst_269 : f32 to vector<16x1xf32>
    %568 = arith.mulf %566, %567 : vector<16x1xf32>
    %569 = vector.extract_strided_slice %563 {offsets = [0, 128], sizes = [16, 128], strides = [1, 1]} : vector<16x256xf32> to vector<16x128xf32>
    %cst_270 = arith.constant dense<0.000000e+00> : vector<16xf32>
    %570 = vector.multi_reduction <add>, %569, %cst_270 [1] : vector<16x128xf32> to vector<16xf32>
    %571 = vector.shape_cast %570 : vector<16xf32> to vector<16x1xf32>
    %cst_271 = arith.constant 0.0883883461 : f32
    %572 = vector.broadcast %cst_271 : f32 to vector<16x1xf32>
    %573 = arith.mulf %571, %572 : vector<16x1xf32>
    %574 = arith.maximumf %377, %568 : vector<16x1xf32>
    %575 = arith.subf %377, %574 : vector<16x1xf32>
    %576 = math.exp %575 : vector<16x1xf32>
    %577 = arith.subf %568, %574 : vector<16x1xf32>
    %578 = math.exp %577 : vector<16x1xf32>
    %579 = arith.mulf %383, %576 : vector<16x1xf32>
    %580 = arith.addf %579, %578 : vector<16x1xf32>
    %581 = vector.broadcast %576 : vector<16x1xf32> to vector<16x128xf32>
    %582 = arith.mulf %389, %581 : vector<16x128xf32>
    %583 = vector.extract_strided_slice %562 {offsets = [0, 0], sizes = [16, 128], strides = [1, 1]} : vector<16x256xf32> to vector<16x128xf32>
    %584 = vector.broadcast %578 : vector<16x1xf32> to vector<16x128xf32>
    %585 = arith.mulf %583, %584 : vector<16x128xf32>
    %586 = arith.addf %582, %585 : vector<16x128xf32>
    %587 = arith.maximumf %390, %573 : vector<16x1xf32>
    %588 = arith.subf %390, %587 : vector<16x1xf32>
    %589 = math.exp %588 : vector<16x1xf32>
    %590 = arith.subf %573, %587 : vector<16x1xf32>
    %591 = math.exp %590 : vector<16x1xf32>
    %592 = arith.mulf %396, %589 : vector<16x1xf32>
    %593 = arith.addf %592, %591 : vector<16x1xf32>
    %594 = vector.broadcast %589 : vector<16x1xf32> to vector<16x128xf32>
    %595 = arith.mulf %402, %594 : vector<16x128xf32>
    %596 = vector.extract_strided_slice %562 {offsets = [0, 128], sizes = [16, 128], strides = [1, 1]} : vector<16x256xf32> to vector<16x128xf32>
    %597 = vector.broadcast %591 : vector<16x1xf32> to vector<16x128xf32>
    %598 = arith.mulf %596, %597 : vector<16x128xf32>
    %599 = arith.addf %595, %598 : vector<16x128xf32>
    %c3 = arith.constant 3 : index
    %c0_272 = arith.constant 0 : index
    %c0_273 = arith.constant 0 : index
    %600 = vector.load %arg2[%c3, %c0_272, %c0_273] : memref<4x16x128xbf16, #tpu.memory_space<vmem>>, vector<1x16x128xbf16>
    %601 = vector.shape_cast %600 : vector<1x16x128xbf16> to vector<16x128xbf16>
    %c0_274 = arith.constant 0 : index
    %c0_275 = arith.constant 0 : index
    %602 = vector.load %arg6[%c0_274, %c0_275] : memref<128x256xbf16, #tpu.memory_space<vmem>>, vector<128x256xbf16>
    %cst_276 = arith.constant dense<0.000000e+00> : vector<16x256xf32>
    %603 = tpu.matmul %601, %602, %cst_276 {dimension_numbers = #tpu.dot_dimension_numbers<[1], [0], [0], [1], [0, 0, 1, 1], [], []>} : vector<16x128xbf16>, vector<128x256xbf16>, vector<16x256xf32> -> vector<16x256xf32>
    %c0_277 = arith.constant 0 : index
    %c0_278 = arith.constant 0 : index
    %604 = vector.load %arg7[%c0_277, %c0_278] : memref<1x256xf32, #tpu.memory_space<vmem>>, vector<1x256xf32>
    %605 = vector.broadcast %604 : vector<1x256xf32> to vector<16x256xf32>
    %606 = arith.addf %603, %605 : vector<16x256xf32>
    %cst_279 = arith.constant 5.000000e-01 : f32
    %607 = vector.broadcast %cst_279 : f32 to vector<16x256xf32>
    %608 = arith.mulf %607, %606 : vector<16x256xf32>
    %cst_280 = arith.constant 0.707106769 : f32
    %609 = vector.broadcast %cst_280 : f32 to vector<16x256xf32>
    %610 = arith.mulf %606, %609 : vector<16x256xf32>
    %611 = math.absf %610 : vector<16x256xf32>
    %cst_281 = arith.constant 0.327591091 : f32
    %612 = vector.broadcast %cst_281 : f32 to vector<16x256xf32>
    %613 = arith.mulf %612, %611 : vector<16x256xf32>
    %cst_282 = arith.constant 1.000000e+00 : f32
    %614 = vector.broadcast %cst_282 : f32 to vector<16x256xf32>
    %615 = arith.addf %614, %613 : vector<16x256xf32>
    %cst_283 = arith.constant 1.000000e+00 : f32
    %616 = vector.broadcast %cst_283 : f32 to vector<16x256xf32>
    %617 = arith.divf %616, %615 : vector<16x256xf32>
    %cst_284 = arith.constant 1.06140542 : f32
    %618 = vector.broadcast %cst_284 : f32 to vector<16x256xf32>
    %619 = arith.mulf %618, %617 : vector<16x256xf32>
    %cst_285 = arith.constant -1.45315206 : f32
    %620 = vector.broadcast %cst_285 : f32 to vector<16x256xf32>
    %621 = arith.addf %619, %620 : vector<16x256xf32>
    %622 = arith.mulf %621, %617 : vector<16x256xf32>
    %cst_286 = arith.constant 1.42141378 : f32
    %623 = vector.broadcast %cst_286 : f32 to vector<16x256xf32>
    %624 = arith.addf %622, %623 : vector<16x256xf32>
    %625 = arith.mulf %624, %617 : vector<16x256xf32>
    %cst_287 = arith.constant -0.284496725 : f32
    %626 = vector.broadcast %cst_287 : f32 to vector<16x256xf32>
    %627 = arith.addf %625, %626 : vector<16x256xf32>
    %628 = arith.mulf %627, %617 : vector<16x256xf32>
    %cst_288 = arith.constant 0.254829586 : f32
    %629 = vector.broadcast %cst_288 : f32 to vector<16x256xf32>
    %630 = arith.addf %628, %629 : vector<16x256xf32>
    %631 = arith.mulf %630, %617 : vector<16x256xf32>
    %cst_289 = arith.constant 0.000000e+00 : f32
    %632 = vector.broadcast %cst_289 : f32 to vector<16x256xf32>
    %633 = arith.subf %632, %611 : vector<16x256xf32>
    %634 = arith.mulf %633, %611 : vector<16x256xf32>
    %635 = math.exp %634 : vector<16x256xf32>
    %636 = arith.mulf %631, %635 : vector<16x256xf32>
    %cst_290 = arith.constant 1.000000e+00 : f32
    %637 = vector.broadcast %cst_290 : f32 to vector<16x256xf32>
    %638 = arith.subf %637, %636 : vector<16x256xf32>
    %cst_291 = arith.constant 0.000000e+00 : f32
    %639 = vector.broadcast %cst_291 : f32 to vector<16x256xf32>
    %640 = arith.cmpf olt, %610, %639 : vector<16x256xf32>
    %cst_292 = arith.constant 0.000000e+00 : f32
    %641 = vector.broadcast %cst_292 : f32 to vector<16x256xf32>
    %642 = arith.subf %641, %638 : vector<16x256xf32>
    %643 = arith.select %640, %642, %638 : vector<16x256xi1>, vector<16x256xf32>
    %cst_293 = arith.constant 1.000000e+00 : f32
    %644 = vector.broadcast %cst_293 : f32 to vector<16x256xf32>
    %645 = arith.addf %644, %643 : vector<16x256xf32>
    %646 = arith.mulf %608, %645 : vector<16x256xf32>
    %647 = arith.truncf %646 : vector<16x256xf32> to vector<16x256xbf16>
    %c0_294 = arith.constant 0 : index
    %c0_295 = arith.constant 0 : index
    %648 = vector.load %arg8[%c0_294, %c0_295] : memref<256x256xbf16, #tpu.memory_space<vmem>>, vector<256x256xbf16>
    %cst_296 = arith.constant dense<0.000000e+00> : vector<16x256xf32>
    %649 = tpu.matmul %647, %648, %cst_296 {dimension_numbers = #tpu.dot_dimension_numbers<[1], [0], [0], [1], [0, 0, 1, 1], [], []>} : vector<16x256xbf16>, vector<256x256xbf16>, vector<16x256xf32> -> vector<16x256xf32>
    %c0_297 = arith.constant 0 : index
    %c0_298 = arith.constant 0 : index
    %650 = vector.load %arg9[%c0_297, %c0_298] : memref<1x256xf32, #tpu.memory_space<vmem>>, vector<1x256xf32>
    %651 = vector.broadcast %650 : vector<1x256xf32> to vector<16x256xf32>
    %652 = arith.addf %649, %651 : vector<16x256xf32>
    %c0_299 = arith.constant 0 : index
    %c0_300 = arith.constant 0 : index
    %653 = vector.load %arg10[%c0_299, %c0_300] : memref<1x256xf32, #tpu.memory_space<vmem>>, vector<1x256xf32>
    %c0_301 = arith.constant 0 : index
    %c0_302 = arith.constant 0 : index
    %654 = vector.load %arg11[%c0_301, %c0_302] : memref<1x256xf32, #tpu.memory_space<vmem>>, vector<1x256xf32>
    %cst_303 = arith.constant dense<0.000000e+00> : vector<16xf32>
    %655 = vector.multi_reduction <add>, %652, %cst_303 [1] : vector<16x256xf32> to vector<16xf32>
    %656 = vector.shape_cast %655 : vector<16xf32> to vector<16x1xf32>
    %cst_304 = arith.constant 2.560000e+02 : f32
    %657 = vector.broadcast %cst_304 : f32 to vector<16x1xf32>
    %658 = arith.divf %656, %657 : vector<16x1xf32>
    %659 = vector.broadcast %658 : vector<16x1xf32> to vector<16x256xf32>
    %660 = arith.subf %652, %659 : vector<16x256xf32>
    %661 = arith.mulf %660, %660 : vector<16x256xf32>
    %cst_305 = arith.constant dense<0.000000e+00> : vector<16xf32>
    %662 = vector.multi_reduction <add>, %661, %cst_305 [1] : vector<16x256xf32> to vector<16xf32>
    %663 = vector.shape_cast %662 : vector<16xf32> to vector<16x1xf32>
    %cst_306 = arith.constant 2.560000e+02 : f32
    %664 = vector.broadcast %cst_306 : f32 to vector<16x1xf32>
    %665 = arith.divf %663, %664 : vector<16x1xf32>
    %cst_307 = arith.constant 9.99999997E-7 : f32
    %666 = vector.broadcast %cst_307 : f32 to vector<16x1xf32>
    %667 = arith.addf %665, %666 : vector<16x1xf32>
    %668 = math.rsqrt %667 : vector<16x1xf32>
    %669 = vector.broadcast %668 : vector<16x1xf32> to vector<16x256xf32>
    %670 = arith.mulf %660, %669 : vector<16x256xf32>
    %671 = vector.broadcast %653 : vector<1x256xf32> to vector<16x256xf32>
    %672 = arith.mulf %670, %671 : vector<16x256xf32>
    %673 = vector.broadcast %654 : vector<1x256xf32> to vector<16x256xf32>
    %674 = arith.addf %672, %673 : vector<16x256xf32>
    %675 = arith.truncf %674 : vector<16x256xf32> to vector<16x256xbf16>
    %c0_308 = arith.constant 0 : index
    %c0_309 = arith.constant 0 : index
    %676 = vector.load %arg12[%c0_308, %c0_309] : memref<128x256xbf16, #tpu.memory_space<vmem>>, vector<128x256xbf16>
    %cst_310 = arith.constant dense<0.000000e+00> : vector<16x256xf32>
    %677 = tpu.matmul %601, %676, %cst_310 {dimension_numbers = #tpu.dot_dimension_numbers<[1], [0], [0], [1], [0, 0, 1, 1], [], []>} : vector<16x128xbf16>, vector<128x256xbf16>, vector<16x256xf32> -> vector<16x256xf32>
    %c0_311 = arith.constant 0 : index
    %c0_312 = arith.constant 0 : index
    %678 = vector.load %arg13[%c0_311, %c0_312] : memref<1x256xf32, #tpu.memory_space<vmem>>, vector<1x256xf32>
    %679 = vector.broadcast %678 : vector<1x256xf32> to vector<16x256xf32>
    %680 = arith.addf %677, %679 : vector<16x256xf32>
    %cst_313 = arith.constant 5.000000e-01 : f32
    %681 = vector.broadcast %cst_313 : f32 to vector<16x256xf32>
    %682 = arith.mulf %681, %680 : vector<16x256xf32>
    %cst_314 = arith.constant 0.707106769 : f32
    %683 = vector.broadcast %cst_314 : f32 to vector<16x256xf32>
    %684 = arith.mulf %680, %683 : vector<16x256xf32>
    %685 = math.absf %684 : vector<16x256xf32>
    %cst_315 = arith.constant 0.327591091 : f32
    %686 = vector.broadcast %cst_315 : f32 to vector<16x256xf32>
    %687 = arith.mulf %686, %685 : vector<16x256xf32>
    %cst_316 = arith.constant 1.000000e+00 : f32
    %688 = vector.broadcast %cst_316 : f32 to vector<16x256xf32>
    %689 = arith.addf %688, %687 : vector<16x256xf32>
    %cst_317 = arith.constant 1.000000e+00 : f32
    %690 = vector.broadcast %cst_317 : f32 to vector<16x256xf32>
    %691 = arith.divf %690, %689 : vector<16x256xf32>
    %cst_318 = arith.constant 1.06140542 : f32
    %692 = vector.broadcast %cst_318 : f32 to vector<16x256xf32>
    %693 = arith.mulf %692, %691 : vector<16x256xf32>
    %cst_319 = arith.constant -1.45315206 : f32
    %694 = vector.broadcast %cst_319 : f32 to vector<16x256xf32>
    %695 = arith.addf %693, %694 : vector<16x256xf32>
    %696 = arith.mulf %695, %691 : vector<16x256xf32>
    %cst_320 = arith.constant 1.42141378 : f32
    %697 = vector.broadcast %cst_320 : f32 to vector<16x256xf32>
    %698 = arith.addf %696, %697 : vector<16x256xf32>
    %699 = arith.mulf %698, %691 : vector<16x256xf32>
    %cst_321 = arith.constant -0.284496725 : f32
    %700 = vector.broadcast %cst_321 : f32 to vector<16x256xf32>
    %701 = arith.addf %699, %700 : vector<16x256xf32>
    %702 = arith.mulf %701, %691 : vector<16x256xf32>
    %cst_322 = arith.constant 0.254829586 : f32
    %703 = vector.broadcast %cst_322 : f32 to vector<16x256xf32>
    %704 = arith.addf %702, %703 : vector<16x256xf32>
    %705 = arith.mulf %704, %691 : vector<16x256xf32>
    %cst_323 = arith.constant 0.000000e+00 : f32
    %706 = vector.broadcast %cst_323 : f32 to vector<16x256xf32>
    %707 = arith.subf %706, %685 : vector<16x256xf32>
    %708 = arith.mulf %707, %685 : vector<16x256xf32>
    %709 = math.exp %708 : vector<16x256xf32>
    %710 = arith.mulf %705, %709 : vector<16x256xf32>
    %cst_324 = arith.constant 1.000000e+00 : f32
    %711 = vector.broadcast %cst_324 : f32 to vector<16x256xf32>
    %712 = arith.subf %711, %710 : vector<16x256xf32>
    %cst_325 = arith.constant 0.000000e+00 : f32
    %713 = vector.broadcast %cst_325 : f32 to vector<16x256xf32>
    %714 = arith.cmpf olt, %684, %713 : vector<16x256xf32>
    %cst_326 = arith.constant 0.000000e+00 : f32
    %715 = vector.broadcast %cst_326 : f32 to vector<16x256xf32>
    %716 = arith.subf %715, %712 : vector<16x256xf32>
    %717 = arith.select %714, %716, %712 : vector<16x256xi1>, vector<16x256xf32>
    %cst_327 = arith.constant 1.000000e+00 : f32
    %718 = vector.broadcast %cst_327 : f32 to vector<16x256xf32>
    %719 = arith.addf %718, %717 : vector<16x256xf32>
    %720 = arith.mulf %682, %719 : vector<16x256xf32>
    %721 = arith.truncf %720 : vector<16x256xf32> to vector<16x256xbf16>
    %c0_328 = arith.constant 0 : index
    %c0_329 = arith.constant 0 : index
    %722 = vector.load %arg14[%c0_328, %c0_329] : memref<256x256xbf16, #tpu.memory_space<vmem>>, vector<256x256xbf16>
    %cst_330 = arith.constant dense<0.000000e+00> : vector<16x256xf32>
    %723 = tpu.matmul %721, %722, %cst_330 {dimension_numbers = #tpu.dot_dimension_numbers<[1], [0], [0], [1], [0, 0, 1, 1], [], []>} : vector<16x256xbf16>, vector<256x256xbf16>, vector<16x256xf32> -> vector<16x256xf32>
    %c0_331 = arith.constant 0 : index
    %c0_332 = arith.constant 0 : index
    %724 = vector.load %arg15[%c0_331, %c0_332] : memref<1x256xf32, #tpu.memory_space<vmem>>, vector<1x256xf32>
    %725 = vector.broadcast %724 : vector<1x256xf32> to vector<16x256xf32>
    %726 = arith.addf %723, %725 : vector<16x256xf32>
    %c0_333 = arith.constant 0 : index
    %c0_334 = arith.constant 0 : index
    %727 = vector.load %arg16[%c0_333, %c0_334] : memref<1x256xf32, #tpu.memory_space<vmem>>, vector<1x256xf32>
    %c0_335 = arith.constant 0 : index
    %c0_336 = arith.constant 0 : index
    %728 = vector.load %arg17[%c0_335, %c0_336] : memref<1x256xf32, #tpu.memory_space<vmem>>, vector<1x256xf32>
    %cst_337 = arith.constant dense<0.000000e+00> : vector<16xf32>
    %729 = vector.multi_reduction <add>, %726, %cst_337 [1] : vector<16x256xf32> to vector<16xf32>
    %730 = vector.shape_cast %729 : vector<16xf32> to vector<16x1xf32>
    %cst_338 = arith.constant 2.560000e+02 : f32
    %731 = vector.broadcast %cst_338 : f32 to vector<16x1xf32>
    %732 = arith.divf %730, %731 : vector<16x1xf32>
    %733 = vector.broadcast %732 : vector<16x1xf32> to vector<16x256xf32>
    %734 = arith.subf %726, %733 : vector<16x256xf32>
    %735 = arith.mulf %734, %734 : vector<16x256xf32>
    %cst_339 = arith.constant dense<0.000000e+00> : vector<16xf32>
    %736 = vector.multi_reduction <add>, %735, %cst_339 [1] : vector<16x256xf32> to vector<16xf32>
    %737 = vector.shape_cast %736 : vector<16xf32> to vector<16x1xf32>
    %cst_340 = arith.constant 2.560000e+02 : f32
    %738 = vector.broadcast %cst_340 : f32 to vector<16x1xf32>
    %739 = arith.divf %737, %738 : vector<16x1xf32>
    %cst_341 = arith.constant 9.99999997E-7 : f32
    %740 = vector.broadcast %cst_341 : f32 to vector<16x1xf32>
    %741 = arith.addf %739, %740 : vector<16x1xf32>
    %742 = math.rsqrt %741 : vector<16x1xf32>
    %743 = vector.broadcast %742 : vector<16x1xf32> to vector<16x256xf32>
    %744 = arith.mulf %734, %743 : vector<16x256xf32>
    %745 = vector.broadcast %727 : vector<1x256xf32> to vector<16x256xf32>
    %746 = arith.mulf %744, %745 : vector<16x256xf32>
    %747 = vector.broadcast %728 : vector<1x256xf32> to vector<16x256xf32>
    %748 = arith.addf %746, %747 : vector<16x256xf32>
    %749 = arith.truncf %748 : vector<16x256xf32> to vector<16x256xbf16>
    %c0_342 = arith.constant 0 : index
    %c0_343 = arith.constant 0 : index
    %750 = vector.load %arg20[%c0_342, %c0_343] : memref<256x256xbf16, #tpu.memory_space<vmem>>, vector<256x256xbf16>
    %cst_344 = arith.constant dense<0.000000e+00> : vector<16x256xf32>
    %751 = tpu.matmul %675, %750, %cst_344 {dimension_numbers = #tpu.dot_dimension_numbers<[1], [0], [0], [1], [0, 0, 1, 1], [], []>} : vector<16x256xbf16>, vector<256x256xbf16>, vector<16x256xf32> -> vector<16x256xf32>
    %c0_345 = arith.constant 0 : index
    %c0_346 = arith.constant 0 : index
    %752 = vector.load %arg21[%c0_345, %c0_346] : memref<1x256xf32, #tpu.memory_space<vmem>>, vector<1x256xf32>
    %753 = vector.broadcast %752 : vector<1x256xf32> to vector<16x256xf32>
    %754 = arith.addf %751, %753 : vector<16x256xf32>
    %c0_347 = arith.constant 0 : index
    %c0_348 = arith.constant 0 : index
    %755 = vector.load %arg22[%c0_347, %c0_348] : memref<256x256xbf16, #tpu.memory_space<vmem>>, vector<256x256xbf16>
    %cst_349 = arith.constant dense<0.000000e+00> : vector<16x256xf32>
    %756 = tpu.matmul %749, %755, %cst_349 {dimension_numbers = #tpu.dot_dimension_numbers<[1], [0], [0], [1], [0, 0, 1, 1], [], []>} : vector<16x256xbf16>, vector<256x256xbf16>, vector<16x256xf32> -> vector<16x256xf32>
    %c0_350 = arith.constant 0 : index
    %c0_351 = arith.constant 0 : index
    %757 = vector.load %arg23[%c0_350, %c0_351] : memref<1x256xf32, #tpu.memory_space<vmem>>, vector<1x256xf32>
    %758 = vector.broadcast %757 : vector<1x256xf32> to vector<16x256xf32>
    %759 = arith.addf %756, %758 : vector<16x256xf32>
    %760 = arith.mulf %30, %754 : vector<16x256xf32>
    %761 = vector.extract_strided_slice %760 {offsets = [0, 0], sizes = [16, 128], strides = [1, 1]} : vector<16x256xf32> to vector<16x128xf32>
    %cst_352 = arith.constant dense<0.000000e+00> : vector<16xf32>
    %762 = vector.multi_reduction <add>, %761, %cst_352 [1] : vector<16x128xf32> to vector<16xf32>
    %763 = vector.shape_cast %762 : vector<16xf32> to vector<16x1xf32>
    %cst_353 = arith.constant 0.0883883461 : f32
    %764 = vector.broadcast %cst_353 : f32 to vector<16x1xf32>
    %765 = arith.mulf %763, %764 : vector<16x1xf32>
    %766 = vector.extract_strided_slice %760 {offsets = [0, 128], sizes = [16, 128], strides = [1, 1]} : vector<16x256xf32> to vector<16x128xf32>
    %cst_354 = arith.constant dense<0.000000e+00> : vector<16xf32>
    %767 = vector.multi_reduction <add>, %766, %cst_354 [1] : vector<16x128xf32> to vector<16xf32>
    %768 = vector.shape_cast %767 : vector<16xf32> to vector<16x1xf32>
    %cst_355 = arith.constant 0.0883883461 : f32
    %769 = vector.broadcast %cst_355 : f32 to vector<16x1xf32>
    %770 = arith.mulf %768, %769 : vector<16x1xf32>
    %771 = arith.maximumf %574, %765 : vector<16x1xf32>
    %772 = arith.subf %574, %771 : vector<16x1xf32>
    %773 = math.exp %772 : vector<16x1xf32>
    %774 = arith.subf %765, %771 : vector<16x1xf32>
    %775 = math.exp %774 : vector<16x1xf32>
    %776 = arith.mulf %580, %773 : vector<16x1xf32>
    %777 = arith.addf %776, %775 : vector<16x1xf32>
    %778 = vector.broadcast %773 : vector<16x1xf32> to vector<16x128xf32>
    %779 = arith.mulf %586, %778 : vector<16x128xf32>
    %780 = vector.extract_strided_slice %759 {offsets = [0, 0], sizes = [16, 128], strides = [1, 1]} : vector<16x256xf32> to vector<16x128xf32>
    %781 = vector.broadcast %775 : vector<16x1xf32> to vector<16x128xf32>
    %782 = arith.mulf %780, %781 : vector<16x128xf32>
    %783 = arith.addf %779, %782 : vector<16x128xf32>
    %784 = arith.maximumf %587, %770 : vector<16x1xf32>
    %785 = arith.subf %587, %784 : vector<16x1xf32>
    %786 = math.exp %785 : vector<16x1xf32>
    %787 = arith.subf %770, %784 : vector<16x1xf32>
    %788 = math.exp %787 : vector<16x1xf32>
    %789 = arith.mulf %593, %786 : vector<16x1xf32>
    %790 = arith.addf %789, %788 : vector<16x1xf32>
    %791 = vector.broadcast %786 : vector<16x1xf32> to vector<16x128xf32>
    %792 = arith.mulf %599, %791 : vector<16x128xf32>
    %793 = vector.extract_strided_slice %759 {offsets = [0, 128], sizes = [16, 128], strides = [1, 1]} : vector<16x256xf32> to vector<16x128xf32>
    %794 = vector.broadcast %788 : vector<16x1xf32> to vector<16x128xf32>
    %795 = arith.mulf %793, %794 : vector<16x128xf32>
    %796 = arith.addf %792, %795 : vector<16x128xf32>
    %c0_356 = arith.constant 0 : index
    %c0_357 = arith.constant 0 : index
    %797 = vector.load %arg25[%c0_356, %c0_357] : memref<1x256xf32, #tpu.memory_space<vmem>>, vector<1x256xf32>
    %798 = tpu.reciprocal %777 {approx = true} : vector<16x1xf32> -> vector<16x1xf32>
    %799 = vector.broadcast %798 : vector<16x1xf32> to vector<16x128xf32>
    %800 = arith.mulf %783, %799 : vector<16x128xf32>
    %801 = arith.truncf %800 : vector<16x128xf32> to vector<16x128xbf16>
    %c0_358 = arith.constant 0 : index
    %c0_359 = arith.constant 0 : index
    %802 = vector.load %arg24[%c0_358, %c0_359] : memref<256x256xbf16, #tpu.memory_space<vmem>>, vector<128x256xbf16>
    %cst_360 = arith.constant dense<0.000000e+00> : vector<16x256xf32>
    %803 = tpu.matmul %801, %802, %cst_360 {dimension_numbers = #tpu.dot_dimension_numbers<[1], [0], [0], [1], [0, 0, 1, 1], [], []>} : vector<16x128xbf16>, vector<128x256xbf16>, vector<16x256xf32> -> vector<16x256xf32>
    %804 = vector.broadcast %797 : vector<1x256xf32> to vector<16x256xf32>
    %805 = arith.addf %804, %803 : vector<16x256xf32>
    %806 = tpu.reciprocal %790 {approx = true} : vector<16x1xf32> -> vector<16x1xf32>
    %807 = vector.broadcast %806 : vector<16x1xf32> to vector<16x128xf32>
    %808 = arith.mulf %796, %807 : vector<16x128xf32>
    %809 = arith.truncf %808 : vector<16x128xf32> to vector<16x128xbf16>
    %c128 = arith.constant 128 : index
    %c0_361 = arith.constant 0 : index
    %810 = vector.load %arg24[%c128, %c0_361] : memref<256x256xbf16, #tpu.memory_space<vmem>>, vector<128x256xbf16>
    %cst_362 = arith.constant dense<0.000000e+00> : vector<16x256xf32>
    %811 = tpu.matmul %809, %810, %cst_362 {dimension_numbers = #tpu.dot_dimension_numbers<[1], [0], [0], [1], [0, 0, 1, 1], [], []>} : vector<16x128xbf16>, vector<128x256xbf16>, vector<16x256xf32> -> vector<16x256xf32>
    %812 = arith.addf %805, %811 : vector<16x256xf32>
    %c0_363 = arith.constant 0 : index
    %c0_364 = arith.constant 0 : index
    %813 = vector.load %arg26[%c0_363, %c0_364] : memref<16x256xf32, #tpu.memory_space<vmem>>, vector<16x256xf32>
    tpu.vector_store %arg26[%c0_363, %c0_364], %812 {strides = array<i32>} : memref<16x256xf32, #tpu.memory_space<vmem>>, vector<16x256xf32>,
    return
  }
  func.func @transform_0(%arg0: i32) -> (i32, i32) {
    %c0_i32 = arith.constant 0 : i32
    %c0_i32_0 = arith.constant 0 : i32
    return %arg0, %c0_i32 : i32, i32
  }
  func.func @transform_1(%arg0: i32) -> (i32, i32, i32) {
    %c0_i32 = arith.constant 0 : i32
    %c0_i32_0 = arith.constant 0 : i32
    %c0_i32_1 = arith.constant 0 : i32
    return %c0_i32, %arg0, %c0_i32_0 : i32, i32, i32
  }
  func.func @transform_2(%arg0: i32) -> (i32, i32) {
    %c0_i32 = arith.constant 0 : i32
    %c0_i32_0 = arith.constant 0 : i32
    %c0_i32_1 = arith.constant 0 : i32
    return %c0_i32, %c0_i32_0 : i32, i32
  }
  func.func @transform_3(%arg0: i32) -> (i32, i32) {
    %c0_i32 = arith.constant 0 : i32
    %c0_i32_0 = arith.constant 0 : i32
    %c0_i32_1 = arith.constant 0 : i32
    return %c0_i32, %c0_i32_0 : i32, i32
  }
  func.func @transform_4(%arg0: i32) -> (i32, i32) {
    %c0_i32 = arith.constant 0 : i32
    %c0_i32_0 = arith.constant 0 : i32
    %c0_i32_1 = arith.constant 0 : i32
    return %c0_i32, %c0_i32_0 : i32, i32
  }
  func.func @transform_5(%arg0: i32) -> (i32, i32) {
    %c0_i32 = arith.constant 0 : i32
    %c0_i32_0 = arith.constant 0 : i32
    %c0_i32_1 = arith.constant 0 : i32
    return %c0_i32, %c0_i32_0 : i32, i32
  }
  func.func @transform_6(%arg0: i32) -> (i32, i32) {
    %c0_i32 = arith.constant 0 : i32
    %c0_i32_0 = arith.constant 0 : i32
    %c0_i32_1 = arith.constant 0 : i32
    return %c0_i32, %c0_i32_0 : i32, i32
  }
  func.func @transform_7(%arg0: i32) -> (i32, i32) {
    %c0_i32 = arith.constant 0 : i32
    %c0_i32_0 = arith.constant 0 : i32
    %c0_i32_1 = arith.constant 0 : i32
    return %c0_i32, %c0_i32_0 : i32, i32
  }
  func.func @transform_8(%arg0: i32) -> (i32, i32) {
    %c0_i32 = arith.constant 0 : i32
    %c0_i32_0 = arith.constant 0 : i32
    %c0_i32_1 = arith.constant 0 : i32
    return %c0_i32, %c0_i32_0 : i32, i32
  }
  func.func @transform_9(%arg0: i32) -> (i32, i32) {
    %c0_i32 = arith.constant 0 : i32
    %c0_i32_0 = arith.constant 0 : i32
    %c0_i32_1 = arith.constant 0 : i32
    return %c0_i32, %c0_i32_0 : i32, i32
  }
  func.func @transform_10(%arg0: i32) -> (i32, i32) {
    %c0_i32 = arith.constant 0 : i32
    %c0_i32_0 = arith.constant 0 : i32
    %c0_i32_1 = arith.constant 0 : i32
    return %c0_i32, %c0_i32_0 : i32, i32
  }
  func.func @transform_11(%arg0: i32) -> (i32, i32) {
    %c0_i32 = arith.constant 0 : i32
    %c0_i32_0 = arith.constant 0 : i32
    %c0_i32_1 = arith.constant 0 : i32
    return %c0_i32, %c0_i32_0 : i32, i32
  }
  func.func @transform_12(%arg0: i32) -> (i32, i32) {
    %c0_i32 = arith.constant 0 : i32
    %c0_i32_0 = arith.constant 0 : i32
    %c0_i32_1 = arith.constant 0 : i32
    return %c0_i32, %c0_i32_0 : i32, i32
  }
  func.func @transform_13(%arg0: i32) -> (i32, i32) {
    %c0_i32 = arith.constant 0 : i32
    %c0_i32_0 = arith.constant 0 : i32
    %c0_i32_1 = arith.constant 0 : i32
    return %c0_i32, %c0_i32_0 : i32, i32
  }
  func.func @transform_14(%arg0: i32) -> (i32, i32) {
    %c0_i32 = arith.constant 0 : i32
    %c0_i32_0 = arith.constant 0 : i32
    %c0_i32_1 = arith.constant 0 : i32
    return %c0_i32, %c0_i32_0 : i32, i32
  }
  func.func @transform_15(%arg0: i32) -> (i32, i32) {
    %c0_i32 = arith.constant 0 : i32
    %c0_i32_0 = arith.constant 0 : i32
    %c0_i32_1 = arith.constant 0 : i32
    return %c0_i32, %c0_i32_0 : i32, i32
  }
  func.func @transform_16(%arg0: i32) -> (i32, i32) {
    %c0_i32 = arith.constant 0 : i32
    %c0_i32_0 = arith.constant 0 : i32
    %c0_i32_1 = arith.constant 0 : i32
    return %c0_i32, %c0_i32_0 : i32, i32
  }
  func.func @transform_17(%arg0: i32) -> (i32, i32) {
    %c0_i32 = arith.constant 0 : i32
    %c0_i32_0 = arith.constant 0 : i32
    %c0_i32_1 = arith.constant 0 : i32
    return %c0_i32, %c0_i32_0 : i32, i32
  }
  func.func @transform_18(%arg0: i32) -> (i32, i32) {
    %c0_i32 = arith.constant 0 : i32
    %c0_i32_0 = arith.constant 0 : i32
    %c0_i32_1 = arith.constant 0 : i32
    return %c0_i32, %c0_i32_0 : i32, i32
  }
  func.func @transform_19(%arg0: i32) -> (i32, i32) {
    %c0_i32 = arith.constant 0 : i32
    %c0_i32_0 = arith.constant 0 : i32
    %c0_i32_1 = arith.constant 0 : i32
    return %c0_i32, %c0_i32_0 : i32, i32
  }
  func.func @transform_20(%arg0: i32) -> (i32, i32) {
    %c0_i32 = arith.constant 0 : i32
    %c0_i32_0 = arith.constant 0 : i32
    %c0_i32_1 = arith.constant 0 : i32
    return %c0_i32, %c0_i32_0 : i32, i32
  }
  func.func @transform_21(%arg0: i32) -> (i32, i32) {
    %c0_i32 = arith.constant 0 : i32
    %c0_i32_0 = arith.constant 0 : i32
    %c0_i32_1 = arith.constant 0 : i32
    return %c0_i32, %c0_i32_0 : i32, i32
  }
  func.func @transform_22(%arg0: i32) -> (i32, i32) {
    %c0_i32 = arith.constant 0 : i32
    %c0_i32_0 = arith.constant 0 : i32
    %c0_i32_1 = arith.constant 0 : i32
    return %c0_i32, %c0_i32_0 : i32, i32
  }
  func.func @transform_23(%arg0: i32) -> (i32, i32) {
    %c0_i32 = arith.constant 0 : i32
    %c0_i32_0 = arith.constant 0 : i32
    %c0_i32_1 = arith.constant 0 : i32
    return %c0_i32, %c0_i32_0 : i32, i32
  }
  func.func @transform_24(%arg0: i32) -> (i32, i32) {
    %c0_i32 = arith.constant 0 : i32
    %c0_i32_0 = arith.constant 0 : i32
    %c0_i32_1 = arith.constant 0 : i32
    return %c0_i32, %c0_i32_0 : i32, i32
  }
  func.func @transform_25(%arg0: i32) -> (i32, i32) {
    %c0_i32 = arith.constant 0 : i32
    %c0_i32_0 = arith.constant 0 : i32
    return %arg0, %c0_i32 : i32, i32
  }
}

</mosaic_0001>

<llo_original>
// kernel: tpu_custom_call.1
$region0: #{tpu_custom_call.1}
  #allocation0 [shape = 'u32[]', space=smem, size = 0x4, offset = 0x4, fixed_abs, tag = 'smem constant byte address 0x4 - core index']
  #allocation1 [shape = 'u32[144,128]{1,0:T(1,128)}', space=vmem, size = 0x12000, scoped, tag = 'internal scratch']
  #allocation21 [shape = 's32[]', space=sflag, size = 0x4, offset = 0, fixed_abs, tag = 'sflag constant byte address 0x0 - dummy sync flag']
  %s0 = inlined_call_operand.hbm [shape: bf16[32,128], index: 0, kind: input, shape index: {}]
  %s1 = inlined_call_operand.hbm [shape: bf16[4,32,128], index: 1, kind: input, shape index: {}]
  %s2 = inlined_call_operand.hbm [shape: bf16[128,256], index: 2, kind: input, shape index: {}]
  %s3 = inlined_call_operand.vmem [shape: f32[1,256], index: 3, kind: input, shape index: {}]
  %s4 = inlined_call_operand.vmem [shape: f32[1,256], index: 4, kind: input, shape index: {}]
  %s5 = inlined_call_operand.hbm [shape: bf16[128,256], index: 5, kind: input, shape index: {}]
  %s6 = inlined_call_operand.vmem [shape: f32[1,256], index: 6, kind: input, shape index: {}]
  %s7 = inlined_call_operand.hbm [shape: bf16[256,256], index: 7, kind: input, shape index: {}]
  %s8 = inlined_call_operand.vmem [shape: f32[1,256], index: 8, kind: input, shape index: {}]
  %s9 = inlined_call_operand.vmem [shape: f32[1,256], index: 9, kind: input, shape index: {}]
  %s10 = inlined_call_operand.vmem [shape: f32[1,256], index: 10, kind: input, shape index: {}]
  %s11 = inlined_call_operand.hbm [shape: bf16[128,256], index: 11, kind: input, shape index: {}]
  %s12 = inlined_call_operand.vmem [shape: f32[1,256], index: 12, kind: input, shape index: {}]
  %s13 = inlined_call_operand.hbm [shape: bf16[256,256], index: 13, kind: input, shape index: {}]
  %s14 = inlined_call_operand.vmem [shape: f32[1,256], index: 14, kind: input, shape index: {}]
  %s15 = inlined_call_operand.vmem [shape: f32[1,256], index: 15, kind: input, shape index: {}]
  %s16 = inlined_call_operand.vmem [shape: f32[1,256], index: 16, kind: input, shape index: {}]
  %s17 = inlined_call_operand.hbm [shape: bf16[256,256], index: 17, kind: input, shape index: {}]
  %s18 = inlined_call_operand.vmem [shape: f32[1,256], index: 18, kind: input, shape index: {}]
  %s19 = inlined_call_operand.hbm [shape: bf16[256,256], index: 19, kind: input, shape index: {}]
  %s20 = inlined_call_operand.vmem [shape: f32[1,256], index: 20, kind: input, shape index: {}]
  %s21 = inlined_call_operand.hbm [shape: bf16[256,256], index: 21, kind: input, shape index: {}]
  %s22 = inlined_call_operand.vmem [shape: f32[1,256], index: 22, kind: input, shape index: {}]
  %s23 = inlined_call_operand.hbm [shape: bf16[256,256], index: 23, kind: input, shape index: {}]
  %s24 = inlined_call_operand.vmem [shape: f32[1,256], index: 24, kind: input, shape index: {}]
  %s25 = inlined_call_operand.hbm [shape: f32[32,256], index: 25, kind: output, shape index: {}]
  %s26 = sld [smem:[#allocation0]]
  $region177: #{tpu_custom_call.1} parent=0
    _
  %s28 = ssub.s32 1, %s26
  %s29 = scalar_select 0, %s28, %s26
  $region1: #{tpu_custom_call.1} parent=0
    #allocation2 [shape = 'u8[8192]{0}', space=vmem, size = 0x2000, scoped, tag = 'input window, operand 0']
    #allocation3 [shape = 's32[2]{0}', space=sflag, size = 0x8, scoped, tag = 'scoped memory for tpu_custom_call.1']
    #allocation4 [shape = 's32[2]{0}', space=sflag, size = 0x8, scoped, tag = 'scoped memory for tpu_custom_call.1']
    #allocation5 [shape = 'u8[32768]{0}', space=vmem, size = 0x8000, scoped, tag = 'input window, operand 1']
    #allocation6 [shape = 's32[2]{0}', space=sflag, size = 0x8, scoped, tag = 'scoped memory for tpu_custom_call.1']
    #allocation7 [shape = 'u8[65536]{0}', space=vmem, size = 0x10000, scoped, tag = 'input window, operand 2, single buffered']
    #allocation8 [shape = 'u8[65536]{0}', space=vmem, size = 0x10000, scoped, tag = 'input window, operand 5, single buffered']
    #allocation9 [shape = 's32[1]{0}', space=sflag, size = 0x4, scoped, tag = 'scoped memory for tpu_custom_call.1']
    #allocation10 [shape = 'u8[131072]{0}', space=vmem, size = 0x20000, scoped, tag = 'input window, operand 7, single buffered']
    #allocation11 [shape = 'u8[65536]{0}', space=vmem, size = 0x10000, scoped, tag = 'input window, operand 11, single buffered']
    #allocation12 [shape = 's32[1]{0}', space=sflag, size = 0x4, scoped, tag = 'scoped memory for tpu_custom_call.1']
    #allocation13 [shape = 'u8[131072]{0}', space=vmem, size = 0x20000, scoped, tag = 'input window, operand 13, single buffered']
    #allocation14 [shape = 'u8[131072]{0}', space=vmem, size = 0x20000, scoped, tag = 'input window, operand 17, single buffered']
    #allocation15 [shape = 's32[1]{0}', space=sflag, size = 0x4, scoped, tag = 'scoped memory for tpu_custom_call.1']
    #allocation16 [shape = 'u8[131072]{0}', space=vmem, size = 0x20000, scoped, tag = 'input window, operand 19, single buffered']
    #allocation17 [shape = 'u8[131072]{0}', space=vmem, size = 0x20000, scoped, tag = 'input window, operand 21, single buffered']
    #allocation18 [shape = 's32[1]{0}', space=sflag, size = 0x4, scoped, tag = 'scoped memory for tpu_custom_call.1']
    #allocation19 [shape = 'u8[131072]{0}', space=vmem, size = 0x20000, scoped, tag = 'input window, operand 23, single buffered']
    #allocation20 [shape = 'u8[32768]{0}', space=vmem, size = 0x8000, scoped, tag = 'output window, operand 0']
    %30 = vsyncpa [#allocation3], 0
    %s31 = scalar_lea.sflag [#allocation3], 1
    %32 = vsyncpa %s31, 0
    %33 = vsyncpa [#allocation6], 0
    %s34 = scalar_lea.sflag [#allocation6], 1
    %35 = vsyncpa %s34, 0
    %36 = vsyncpa [#allocation9], 0
    %37 = vsyncpa [#allocation12], 0
    %38 = vsyncpa [#allocation15], 0
    %39 = vsyncpa [#allocation18], 0
    %40 = vsyncpa [#allocation4], 0
    %s41 = scalar_lea.sflag [#allocation4], 1
    %42 = vsyncpa %s41, 0
    loop: start=0, step=1, limit=4
    $region2: #{tpu_custom_call.1} parent=1 // loop_pre_header
      _
    $region3: #{tpu_custom_call.1} parent=1 // loop_header
      %s44 = sphi 0, %s48
      %p45 = scmp.ge.s32.totalorder %s44, 4
      %s54 = sphi 0, %s56
      %s57 = sphi 0, %s54
      %s58 = sphi 0, %s57
      %s74 = sphi 0, %s58
      %s80 = sphi 0, %s82
      %s83 = sphi 0, %s80
      %s84 = sphi 0, %s83
      %s100 = sphi 0, %s84
      %s104 = sphi 0, %s104
      %s106 = sphi 0, %s104
      %s107 = sphi 0, %s106
      %s121 = sphi 0, %s107
      %s125 = sphi 0, %s125
      %s127 = sphi 0, %s125
      %s128 = sphi 0, %s127
      %s142 = sphi 0, %s128
      %s146 = sphi 0, %s146
      %s148 = sphi 0, %s146
      %s149 = sphi 0, %s148
      %s163 = sphi 0, %s149
      %s167 = sphi 0, %s167
      %s169 = sphi 0, %s167
      %s170 = sphi 0, %s169
      %s184 = sphi 0, %s170
      %s188 = sphi 0, %s188
      %s190 = sphi 0, %s188
      %s191 = sphi 0, %s190
      %s205 = sphi 0, %s191
      %s209 = sphi 0, %s209
      %s211 = sphi 0, %s209
      %s212 = sphi 0, %s211
      %s226 = sphi 0, %s212
      %s230 = sphi 0, %s230
      %s232 = sphi 0, %s230
      %s233 = sphi 0, %s232
      %s247 = sphi 0, %s233
      %s251 = sphi 0, %s251
      %s253 = sphi 0, %s251
      %s254 = sphi 0, %s253
      %s268 = sphi 0, %s254
      %s272 = sphi 0, %s272
      %s274 = sphi 0, %s272
      %s275 = sphi 0, %s274
      %s289 = sphi 0, %s275
      %s293 = sphi 0, %s293
      %s295 = sphi 0, %s293
      %s296 = sphi 0, %s295
      %s310 = sphi 0, %s296
      %s314 = sphi 0, %s314
      %s316 = sphi 0, %s314
      %s317 = sphi 0, %s316
      %s331 = sphi 0, %s317
      %s335 = sphi 0, %s335
      %s337 = sphi 0, %s335
      %s338 = sphi 0, %s337
      %s352 = sphi 0, %s338
      %s356 = sphi 0, %s356
      %s358 = sphi 0, %s356
      %s359 = sphi 0, %s358
      %s373 = sphi 0, %s359
      %s377 = sphi 0, %s377
      %s379 = sphi 0, %s377
      %s380 = sphi 0, %s379
      %s394 = sphi 0, %s380
      %s398 = sphi 0, %s398
      %s400 = sphi 0, %s398
      %s401 = sphi 0, %s400
      %s415 = sphi 0, %s401
      %s419 = sphi 0, %s419
      %s421 = sphi 0, %s419
      %s422 = sphi 0, %s421
      %s436 = sphi 0, %s422
      %s440 = sphi 0, %s440
      %s442 = sphi 0, %s440
      %s443 = sphi 0, %s442
      %s457 = sphi 0, %s443
      %s461 = sphi 0, %s461
      %s463 = sphi 0, %s461
      %s464 = sphi 0, %s463
      %s478 = sphi 0, %s464
      %s482 = sphi 0, %s482
      %s484 = sphi 0, %s482
      %s485 = sphi 0, %s484
      %s499 = sphi 0, %s485
      %s503 = sphi 0, %s503
      %s505 = sphi 0, %s503
      %s506 = sphi 0, %s505
      %s520 = sphi 0, %s506
      %s524 = sphi 0, %s524
      %s526 = sphi 0, %s524
      %s527 = sphi 0, %s526
      %s541 = sphi 0, %s527
      %s545 = sphi 0, %s545
      %s547 = sphi 0, %s545
      %s548 = sphi 0, %s547
      %s562 = sphi 0, %s548
      %s566 = sphi 0, %s566
      %s568 = sphi 0, %s566
      %s569 = sphi 0, %s568
      %s583 = sphi 0, %s569
      %s589 = sphi 0, %s591
      %s592 = sphi 0, %s589
      %s593 = sphi 0, %s592
      %s609 = sphi 0, %s593
    $region4: #{tpu_custom_call.1} parent=1 // loop_header_branch
      %47 = sbr.rel (%p45) target = $region8
    $region5: #{tpu_custom_call.1} parent=1 // loop_body
      %s49 = ssub.s32 %s44, 1
      %s50 = ssub.s32 %s44, 2
      %s51 = sadd.s32 %s44, 1
      %s52 = ssub.s32 %s44, %s51
      %p53 = scmp.eq.s32.totalorder %s52, 0
      %s55 = sadd.s32 %s54, 1
      %s56 = scalar_select %p53, %s54, %s55
      %p59 = pneg %p53
      %p60 = scmp.eq.s32.totalorder %s44, 1
      %p61 = por %p59, %p60
      %p62 = scmp.ne.s32.totalorder %s54, %s57
      %p63 = scmp.eq.s32.totalorder %s44, 0
      %p64 = por %p62, %p63
      %p65 = scmp.ne.s32.totalorder %s54, %s57
      %p66 = scmp.eq.s32.totalorder %s49, 1
      %p67 = por %p65, %p66
      %p68 = scmp.ne.s32.totalorder %s57, %s58
      %p69 = scmp.eq.s32.totalorder %s49, 0
      %p70 = por %p68, %p69
      %p71 = scmp.ne.s32.totalorder %s57, %s58
      %p72 = scmp.eq.s32.totalorder %s50, 1
      %p73 = por %p71, %p72
      %p75 = scmp.ne.s32.totalorder %s58, %s74
      %p76 = scmp.eq.s32.totalorder %s50, 0
      %p77 = por %p75, %p76
      %s78 = ssub.s32 %s44, %s51
      %p79 = scmp.eq.s32.totalorder %s78, 0
      %s81 = sadd.s32 %s80, 1
      %s82 = scalar_select %p79, %s80, %s81
      %p85 = pneg %p79
      %p86 = scmp.eq.s32.totalorder %s44, 1
      %p87 = por %p85, %p86
      %p88 = scmp.ne.s32.totalorder %s80, %s83
      %p89 = scmp.eq.s32.totalorder %s44, 0
      %p90 = por %p88, %p89
      %p91 = scmp.ne.s32.totalorder %s80, %s83
      %p92 = scmp.eq.s32.totalorder %s49, 1
      %p93 = por %p91, %p92
      %p94 = scmp.ne.s32.totalorder %s83, %s84
      %p95 = scmp.eq.s32.totalorder %s49, 0
      %p96 = por %p94, %p95
      %p97 = scmp.ne.s32.totalorder %s83, %s84
      %p98 = scmp.eq.s32.totalorder %s50, 1
      %p99 = por %p97, %p98
      %p101 = scmp.ne.s32.totalorder %s84, %s100
      %p102 = scmp.eq.s32.totalorder %s50, 0
      %p103 = por %p101, %p102
      %s105 = sadd.s32 %s104, 1
      %p108 = scmp.eq.s32.totalorder %s44, 1
      %p109 = scmp.ne.s32.totalorder %s104, %s106
      %p110 = scmp.eq.s32.totalorder %s44, 0
      %p111 = por %p109, %p110
      %p112 = scmp.ne.s32.totalorder %s104, %s106
      %p113 = scmp.eq.s32.totalorder %s49, 1
      %p114 = por %p112, %p113
      %p115 = scmp.ne.s32.totalorder %s106, %s107
      %p116 = scmp.eq.s32.totalorder %s49, 0
      %p117 = por %p115, %p116
      %p118 = scmp.ne.s32.totalorder %s106, %s107
      %p119 = scmp.eq.s32.totalorder %s50, 1
      %p120 = por %p118, %p119
      %p122 = scmp.ne.s32.totalorder %s107, %s121
      %p123 = scmp.eq.s32.totalorder %s50, 0
      %p124 = por %p122, %p123
      %s126 = sadd.s32 %s125, 1
      %p129 = scmp.eq.s32.totalorder %s44, 1
      %p130 = scmp.ne.s32.totalorder %s125, %s127
      %p131 = scmp.eq.s32.totalorder %s44, 0
      %p132 = por %p130, %p131
      %p133 = scmp.ne.s32.totalorder %s125, %s127
      %p134 = scmp.eq.s32.totalorder %s49, 1
      %p135 = por %p133, %p134
      %p136 = scmp.ne.s32.totalorder %s127, %s128
      %p137 = scmp.eq.s32.totalorder %s49, 0
      %p138 = por %p136, %p137
      %p139 = scmp.ne.s32.totalorder %s127, %s128
      %p140 = scmp.eq.s32.totalorder %s50, 1
      %p141 = por %p139, %p140
      %p143 = scmp.ne.s32.totalorder %s128, %s142
      %p144 = scmp.eq.s32.totalorder %s50, 0
      %p145 = por %p143, %p144
      %s147 = sadd.s32 %s146, 1
      %p150 = scmp.eq.s32.totalorder %s44, 1
      %p151 = scmp.ne.s32.totalorder %s146, %s148
      %p152 = scmp.eq.s32.totalorder %s44, 0
      %p153 = por %p151, %p152
      %p154 = scmp.ne.s32.totalorder %s146, %s148
      %p155 = scmp.eq.s32.totalorder %s49, 1
      %p156 = por %p154, %p155
      %p157 = scmp.ne.s32.totalorder %s148, %s149
      %p158 = scmp.eq.s32.totalorder %s49, 0
      %p159 = por %p157, %p158
      %p160 = scmp.ne.s32.totalorder %s148, %s149
      %p161 = scmp.eq.s32.totalorder %s50, 1
      %p162 = por %p160, %p161
      %p164 = scmp.ne.s32.totalorder %s149, %s163
      %p165 = scmp.eq.s32.totalorder %s50, 0
      %p166 = por %p164, %p165
      %s168 = sadd.s32 %s167, 1
      %p171 = scmp.eq.s32.totalorder %s44, 1
      %p172 = scmp.ne.s32.totalorder %s167, %s169
      %p173 = scmp.eq.s32.totalorder %s44, 0
      %p174 = por %p172, %p173
      %p175 = scmp.ne.s32.totalorder %s167, %s169
      %p176 = scmp.eq.s32.totalorder %s49, 1
      %p177 = por %p175, %p176
      %p178 = scmp.ne.s32.totalorder %s169, %s170
      %p179 = scmp.eq.s32.totalorder %s49, 0
      %p180 = por %p178, %p179
      %p181 = scmp.ne.s32.totalorder %s169, %s170
      %p182 = scmp.eq.s32.totalorder %s50, 1
      %p183 = por %p181, %p182
      %p185 = scmp.ne.s32.totalorder %s170, %s184
      %p186 = scmp.eq.s32.totalorder %s50, 0
      %p187 = por %p185, %p186
      %s189 = sadd.s32 %s188, 1
      %p192 = scmp.eq.s32.totalorder %s44, 1
      %p193 = scmp.ne.s32.totalorder %s188, %s190
      %p194 = scmp.eq.s32.totalorder %s44, 0
      %p195 = por %p193, %p194
      %p196 = scmp.ne.s32.totalorder %s188, %s190
      %p197 = scmp.eq.s32.totalorder %s49, 1
      %p198 = por %p196, %p197
      %p199 = scmp.ne.s32.totalorder %s190, %s191
      %p200 = scmp.eq.s32.totalorder %s49, 0
      %p201 = por %p199, %p200
      %p202 = scmp.ne.s32.totalorder %s190, %s191
      %p203 = scmp.eq.s32.totalorder %s50, 1
      %p204 = por %p202, %p203
      %p206 = scmp.ne.s32.totalorder %s191, %s205
      %p207 = scmp.eq.s32.totalorder %s50, 0
      %p208 = por %p206, %p207
      %s210 = sadd.s32 %s209, 1
      %p213 = scmp.eq.s32.totalorder %s44, 1
      %p214 = scmp.ne.s32.totalorder %s209, %s211
      %p215 = scmp.eq.s32.totalorder %s44, 0
      %p216 = por %p214, %p215
      %p217 = scmp.ne.s32.totalorder %s209, %s211
      %p218 = scmp.eq.s32.totalorder %s49, 1
      %p219 = por %p217, %p218
      %p220 = scmp.ne.s32.totalorder %s211, %s212
      %p221 = scmp.eq.s32.totalorder %s49, 0
      %p222 = por %p220, %p221
      %p223 = scmp.ne.s32.totalorder %s211, %s212
      %p224 = scmp.eq.s32.totalorder %s50, 1
      %p225 = por %p223, %p224
      %p227 = scmp.ne.s32.totalorder %s212, %s226
      %p228 = scmp.eq.s32.totalorder %s50, 0
      %p229 = por %p227, %p228
      %s231 = sadd.s32 %s230, 1
      %p234 = scmp.eq.s32.totalorder %s44, 1
      %p235 = scmp.ne.s32.totalorder %s230, %s232
      %p236 = scmp.eq.s32.totalorder %s44, 0
      %p237 = por %p235, %p236
      %p238 = scmp.ne.s32.totalorder %s230, %s232
      %p239 = scmp.eq.s32.totalorder %s49, 1
      %p240 = por %p238, %p239
      %p241 = scmp.ne.s32.totalorder %s232, %s233
      %p242 = scmp.eq.s32.totalorder %s49, 0
      %p243 = por %p241, %p242
      %p244 = scmp.ne.s32.totalorder %s232, %s233
      %p245 = scmp.eq.s32.totalorder %s50, 1
      %p246 = por %p244, %p245
      %p248 = scmp.ne.s32.totalorder %s233, %s247
      %p249 = scmp.eq.s32.totalorder %s50, 0
      %p250 = por %p248, %p249
      %s252 = sadd.s32 %s251, 1
      %p255 = scmp.eq.s32.totalorder %s44, 1
      %p256 = scmp.ne.s32.totalorder %s251, %s253
      %p257 = scmp.eq.s32.totalorder %s44, 0
      %p258 = por %p256, %p257
      %p259 = scmp.ne.s32.totalorder %s251, %s253
      %p260 = scmp.eq.s32.totalorder %s49, 1
      %p261 = por %p259, %p260
      %p262 = scmp.ne.s32.totalorder %s253, %s254
      %p263 = scmp.eq.s32.totalorder %s49, 0
      %p264 = por %p262, %p263
      %p265 = scmp.ne.s32.totalorder %s253, %s254
      %p266 = scmp.eq.s32.totalorder %s50, 1
      %p267 = por %p265, %p266
      %p269 = scmp.ne.s32.totalorder %s254, %s268
      %p270 = scmp.eq.s32.totalorder %s50, 0
      %p271 = por %p269, %p270
      %s273 = sadd.s32 %s272, 1
      %p276 = scmp.eq.s32.totalorder %s44, 1
      %p277 = scmp.ne.s32.totalorder %s272, %s274
      %p278 = scmp.eq.s32.totalorder %s44, 0
      %p279 = por %p277, %p278
      %p280 = scmp.ne.s32.totalorder %s272, %s274
      %p281 = scmp.eq.s32.totalorder %s49, 1
      %p282 = por %p280, %p281
      %p283 = scmp.ne.s32.totalorder %s274, %s275
      %p284 = scmp.eq.s32.totalorder %s49, 0
      %p285 = por %p283, %p284
      %p286 = scmp.ne.s32.totalorder %s274, %s275
      %p287 = scmp.eq.s32.totalorder %s50, 1
      %p288 = por %p286, %p287
      %p290 = scmp.ne.s32.totalorder %s275, %s289
      %p291 = scmp.eq.s32.totalorder %s50, 0
      %p292 = por %p290, %p291
      %s294 = sadd.s32 %s293, 1
      %p297 = scmp.eq.s32.totalorder %s44, 1
      %p298 = scmp.ne.s32.totalorder %s293, %s295
      %p299 = scmp.eq.s32.totalorder %s44, 0
      %p300 = por %p298, %p299
      %p301 = scmp.ne.s32.totalorder %s293, %s295
      %p302 = scmp.eq.s32.totalorder %s49, 1
      %p303 = por %p301, %p302
      %p304 = scmp.ne.s32.totalorder %s295, %s296
      %p305 = scmp.eq.s32.totalorder %s49, 0
      %p306 = por %p304, %p305
      %p307 = scmp.ne.s32.totalorder %s295, %s296
      %p308 = scmp.eq.s32.totalorder %s50, 1
      %p309 = por %p307, %p308
      %p311 = scmp.ne.s32.totalorder %s296, %s310
      %p312 = scmp.eq.s32.totalorder %s50, 0
      %p313 = por %p311, %p312
      %s315 = sadd.s32 %s314, 1
      %p318 = scmp.eq.s32.totalorder %s44, 1
      %p319 = scmp.ne.s32.totalorder %s314, %s316
      %p320 = scmp.eq.s32.totalorder %s44, 0
      %p321 = por %p319, %p320
      %p322 = scmp.ne.s32.totalorder %s314, %s316
      %p323 = scmp.eq.s32.totalorder %s49, 1
      %p324 = por %p322, %p323
      %p325 = scmp.ne.s32.totalorder %s316, %s317
      %p326 = scmp.eq.s32.totalorder %s49, 0
      %p327 = por %p325, %p326
      %p328 = scmp.ne.s32.totalorder %s316, %s317
      %p329 = scmp.eq.s32.totalorder %s50, 1
      %p330 = por %p328, %p329
      %p332 = scmp.ne.s32.totalorder %s317, %s331
      %p333 = scmp.eq.s32.totalorder %s50, 0
      %p334 = por %p332, %p333
      %s336 = sadd.s32 %s335, 1
      %p339 = scmp.eq.s32.totalorder %s44, 1
      %p340 = scmp.ne.s32.totalorder %s335, %s337
      %p341 = scmp.eq.s32.totalorder %s44, 0
      %p342 = por %p340, %p341
      %p343 = scmp.ne.s32.totalorder %s335, %s337
      %p344 = scmp.eq.s32.totalorder %s49, 1
      %p345 = por %p343, %p344
      %p346 = scmp.ne.s32.totalorder %s337, %s338
      %p347 = scmp.eq.s32.totalorder %s49, 0
      %p348 = por %p346, %p347
      %p349 = scmp.ne.s32.totalorder %s337, %s338
      %p350 = scmp.eq.s32.totalorder %s50, 1
      %p351 = por %p349, %p350
      %p353 = scmp.ne.s32.totalorder %s338, %s352
      %p354 = scmp.eq.s32.totalorder %s50, 0
      %p355 = por %p353, %p354
      %s357 = sadd.s32 %s356, 1
      %p360 = scmp.eq.s32.totalorder %s44, 1
      %p361 = scmp.ne.s32.totalorder %s356, %s358
      %p362 = scmp.eq.s32.totalorder %s44, 0
      %p363 = por %p361, %p362
      %p364 = scmp.ne.s32.totalorder %s356, %s358
      %p365 = scmp.eq.s32.totalorder %s49, 1
      %p366 = por %p364, %p365
      %p367 = scmp.ne.s32.totalorder %s358, %s359
      %p368 = scmp.eq.s32.totalorder %s49, 0
      %p369 = por %p367, %p368
      %p370 = scmp.ne.s32.totalorder %s358, %s359
      %p371 = scmp.eq.s32.totalorder %s50, 1
      %p372 = por %p370, %p371
      %p374 = scmp.ne.s32.totalorder %s359, %s373
      %p375 = scmp.eq.s32.totalorder %s50, 0
      %p376 = por %p374, %p375
      %s378 = sadd.s32 %s377, 1
      %p381 = scmp.eq.s32.totalorder %s44, 1
      %p382 = scmp.ne.s32.totalorder %s377, %s379
      %p383 = scmp.eq.s32.totalorder %s44, 0
      %p384 = por %p382, %p383
      %p385 = scmp.ne.s32.totalorder %s377, %s379
      %p386 = scmp.eq.s32.totalorder %s49, 1
      %p387 = por %p385, %p386
      %p388 = scmp.ne.s32.totalorder %s379, %s380
      %p389 = scmp.eq.s32.totalorder %s49, 0
      %p390 = por %p388, %p389
      %p391 = scmp.ne.s32.totalorder %s379, %s380
      %p392 = scmp.eq.s32.totalorder %s50, 1
      %p393 = por %p391, %p392
      %p395 = scmp.ne.s32.totalorder %s380, %s394
      %p396 = scmp.eq.s32.totalorder %s50, 0
      %p397 = por %p395, %p396
      %s399 = sadd.s32 %s398, 1
      %p402 = scmp.eq.s32.totalorder %s44, 1
      %p403 = scmp.ne.s32.totalorder %s398, %s400
      %p404 = scmp.eq.s32.totalorder %s44, 0
      %p405 = por %p403, %p404
      %p406 = scmp.ne.s32.totalorder %s398, %s400
      %p407 = scmp.eq.s32.totalorder %s49, 1
      %p408 = por %p406, %p407
      %p409 = scmp.ne.s32.totalorder %s400, %s401
      %p410 = scmp.eq.s32.totalorder %s49, 0
      %p411 = por %p409, %p410
      %p412 = scmp.ne.s32.totalorder %s400, %s401
      %p413 = scmp.eq.s32.totalorder %s50, 1
      %p414 = por %p412, %p413
      %p416 = scmp.ne.s32.totalorder %s401, %s415
      %p417 = scmp.eq.s32.totalorder %s50, 0
      %p418 = por %p416, %p417
      %s420 = sadd.s32 %s419, 1
      %p423 = scmp.eq.s32.totalorder %s44, 1
      %p424 = scmp.ne.s32.totalorder %s419, %s421
      %p425 = scmp.eq.s32.totalorder %s44, 0
      %p426 = por %p424, %p425
      %p427 = scmp.ne.s32.totalorder %s419, %s421
      %p428 = scmp.eq.s32.totalorder %s49, 1
      %p429 = por %p427, %p428
      %p430 = scmp.ne.s32.totalorder %s421, %s422
      %p431 = scmp.eq.s32.totalorder %s49, 0
      %p432 = por %p430, %p431
      %p433 = scmp.ne.s32.totalorder %s421, %s422
      %p434 = scmp.eq.s32.totalorder %s50, 1
      %p435 = por %p433, %p434
      %p437 = scmp.ne.s32.totalorder %s422, %s436
      %p438 = scmp.eq.s32.totalorder %s50, 0
      %p439 = por %p437, %p438
      %s441 = sadd.s32 %s440, 1
      %p444 = scmp.eq.s32.totalorder %s44, 1
      %p445 = scmp.ne.s32.totalorder %s440, %s442
      %p446 = scmp.eq.s32.totalorder %s44, 0
      %p447 = por %p445, %p446
      %p448 = scmp.ne.s32.totalorder %s440, %s442
      %p449 = scmp.eq.s32.totalorder %s49, 1
      %p450 = por %p448, %p449
      %p451 = scmp.ne.s32.totalorder %s442, %s443
      %p452 = scmp.eq.s32.totalorder %s49, 0
      %p453 = por %p451, %p452
      %p454 = scmp.ne.s32.totalorder %s442, %s443
      %p455 = scmp.eq.s32.totalorder %s50, 1
      %p456 = por %p454, %p455
      %p458 = scmp.ne.s32.totalorder %s443, %s457
      %p459 = scmp.eq.s32.totalorder %s50, 0
      %p460 = por %p458, %p459
      %s462 = sadd.s32 %s461, 1
      %p465 = scmp.eq.s32.totalorder %s44, 1
      %p466 = scmp.ne.s32.totalorder %s461, %s463
      %p467 = scmp.eq.s32.totalorder %s44, 0
      %p468 = por %p466, %p467
      %p469 = scmp.ne.s32.totalorder %s461, %s463
      %p470 = scmp.eq.s32.totalorder %s49, 1
      %p471 = por %p469, %p470
      %p472 = scmp.ne.s32.totalorder %s463, %s464
      %p473 = scmp.eq.s32.totalorder %s49, 0
      %p474 = por %p472, %p473
      %p475 = scmp.ne.s32.totalorder %s463, %s464
      %p476 = scmp.eq.s32.totalorder %s50, 1
      %p477 = por %p475, %p476
      %p479 = scmp.ne.s32.totalorder %s464, %s478
      %p480 = scmp.eq.s32.totalorder %s50, 0
      %p481 = por %p479, %p480
      %s483 = sadd.s32 %s482, 1
      %p486 = scmp.eq.s32.totalorder %s44, 1
      %p487 = scmp.ne.s32.totalorder %s482, %s484
      %p488 = scmp.eq.s32.totalorder %s44, 0
      %p489 = por %p487, %p488
      %p490 = scmp.ne.s32.totalorder %s482, %s484
      %p491 = scmp.eq.s32.totalorder %s49, 1
      %p492 = por %p490, %p491
      %p493 = scmp.ne.s32.totalorder %s484, %s485
      %p494 = scmp.eq.s32.totalorder %s49, 0
      %p495 = por %p493, %p494
      %p496 = scmp.ne.s32.totalorder %s484, %s485
      %p497 = scmp.eq.s32.totalorder %s50, 1
      %p498 = por %p496, %p497
      %p500 = scmp.ne.s32.totalorder %s485, %s499
      %p501 = scmp.eq.s32.totalorder %s50, 0
      %p502 = por %p500, %p501
      %s504 = sadd.s32 %s503, 1
      %p507 = scmp.eq.s32.totalorder %s44, 1
      %p508 = scmp.ne.s32.totalorder %s503, %s505
      %p509 = scmp.eq.s32.totalorder %s44, 0
      %p510 = por %p508, %p509
      %p511 = scmp.ne.s32.totalorder %s503, %s505
      %p512 = scmp.eq.s32.totalorder %s49, 1
      %p513 = por %p511, %p512
      %p514 = scmp.ne.s32.totalorder %s505, %s506
      %p515 = scmp.eq.s32.totalorder %s49, 0
      %p516 = por %p514, %p515
      %p517 = scmp.ne.s32.totalorder %s505, %s506
      %p518 = scmp.eq.s32.totalorder %s50, 1
      %p519 = por %p517, %p518
      %p521 = scmp.ne.s32.totalorder %s506, %s520
      %p522 = scmp.eq.s32.totalorder %s50, 0
      %p523 = por %p521, %p522
      %s525 = sadd.s32 %s524, 1
      %p528 = scmp.eq.s32.totalorder %s44, 1
      %p529 = scmp.ne.s32.totalorder %s524, %s526
      %p530 = scmp.eq.s32.totalorder %s44, 0
      %p531 = por %p529, %p530
      %p532 = scmp.ne.s32.totalorder %s524, %s526
      %p533 = scmp.eq.s32.totalorder %s49, 1
      %p534 = por %p532, %p533
      %p535 = scmp.ne.s32.totalorder %s526, %s527
      %p536 = scmp.eq.s32.totalorder %s49, 0
      %p537 = por %p535, %p536
      %p538 = scmp.ne.s32.totalorder %s526, %s527
      %p539 = scmp.eq.s32.totalorder %s50, 1
      %p540 = por %p538, %p539
      %p542 = scmp.ne.s32.totalorder %s527, %s541
      %p543 = scmp.eq.s32.totalorder %s50, 0
      %p544 = por %p542, %p543
      %s546 = sadd.s32 %s545, 1
      %p549 = scmp.eq.s32.totalorder %s44, 1
      %p550 = scmp.ne.s32.totalorder %s545, %s547
      %p551 = scmp.eq.s32.totalorder %s44, 0
      %p552 = por %p550, %p551
      %p553 = scmp.ne.s32.totalorder %s545, %s547
      %p554 = scmp.eq.s32.totalorder %s49, 1
      %p555 = por %p553, %p554
      %p556 = scmp.ne.s32.totalorder %s547, %s548
      %p557 = scmp.eq.s32.totalorder %s49, 0
      %p558 = por %p556, %p557
      %p559 = scmp.ne.s32.totalorder %s547, %s548
      %p560 = scmp.eq.s32.totalorder %s50, 1
      %p561 = por %p559, %p560
      %p563 = scmp.ne.s32.totalorder %s548, %s562
      %p564 = scmp.eq.s32.totalorder %s50, 0
      %p565 = por %p563, %p564
      %s567 = sadd.s32 %s566, 1
      %p570 = scmp.eq.s32.totalorder %s44, 1
      %p571 = scmp.ne.s32.totalorder %s566, %s568
      %p572 = scmp.eq.s32.totalorder %s44, 0
      %p573 = por %p571, %p572
      %p574 = scmp.ne.s32.totalorder %s566, %s568
      %p575 = scmp.eq.s32.totalorder %s49, 1
      %p576 = por %p574, %p575
      %p577 = scmp.ne.s32.totalorder %s568, %s569
      %p578 = scmp.eq.s32.totalorder %s49, 0
      %p579 = por %p577, %p578
      %p580 = scmp.ne.s32.totalorder %s568, %s569
      %p581 = scmp.eq.s32.totalorder %s50, 1
      %p582 = por %p580, %p581
      %p584 = scmp.ne.s32.totalorder %s569, %s583
      %p585 = scmp.eq.s32.totalorder %s50, 0
      %p586 = por %p584, %p585
      %s587 = ssub.s32 %s44, %s51
      %p588 = scmp.eq.s32.totalorder %s587, 0
      %s590 = sadd.s32 %s589, 1
      %s591 = scalar_select %p588, %s589, %s590
      %p594 = pneg %p588
      %p595 = scmp.eq.s32.totalorder %s44, 1
      %p596 = por %p594, %p595
      %p597 = scmp.ne.s32.totalorder %s589, %s592
      %p598 = scmp.eq.s32.totalorder %s44, 0
      %p599 = por %p597, %p598
      %p600 = scmp.ne.s32.totalorder %s589, %s592
      %p601 = scmp.eq.s32.totalorder %s49, 1
      %p602 = por %p600, %p601
      %p603 = scmp.ne.s32.totalorder %s592, %s593
      %p604 = scmp.eq.s32.totalorder %s49, 0
      %p605 = por %p603, %p604
      %p606 = scmp.ne.s32.totalorder %s592, %s593
      %p607 = scmp.eq.s32.totalorder %s50, 1
      %p608 = por %p606, %p607
      %p610 = scmp.ne.s32.totalorder %s593, %s609
      %p611 = scmp.eq.s32.totalorder %s50, 0
      %p612 = por %p610, %p611
      %p613 = scmp.le.s32.totalorder 1, %s44
      %p614 = scmp.lt.s32.totalorder %s44, 3
      %p615 = pnand %p613, %p614
      %p616 = pneg %p615
      // Predicated region
      $region9: #{tpu_custom_call.1} parent=5 // pred_check
        _
      $region10: #{tpu_custom_call.1} parent=5 // pred_check_branch
        %618 = sbr.rel (%p615) target = $region12
      $region11: #{tpu_custom_call.1} parent=5 // pred_region
        %s619 = ssub.s32 %s44, 1
        // Predicated region
        $region13: #{tpu_custom_call.1} parent=11 // pred_check
          %p620 = pneg %p117
        $region14: #{tpu_custom_call.1} parent=11 // pred_check_branch
          %622 = sbr.rel (%p620) target = $region16
        $region15: #{tpu_custom_call.1} parent=11 // pred_region
          %s624 = ssub.s32 2048, 2048
          %625 = vsyncadd [#allocation6], %s624
          %s626 = sshll.u32 [#allocation7], 4
          %s627 = int_to_ptr.vmem [resolvable:$true] %s626
          %632 = dma.hbm_to_vmem [thread:$0]  %s2, 2048, %s627, [#allocation6], 128, 128, 8
        $region16: #{tpu_custom_call.1} parent=11 // pred_fallthru
          _
        // Predicated region
        $region17: #{tpu_custom_call.1} parent=11 // pred_check
          %p633 = pneg %p138
        $region18: #{tpu_custom_call.1} parent=11 // pred_check_branch
          %635 = sbr.rel (%p633) target = $region20
        $region19: #{tpu_custom_call.1} parent=11 // pred_region
          _
        $region20: #{tpu_custom_call.1} parent=11 // pred_fallthru
          _
        // Predicated region
        $region21: #{tpu_custom_call.1} parent=11 // pred_check
          %p636 = pneg %p159
        $region22: #{tpu_custom_call.1} parent=11 // pred_check_branch
          %638 = sbr.rel (%p636) target = $region24
        $region23: #{tpu_custom_call.1} parent=11 // pred_region
          _
        $region24: #{tpu_custom_call.1} parent=11 // pred_fallthru
          _
        // Predicated region
        $region25: #{tpu_custom_call.1} parent=11 // pred_check
          %p639 = pneg %p180
        $region26: #{tpu_custom_call.1} parent=11 // pred_check_branch
          %641 = sbr.rel (%p639) target = $region28
        $region27: #{tpu_custom_call.1} parent=11 // pred_region
          %s643 = ssub.s32 2048, 2048
          %644 = vsyncadd [#allocation9], %s643
          %s645 = sshll.u32 [#allocation8], 4
          %s646 = int_to_ptr.vmem [resolvable:$true] %s645
          %651 = dma.hbm_to_vmem [thread:$0]  %s5, 2048, %s646, [#allocation9], 128, 128, 8
        $region28: #{tpu_custom_call.1} parent=11 // pred_fallthru
          _
        // Predicated region
        $region29: #{tpu_custom_call.1} parent=11 // pred_check
          %p652 = pneg %p201
        $region30: #{tpu_custom_call.1} parent=11 // pred_check_branch
          %654 = sbr.rel (%p652) target = $region32
        $region31: #{tpu_custom_call.1} parent=11 // pred_region
          _
        $region32: #{tpu_custom_call.1} parent=11 // pred_fallthru
          _
        // Predicated region
        $region33: #{tpu_custom_call.1} parent=11 // pred_check
          %p655 = pneg %p222
        $region34: #{tpu_custom_call.1} parent=11 // pred_check_branch
          %657 = sbr.rel (%p655) target = $region36
        $region35: #{tpu_custom_call.1} parent=11 // pred_region
          %s659 = ssub.s32 4096, 4096
          %660 = vsyncadd [#allocation9], %s659
          %s661 = sshll.u32 [#allocation10], 4
          %s662 = int_to_ptr.vmem [resolvable:$true] %s661
          %667 = dma.hbm_to_vmem [thread:$0]  %s7, 4096, %s662, [#allocation9], 128, 128, 8
        $region36: #{tpu_custom_call.1} parent=11 // pred_fallthru
          _
        // Predicated region
        $region37: #{tpu_custom_call.1} parent=11 // pred_check
          %p668 = pneg %p243
        $region38: #{tpu_custom_call.1} parent=11 // pred_check_branch
          %670 = sbr.rel (%p668) target = $region40
        $region39: #{tpu_custom_call.1} parent=11 // pred_region
          _
        $region40: #{tpu_custom_call.1} parent=11 // pred_fallthru
          _
        // Predicated region
        $region41: #{tpu_custom_call.1} parent=11 // pred_check
          %p671 = pneg %p264
        $region42: #{tpu_custom_call.1} parent=11 // pred_check_branch
          %673 = sbr.rel (%p671) target = $region44
        $region43: #{tpu_custom_call.1} parent=11 // pred_region
          _
        $region44: #{tpu_custom_call.1} parent=11 // pred_fallthru
          _
        // Predicated region
        $region45: #{tpu_custom_call.1} parent=11 // pred_check
          %p674 = pneg %p285
        $region46: #{tpu_custom_call.1} parent=11 // pred_check_branch
          %676 = sbr.rel (%p674) target = $region48
        $region47: #{tpu_custom_call.1} parent=11 // pred_region
          _
        $region48: #{tpu_custom_call.1} parent=11 // pred_fallthru
          _
        // Predicated region
        $region49: #{tpu_custom_call.1} parent=11 // pred_check
          %p677 = pneg %p306
        $region50: #{tpu_custom_call.1} parent=11 // pred_check_branch
          %679 = sbr.rel (%p677) target = $region52
        $region51: #{tpu_custom_call.1} parent=11 // pred_region
          %s681 = ssub.s32 2048, 2048
          %682 = vsyncadd [#allocation12], %s681
          %s683 = sshll.u32 [#allocation11], 4
          %s684 = int_to_ptr.vmem [resolvable:$true] %s683
          %689 = dma.hbm_to_vmem [thread:$0]  %s11, 2048, %s684, [#allocation12], 128, 128, 8
        $region52: #{tpu_custom_call.1} parent=11 // pred_fallthru
          _
        // Predicated region
        $region53: #{tpu_custom_call.1} parent=11 // pred_check
          %p690 = pneg %p327
        $region54: #{tpu_custom_call.1} parent=11 // pred_check_branch
          %692 = sbr.rel (%p690) target = $region56
        $region55: #{tpu_custom_call.1} parent=11 // pred_region
          _
        $region56: #{tpu_custom_call.1} parent=11 // pred_fallthru
          _
        // Predicated region
        $region57: #{tpu_custom_call.1} parent=11 // pred_check
          %p693 = pneg %p348
        $region58: #{tpu_custom_call.1} parent=11 // pred_check_branch
          %695 = sbr.rel (%p693) target = $region60
        $region59: #{tpu_custom_call.1} parent=11 // pred_region
          %s697 = ssub.s32 4096, 4096
          %698 = vsyncadd [#allocation12], %s697
          %s699 = sshll.u32 [#allocation13], 4
          %s700 = int_to_ptr.vmem [resolvable:$true] %s699
          %705 = dma.hbm_to_vmem [thread:$0]  %s13, 4096, %s700, [#allocation12], 128, 128, 8
        $region60: #{tpu_custom_call.1} parent=11 // pred_fallthru
          _
        // Predicated region
        $region61: #{tpu_custom_call.1} parent=11 // pred_check
          %p706 = pneg %p369
        $region62: #{tpu_custom_call.1} parent=11 // pred_check_branch
          %708 = sbr.rel (%p706) target = $region64
        $region63: #{tpu_custom_call.1} parent=11 // pred_region
          _
        $region64: #{tpu_custom_call.1} parent=11 // pred_fallthru
          _
        // Predicated region
        $region65: #{tpu_custom_call.1} parent=11 // pred_check
          %p709 = pneg %p390
        $region66: #{tpu_custom_call.1} parent=11 // pred_check_branch
          %711 = sbr.rel (%p709) target = $region68
        $region67: #{tpu_custom_call.1} parent=11 // pred_region
          _
        $region68: #{tpu_custom_call.1} parent=11 // pred_fallthru
          _
        // Predicated region
        $region69: #{tpu_custom_call.1} parent=11 // pred_check
          %p712 = pneg %p411
        $region70: #{tpu_custom_call.1} parent=11 // pred_check_branch
          %714 = sbr.rel (%p712) target = $region72
        $region71: #{tpu_custom_call.1} parent=11 // pred_region
          _
        $region72: #{tpu_custom_call.1} parent=11 // pred_fallthru
          _
        // Predicated region
        $region73: #{tpu_custom_call.1} parent=11 // pred_check
          %p715 = pneg %p432
        $region74: #{tpu_custom_call.1} parent=11 // pred_check_branch
          %717 = sbr.rel (%p715) target = $region76
        $region75: #{tpu_custom_call.1} parent=11 // pred_region
          %s719 = ssub.s32 4096, 4096
          %720 = vsyncadd [#allocation15], %s719
          %s721 = sshll.u32 [#allocation14], 4
          %s722 = int_to_ptr.vmem [resolvable:$true] %s721
          %727 = dma.hbm_to_vmem [thread:$0]  %s17, 4096, %s722, [#allocation15], 128, 128, 8
        $region76: #{tpu_custom_call.1} parent=11 // pred_fallthru
          _
        // Predicated region
        $region77: #{tpu_custom_call.1} parent=11 // pred_check
          %p728 = pneg %p453
        $region78: #{tpu_custom_call.1} parent=11 // pred_check_branch
          %730 = sbr.rel (%p728) target = $region80
        $region79: #{tpu_custom_call.1} parent=11 // pred_region
          _
        $region80: #{tpu_custom_call.1} parent=11 // pred_fallthru
          _
        // Predicated region
        $region81: #{tpu_custom_call.1} parent=11 // pred_check
          %p731 = pneg %p474
        $region82: #{tpu_custom_call.1} parent=11 // pred_check_branch
          %733 = sbr.rel (%p731) target = $region84
        $region83: #{tpu_custom_call.1} parent=11 // pred_region
          %s735 = ssub.s32 4096, 4096
          %736 = vsyncadd [#allocation15], %s735
          %s737 = sshll.u32 [#allocation16], 4
          %s738 = int_to_ptr.vmem [resolvable:$true] %s737
          %743 = dma.hbm_to_vmem [thread:$0]  %s19, 4096, %s738, [#allocation15], 128, 128, 8
        $region84: #{tpu_custom_call.1} parent=11 // pred_fallthru
          _
        // Predicated region
        $region85: #{tpu_custom_call.1} parent=11 // pred_check
          %p744 = pneg %p495
        $region86: #{tpu_custom_call.1} parent=11 // pred_check_branch
          %746 = sbr.rel (%p744) target = $region88
        $region87: #{tpu_custom_call.1} parent=11 // pred_region
          _
        $region88: #{tpu_custom_call.1} parent=11 // pred_fallthru
          _
        // Predicated region
        $region89: #{tpu_custom_call.1} parent=11 // pred_check
          %p747 = pneg %p516
        $region90: #{tpu_custom_call.1} parent=11 // pred_check_branch
          %749 = sbr.rel (%p747) target = $region92
        $region91: #{tpu_custom_call.1} parent=11 // pred_region
          %s751 = ssub.s32 4096, 4096
          %752 = vsyncadd [#allocation18], %s751
          %s753 = sshll.u32 [#allocation17], 4
          %s754 = int_to_ptr.vmem [resolvable:$true] %s753
          %759 = dma.hbm_to_vmem [thread:$0]  %s21, 4096, %s754, [#allocation18], 128, 128, 8
        $region92: #{tpu_custom_call.1} parent=11 // pred_fallthru
          _
        // Predicated region
        $region93: #{tpu_custom_call.1} parent=11 // pred_check
          %p760 = pneg %p537
        $region94: #{tpu_custom_call.1} parent=11 // pred_check_branch
          %762 = sbr.rel (%p760) target = $region96
        $region95: #{tpu_custom_call.1} parent=11 // pred_region
          _
        $region96: #{tpu_custom_call.1} parent=11 // pred_fallthru
          _
        // Predicated region
        $region97: #{tpu_custom_call.1} parent=11 // pred_check
          %p763 = pneg %p558
        $region98: #{tpu_custom_call.1} parent=11 // pred_check_branch
          %765 = sbr.rel (%p763) target = $region100
        $region99: #{tpu_custom_call.1} parent=11 // pred_region
          %s767 = ssub.s32 4096, 4096
          %768 = vsyncadd [#allocation18], %s767
          %s769 = sshll.u32 [#allocation19], 4
          %s770 = int_to_ptr.vmem [resolvable:$true] %s769
          %775 = dma.hbm_to_vmem [thread:$0]  %s23, 4096, %s770, [#allocation18], 128, 128, 8
        $region100: #{tpu_custom_call.1} parent=11 // pred_fallthru
          _
        // Predicated region
        $region101: #{tpu_custom_call.1} parent=11 // pred_check
          %p776 = pneg %p579
        $region102: #{tpu_custom_call.1} parent=11 // pred_check_branch
          %778 = sbr.rel (%p776) target = $region104
        $region103: #{tpu_custom_call.1} parent=11 // pred_region
          _
        $region104: #{tpu_custom_call.1} parent=11 // pred_fallthru
          _
      $region12: #{tpu_custom_call.1} parent=5 // pred_fallthru
        _
      %p779 = scmp.lt.s32.totalorder %s44, 2
      // Predicated region
      $region105: #{tpu_custom_call.1} parent=5 // pred_check
        %p780 = pneg %p779
      $region106: #{tpu_custom_call.1} parent=5 // pred_check_branch
        %782 = sbr.rel (%p780) target = $region108
      $region107: #{tpu_custom_call.1} parent=5 // pred_region
        // Predicated region
        $region109: #{tpu_custom_call.1} parent=107 // pred_check
          %p783 = pneg %p64
        $region110: #{tpu_custom_call.1} parent=107 // pred_check_branch
          %785 = sbr.rel (%p783) target = $region112
        $region111: #{tpu_custom_call.1} parent=107 // pred_region
          %s786 = sand.u32 %s54, 1
          %s787 = scalar_lea.sflag [#allocation3], %s786
          %s788 = sand.u32 %s54, 1
          %s789 = smul.addr %s788, 8
          %s790 = scalar_lea.vmem [#allocation2], %s789
          %s791 = smul.u32 2, %s44
          %s793 = ssub.s32 128, 128
          %794 = vsyncadd %s787, %s793
          %s795 = smul.addr %s791, 64
          %s796 = scalar_lea.hbm %s0, %s795
          %s797 = sshll.u32 %s790, 4
          %s798 = int_to_ptr.vmem [resolvable:$true] %s797
          %803 = dma.hbm_to_vmem [thread:$0]  %s796, 128, %s798, %s787, 64, 64, 4
        $region112: #{tpu_custom_call.1} parent=107 // pred_fallthru
          _
        // Predicated region
        $region113: #{tpu_custom_call.1} parent=107 // pred_check
          %p804 = pneg %p90
        $region114: #{tpu_custom_call.1} parent=107 // pred_check_branch
          %806 = sbr.rel (%p804) target = $region116
        $region115: #{tpu_custom_call.1} parent=107 // pred_region
          #allocation22 [shape = 'u32[6]{0}', space=smem, size = 0x18, scoped, tag = 'DMA stride descriptor']
          %s807 = sand.u32 %s44, 1
          %s808 = scalar_lea.sflag [#allocation6], %s807
          %s809 = sand.u32 %s80, 1
          %s810 = smul.addr %s809, 32
          %s811 = scalar_lea.vmem [#allocation5], %s810
          %s812 = smul.u32 2, %s44
          %s814 = ssub.s32 512, 512
          %815 = vsyncadd %s808, %s814
          %s816 = smul.addr %s812, 64
          %s817 = scalar_lea.hbm %s1, %s816
          %s819 = sshll.u32 1, 14
          %s820 = sxor.u32 4294967295, %s819
          %s822 = sld [smem:[#allocation0]]
          %s823 = sadd.s32 2, %s822
          %s825 = sshll.u32 7, 26
          %s826 = sxor.u32 4294967295, %s825
          %s827 = sand.u32 0, %s826
          %s828 = sshll.u32 %s823, 26
          %s829 = sor.u32 %s827, %s828
          %s830 = sshll.u32 %s811, 4
          %s831 = int_to_ptr.vmem [resolvable:$true] %s830
          %837 = sst [smem:[#allocation22]] 256
          %s838 = scalar_lea.smem [#allocation22], 1
          %839 = sst [smem:[%s838]] 128
          %s840 = scalar_lea.smem [#allocation22], 2
          %841 = sst [smem:[%s840]] 2
          %s842 = scalar_lea.smem [#allocation22], 3
          %843 = sst [smem:[%s842]] 64
          %s844 = scalar_lea.smem [#allocation22], 4
          %845 = sst [smem:[%s844]] 64
          %s846 = scalar_lea.smem [#allocation22], 5
          %847 = sst [smem:[%s846]] 4
          %849 = dma.general %s817, 512, %s831, %s808, 131072, [#allocation22], %s829, 0
        $region116: #{tpu_custom_call.1} parent=107 // pred_fallthru
          _
      $region108: #{tpu_custom_call.1} parent=5 // pred_fallthru
        _
      %p850 = scmp.le.s32.totalorder 1, %s44
      %p851 = scmp.lt.s32.totalorder %s44, 3
      %p852 = pnand %p850, %p851
      %p853 = pneg %p852
      // Predicated region
      $region117: #{tpu_custom_call.1} parent=5 // pred_check
        _
      $region118: #{tpu_custom_call.1} parent=5 // pred_check_branch
        %855 = sbr.rel (%p852) target = $region120
      $region119: #{tpu_custom_call.1} parent=5 // pred_region
        %s856 = ssub.s32 %s44, 1
        %s857 = sand.u32 %s57, 1
        %s858 = scalar_lea.sflag [#allocation3], %s857
        %s859 = sand.u32 %s57, 1
        %s860 = smul.addr %s859, 8
        %s861 = scalar_lea.vmem [#allocation2], %s860
        // Predicated region
        $region121: #{tpu_custom_call.1} parent=119 // pred_check
          %p862 = pneg %p70
        $region122: #{tpu_custom_call.1} parent=119 // pred_check_branch
          %864 = sbr.rel (%p862) target = $region124
        $region123: #{tpu_custom_call.1} parent=119 // pred_region
          %865 = dma.done %s858, 128
        $region124: #{tpu_custom_call.1} parent=119 // pred_fallthru
          _
        %s866 = sand.u32 %s49, 1
        %s867 = scalar_lea.sflag [#allocation6], %s866
        %s868 = sand.u32 %s83, 1
        %s869 = smul.addr %s868, 32
        %s870 = scalar_lea.vmem [#allocation5], %s869
        // Predicated region
        $region125: #{tpu_custom_call.1} parent=119 // pred_check
          %p871 = pneg %p96
        $region126: #{tpu_custom_call.1} parent=119 // pred_check_branch
          %873 = sbr.rel (%p871) target = $region128
        $region127: #{tpu_custom_call.1} parent=119 // pred_region
          %874 = dma.done %s867, 512
        $region128: #{tpu_custom_call.1} parent=119 // pred_fallthru
          _
        // Predicated region
        $region129: #{tpu_custom_call.1} parent=119 // pred_check
          %p875 = pneg %p117
        $region130: #{tpu_custom_call.1} parent=119 // pred_check_branch
          %877 = sbr.rel (%p875) target = $region132
        $region131: #{tpu_custom_call.1} parent=119 // pred_region
          %878 = dma.done [#allocation6], 2048
        $region132: #{tpu_custom_call.1} parent=119 // pred_fallthru
          _
        // Predicated region
        $region133: #{tpu_custom_call.1} parent=119 // pred_check
          %p879 = pneg %p180
        $region134: #{tpu_custom_call.1} parent=119 // pred_check_branch
          %881 = sbr.rel (%p879) target = $region136
        $region135: #{tpu_custom_call.1} parent=119 // pred_region
          %882 = dma.done [#allocation9], 2048
        $region136: #{tpu_custom_call.1} parent=119 // pred_fallthru
          _
        // Predicated region
        $region137: #{tpu_custom_call.1} parent=119 // pred_check
          %p883 = pneg %p222
        $region138: #{tpu_custom_call.1} parent=119 // pred_check_branch
          %885 = sbr.rel (%p883) target = $region140
        $region139: #{tpu_custom_call.1} parent=119 // pred_region
          %886 = dma.done [#allocation9], 4096
        $region140: #{tpu_custom_call.1} parent=119 // pred_fallthru
          _
        // Predicated region
        $region141: #{tpu_custom_call.1} parent=119 // pred_check
          %p887 = pneg %p306
        $region142: #{tpu_custom_call.1} parent=119 // pred_check_branch
          %889 = sbr.rel (%p887) target = $region144
        $region143: #{tpu_custom_call.1} parent=119 // pred_region
          %890 = dma.done [#allocation12], 2048
        $region144: #{tpu_custom_call.1} parent=119 // pred_fallthru
          _
        // Predicated region
        $region145: #{tpu_custom_call.1} parent=119 // pred_check
          %p891 = pneg %p348
        $region146: #{tpu_custom_call.1} parent=119 // pred_check_branch
          %893 = sbr.rel (%p891) target = $region148
        $region147: #{tpu_custom_call.1} parent=119 // pred_region
          %894 = dma.done [#allocation12], 4096
        $region148: #{tpu_custom_call.1} parent=119 // pred_fallthru
          _
        // Predicated region
        $region149: #{tpu_custom_call.1} parent=119 // pred_check
          %p895 = pneg %p432
        $region150: #{tpu_custom_call.1} parent=119 // pred_check_branch
          %897 = sbr.rel (%p895) target = $region152
        $region151: #{tpu_custom_call.1} parent=119 // pred_region
          %898 = dma.done [#allocation15], 4096
        $region152: #{tpu_custom_call.1} parent=119 // pred_fallthru
          _
        // Predicated region
        $region153: #{tpu_custom_call.1} parent=119 // pred_check
          %p899 = pneg %p474
        $region154: #{tpu_custom_call.1} parent=119 // pred_check_branch
          %901 = sbr.rel (%p899) target = $region156
        $region155: #{tpu_custom_call.1} parent=119 // pred_region
          %902 = dma.done [#allocation15], 4096
        $region156: #{tpu_custom_call.1} parent=119 // pred_fallthru
          _
        // Predicated region
        $region157: #{tpu_custom_call.1} parent=119 // pred_check
          %p903 = pneg %p516
        $region158: #{tpu_custom_call.1} parent=119 // pred_check_branch
          %905 = sbr.rel (%p903) target = $region160
        $region159: #{tpu_custom_call.1} parent=119 // pred_region
          %906 = dma.done [#allocation18], 4096
        $region160: #{tpu_custom_call.1} parent=119 // pred_fallthru
          _
        // Predicated region
        $region161: #{tpu_custom_call.1} parent=119 // pred_check
          %p907 = pneg %p558
        $region162: #{tpu_custom_call.1} parent=119 // pred_check_branch
          %909 = sbr.rel (%p907) target = $region164
        $region163: #{tpu_custom_call.1} parent=119 // pred_region
          %910 = dma.done [#allocation18], 4096
        $region164: #{tpu_custom_call.1} parent=119 // pred_fallthru
          _
        %s911 = sand.u32 %s57, 1
        %s912 = scalar_lea.sflag [#allocation3], %s911
        %s913 = sand.u32 %s57, 1
        %s914 = smul.addr %s913, 8
        %s915 = scalar_lea.vmem [#allocation2], %s914
        %p916 = pneg %p70
        %p917 = pneg %p67
        %s918 = sand.u32 %s49, 1
        %s919 = scalar_lea.sflag [#allocation6], %s918
        %s920 = sand.u32 %s83, 1
        %s921 = smul.addr %s920, 32
        %s922 = scalar_lea.vmem [#allocation5], %s921
        %p923 = pneg %p96
        %p924 = pneg %p93
        %p925 = pneg %p117
        %p926 = pneg %p114
        %p927 = pneg %p138
        %p928 = pneg %p135
        %p929 = pneg %p159
        %p930 = pneg %p156
        %p931 = pneg %p180
        %p932 = pneg %p177
        %p933 = pneg %p201
        %p934 = pneg %p198
        %p935 = pneg %p222
        %p936 = pneg %p219
        %p937 = pneg %p243
        %p938 = pneg %p240
        %p939 = pneg %p264
        %p940 = pneg %p261
        %p941 = pneg %p285
        %p942 = pneg %p282
        %p943 = pneg %p306
        %p944 = pneg %p303
        %p945 = pneg %p327
        %p946 = pneg %p324
        %p947 = pneg %p348
        %p948 = pneg %p345
        %p949 = pneg %p369
        %p950 = pneg %p366
        %p951 = pneg %p390
        %p952 = pneg %p387
        %p953 = pneg %p411
        %p954 = pneg %p408
        %p955 = pneg %p432
        %p956 = pneg %p429
        %p957 = pneg %p453
        %p958 = pneg %p450
        %p959 = pneg %p474
        %p960 = pneg %p471
        %p961 = pneg %p495
        %p962 = pneg %p492
        %p963 = pneg %p516
        %p964 = pneg %p513
        %p965 = pneg %p537
        %p966 = pneg %p534
        %p967 = pneg %p558
        %p968 = pneg %p555
        %p969 = pneg %p579
        %p970 = pneg %p576
        %p971 = pneg %p605
        %p972 = pneg %p602
        %s973 = sand.u32 %s592, 1
        %s974 = scalar_lea.sflag [#allocation4], %s973
        %s975 = sand.u32 %s592, 1
        %s976 = smul.addr %s975, 32
        %s977 = scalar_lea.vmem [#allocation20], %s976
        %s978 = smul.u32 2, %s49
        %s979 = smul.u32 2, %s49
        %s980 = smul.u32 2, %s49
        %v982 = vld [vmem:[%s861] sm:$0xf]
        %v983 = vld [vmem:[%s861 + $0x4] sm:$0xf]
        %v984 = vld [vmem:[#allocation7] sm:$0xff]
        %v985 = vld [vmem:[#allocation7 + $0x8] sm:$0xff]
        %v986 = vld [vmem:[#allocation7 + $0x10] sm:$0xff]
        %v987 = vld [vmem:[#allocation7 + $0x18] sm:$0xff]
        %v988 = vld [vmem:[#allocation7 + $0x20] sm:$0xff]
        %v989 = vld [vmem:[#allocation7 + $0x28] sm:$0xff]
        %v990 = vld [vmem:[#allocation7 + $0x30] sm:$0xff]
        %v991 = vld [vmem:[#allocation7 + $0x38] sm:$0xff]
        %v992 = vld [vmem:[#allocation7 + $0x40] sm:$0xff]
        %v993 = vld [vmem:[#allocation7 + $0x48] sm:$0xff]
        %v994 = vld [vmem:[#allocation7 + $0x50] sm:$0xff]
        %v995 = vld [vmem:[#allocation7 + $0x58] sm:$0xff]
        %v996 = vld [vmem:[#allocation7 + $0x60] sm:$0xff]
        %v997 = vld [vmem:[#allocation7 + $0x68] sm:$0xff]
        %v998 = vld [vmem:[#allocation7 + $0x70] sm:$0xff]
        %v999 = vld [vmem:[#allocation7 + $0x78] sm:$0xff]
        %v1002 = vunpack.c.l.b16 %v982
        %v1003 = vunpack.c.l.b16 %v983
        %v1004 = vpack.c.b16 %v1003, %v1002
        %v1022 = vunpack.c.l.b16 %v984
        %v1023 = vunpack.c.h.b16 %v984
        %v1024 = vunpack.c.l.b16 %v985
        %v1025 = vunpack.c.h.b16 %v985
        %v1026 = vunpack.c.l.b16 %v986
        %v1027 = vunpack.c.h.b16 %v986
        %v1028 = vunpack.c.l.b16 %v987
        %v1029 = vunpack.c.h.b16 %v987
        %v1030 = vunpack.c.l.b16 %v988
        %v1031 = vunpack.c.h.b16 %v988
        %v1032 = vunpack.c.l.b16 %v989
        %v1033 = vunpack.c.h.b16 %v989
        %v1034 = vunpack.c.l.b16 %v990
        %v1035 = vunpack.c.h.b16 %v990
        %v1036 = vunpack.c.l.b16 %v991
        %v1037 = vunpack.c.h.b16 %v991
        %v1038 = vunpack.c.l.b16 %v992
        %v1039 = vunpack.c.h.b16 %v992
        %v1040 = vunpack.c.l.b16 %v993
        %v1041 = vunpack.c.h.b16 %v993
        %v1042 = vunpack.c.l.b16 %v994
        %v1043 = vunpack.c.h.b16 %v994
        %v1044 = vunpack.c.l.b16 %v995
        %v1045 = vunpack.c.h.b16 %v995
        %v1046 = vunpack.c.l.b16 %v996
        %v1047 = vunpack.c.h.b16 %v996
        %v1048 = vunpack.c.l.b16 %v997
        %v1049 = vunpack.c.h.b16 %v997
        %v1050 = vunpack.c.l.b16 %v998
        %v1051 = vunpack.c.h.b16 %v998
        %v1052 = vunpack.c.l.b16 %v999
        %v1053 = vunpack.c.h.b16 %v999
        %v1054 = vpack.c.b16 %v1024, %v1022
        %v1055 = vpack.c.b16 %v1025, %v1023
        %v1056 = vpack.c.b16 %v1028, %v1026
        %v1057 = vpack.c.b16 %v1029, %v1027
        %v1058 = vpack.c.b16 %v1032, %v1030
        %v1059 = vpack.c.b16 %v1033, %v1031
        %v1060 = vpack.c.b16 %v1036, %v1034
        %v1061 = vpack.c.b16 %v1037, %v1035
        %v1062 = vpack.c.b16 %v1040, %v1038
        %v1063 = vpack.c.b16 %v1041, %v1039
        %v1064 = vpack.c.b16 %v1044, %v1042
        %v1065 = vpack.c.b16 %v1045, %v1043
        %v1066 = vpack.c.b16 %v1048, %v1046
        %v1067 = vpack.c.b16 %v1049, %v1047
        %v1068 = vpack.c.b16 %v1052, %v1050
        %v1069 = vpack.c.b16 %v1053, %v1051
        %1086 = vmatprep.subr.bf16.mxu0 %v1069
        %1087 = vmatpush1.bf16.msra.mxu0 %v1068
        %1088 = vmatprep.subr.bf16.mxu0 %v1067
        %1089 = vmatpush1.bf16.msra.mxu0 %v1066
        %1090 = vmatprep.subr.bf16.mxu0 %v1065
        %1091 = vmatpush1.bf16.msra.mxu0 %v1064
        %1092 = vmatprep.subr.bf16.mxu0 %v1063
        %1093 = vmatpush1.bf16.msra.mxu0 %v1062
        %1094 = vmatprep.subr.bf16.mxu0 %v1061
        %1095 = vmatpush1.bf16.msra.mxu0 %v1060
        %1096 = vmatprep.subr.bf16.mxu0 %v1059
        %1097 = vmatpush1.bf16.msra.mxu0 %v1058
        %1098 = vmatprep.subr.bf16.mxu0 %v1057
        %1099 = vmatpush1.bf16.msra.mxu0 %v1056
        %1100 = vmatprep.subr.bf16.mxu0 %v1055
        %1101 = vmatpush1.bf16.msra.mxu0 %v1054
        %1102 = vmatprep.subr.bf16.mxu0 0
        %1103 = vmatpush2.bf16.msra.mxu0 0
        %1104 = vmatprep.subr.bf16.mxu0 0
        %1105 = vmatpush2.bf16.msra.mxu0 0
        %1106 = vmatprep.subr.bf16.mxu0 0
        %1107 = vmatpush2.bf16.msra.mxu0 0
        %1108 = vmatprep.subr.bf16.mxu0 0
        %1109 = vmatpush2.bf16.msra.mxu0 0
        %1110 = vmatprep.subr.bf16.mxu0 0
        %1111 = vmatpush2.bf16.msra.mxu0 0
        %1112 = vmatprep.subr.bf16.mxu0 0
        %1113 = vmatpush2.bf16.msra.mxu0 0
        %1114 = vmatprep.subr.bf16.mxu0 0
        %1115 = vmatpush2.bf16.msra.mxu0 0
        %1116 = vmatprep.subr.bf16.mxu0 0
        %1117 = vmatpush2.bf16.msra.mxu0 0
        %1118 = vmatprep.mubr.bf16.mxu0 0
        %1119 = vmatmul.mubr.bf16.gmra.mxu0 %v1004
        %v1120 = vpop.f32.mrf.mxu0
        %v1121 = vadd.f32 0.0, %v1120
        %v1122 = vpop.f32.mrf.mxu0
        %v1123 = vadd.f32 0.0, %v1122
        %v1124 = vpop.f32.mrf.mxu0
        %v1125 = vadd.f32 0.0, %v1124
        %v1126 = vpop.f32.mrf.mxu0
        %v1127 = vadd.f32 0.0, %v1126
        %1128 = vdwg.mxu0
        %v1129 = vld [vmem:[%s3] sm:$0x3]
        %v1130 = vld [vmem:[%s4] sm:$0x3]
        %v1131 = vadd.f32 %v1121, %v1123
        %1132 = vadd.xlane.f32.xlu0 %v1131
        %v1133 = vpop.xlane.xlu0 %1132
        %v1134 = vadd.f32 %v1125, %v1127
        %1135 = vadd.xlane.f32.xlu0 %v1134
        %v1136 = vpop.xlane.xlu0 %1135
        %v1137 = vrcp.pop 256.0
        %v1138 = vmul.f32 %v1133, %v1137
        %v1139 = vmul.f32 %v1136, %v1137
        %v1140 = vsub.f32 %v1121, %v1138
        %v1141 = vsub.f32 %v1123, %v1138
        %v1142 = vsub.f32 %v1125, %v1139
        %v1143 = vsub.f32 %v1127, %v1139
        %v1144 = vmul.f32 %v1140, %v1140
        %v1145 = vmul.f32 %v1141, %v1141
        %v1146 = vmul.f32 %v1142, %v1142
        %v1147 = vmul.f32 %v1143, %v1143
        %v1148 = vadd.f32 %v1144, %v1145
        %1149 = vadd.xlane.f32.xlu0 %v1148
        %v1150 = vpop.xlane.xlu0 %1149
        %v1151 = vadd.f32 %v1146, %v1147
        %1152 = vadd.xlane.f32.xlu0 %v1151
        %v1153 = vpop.xlane.xlu0 %1152
        %v1154 = vmul.f32 %v1150, %v1137
        %v1155 = vmul.f32 %v1153, %v1137
        %v1156 = vadd.f32 %v1154, 1e-06
        %v1157 = vadd.f32 %v1155, 1e-06
        %v1158 = vrsqrt.pop %v1156
        %v1159 = vrsqrt.pop %v1157
        %v1160 = vmul.f32 %v1140, %v1158
        %v1161 = vmul.f32 %v1141, %v1158
        %v1162 = vmul.f32 %v1142, %v1159
        %v1163 = vmul.f32 %v1143, %v1159
        %v1165 = vlaneseq
        %v1166 = vshrl.u32 %v1165, 7
        %v1167 = vsub.s32 0, %v1166
        %v1168 = vrot.slane %v1129, %v1167
        %v1169 = vlaneseq
        %v1170 = vshrl.u32 %v1169, 7
        %v1171 = vsub.s32 1, %v1170
        %v1172 = vrot.slane %v1129, %v1171
        %v1175 = vmul.f32 %v1160, %v1168
        %v1176 = vmul.f32 %v1161, %v1172
        %v1177 = vmul.f32 %v1162, %v1168
        %v1178 = vmul.f32 %v1163, %v1172
        %v1180 = vlaneseq
        %v1181 = vshrl.u32 %v1180, 7
        %v1182 = vsub.s32 0, %v1181
        %v1183 = vrot.slane %v1130, %v1182
        %v1184 = vlaneseq
        %v1185 = vshrl.u32 %v1184, 7
        %v1186 = vsub.s32 1, %v1185
        %v1187 = vrot.slane %v1130, %v1186
        %v1190 = vadd.f32 %v1175, %v1183
        %v1191 = vadd.f32 %v1176, %v1187
        %v1192 = vadd.f32 %v1177, %v1183
        %v1193 = vadd.f32 %v1178, %v1187
        %v1194 = vpack.c.bf16 %v1192, %v1190
        %v1195 = vpack.c.bf16 %v1193, %v1191
        %v1196 = vld [vmem:[#allocation14] sm:$0xff]
        %v1197 = vld [vmem:[#allocation14 + $0x8] sm:$0xff]
        %v1198 = vld [vmem:[#allocation14 + $0x10] sm:$0xff]
        %v1199 = vld [vmem:[#allocation14 + $0x18] sm:$0xff]
        %v1200 = vld [vmem:[#allocation14 + $0x20] sm:$0xff]
        %v1201 = vld [vmem:[#allocation14 + $0x28] sm:$0xff]
        %v1202 = vld [vmem:[#allocation14 + $0x30] sm:$0xff]
        %v1203 = vld [vmem:[#allocation14 + $0x38] sm:$0xff]
        %v1204 = vld [vmem:[#allocation14 + $0x40] sm:$0xff]
        %v1205 = vld [vmem:[#allocation14 + $0x48] sm:$0xff]
        %v1206 = vld [vmem:[#allocation14 + $0x50] sm:$0xff]
        %v1207 = vld [vmem:[#allocation14 + $0x58] sm:$0xff]
        %v1208 = vld [vmem:[#allocation14 + $0x60] sm:$0xff]
        %v1209 = vld [vmem:[#allocation14 + $0x68] sm:$0xff]
        %v1210 = vld [vmem:[#allocation14 + $0x70] sm:$0xff]
        %v1211 = vld [vmem:[#allocation14 + $0x78] sm:$0xff]
        %v1212 = vld [vmem:[#allocation14 + $0x80] sm:$0xff]
        %v1213 = vld [vmem:[#allocation14 + $0x88] sm:$0xff]
        %v1214 = vld [vmem:[#allocation14 + $0x90] sm:$0xff]
        %v1215 = vld [vmem:[#allocation14 + $0x98] sm:$0xff]
        %v1216 = vld [vmem:[#allocation14 + $0xa0] sm:$0xff]
        %v1217 = vld [vmem:[#allocation14 + $0xa8] sm:$0xff]
        %v1218 = vld [vmem:[#allocation14 + $0xb0] sm:$0xff]
        %v1219 = vld [vmem:[#allocation14 + $0xb8] sm:$0xff]
        %v1220 = vld [vmem:[#allocation14 + $0xc0] sm:$0xff]
        %v1221 = vld [vmem:[#allocation14 + $0xc8] sm:$0xff]
        %v1222 = vld [vmem:[#allocation14 + $0xd0] sm:$0xff]
        %v1223 = vld [vmem:[#allocation14 + $0xd8] sm:$0xff]
        %v1224 = vld [vmem:[#allocation14 + $0xe0] sm:$0xff]
        %v1225 = vld [vmem:[#allocation14 + $0xe8] sm:$0xff]
        %v1226 = vld [vmem:[#allocation14 + $0xf0] sm:$0xff]
        %v1227 = vld [vmem:[#allocation14 + $0xf8] sm:$0xff]
        %v1228 = vld [vmem:[%s18] sm:$0x3]
        %v1230 = vlaneseq
        %v1231 = vshrl.u32 %v1230, 7
        %v1232 = vsub.s32 0, %v1231
        %v1233 = vrot.slane %v1228, %v1232
        %v1234 = vlaneseq
        %v1235 = vshrl.u32 %v1234, 7
        %v1236 = vsub.s32 1, %v1235
        %v1237 = vrot.slane %v1228, %v1236
        %v1272 = vunpack.c.l.b16 %v1196
        %v1273 = vunpack.c.h.b16 %v1196
        %v1274 = vunpack.c.l.b16 %v1197
        %v1275 = vunpack.c.h.b16 %v1197
        %v1276 = vunpack.c.l.b16 %v1198
        %v1277 = vunpack.c.h.b16 %v1198
        %v1278 = vunpack.c.l.b16 %v1199
        %v1279 = vunpack.c.h.b16 %v1199
        %v1280 = vunpack.c.l.b16 %v1200
        %v1281 = vunpack.c.h.b16 %v1200
        %v1282 = vunpack.c.l.b16 %v1201
        %v1283 = vunpack.c.h.b16 %v1201
        %v1284 = vunpack.c.l.b16 %v1202
        %v1285 = vunpack.c.h.b16 %v1202
        %v1286 = vunpack.c.l.b16 %v1203
        %v1287 = vunpack.c.h.b16 %v1203
        %v1288 = vunpack.c.l.b16 %v1204
        %v1289 = vunpack.c.h.b16 %v1204
        %v1290 = vunpack.c.l.b16 %v1205
        %v1291 = vunpack.c.h.b16 %v1205
        %v1292 = vunpack.c.l.b16 %v1206
        %v1293 = vunpack.c.h.b16 %v1206
        %v1294 = vunpack.c.l.b16 %v1207
        %v1295 = vunpack.c.h.b16 %v1207
        %v1296 = vunpack.c.l.b16 %v1208
        %v1297 = vunpack.c.h.b16 %v1208
        %v1298 = vunpack.c.l.b16 %v1209
        %v1299 = vunpack.c.h.b16 %v1209
        %v1300 = vunpack.c.l.b16 %v1210
        %v1301 = vunpack.c.h.b16 %v1210
        %v1302 = vunpack.c.l.b16 %v1211
        %v1303 = vunpack.c.h.b16 %v1211
        %v1304 = vunpack.c.l.b16 %v1212
        %v1305 = vunpack.c.h.b16 %v1212
        %v1306 = vunpack.c.l.b16 %v1213
        %v1307 = vunpack.c.h.b16 %v1213
        %v1308 = vunpack.c.l.b16 %v1214
        %v1309 = vunpack.c.h.b16 %v1214
        %v1310 = vunpack.c.l.b16 %v1215
        %v1311 = vunpack.c.h.b16 %v1215
        %v1312 = vunpack.c.l.b16 %v1216
        %v1313 = vunpack.c.h.b16 %v1216
        %v1314 = vunpack.c.l.b16 %v1217
        %v1315 = vunpack.c.h.b16 %v1217
        %v1316 = vunpack.c.l.b16 %v1218
        %v1317 = vunpack.c.h.b16 %v1218
        %v1318 = vunpack.c.l.b16 %v1219
        %v1319 = vunpack.c.h.b16 %v1219
        %v1320 = vunpack.c.l.b16 %v1220
        %v1321 = vunpack.c.h.b16 %v1220
        %v1322 = vunpack.c.l.b16 %v1221
        %v1323 = vunpack.c.h.b16 %v1221
        %v1324 = vunpack.c.l.b16 %v1222
        %v1325 = vunpack.c.h.b16 %v1222
        %v1326 = vunpack.c.l.b16 %v1223
        %v1327 = vunpack.c.h.b16 %v1223
        %v1328 = vunpack.c.l.b16 %v1224
        %v1329 = vunpack.c.h.b16 %v1224
        %v1330 = vunpack.c.l.b16 %v1225
        %v1331 = vunpack.c.h.b16 %v1225
        %v1332 = vunpack.c.l.b16 %v1226
        %v1333 = vunpack.c.h.b16 %v1226
        %v1334 = vunpack.c.l.b16 %v1227
        %v1335 = vunpack.c.h.b16 %v1227
        %v1336 = vpack.c.b16 %v1274, %v1272
        %v1337 = vpack.c.b16 %v1275, %v1273
        %v1338 = vpack.c.b16 %v1278, %v1276
        %v1339 = vpack.c.b16 %v1279, %v1277
        %v1340 = vpack.c.b16 %v1282, %v1280
        %v1341 = vpack.c.b16 %v1283, %v1281
        %v1342 = vpack.c.b16 %v1286, %v1284
        %v1343 = vpack.c.b16 %v1287, %v1285
        %v1344 = vpack.c.b16 %v1290, %v1288
        %v1345 = vpack.c.b16 %v1291, %v1289
        %v1346 = vpack.c.b16 %v1294, %v1292
        %v1347 = vpack.c.b16 %v1295, %v1293
        %v1348 = vpack.c.b16 %v1298, %v1296
        %v1349 = vpack.c.b16 %v1299, %v1297
        %v1350 = vpack.c.b16 %v1302, %v1300
        %v1351 = vpack.c.b16 %v1303, %v1301
        %v1352 = vpack.c.b16 %v1306, %v1304
        %v1353 = vpack.c.b16 %v1307, %v1305
        %v1354 = vpack.c.b16 %v1310, %v1308
        %v1355 = vpack.c.b16 %v1311, %v1309
        %v1356 = vpack.c.b16 %v1314, %v1312
        %v1357 = vpack.c.b16 %v1315, %v1313
        %v1358 = vpack.c.b16 %v1318, %v1316
        %v1359 = vpack.c.b16 %v1319, %v1317
        %v1360 = vpack.c.b16 %v1322, %v1320
        %v1361 = vpack.c.b16 %v1323, %v1321
        %v1362 = vpack.c.b16 %v1326, %v1324
        %v1363 = vpack.c.b16 %v1327, %v1325
        %v1364 = vpack.c.b16 %v1330, %v1328
        %v1365 = vpack.c.b16 %v1331, %v1329
        %v1366 = vpack.c.b16 %v1334, %v1332
        %v1367 = vpack.c.b16 %v1335, %v1333
        %1400 = vmatprep.subr.bf16.mxu0 %v1351
        %1401 = vmatpush1.bf16.msra.mxu0 %v1350
        %1402 = vmatprep.subr.bf16.mxu0 %v1349
        %1403 = vmatpush1.bf16.msra.mxu0 %v1348
        %1404 = vmatprep.subr.bf16.mxu0 %v1347
        %1405 = vmatpush1.bf16.msra.mxu0 %v1346
        %1406 = vmatprep.subr.bf16.mxu0 %v1345
        %1407 = vmatpush1.bf16.msra.mxu0 %v1344
        %1408 = vmatprep.subr.bf16.mxu0 %v1343
        %1409 = vmatpush1.bf16.msra.mxu0 %v1342
        %1410 = vmatprep.subr.bf16.mxu0 %v1341
        %1411 = vmatpush1.bf16.msra.mxu0 %v1340
        %1412 = vmatprep.subr.bf16.mxu0 %v1339
        %1413 = vmatpush1.bf16.msra.mxu0 %v1338
        %1414 = vmatprep.subr.bf16.mxu0 %v1337
        %1415 = vmatpush1.bf16.msra.mxu0 %v1336
        %1416 = vmatprep.subr.bf16.mxu0 %v1367
        %1417 = vmatpush2.bf16.msra.mxu0 %v1366
        %1418 = vmatprep.subr.bf16.mxu0 %v1365
        %1419 = vmatpush2.bf16.msra.mxu0 %v1364
        %1420 = vmatprep.subr.bf16.mxu0 %v1363
        %1421 = vmatpush2.bf16.msra.mxu0 %v1362
        %1422 = vmatprep.subr.bf16.mxu0 %v1361
        %1423 = vmatpush2.bf16.msra.mxu0 %v1360
        %1424 = vmatprep.subr.bf16.mxu0 %v1359
        %1425 = vmatpush2.bf16.msra.mxu0 %v1358
        %1426 = vmatprep.subr.bf16.mxu0 %v1357
        %1427 = vmatpush2.bf16.msra.mxu0 %v1356
        %1428 = vmatprep.subr.bf16.mxu0 %v1355
        %1429 = vmatpush2.bf16.msra.mxu0 %v1354
        %1430 = vmatprep.subr.bf16.mxu0 %v1353
        %1431 = vmatpush2.bf16.msra.mxu0 %v1352
        %1432 = vmatprep.mubr.bf16.mxu0 %v1195
        %1433 = vmatmul.mubr.bf16.gmra.mxu0 %v1194
        %v1434 = vpop.f32.mrf.mxu0
        %v1435 = vadd.f32 %v1233, %v1434
        %v1436 = vpop.f32.mrf.mxu0
        %v1437 = vadd.f32 %v1237, %v1436
        %v1438 = vpop.f32.mrf.mxu0
        %v1439 = vadd.f32 %v1233, %v1438
        %v1440 = vpop.f32.mrf.mxu0
        %v1441 = vadd.f32 %v1237, %v1440
        %1442 = vdwg.mxu0
        %v1443 = vld [vmem:[%s870] sm:$0xf]
        %v1444 = vld [vmem:[%s870 + $0x4] sm:$0xf]
        %v1445 = vld [vmem:[#allocation8] sm:$0xff]
        %v1446 = vld [vmem:[#allocation8 + $0x8] sm:$0xff]
        %v1447 = vld [vmem:[#allocation8 + $0x10] sm:$0xff]
        %v1448 = vld [vmem:[#allocation8 + $0x18] sm:$0xff]
        %v1449 = vld [vmem:[#allocation8 + $0x20] sm:$0xff]
        %v1450 = vld [vmem:[#allocation8 + $0x28] sm:$0xff]
        %v1451 = vld [vmem:[#allocation8 + $0x30] sm:$0xff]
        %v1452 = vld [vmem:[#allocation8 + $0x38] sm:$0xff]
        %v1453 = vld [vmem:[#allocation8 + $0x40] sm:$0xff]
        %v1454 = vld [vmem:[#allocation8 + $0x48] sm:$0xff]
        %v1455 = vld [vmem:[#allocation8 + $0x50] sm:$0xff]
        %v1456 = vld [vmem:[#allocation8 + $0x58] sm:$0xff]
        %v1457 = vld [vmem:[#allocation8 + $0x60] sm:$0xff]
        %v1458 = vld [vmem:[#allocation8 + $0x68] sm:$0xff]
        %v1459 = vld [vmem:[#allocation8 + $0x70] sm:$0xff]
        %v1460 = vld [vmem:[#allocation8 + $0x78] sm:$0xff]
        %v1461 = vld [vmem:[%s6] sm:$0x3]
        %v1463 = vlaneseq
        %v1464 = vshrl.u32 %v1463, 7
        %v1465 = vsub.s32 0, %v1464
        %v1466 = vrot.slane %v1461, %v1465
        %v1467 = vlaneseq
        %v1468 = vshrl.u32 %v1467, 7
        %v1469 = vsub.s32 1, %v1468
        %v1470 = vrot.slane %v1461, %v1469
        %v1475 = vunpack.c.l.b16 %v1443
        %v1476 = vunpack.c.l.b16 %v1444
        %v1477 = vpack.c.b16 %v1476, %v1475
        %v1495 = vunpack.c.l.b16 %v1445
        %v1496 = vunpack.c.h.b16 %v1445
        %v1497 = vunpack.c.l.b16 %v1446
        %v1498 = vunpack.c.h.b16 %v1446
        %v1499 = vunpack.c.l.b16 %v1447
        %v1500 = vunpack.c.h.b16 %v1447
        %v1501 = vunpack.c.l.b16 %v1448
        %v1502 = vunpack.c.h.b16 %v1448
        %v1503 = vunpack.c.l.b16 %v1449
        %v1504 = vunpack.c.h.b16 %v1449
        %v1505 = vunpack.c.l.b16 %v1450
        %v1506 = vunpack.c.h.b16 %v1450
        %v1507 = vunpack.c.l.b16 %v1451
        %v1508 = vunpack.c.h.b16 %v1451
        %v1509 = vunpack.c.l.b16 %v1452
        %v1510 = vunpack.c.h.b16 %v1452
        %v1511 = vunpack.c.l.b16 %v1453
        %v1512 = vunpack.c.h.b16 %v1453
        %v1513 = vunpack.c.l.b16 %v1454
        %v1514 = vunpack.c.h.b16 %v1454
        %v1515 = vunpack.c.l.b16 %v1455
        %v1516 = vunpack.c.h.b16 %v1455
        %v1517 = vunpack.c.l.b16 %v1456
        %v1518 = vunpack.c.h.b16 %v1456
        %v1519 = vunpack.c.l.b16 %v1457
        %v1520 = vunpack.c.h.b16 %v1457
        %v1521 = vunpack.c.l.b16 %v1458
        %v1522 = vunpack.c.h.b16 %v1458
        %v1523 = vunpack.c.l.b16 %v1459
        %v1524 = vunpack.c.h.b16 %v1459
        %v1525 = vunpack.c.l.b16 %v1460
        %v1526 = vunpack.c.h.b16 %v1460
        %v1527 = vpack.c.b16 %v1497, %v1495
        %v1528 = vpack.c.b16 %v1498, %v1496
        %v1529 = vpack.c.b16 %v1501, %v1499
        %v1530 = vpack.c.b16 %v1502, %v1500
        %v1531 = vpack.c.b16 %v1505, %v1503
        %v1532 = vpack.c.b16 %v1506, %v1504
        %v1533 = vpack.c.b16 %v1509, %v1507
        %v1534 = vpack.c.b16 %v1510, %v1508
        %v1535 = vpack.c.b16 %v1513, %v1511
        %v1536 = vpack.c.b16 %v1514, %v1512
        %v1537 = vpack.c.b16 %v1517, %v1515
        %v1538 = vpack.c.b16 %v1518, %v1516
        %v1539 = vpack.c.b16 %v1521, %v1519
        %v1540 = vpack.c.b16 %v1522, %v1520
        %v1541 = vpack.c.b16 %v1525, %v1523
        %v1542 = vpack.c.b16 %v1526, %v1524
        %1559 = vmatprep.subr.bf16.mxu0 %v1542
        %1560 = vmatpush1.bf16.msra.mxu0 %v1541
        %1561 = vmatprep.subr.bf16.mxu0 %v1540
        %1562 = vmatpush1.bf16.msra.mxu0 %v1539
        %1563 = vmatprep.subr.bf16.mxu0 %v1538
        %1564 = vmatpush1.bf16.msra.mxu0 %v1537
        %1565 = vmatprep.subr.bf16.mxu0 %v1536
        %1566 = vmatpush1.bf16.msra.mxu0 %v1535
        %1567 = vmatprep.subr.bf16.mxu0 %v1534
        %1568 = vmatpush1.bf16.msra.mxu0 %v1533
        %1569 = vmatprep.subr.bf16.mxu0 %v1532
        %1570 = vmatpush1.bf16.msra.mxu0 %v1531
        %1571 = vmatprep.subr.bf16.mxu0 %v1530
        %1572 = vmatpush1.bf16.msra.mxu0 %v1529
        %1573 = vmatprep.subr.bf16.mxu0 %v1528
        %1574 = vmatpush1.bf16.msra.mxu0 %v1527
        %1575 = vmatprep.subr.bf16.mxu0 0
        %1576 = vmatpush2.bf16.msra.mxu0 0
        %1577 = vmatprep.subr.bf16.mxu0 0
        %1578 = vmatpush2.bf16.msra.mxu0 0
        %1579 = vmatprep.subr.bf16.mxu0 0
        %1580 = vmatpush2.bf16.msra.mxu0 0
        %1581 = vmatprep.subr.bf16.mxu0 0
        %1582 = vmatpush2.bf16.msra.mxu0 0
        %1583 = vmatprep.subr.bf16.mxu0 0
        %1584 = vmatpush2.bf16.msra.mxu0 0
        %1585 = vmatprep.subr.bf16.mxu0 0
        %1586 = vmatpush2.bf16.msra.mxu0 0
        %1587 = vmatprep.subr.bf16.mxu0 0
        %1588 = vmatpush2.bf16.msra.mxu0 0
        %1589 = vmatprep.subr.bf16.mxu0 0
        %1590 = vmatpush2.bf16.msra.mxu0 0
        %1591 = vmatprep.mubr.bf16.mxu0 0
        %1592 = vmatmul.mubr.bf16.gmra.mxu0 %v1477
        %v1593 = vpop.f32.mrf.mxu0
        %v1594 = vadd.f32 %v1466, %v1593
        %v1595 = vpop.f32.mrf.mxu0
        %v1596 = vadd.f32 %v1470, %v1595
        %v1597 = vpop.f32.mrf.mxu0
        %v1598 = vadd.f32 %v1466, %v1597
        %v1599 = vpop.f32.mrf.mxu0
        %v1600 = vadd.f32 %v1470, %v1599
        %1601 = vdwg.mxu0
        %v1602 = vmul.f32 %v1594, 0.5
        %v1603 = vmul.f32 %v1596, 0.5
        %v1604 = vmul.f32 %v1598, 0.5
        %v1605 = vmul.f32 %v1600, 0.5
        %v1606 = vmul.f32 %v1594, 0.70710677
        %v1607 = vmul.f32 %v1596, 0.70710677
        %v1608 = vmul.f32 %v1598, 0.70710677
        %v1609 = vmul.f32 %v1600, 0.70710677
        %v1610 = vand.u32 2147483647, %v1606
        %v1611 = vand.u32 2147483647, %v1607
        %v1612 = vand.u32 2147483647, %v1608
        %v1613 = vand.u32 2147483647, %v1609
        %v1614 = vmul.f32 %v1610, 0.3275911
        %v1615 = vmul.f32 %v1611, 0.3275911
        %v1616 = vmul.f32 %v1612, 0.3275911
        %v1617 = vmul.f32 %v1613, 0.3275911
        %v1618 = vadd.f32 %v1614, 1.0
        %v1619 = vadd.f32 %v1615, 1.0
        %v1620 = vadd.f32 %v1616, 1.0
        %v1621 = vadd.f32 %v1617, 1.0
        %v1622 = vrcp.pop %v1618
        %v1623 = vmul.f32 1.0, %v1622
        %v1624 = vrcp.pop %v1619
        %v1625 = vmul.f32 1.0, %v1624
        %v1626 = vrcp.pop %v1620
        %v1627 = vmul.f32 1.0, %v1626
        %v1628 = vrcp.pop %v1621
        %v1629 = vmul.f32 1.0, %v1628
        %v1630 = vmul.f32 %v1623, 1.0614054
        %v1631 = vmul.f32 %v1625, 1.0614054
        %v1632 = vmul.f32 %v1627, 1.0614054
        %v1633 = vmul.f32 %v1629, 1.0614054
        %v1634 = vadd.f32 %v1630, -1.4531521
        %v1635 = vadd.f32 %v1631, -1.4531521
        %v1636 = vadd.f32 %v1632, -1.4531521
        %v1637 = vadd.f32 %v1633, -1.4531521
        %v1638 = vmul.f32 %v1634, %v1623
        %v1639 = vmul.f32 %v1635, %v1625
        %v1640 = vmul.f32 %v1636, %v1627
        %v1641 = vmul.f32 %v1637, %v1629
        %v1642 = vadd.f32 %v1638, 1.4214138
        %v1643 = vadd.f32 %v1639, 1.4214138
        %v1644 = vadd.f32 %v1640, 1.4214138
        %v1645 = vadd.f32 %v1641, 1.4214138
        %v1646 = vmul.f32 %v1642, %v1623
        %v1647 = vmul.f32 %v1643, %v1625
        %v1648 = vmul.f32 %v1644, %v1627
        %v1649 = vmul.f32 %v1645, %v1629
        %v1650 = vadd.f32 %v1646, -0.28449672
        %v1651 = vadd.f32 %v1647, -0.28449672
        %v1652 = vadd.f32 %v1648, -0.28449672
        %v1653 = vadd.f32 %v1649, -0.28449672
        %v1654 = vmul.f32 %v1650, %v1623
        %v1655 = vmul.f32 %v1651, %v1625
        %v1656 = vmul.f32 %v1652, %v1627
        %v1657 = vmul.f32 %v1653, %v1629
        %v1658 = vadd.f32 %v1654, 0.2548296
        %v1659 = vadd.f32 %v1655, 0.2548296
        %v1660 = vadd.f32 %v1656, 0.2548296
        %v1661 = vadd.f32 %v1657, 0.2548296
        %v1662 = vmul.f32 %v1658, %v1623
        %v1663 = vmul.f32 %v1659, %v1625
        %v1664 = vmul.f32 %v1660, %v1627
        %v1665 = vmul.f32 %v1661, %v1629
        %v1666 = vsub.f32 0.0, %v1610
        %v1667 = vsub.f32 0.0, %v1611
        %v1668 = vsub.f32 0.0, %v1612
        %v1669 = vsub.f32 0.0, %v1613
        %v1670 = vmul.f32 %v1666, %v1610
        %v1671 = vmul.f32 %v1667, %v1611
        %v1672 = vmul.f32 %v1668, %v1612
        %v1673 = vmul.f32 %v1669, %v1613
        %v1674 = vmul.f32 %v1670, 1.442695
        %v1675 = vpow.pop %v1674
        %v1676 = vmul.f32 %v1671, 1.442695
        %v1677 = vpow.pop %v1676
        %v1678 = vmul.f32 %v1672, 1.442695
        %v1679 = vpow.pop %v1678
        %v1680 = vmul.f32 %v1673, 1.442695
        %v1681 = vpow.pop %v1680
        %v1682 = vmul.f32 %v1662, %v1675
        %v1683 = vmul.f32 %v1663, %v1677
        %v1684 = vmul.f32 %v1664, %v1679
        %v1685 = vmul.f32 %v1665, %v1681
        %v1686 = vsub.f32 1.0, %v1682
        %v1687 = vsub.f32 1.0, %v1683
        %v1688 = vsub.f32 1.0, %v1684
        %v1689 = vsub.f32 1.0, %v1685
        %vm1690 = vcmp.lt.f32.partialorder %v1606, 0.0
        %vm1691 = vcmp.lt.f32.partialorder %v1607, 0.0
        %vm1692 = vcmp.lt.f32.partialorder %v1608, 0.0
        %vm1693 = vcmp.lt.f32.partialorder %v1609, 0.0
        %v1694 = vsub.f32 0.0, %v1686
        %v1695 = vsub.f32 0.0, %v1687
        %v1696 = vsub.f32 0.0, %v1688
        %v1697 = vsub.f32 0.0, %v1689
        %v1698 = vsel %vm1690, %v1694, %v1686
        %v1699 = vsel %vm1691, %v1695, %v1687
        %v1700 = vsel %vm1692, %v1696, %v1688
        %v1701 = vsel %vm1693, %v1697, %v1689
        %v1702 = vadd.f32 %v1698, 1.0
        %v1703 = vadd.f32 %v1699, 1.0
        %v1704 = vadd.f32 %v1700, 1.0
        %v1705 = vadd.f32 %v1701, 1.0
        %v1706 = vmul.f32 %v1602, %v1702
        %v1707 = vmul.f32 %v1603, %v1703
        %v1708 = vmul.f32 %v1604, %v1704
        %v1709 = vmul.f32 %v1605, %v1705
        %v1710 = vpack.c.bf16 %v1708, %v1706
        %v1711 = vpack.c.bf16 %v1709, %v1707
        %v1712 = vld [vmem:[#allocation10] sm:$0xff]
        %v1713 = vld [vmem:[#allocation10 + $0x8] sm:$0xff]
        %v1714 = vld [vmem:[#allocation10 + $0x10] sm:$0xff]
        %v1715 = vld [vmem:[#allocation10 + $0x18] sm:$0xff]
        %v1716 = vld [vmem:[#allocation10 + $0x20] sm:$0xff]
        %v1717 = vld [vmem:[#allocation10 + $0x28] sm:$0xff]
        %v1718 = vld [vmem:[#allocation10 + $0x30] sm:$0xff]
        %v1719 = vld [vmem:[#allocation10 + $0x38] sm:$0xff]
        %v1720 = vld [vmem:[#allocation10 + $0x40] sm:$0xff]
        %v1721 = vld [vmem:[#allocation10 + $0x48] sm:$0xff]
        %v1722 = vld [vmem:[#allocation10 + $0x50] sm:$0xff]
        %v1723 = vld [vmem:[#allocation10 + $0x58] sm:$0xff]
        %v1724 = vld [vmem:[#allocation10 + $0x60] sm:$0xff]
        %v1725 = vld [vmem:[#allocation10 + $0x68] sm:$0xff]
        %v1726 = vld [vmem:[#allocation10 + $0x70] sm:$0xff]
        %v1727 = vld [vmem:[#allocation10 + $0x78] sm:$0xff]
        %v1728 = vld [vmem:[#allocation10 + $0x80] sm:$0xff]
        %v1729 = vld [vmem:[#allocation10 + $0x88] sm:$0xff]
        %v1730 = vld [vmem:[#allocation10 + $0x90] sm:$0xff]
        %v1731 = vld [vmem:[#allocation10 + $0x98] sm:$0xff]
        %v1732 = vld [vmem:[#allocation10 + $0xa0] sm:$0xff]
        %v1733 = vld [vmem:[#allocation10 + $0xa8] sm:$0xff]
        %v1734 = vld [vmem:[#allocation10 + $0xb0] sm:$0xff]
        %v1735 = vld [vmem:[#allocation10 + $0xb8] sm:$0xff]
        %v1736 = vld [vmem:[#allocation10 + $0xc0] sm:$0xff]
        %v1737 = vld [vmem:[#allocation10 + $0xc8] sm:$0xff]
        %v1738 = vld [vmem:[#allocation10 + $0xd0] sm:$0xff]
        %v1739 = vld [vmem:[#allocation10 + $0xd8] sm:$0xff]
        %v1740 = vld [vmem:[#allocation10 + $0xe0] sm:$0xff]
        %v1741 = vld [vmem:[#allocation10 + $0xe8] sm:$0xff]
        %v1742 = vld [vmem:[#allocation10 + $0xf0] sm:$0xff]
        %v1743 = vld [vmem:[#allocation10 + $0xf8] sm:$0xff]
        %v1744 = vld [vmem:[%s8] sm:$0x3]
        %v1746 = vlaneseq
        %v1747 = vshrl.u32 %v1746, 7
        %v1748 = vsub.s32 0, %v1747
        %v1749 = vrot.slane %v1744, %v1748
        %v1750 = vlaneseq
        %v1751 = vshrl.u32 %v1750, 7
        %v1752 = vsub.s32 1, %v1751
        %v1753 = vrot.slane %v1744, %v1752
        %v1788 = vunpack.c.l.b16 %v1712
        %v1789 = vunpack.c.h.b16 %v1712
        %v1790 = vunpack.c.l.b16 %v1713
        %v1791 = vunpack.c.h.b16 %v1713
        %v1792 = vunpack.c.l.b16 %v1714
        %v1793 = vunpack.c.h.b16 %v1714
        %v1794 = vunpack.c.l.b16 %v1715
        %v1795 = vunpack.c.h.b16 %v1715
        %v1796 = vunpack.c.l.b16 %v1716
        %v1797 = vunpack.c.h.b16 %v1716
        %v1798 = vunpack.c.l.b16 %v1717
        %v1799 = vunpack.c.h.b16 %v1717
        %v1800 = vunpack.c.l.b16 %v1718
        %v1801 = vunpack.c.h.b16 %v1718
        %v1802 = vunpack.c.l.b16 %v1719
        %v1803 = vunpack.c.h.b16 %v1719
        %v1804 = vunpack.c.l.b16 %v1720
        %v1805 = vunpack.c.h.b16 %v1720
        %v1806 = vunpack.c.l.b16 %v1721
        %v1807 = vunpack.c.h.b16 %v1721
        %v1808 = vunpack.c.l.b16 %v1722
        %v1809 = vunpack.c.h.b16 %v1722
        %v1810 = vunpack.c.l.b16 %v1723
        %v1811 = vunpack.c.h.b16 %v1723
        %v1812 = vunpack.c.l.b16 %v1724
        %v1813 = vunpack.c.h.b16 %v1724
        %v1814 = vunpack.c.l.b16 %v1725
        %v1815 = vunpack.c.h.b16 %v1725
        %v1816 = vunpack.c.l.b16 %v1726
        %v1817 = vunpack.c.h.b16 %v1726
        %v1818 = vunpack.c.l.b16 %v1727
        %v1819 = vunpack.c.h.b16 %v1727
        %v1820 = vunpack.c.l.b16 %v1728
        %v1821 = vunpack.c.h.b16 %v1728
        %v1822 = vunpack.c.l.b16 %v1729
        %v1823 = vunpack.c.h.b16 %v1729
        %v1824 = vunpack.c.l.b16 %v1730
        %v1825 = vunpack.c.h.b16 %v1730
        %v1826 = vunpack.c.l.b16 %v1731
        %v1827 = vunpack.c.h.b16 %v1731
        %v1828 = vunpack.c.l.b16 %v1732
        %v1829 = vunpack.c.h.b16 %v1732
        %v1830 = vunpack.c.l.b16 %v1733
        %v1831 = vunpack.c.h.b16 %v1733
        %v1832 = vunpack.c.l.b16 %v1734
        %v1833 = vunpack.c.h.b16 %v1734
        %v1834 = vunpack.c.l.b16 %v1735
        %v1835 = vunpack.c.h.b16 %v1735
        %v1836 = vunpack.c.l.b16 %v1736
        %v1837 = vunpack.c.h.b16 %v1736
        %v1838 = vunpack.c.l.b16 %v1737
        %v1839 = vunpack.c.h.b16 %v1737
        %v1840 = vunpack.c.l.b16 %v1738
        %v1841 = vunpack.c.h.b16 %v1738
        %v1842 = vunpack.c.l.b16 %v1739
        %v1843 = vunpack.c.h.b16 %v1739
        %v1844 = vunpack.c.l.b16 %v1740
        %v1845 = vunpack.c.h.b16 %v1740
        %v1846 = vunpack.c.l.b16 %v1741
        %v1847 = vunpack.c.h.b16 %v1741
        %v1848 = vunpack.c.l.b16 %v1742
        %v1849 = vunpack.c.h.b16 %v1742
        %v1850 = vunpack.c.l.b16 %v1743
        %v1851 = vunpack.c.h.b16 %v1743
        %v1852 = vpack.c.b16 %v1790, %v1788
        %v1853 = vpack.c.b16 %v1791, %v1789
        %v1854 = vpack.c.b16 %v1794, %v1792
        %v1855 = vpack.c.b16 %v1795, %v1793
        %v1856 = vpack.c.b16 %v1798, %v1796
        %v1857 = vpack.c.b16 %v1799, %v1797
        %v1858 = vpack.c.b16 %v1802, %v1800
        %v1859 = vpack.c.b16 %v1803, %v1801
        %v1860 = vpack.c.b16 %v1806, %v1804
        %v1861 = vpack.c.b16 %v1807, %v1805
        %v1862 = vpack.c.b16 %v1810, %v1808
        %v1863 = vpack.c.b16 %v1811, %v1809
        %v1864 = vpack.c.b16 %v1814, %v1812
        %v1865 = vpack.c.b16 %v1815, %v1813
        %v1866 = vpack.c.b16 %v1818, %v1816
        %v1867 = vpack.c.b16 %v1819, %v1817
        %v1868 = vpack.c.b16 %v1822, %v1820
        %v1869 = vpack.c.b16 %v1823, %v1821
        %v1870 = vpack.c.b16 %v1826, %v1824
        %v1871 = vpack.c.b16 %v1827, %v1825
        %v1872 = vpack.c.b16 %v1830, %v1828
        %v1873 = vpack.c.b16 %v1831, %v1829
        %v1874 = vpack.c.b16 %v1834, %v1832
        %v1875 = vpack.c.b16 %v1835, %v1833
        %v1876 = vpack.c.b16 %v1838, %v1836
        %v1877 = vpack.c.b16 %v1839, %v1837
        %v1878 = vpack.c.b16 %v1842, %v1840
        %v1879 = vpack.c.b16 %v1843, %v1841
        %v1880 = vpack.c.b16 %v1846, %v1844
        %v1881 = vpack.c.b16 %v1847, %v1845
        %v1882 = vpack.c.b16 %v1850, %v1848
        %v1883 = vpack.c.b16 %v1851, %v1849
        %1916 = vmatprep.subr.bf16.mxu0 %v1867
        %1917 = vmatpush1.bf16.msra.mxu0 %v1866
        %1918 = vmatprep.subr.bf16.mxu0 %v1865
        %1919 = vmatpush1.bf16.msra.mxu0 %v1864
        %1920 = vmatprep.subr.bf16.mxu0 %v1863
        %1921 = vmatpush1.bf16.msra.mxu0 %v1862
        %1922 = vmatprep.subr.bf16.mxu0 %v1861
        %1923 = vmatpush1.bf16.msra.mxu0 %v1860
        %1924 = vmatprep.subr.bf16.mxu0 %v1859
        %1925 = vmatpush1.bf16.msra.mxu0 %v1858
        %1926 = vmatprep.subr.bf16.mxu0 %v1857
        %1927 = vmatpush1.bf16.msra.mxu0 %v1856
        %1928 = vmatprep.subr.bf16.mxu0 %v1855
        %1929 = vmatpush1.bf16.msra.mxu0 %v1854
        %1930 = vmatprep.subr.bf16.mxu0 %v1853
        %1931 = vmatpush1.bf16.msra.mxu0 %v1852
        %1932 = vmatprep.subr.bf16.mxu0 %v1883
        %1933 = vmatpush2.bf16.msra.mxu0 %v1882
        %1934 = vmatprep.subr.bf16.mxu0 %v1881
        %1935 = vmatpush2.bf16.msra.mxu0 %v1880
        %1936 = vmatprep.subr.bf16.mxu0 %v1879
        %1937 = vmatpush2.bf16.msra.mxu0 %v1878
        %1938 = vmatprep.subr.bf16.mxu0 %v1877
        %1939 = vmatpush2.bf16.msra.mxu0 %v1876
        %1940 = vmatprep.subr.bf16.mxu0 %v1875
        %1941 = vmatpush2.bf16.msra.mxu0 %v1874
        %1942 = vmatprep.subr.bf16.mxu0 %v1873
        %1943 = vmatpush2.bf16.msra.mxu0 %v1872
        %1944 = vmatprep.subr.bf16.mxu0 %v1871
        %1945 = vmatpush2.bf16.msra.mxu0 %v1870
        %1946 = vmatprep.subr.bf16.mxu0 %v1869
        %1947 = vmatpush2.bf16.msra.mxu0 %v1868
        %1948 = vmatprep.mubr.bf16.mxu0 %v1711
        %1949 = vmatmul.mubr.bf16.gmra.mxu0 %v1710
        %v1950 = vpop.f32.mrf.mxu0
        %v1951 = vadd.f32 %v1749, %v1950
        %v1952 = vpop.f32.mrf.mxu0
        %v1953 = vadd.f32 %v1753, %v1952
        %v1954 = vpop.f32.mrf.mxu0
        %v1955 = vadd.f32 %v1749, %v1954
        %v1956 = vpop.f32.mrf.mxu0
        %v1957 = vadd.f32 %v1753, %v1956
        %1958 = vdwg.mxu0
        %v1959 = vld [vmem:[%s9] sm:$0x3]
        %v1960 = vld [vmem:[%s10] sm:$0x3]
        %v1961 = vadd.f32 %v1951, %v1953
        %1962 = vadd.xlane.f32.xlu0 %v1961
        %v1963 = vpop.xlane.xlu0 %1962
        %v1964 = vadd.f32 %v1955, %v1957
        %1965 = vadd.xlane.f32.xlu0 %v1964
        %v1966 = vpop.xlane.xlu0 %1965
        %v1967 = vmul.f32 %v1963, %v1137
        %v1968 = vmul.f32 %v1966, %v1137
        %v1969 = vsub.f32 %v1951, %v1967
        %v1970 = vsub.f32 %v1953, %v1967
        %v1971 = vsub.f32 %v1955, %v1968
        %v1972 = vsub.f32 %v1957, %v1968
        %v1973 = vmul.f32 %v1969, %v1969
        %v1974 = vmul.f32 %v1970, %v1970
        %v1975 = vmul.f32 %v1971, %v1971
        %v1976 = vmul.f32 %v1972, %v1972
        %v1977 = vadd.f32 %v1973, %v1974
        %1978 = vadd.xlane.f32.xlu0 %v1977
        %v1979 = vpop.xlane.xlu0 %1978
        %v1980 = vadd.f32 %v1975, %v1976
        %1981 = vadd.xlane.f32.xlu0 %v1980
        %v1982 = vpop.xlane.xlu0 %1981
        %v1983 = vmul.f32 %v1979, %v1137
        %v1984 = vmul.f32 %v1982, %v1137
        %v1985 = vadd.f32 %v1983, 1e-06
        %v1986 = vadd.f32 %v1984, 1e-06
        %v1987 = vrsqrt.pop %v1985
        %v1988 = vrsqrt.pop %v1986
        %v1989 = vmul.f32 %v1969, %v1987
        %v1990 = vmul.f32 %v1970, %v1987
        %v1991 = vmul.f32 %v1971, %v1988
        %v1992 = vmul.f32 %v1972, %v1988
        %v1994 = vlaneseq
        %v1995 = vshrl.u32 %v1994, 7
        %v1996 = vsub.s32 0, %v1995
        %v1997 = vrot.slane %v1959, %v1996
        %v1998 = vlaneseq
        %v1999 = vshrl.u32 %v1998, 7
        %v2000 = vsub.s32 1, %v1999
        %v2001 = vrot.slane %v1959, %v2000
        %v2004 = vmul.f32 %v1989, %v1997
        %v2005 = vmul.f32 %v1990, %v2001
        %v2006 = vmul.f32 %v1991, %v1997
        %v2007 = vmul.f32 %v1992, %v2001
        %v2009 = vlaneseq
        %v2010 = vshrl.u32 %v2009, 7
        %v2011 = vsub.s32 0, %v2010
        %v2012 = vrot.slane %v1960, %v2011
        %v2013 = vlaneseq
        %v2014 = vshrl.u32 %v2013, 7
        %v2015 = vsub.s32 1, %v2014
        %v2016 = vrot.slane %v1960, %v2015
        %v2019 = vadd.f32 %v2004, %v2012
        %v2020 = vadd.f32 %v2005, %v2016
        %v2021 = vadd.f32 %v2006, %v2012
        %v2022 = vadd.f32 %v2007, %v2016
        %v2023 = vpack.c.bf16 %v2021, %v2019
        %v2024 = vpack.c.bf16 %v2022, %v2020
        %v2025 = vld [vmem:[#allocation11] sm:$0xff]
        %v2026 = vld [vmem:[#allocation11 + $0x8] sm:$0xff]
        %v2027 = vld [vmem:[#allocation11 + $0x10] sm:$0xff]
        %v2028 = vld [vmem:[#allocation11 + $0x18] sm:$0xff]
        %v2029 = vld [vmem:[#allocation11 + $0x20] sm:$0xff]
        %v2030 = vld [vmem:[#allocation11 + $0x28] sm:$0xff]
        %v2031 = vld [vmem:[#allocation11 + $0x30] sm:$0xff]
        %v2032 = vld [vmem:[#allocation11 + $0x38] sm:$0xff]
        %v2033 = vld [vmem:[#allocation11 + $0x40] sm:$0xff]
        %v2034 = vld [vmem:[#allocation11 + $0x48] sm:$0xff]
        %v2035 = vld [vmem:[#allocation11 + $0x50] sm:$0xff]
        %v2036 = vld [vmem:[#allocation11 + $0x58] sm:$0xff]
        %v2037 = vld [vmem:[#allocation11 + $0x60] sm:$0xff]
        %v2038 = vld [vmem:[#allocation11 + $0x68] sm:$0xff]
        %v2039 = vld [vmem:[#allocation11 + $0x70] sm:$0xff]
        %v2040 = vld [vmem:[#allocation11 + $0x78] sm:$0xff]
        %v2041 = vld [vmem:[%s12] sm:$0x3]
        %v2043 = vlaneseq
        %v2044 = vshrl.u32 %v2043, 7
        %v2045 = vsub.s32 0, %v2044
        %v2046 = vrot.slane %v2041, %v2045
        %v2047 = vlaneseq
        %v2048 = vshrl.u32 %v2047, 7
        %v2049 = vsub.s32 1, %v2048
        %v2050 = vrot.slane %v2041, %v2049
        %v2069 = vunpack.c.l.b16 %v2025
        %v2070 = vunpack.c.h.b16 %v2025
        %v2071 = vunpack.c.l.b16 %v2026
        %v2072 = vunpack.c.h.b16 %v2026
        %v2073 = vunpack.c.l.b16 %v2027
        %v2074 = vunpack.c.h.b16 %v2027
        %v2075 = vunpack.c.l.b16 %v2028
        %v2076 = vunpack.c.h.b16 %v2028
        %v2077 = vunpack.c.l.b16 %v2029
        %v2078 = vunpack.c.h.b16 %v2029
        %v2079 = vunpack.c.l.b16 %v2030
        %v2080 = vunpack.c.h.b16 %v2030
        %v2081 = vunpack.c.l.b16 %v2031
        %v2082 = vunpack.c.h.b16 %v2031
        %v2083 = vunpack.c.l.b16 %v2032
        %v2084 = vunpack.c.h.b16 %v2032
        %v2085 = vunpack.c.l.b16 %v2033
        %v2086 = vunpack.c.h.b16 %v2033
        %v2087 = vunpack.c.l.b16 %v2034
        %v2088 = vunpack.c.h.b16 %v2034
        %v2089 = vunpack.c.l.b16 %v2035
        %v2090 = vunpack.c.h.b16 %v2035
        %v2091 = vunpack.c.l.b16 %v2036
        %v2092 = vunpack.c.h.b16 %v2036
        %v2093 = vunpack.c.l.b16 %v2037
        %v2094 = vunpack.c.h.b16 %v2037
        %v2095 = vunpack.c.l.b16 %v2038
        %v2096 = vunpack.c.h.b16 %v2038
        %v2097 = vunpack.c.l.b16 %v2039
        %v2098 = vunpack.c.h.b16 %v2039
        %v2099 = vunpack.c.l.b16 %v2040
        %v2100 = vunpack.c.h.b16 %v2040
        %v2101 = vpack.c.b16 %v2071, %v2069
        %v2102 = vpack.c.b16 %v2072, %v2070
        %v2103 = vpack.c.b16 %v2075, %v2073
        %v2104 = vpack.c.b16 %v2076, %v2074
        %v2105 = vpack.c.b16 %v2079, %v2077
        %v2106 = vpack.c.b16 %v2080, %v2078
        %v2107 = vpack.c.b16 %v2083, %v2081
        %v2108 = vpack.c.b16 %v2084, %v2082
        %v2109 = vpack.c.b16 %v2087, %v2085
        %v2110 = vpack.c.b16 %v2088, %v2086
        %v2111 = vpack.c.b16 %v2091, %v2089
        %v2112 = vpack.c.b16 %v2092, %v2090
        %v2113 = vpack.c.b16 %v2095, %v2093
        %v2114 = vpack.c.b16 %v2096, %v2094
        %v2115 = vpack.c.b16 %v2099, %v2097
        %v2116 = vpack.c.b16 %v2100, %v2098
        %2133 = vmatprep.subr.bf16.mxu0 %v2116
        %2134 = vmatpush1.bf16.msra.mxu0 %v2115
        %2135 = vmatprep.subr.bf16.mxu0 %v2114
        %2136 = vmatpush1.bf16.msra.mxu0 %v2113
        %2137 = vmatprep.subr.bf16.mxu0 %v2112
        %2138 = vmatpush1.bf16.msra.mxu0 %v2111
        %2139 = vmatprep.subr.bf16.mxu0 %v2110
        %2140 = vmatpush1.bf16.msra.mxu0 %v2109
        %2141 = vmatprep.subr.bf16.mxu0 %v2108
        %2142 = vmatpush1.bf16.msra.mxu0 %v2107
        %2143 = vmatprep.subr.bf16.mxu0 %v2106
        %2144 = vmatpush1.bf16.msra.mxu0 %v2105
        %2145 = vmatprep.subr.bf16.mxu0 %v2104
        %2146 = vmatpush1.bf16.msra.mxu0 %v2103
        %2147 = vmatprep.subr.bf16.mxu0 %v2102
        %2148 = vmatpush1.bf16.msra.mxu0 %v2101
        %2149 = vmatprep.subr.bf16.mxu0 0
        %2150 = vmatpush2.bf16.msra.mxu0 0
        %2151 = vmatprep.subr.bf16.mxu0 0
        %2152 = vmatpush2.bf16.msra.mxu0 0
        %2153 = vmatprep.subr.bf16.mxu0 0
        %2154 = vmatpush2.bf16.msra.mxu0 0
        %2155 = vmatprep.subr.bf16.mxu0 0
        %2156 = vmatpush2.bf16.msra.mxu0 0
        %2157 = vmatprep.subr.bf16.mxu0 0
        %2158 = vmatpush2.bf16.msra.mxu0 0
        %2159 = vmatprep.subr.bf16.mxu0 0
        %2160 = vmatpush2.bf16.msra.mxu0 0
        %2161 = vmatprep.subr.bf16.mxu0 0
        %2162 = vmatpush2.bf16.msra.mxu0 0
        %2163 = vmatprep.subr.bf16.mxu0 0
        %2164 = vmatpush2.bf16.msra.mxu0 0
        %2165 = vmatprep.mubr.bf16.mxu0 0
        %2166 = vmatmul.mubr.bf16.gmra.mxu0 %v1477
        %v2167 = vpop.f32.mrf.mxu0
        %v2168 = vadd.f32 %v2046, %v2167
        %v2169 = vpop.f32.mrf.mxu0
        %v2170 = vadd.f32 %v2050, %v2169
        %v2171 = vpop.f32.mrf.mxu0
        %v2172 = vadd.f32 %v2046, %v2171
        %v2173 = vpop.f32.mrf.mxu0
        %v2174 = vadd.f32 %v2050, %v2173
        %2175 = vdwg.mxu0
        %v2176 = vmul.f32 %v2168, 0.5
        %v2177 = vmul.f32 %v2170, 0.5
        %v2178 = vmul.f32 %v2172, 0.5
        %v2179 = vmul.f32 %v2174, 0.5
        %v2180 = vmul.f32 %v2168, 0.70710677
        %v2181 = vmul.f32 %v2170, 0.70710677
        %v2182 = vmul.f32 %v2172, 0.70710677
        %v2183 = vmul.f32 %v2174, 0.70710677
        %v2184 = vand.u32 2147483647, %v2180
        %v2185 = vand.u32 2147483647, %v2181
        %v2186 = vand.u32 2147483647, %v2182
        %v2187 = vand.u32 2147483647, %v2183
        %v2188 = vmul.f32 %v2184, 0.3275911
        %v2189 = vmul.f32 %v2185, 0.3275911
        %v2190 = vmul.f32 %v2186, 0.3275911
        %v2191 = vmul.f32 %v2187, 0.3275911
        %v2192 = vadd.f32 %v2188, 1.0
        %v2193 = vadd.f32 %v2189, 1.0
        %v2194 = vadd.f32 %v2190, 1.0
        %v2195 = vadd.f32 %v2191, 1.0
        %v2196 = vrcp.pop %v2192
        %v2197 = vmul.f32 1.0, %v2196
        %v2198 = vrcp.pop %v2193
        %v2199 = vmul.f32 1.0, %v2198
        %v2200 = vrcp.pop %v2194
        %v2201 = vmul.f32 1.0, %v2200
        %v2202 = vrcp.pop %v2195
        %v2203 = vmul.f32 1.0, %v2202
        %v2204 = vmul.f32 %v2197, 1.0614054
        %v2205 = vmul.f32 %v2199, 1.0614054
        %v2206 = vmul.f32 %v2201, 1.0614054
        %v2207 = vmul.f32 %v2203, 1.0614054
        %v2208 = vadd.f32 %v2204, -1.4531521
        %v2209 = vadd.f32 %v2205, -1.4531521
        %v2210 = vadd.f32 %v2206, -1.4531521
        %v2211 = vadd.f32 %v2207, -1.4531521
        %v2212 = vmul.f32 %v2208, %v2197
        %v2213 = vmul.f32 %v2209, %v2199
        %v2214 = vmul.f32 %v2210, %v2201
        %v2215 = vmul.f32 %v2211, %v2203
        %v2216 = vadd.f32 %v2212, 1.4214138
        %v2217 = vadd.f32 %v2213, 1.4214138
        %v2218 = vadd.f32 %v2214, 1.4214138
        %v2219 = vadd.f32 %v2215, 1.4214138
        %v2220 = vmul.f32 %v2216, %v2197
        %v2221 = vmul.f32 %v2217, %v2199
        %v2222 = vmul.f32 %v2218, %v2201
        %v2223 = vmul.f32 %v2219, %v2203
        %v2224 = vadd.f32 %v2220, -0.28449672
        %v2225 = vadd.f32 %v2221, -0.28449672
        %v2226 = vadd.f32 %v2222, -0.28449672
        %v2227 = vadd.f32 %v2223, -0.28449672
        %v2228 = vmul.f32 %v2224, %v2197
        %v2229 = vmul.f32 %v2225, %v2199
        %v2230 = vmul.f32 %v2226, %v2201
        %v2231 = vmul.f32 %v2227, %v2203
        %v2232 = vadd.f32 %v2228, 0.2548296
        %v2233 = vadd.f32 %v2229, 0.2548296
        %v2234 = vadd.f32 %v2230, 0.2548296
        %v2235 = vadd.f32 %v2231, 0.2548296
        %v2236 = vmul.f32 %v2232, %v2197
        %v2237 = vmul.f32 %v2233, %v2199
        %v2238 = vmul.f32 %v2234, %v2201
        %v2239 = vmul.f32 %v2235, %v2203
        %v2240 = vsub.f32 0.0, %v2184
        %v2241 = vsub.f32 0.0, %v2185
        %v2242 = vsub.f32 0.0, %v2186
        %v2243 = vsub.f32 0.0, %v2187
        %v2244 = vmul.f32 %v2240, %v2184
        %v2245 = vmul.f32 %v2241, %v2185
        %v2246 = vmul.f32 %v2242, %v2186
        %v2247 = vmul.f32 %v2243, %v2187
        %v2248 = vmul.f32 %v2244, 1.442695
        %v2249 = vpow.pop %v2248
        %v2250 = vmul.f32 %v2245, 1.442695
        %v2251 = vpow.pop %v2250
        %v2252 = vmul.f32 %v2246, 1.442695
        %v2253 = vpow.pop %v2252
        %v2254 = vmul.f32 %v2247, 1.442695
        %v2255 = vpow.pop %v2254
        %v2256 = vmul.f32 %v2236, %v2249
        %v2257 = vmul.f32 %v2237, %v2251
        %v2258 = vmul.f32 %v2238, %v2253
        %v2259 = vmul.f32 %v2239, %v2255
        %v2260 = vsub.f32 1.0, %v2256
        %v2261 = vsub.f32 1.0, %v2257
        %v2262 = vsub.f32 1.0, %v2258
        %v2263 = vsub.f32 1.0, %v2259
        %vm2264 = vcmp.lt.f32.partialorder %v2180, 0.0
        %vm2265 = vcmp.lt.f32.partialorder %v2181, 0.0
        %vm2266 = vcmp.lt.f32.partialorder %v2182, 0.0
        %vm2267 = vcmp.lt.f32.partialorder %v2183, 0.0
        %v2268 = vsub.f32 0.0, %v2260
        %v2269 = vsub.f32 0.0, %v2261
        %v2270 = vsub.f32 0.0, %v2262
        %v2271 = vsub.f32 0.0, %v2263
        %v2272 = vsel %vm2264, %v2268, %v2260
        %v2273 = vsel %vm2265, %v2269, %v2261
        %v2274 = vsel %vm2266, %v2270, %v2262
        %v2275 = vsel %vm2267, %v2271, %v2263
        %v2276 = vadd.f32 %v2272, 1.0
        %v2277 = vadd.f32 %v2273, 1.0
        %v2278 = vadd.f32 %v2274, 1.0
        %v2279 = vadd.f32 %v2275, 1.0
        %v2280 = vmul.f32 %v2176, %v2276
        %v2281 = vmul.f32 %v2177, %v2277
        %v2282 = vmul.f32 %v2178, %v2278
        %v2283 = vmul.f32 %v2179, %v2279
        %v2284 = vpack.c.bf16 %v2282, %v2280
        %v2285 = vpack.c.bf16 %v2283, %v2281
        %v2286 = vld [vmem:[#allocation13] sm:$0xff]
        %v2287 = vld [vmem:[#allocation13 + $0x8] sm:$0xff]
        %v2288 = vld [vmem:[#allocation13 + $0x10] sm:$0xff]
        %v2289 = vld [vmem:[#allocation13 + $0x18] sm:$0xff]
        %v2290 = vld [vmem:[#allocation13 + $0x20] sm:$0xff]
        %v2291 = vld [vmem:[#allocation13 + $0x28] sm:$0xff]
        %v2292 = vld [vmem:[#allocation13 + $0x30] sm:$0xff]
        %v2293 = vld [vmem:[#allocation13 + $0x38] sm:$0xff]
        %v2294 = vld [vmem:[#allocation13 + $0x40] sm:$0xff]
        %v2295 = vld [vmem:[#allocation13 + $0x48] sm:$0xff]
        %v2296 = vld [vmem:[#allocation13 + $0x50] sm:$0xff]
        %v2297 = vld [vmem:[#allocation13 + $0x58] sm:$0xff]
        %v2298 = vld [vmem:[#allocation13 + $0x60] sm:$0xff]
        %v2299 = vld [vmem:[#allocation13 + $0x68] sm:$0xff]
        %v2300 = vld [vmem:[#allocation13 + $0x70] sm:$0xff]
        %v2301 = vld [vmem:[#allocation13 + $0x78] sm:$0xff]
        %v2302 = vld [vmem:[#allocation13 + $0x80] sm:$0xff]
        %v2303 = vld [vmem:[#allocation13 + $0x88] sm:$0xff]
        %v2304 = vld [vmem:[#allocation13 + $0x90] sm:$0xff]
        %v2305 = vld [vmem:[#allocation13 + $0x98] sm:$0xff]
        %v2306 = vld [vmem:[#allocation13 + $0xa0] sm:$0xff]
        %v2307 = vld [vmem:[#allocation13 + $0xa8] sm:$0xff]
        %v2308 = vld [vmem:[#allocation13 + $0xb0] sm:$0xff]
        %v2309 = vld [vmem:[#allocation13 + $0xb8] sm:$0xff]
        %v2310 = vld [vmem:[#allocation13 + $0xc0] sm:$0xff]
        %v2311 = vld [vmem:[#allocation13 + $0xc8] sm:$0xff]
        %v2312 = vld [vmem:[#allocation13 + $0xd0] sm:$0xff]
        %v2313 = vld [vmem:[#allocation13 + $0xd8] sm:$0xff]
        %v2314 = vld [vmem:[#allocation13 + $0xe0] sm:$0xff]
        %v2315 = vld [vmem:[#allocation13 + $0xe8] sm:$0xff]
        %v2316 = vld [vmem:[#allocation13 + $0xf0] sm:$0xff]
        %v2317 = vld [vmem:[#allocation13 + $0xf8] sm:$0xff]
        %v2318 = vld [vmem:[%s14] sm:$0x3]
        %v2320 = vlaneseq
        %v2321 = vshrl.u32 %v2320, 7
        %v2322 = vsub.s32 0, %v2321
        %v2323 = vrot.slane %v2318, %v2322
        %v2324 = vlaneseq
        %v2325 = vshrl.u32 %v2324, 7
        %v2326 = vsub.s32 1, %v2325
        %v2327 = vrot.slane %v2318, %v2326
        %v2362 = vunpack.c.l.b16 %v2286
        %v2363 = vunpack.c.h.b16 %v2286
        %v2364 = vunpack.c.l.b16 %v2287
        %v2365 = vunpack.c.h.b16 %v2287
        %v2366 = vunpack.c.l.b16 %v2288
        %v2367 = vunpack.c.h.b16 %v2288
        %v2368 = vunpack.c.l.b16 %v2289
        %v2369 = vunpack.c.h.b16 %v2289
        %v2370 = vunpack.c.l.b16 %v2290
        %v2371 = vunpack.c.h.b16 %v2290
        %v2372 = vunpack.c.l.b16 %v2291
        %v2373 = vunpack.c.h.b16 %v2291
        %v2374 = vunpack.c.l.b16 %v2292
        %v2375 = vunpack.c.h.b16 %v2292
        %v2376 = vunpack.c.l.b16 %v2293
        %v2377 = vunpack.c.h.b16 %v2293
        %v2378 = vunpack.c.l.b16 %v2294
        %v2379 = vunpack.c.h.b16 %v2294
        %v2380 = vunpack.c.l.b16 %v2295
        %v2381 = vunpack.c.h.b16 %v2295
        %v2382 = vunpack.c.l.b16 %v2296
        %v2383 = vunpack.c.h.b16 %v2296
        %v2384 = vunpack.c.l.b16 %v2297
        %v2385 = vunpack.c.h.b16 %v2297
        %v2386 = vunpack.c.l.b16 %v2298
        %v2387 = vunpack.c.h.b16 %v2298
        %v2388 = vunpack.c.l.b16 %v2299
        %v2389 = vunpack.c.h.b16 %v2299
        %v2390 = vunpack.c.l.b16 %v2300
        %v2391 = vunpack.c.h.b16 %v2300
        %v2392 = vunpack.c.l.b16 %v2301
        %v2393 = vunpack.c.h.b16 %v2301
        %v2394 = vunpack.c.l.b16 %v2302
        %v2395 = vunpack.c.h.b16 %v2302
        %v2396 = vunpack.c.l.b16 %v2303
        %v2397 = vunpack.c.h.b16 %v2303
        %v2398 = vunpack.c.l.b16 %v2304
        %v2399 = vunpack.c.h.b16 %v2304
        %v2400 = vunpack.c.l.b16 %v2305
        %v2401 = vunpack.c.h.b16 %v2305
        %v2402 = vunpack.c.l.b16 %v2306
        %v2403 = vunpack.c.h.b16 %v2306
        %v2404 = vunpack.c.l.b16 %v2307
        %v2405 = vunpack.c.h.b16 %v2307
        %v2406 = vunpack.c.l.b16 %v2308
        %v2407 = vunpack.c.h.b16 %v2308
        %v2408 = vunpack.c.l.b16 %v2309
        %v2409 = vunpack.c.h.b16 %v2309
        %v2410 = vunpack.c.l.b16 %v2310
        %v2411 = vunpack.c.h.b16 %v2310
        %v2412 = vunpack.c.l.b16 %v2311
        %v2413 = vunpack.c.h.b16 %v2311
        %v2414 = vunpack.c.l.b16 %v2312
        %v2415 = vunpack.c.h.b16 %v2312
        %v2416 = vunpack.c.l.b16 %v2313
        %v2417 = vunpack.c.h.b16 %v2313
        %v2418 = vunpack.c.l.b16 %v2314
        %v2419 = vunpack.c.h.b16 %v2314
        %v2420 = vunpack.c.l.b16 %v2315
        %v2421 = vunpack.c.h.b16 %v2315
        %v2422 = vunpack.c.l.b16 %v2316
        %v2423 = vunpack.c.h.b16 %v2316
        %v2424 = vunpack.c.l.b16 %v2317
        %v2425 = vunpack.c.h.b16 %v2317
        %v2426 = vpack.c.b16 %v2364, %v2362
        %v2427 = vpack.c.b16 %v2365, %v2363
        %v2428 = vpack.c.b16 %v2368, %v2366
        %v2429 = vpack.c.b16 %v2369, %v2367
        %v2430 = vpack.c.b16 %v2372, %v2370
        %v2431 = vpack.c.b16 %v2373, %v2371
        %v2432 = vpack.c.b16 %v2376, %v2374
        %v2433 = vpack.c.b16 %v2377, %v2375
        %v2434 = vpack.c.b16 %v2380, %v2378
        %v2435 = vpack.c.b16 %v2381, %v2379
        %v2436 = vpack.c.b16 %v2384, %v2382
        %v2437 = vpack.c.b16 %v2385, %v2383
        %v2438 = vpack.c.b16 %v2388, %v2386
        %v2439 = vpack.c.b16 %v2389, %v2387
        %v2440 = vpack.c.b16 %v2392, %v2390
        %v2441 = vpack.c.b16 %v2393, %v2391
        %v2442 = vpack.c.b16 %v2396, %v2394
        %v2443 = vpack.c.b16 %v2397, %v2395
        %v2444 = vpack.c.b16 %v2400, %v2398
        %v2445 = vpack.c.b16 %v2401, %v2399
        %v2446 = vpack.c.b16 %v2404, %v2402
        %v2447 = vpack.c.b16 %v2405, %v2403
        %v2448 = vpack.c.b16 %v2408, %v2406
        %v2449 = vpack.c.b16 %v2409, %v2407
        %v2450 = vpack.c.b16 %v2412, %v2410
        %v2451 = vpack.c.b16 %v2413, %v2411
        %v2452 = vpack.c.b16 %v2416, %v2414
        %v2453 = vpack.c.b16 %v2417, %v2415
        %v2454 = vpack.c.b16 %v2420, %v2418
        %v2455 = vpack.c.b16 %v2421, %v2419
        %v2456 = vpack.c.b16 %v2424, %v2422
        %v2457 = vpack.c.b16 %v2425, %v2423
        %2490 = vmatprep.subr.bf16.mxu0 %v2441
        %2491 = vmatpush1.bf16.msra.mxu0 %v2440
        %2492 = vmatprep.subr.bf16.mxu0 %v2439
        %2493 = vmatpush1.bf16.msra.mxu0 %v2438
        %2494 = vmatprep.subr.bf16.mxu0 %v2437
        %2495 = vmatpush1.bf16.msra.mxu0 %v2436
        %2496 = vmatprep.subr.bf16.mxu0 %v2435
        %2497 = vmatpush1.bf16.msra.mxu0 %v2434
        %2498 = vmatprep.subr.bf16.mxu0 %v2433
        %2499 = vmatpush1.bf16.msra.mxu0 %v2432
        %2500 = vmatprep.subr.bf16.mxu0 %v2431
        %2501 = vmatpush1.bf16.msra.mxu0 %v2430
        %2502 = vmatprep.subr.bf16.mxu0 %v2429
        %2503 = vmatpush1.bf16.msra.mxu0 %v2428
        %2504 = vmatprep.subr.bf16.mxu0 %v2427
        %2505 = vmatpush1.bf16.msra.mxu0 %v2426
        %2506 = vmatprep.subr.bf16.mxu0 %v2457
        %2507 = vmatpush2.bf16.msra.mxu0 %v2456
        %2508 = vmatprep.subr.bf16.mxu0 %v2455
        %2509 = vmatpush2.bf16.msra.mxu0 %v2454
        %2510 = vmatprep.subr.bf16.mxu0 %v2453
        %2511 = vmatpush2.bf16.msra.mxu0 %v2452
        %2512 = vmatprep.subr.bf16.mxu0 %v2451
        %2513 = vmatpush2.bf16.msra.mxu0 %v2450
        %2514 = vmatprep.subr.bf16.mxu0 %v2449
        %2515 = vmatpush2.bf16.msra.mxu0 %v2448
        %2516 = vmatprep.subr.bf16.mxu0 %v2447
        %2517 = vmatpush2.bf16.msra.mxu0 %v2446
        %2518 = vmatprep.subr.bf16.mxu0 %v2445
        %2519 = vmatpush2.bf16.msra.mxu0 %v2444
        %2520 = vmatprep.subr.bf16.mxu0 %v2443
        %2521 = vmatpush2.bf16.msra.mxu0 %v2442
        %2522 = vmatprep.mubr.bf16.mxu0 %v2285
        %2523 = vmatmul.mubr.bf16.gmra.mxu0 %v2284
        %v2524 = vpop.f32.mrf.mxu0
        %v2525 = vadd.f32 %v2323, %v2524
        %v2526 = vpop.f32.mrf.mxu0
        %v2527 = vadd.f32 %v2327, %v2526
        %v2528 = vpop.f32.mrf.mxu0
        %v2529 = vadd.f32 %v2323, %v2528
        %v2530 = vpop.f32.mrf.mxu0
        %v2531 = vadd.f32 %v2327, %v2530
        %2532 = vdwg.mxu0
        %v2533 = vld [vmem:[%s15] sm:$0x3]
        %v2534 = vld [vmem:[%s16] sm:$0x3]
        %v2535 = vadd.f32 %v2525, %v2527
        %2536 = vadd.xlane.f32.xlu0 %v2535
        %v2537 = vpop.xlane.xlu0 %2536
        %v2538 = vadd.f32 %v2529, %v2531
        %2539 = vadd.xlane.f32.xlu0 %v2538
        %v2540 = vpop.xlane.xlu0 %2539
        %v2541 = vmul.f32 %v2537, %v1137
        %v2542 = vmul.f32 %v2540, %v1137
        %v2543 = vsub.f32 %v2525, %v2541
        %v2544 = vsub.f32 %v2527, %v2541
        %v2545 = vsub.f32 %v2529, %v2542
        %v2546 = vsub.f32 %v2531, %v2542
        %v2547 = vmul.f32 %v2543, %v2543
        %v2548 = vmul.f32 %v2544, %v2544
        %v2549 = vmul.f32 %v2545, %v2545
        %v2550 = vmul.f32 %v2546, %v2546
        %v2551 = vadd.f32 %v2547, %v2548
        %2552 = vadd.xlane.f32.xlu0 %v2551
        %v2553 = vpop.xlane.xlu0 %2552
        %v2554 = vadd.f32 %v2549, %v2550
        %2555 = vadd.xlane.f32.xlu0 %v2554
        %v2556 = vpop.xlane.xlu0 %2555
        %v2557 = vmul.f32 %v2553, %v1137
        %v2558 = vmul.f32 %v2556, %v1137
        %v2559 = vadd.f32 %v2557, 1e-06
        %v2560 = vadd.f32 %v2558, 1e-06
        %v2561 = vrsqrt.pop %v2559
        %v2562 = vrsqrt.pop %v2560
        %v2563 = vmul.f32 %v2543, %v2561
        %v2564 = vmul.f32 %v2544, %v2561
        %v2565 = vmul.f32 %v2545, %v2562
        %v2566 = vmul.f32 %v2546, %v2562
        %v2568 = vlaneseq
        %v2569 = vshrl.u32 %v2568, 7
        %v2570 = vsub.s32 0, %v2569
        %v2571 = vrot.slane %v2533, %v2570
        %v2572 = vlaneseq
        %v2573 = vshrl.u32 %v2572, 7
        %v2574 = vsub.s32 1, %v2573
        %v2575 = vrot.slane %v2533, %v2574
        %v2578 = vmul.f32 %v2563, %v2571
        %v2579 = vmul.f32 %v2564, %v2575
        %v2580 = vmul.f32 %v2565, %v2571
        %v2581 = vmul.f32 %v2566, %v2575
        %v2583 = vlaneseq
        %v2584 = vshrl.u32 %v2583, 7
        %v2585 = vsub.s32 0, %v2584
        %v2586 = vrot.slane %v2534, %v2585
        %v2587 = vlaneseq
        %v2588 = vshrl.u32 %v2587, 7
        %v2589 = vsub.s32 1, %v2588
        %v2590 = vrot.slane %v2534, %v2589
        %v2593 = vadd.f32 %v2578, %v2586
        %v2594 = vadd.f32 %v2579, %v2590
        %v2595 = vadd.f32 %v2580, %v2586
        %v2596 = vadd.f32 %v2581, %v2590
        %v2597 = vpack.c.bf16 %v2595, %v2593
        %v2598 = vpack.c.bf16 %v2596, %v2594
        %v2599 = vld [vmem:[#allocation16] sm:$0xff]
        %v2600 = vld [vmem:[#allocation16 + $0x8] sm:$0xff]
        %v2601 = vld [vmem:[#allocation16 + $0x10] sm:$0xff]
        %v2602 = vld [vmem:[#allocation16 + $0x18] sm:$0xff]
        %v2603 = vld [vmem:[#allocation16 + $0x20] sm:$0xff]
        %v2604 = vld [vmem:[#allocation16 + $0x28] sm:$0xff]
        %v2605 = vld [vmem:[#allocation16 + $0x30] sm:$0xff]
        %v2606 = vld [vmem:[#allocation16 + $0x38] sm:$0xff]
        %v2607 = vld [vmem:[#allocation16 + $0x40] sm:$0xff]
        %v2608 = vld [vmem:[#allocation16 + $0x48] sm:$0xff]
        %v2609 = vld [vmem:[#allocation16 + $0x50] sm:$0xff]
        %v2610 = vld [vmem:[#allocation16 + $0x58] sm:$0xff]
        %v2611 = vld [vmem:[#allocation16 + $0x60] sm:$0xff]
        %v2612 = vld [vmem:[#allocation16 + $0x68] sm:$0xff]
        %v2613 = vld [vmem:[#allocation16 + $0x70] sm:$0xff]
        %v2614 = vld [vmem:[#allocation16 + $0x78] sm:$0xff]
        %v2615 = vld [vmem:[#allocation16 + $0x80] sm:$0xff]
        %v2616 = vld [vmem:[#allocation16 + $0x88] sm:$0xff]
        %v2617 = vld [vmem:[#allocation16 + $0x90] sm:$0xff]
        %v2618 = vld [vmem:[#allocation16 + $0x98] sm:$0xff]
        %v2619 = vld [vmem:[#allocation16 + $0xa0] sm:$0xff]
        %v2620 = vld [vmem:[#allocation16 + $0xa8] sm:$0xff]
        %v2621 = vld [vmem:[#allocation16 + $0xb0] sm:$0xff]
        %v2622 = vld [vmem:[#allocation16 + $0xb8] sm:$0xff]
        %v2623 = vld [vmem:[#allocation16 + $0xc0] sm:$0xff]
        %v2624 = vld [vmem:[#allocation16 + $0xc8] sm:$0xff]
        %v2625 = vld [vmem:[#allocation16 + $0xd0] sm:$0xff]
        %v2626 = vld [vmem:[#allocation16 + $0xd8] sm:$0xff]
        %v2627 = vld [vmem:[#allocation16 + $0xe0] sm:$0xff]
        %v2628 = vld [vmem:[#allocation16 + $0xe8] sm:$0xff]
        %v2629 = vld [vmem:[#allocation16 + $0xf0] sm:$0xff]
        %v2630 = vld [vmem:[#allocation16 + $0xf8] sm:$0xff]
        %v2631 = vld [vmem:[%s20] sm:$0x3]
        %v2633 = vlaneseq
        %v2634 = vshrl.u32 %v2633, 7
        %v2635 = vsub.s32 0, %v2634
        %v2636 = vrot.slane %v2631, %v2635
        %v2637 = vlaneseq
        %v2638 = vshrl.u32 %v2637, 7
        %v2639 = vsub.s32 1, %v2638
        %v2640 = vrot.slane %v2631, %v2639
        %v2675 = vunpack.c.l.b16 %v2599
        %v2676 = vunpack.c.h.b16 %v2599
        %v2677 = vunpack.c.l.b16 %v2600
        %v2678 = vunpack.c.h.b16 %v2600
        %v2679 = vunpack.c.l.b16 %v2601
        %v2680 = vunpack.c.h.b16 %v2601
        %v2681 = vunpack.c.l.b16 %v2602
        %v2682 = vunpack.c.h.b16 %v2602
        %v2683 = vunpack.c.l.b16 %v2603
        %v2684 = vunpack.c.h.b16 %v2603
        %v2685 = vunpack.c.l.b16 %v2604
        %v2686 = vunpack.c.h.b16 %v2604
        %v2687 = vunpack.c.l.b16 %v2605
        %v2688 = vunpack.c.h.b16 %v2605
        %v2689 = vunpack.c.l.b16 %v2606
        %v2690 = vunpack.c.h.b16 %v2606
        %v2691 = vunpack.c.l.b16 %v2607
        %v2692 = vunpack.c.h.b16 %v2607
        %v2693 = vunpack.c.l.b16 %v2608
        %v2694 = vunpack.c.h.b16 %v2608
        %v2695 = vunpack.c.l.b16 %v2609
        %v2696 = vunpack.c.h.b16 %v2609
        %v2697 = vunpack.c.l.b16 %v2610
        %v2698 = vunpack.c.h.b16 %v2610
        %v2699 = vunpack.c.l.b16 %v2611
        %v2700 = vunpack.c.h.b16 %v2611
        %v2701 = vunpack.c.l.b16 %v2612
        %v2702 = vunpack.c.h.b16 %v2612
        %v2703 = vunpack.c.l.b16 %v2613
        %v2704 = vunpack.c.h.b16 %v2613
        %v2705 = vunpack.c.l.b16 %v2614
        %v2706 = vunpack.c.h.b16 %v2614
        %v2707 = vunpack.c.l.b16 %v2615
        %v2708 = vunpack.c.h.b16 %v2615
        %v2709 = vunpack.c.l.b16 %v2616
        %v2710 = vunpack.c.h.b16 %v2616
        %v2711 = vunpack.c.l.b16 %v2617
        %v2712 = vunpack.c.h.b16 %v2617
        %v2713 = vunpack.c.l.b16 %v2618
        %v2714 = vunpack.c.h.b16 %v2618
        %v2715 = vunpack.c.l.b16 %v2619
        %v2716 = vunpack.c.h.b16 %v2619
        %v2717 = vunpack.c.l.b16 %v2620
        %v2718 = vunpack.c.h.b16 %v2620
        %v2719 = vunpack.c.l.b16 %v2621
        %v2720 = vunpack.c.h.b16 %v2621
        %v2721 = vunpack.c.l.b16 %v2622
        %v2722 = vunpack.c.h.b16 %v2622
        %v2723 = vunpack.c.l.b16 %v2623
        %v2724 = vunpack.c.h.b16 %v2623
        %v2725 = vunpack.c.l.b16 %v2624
        %v2726 = vunpack.c.h.b16 %v2624
        %v2727 = vunpack.c.l.b16 %v2625
        %v2728 = vunpack.c.h.b16 %v2625
        %v2729 = vunpack.c.l.b16 %v2626
        %v2730 = vunpack.c.h.b16 %v2626
        %v2731 = vunpack.c.l.b16 %v2627
        %v2732 = vunpack.c.h.b16 %v2627
        %v2733 = vunpack.c.l.b16 %v2628
        %v2734 = vunpack.c.h.b16 %v2628
        %v2735 = vunpack.c.l.b16 %v2629
        %v2736 = vunpack.c.h.b16 %v2629
        %v2737 = vunpack.c.l.b16 %v2630
        %v2738 = vunpack.c.h.b16 %v2630
        %v2739 = vpack.c.b16 %v2677, %v2675
        %v2740 = vpack.c.b16 %v2678, %v2676
        %v2741 = vpack.c.b16 %v2681, %v2679
        %v2742 = vpack.c.b16 %v2682, %v2680
        %v2743 = vpack.c.b16 %v2685, %v2683
        %v2744 = vpack.c.b16 %v2686, %v2684
        %v2745 = vpack.c.b16 %v2689, %v2687
        %v2746 = vpack.c.b16 %v2690, %v2688
        %v2747 = vpack.c.b16 %v2693, %v2691
        %v2748 = vpack.c.b16 %v2694, %v2692
        %v2749 = vpack.c.b16 %v2697, %v2695
        %v2750 = vpack.c.b16 %v2698, %v2696
        %v2751 = vpack.c.b16 %v2701, %v2699
        %v2752 = vpack.c.b16 %v2702, %v2700
        %v2753 = vpack.c.b16 %v2705, %v2703
        %v2754 = vpack.c.b16 %v2706, %v2704
        %v2755 = vpack.c.b16 %v2709, %v2707
        %v2756 = vpack.c.b16 %v2710, %v2708
        %v2757 = vpack.c.b16 %v2713, %v2711
        %v2758 = vpack.c.b16 %v2714, %v2712
        %v2759 = vpack.c.b16 %v2717, %v2715
        %v2760 = vpack.c.b16 %v2718, %v2716
        %v2761 = vpack.c.b16 %v2721, %v2719
        %v2762 = vpack.c.b16 %v2722, %v2720
        %v2763 = vpack.c.b16 %v2725, %v2723
        %v2764 = vpack.c.b16 %v2726, %v2724
        %v2765 = vpack.c.b16 %v2729, %v2727
        %v2766 = vpack.c.b16 %v2730, %v2728
        %v2767 = vpack.c.b16 %v2733, %v2731
        %v2768 = vpack.c.b16 %v2734, %v2732
        %v2769 = vpack.c.b16 %v2737, %v2735
        %v2770 = vpack.c.b16 %v2738, %v2736
        %2803 = vmatprep.subr.bf16.mxu0 %v2754
        %2804 = vmatpush1.bf16.msra.mxu0 %v2753
        %2805 = vmatprep.subr.bf16.mxu0 %v2752
        %2806 = vmatpush1.bf16.msra.mxu0 %v2751
        %2807 = vmatprep.subr.bf16.mxu0 %v2750
        %2808 = vmatpush1.bf16.msra.mxu0 %v2749
        %2809 = vmatprep.subr.bf16.mxu0 %v2748
        %2810 = vmatpush1.bf16.msra.mxu0 %v2747
        %2811 = vmatprep.subr.bf16.mxu0 %v2746
        %2812 = vmatpush1.bf16.msra.mxu0 %v2745
        %2813 = vmatprep.subr.bf16.mxu0 %v2744
        %2814 = vmatpush1.bf16.msra.mxu0 %v2743
        %2815 = vmatprep.subr.bf16.mxu0 %v2742
        %2816 = vmatpush1.bf16.msra.mxu0 %v2741
        %2817 = vmatprep.subr.bf16.mxu0 %v2740
        %2818 = vmatpush1.bf16.msra.mxu0 %v2739
        %2819 = vmatprep.subr.bf16.mxu0 %v2770
        %2820 = vmatpush2.bf16.msra.mxu0 %v2769
        %2821 = vmatprep.subr.bf16.mxu0 %v2768
        %2822 = vmatpush2.bf16.msra.mxu0 %v2767
        %2823 = vmatprep.subr.bf16.mxu0 %v2766
        %2824 = vmatpush2.bf16.msra.mxu0 %v2765
        %2825 = vmatprep.subr.bf16.mxu0 %v2764
        %2826 = vmatpush2.bf16.msra.mxu0 %v2763
        %2827 = vmatprep.subr.bf16.mxu0 %v2762
        %2828 = vmatpush2.bf16.msra.mxu0 %v2761
        %2829 = vmatprep.subr.bf16.mxu0 %v2760
        %2830 = vmatpush2.bf16.msra.mxu0 %v2759
        %2831 = vmatprep.subr.bf16.mxu0 %v2758
        %2832 = vmatpush2.bf16.msra.mxu0 %v2757
        %2833 = vmatprep.subr.bf16.mxu0 %v2756
        %2834 = vmatpush2.bf16.msra.mxu0 %v2755
        %2835 = vmatprep.mubr.bf16.mxu0 %v2024
        %2836 = vmatmul.mubr.bf16.gmra.mxu0 %v2023
        %v2837 = vpop.f32.mrf.mxu0
        %v2838 = vadd.f32 %v2636, %v2837
        %v2839 = vpop.f32.mrf.mxu0
        %v2840 = vadd.f32 %v2640, %v2839
        %v2841 = vpop.f32.mrf.mxu0
        %v2842 = vadd.f32 %v2636, %v2841
        %v2843 = vpop.f32.mrf.mxu0
        %v2844 = vadd.f32 %v2640, %v2843
        %2845 = vdwg.mxu0
        %v2846 = vld [vmem:[#allocation17] sm:$0xff]
        %v2847 = vld [vmem:[#allocation17 + $0x8] sm:$0xff]
        %v2848 = vld [vmem:[#allocation17 + $0x10] sm:$0xff]
        %v2849 = vld [vmem:[#allocation17 + $0x18] sm:$0xff]
        %v2850 = vld [vmem:[#allocation17 + $0x20] sm:$0xff]
        %v2851 = vld [vmem:[#allocation17 + $0x28] sm:$0xff]
        %v2852 = vld [vmem:[#allocation17 + $0x30] sm:$0xff]
        %v2853 = vld [vmem:[#allocation17 + $0x38] sm:$0xff]
        %v2854 = vld [vmem:[#allocation17 + $0x40] sm:$0xff]
        %v2855 = vld [vmem:[#allocation17 + $0x48] sm:$0xff]
        %v2856 = vld [vmem:[#allocation17 + $0x50] sm:$0xff]
        %v2857 = vld [vmem:[#allocation17 + $0x58] sm:$0xff]
        %v2858 = vld [vmem:[#allocation17 + $0x60] sm:$0xff]
        %v2859 = vld [vmem:[#allocation17 + $0x68] sm:$0xff]
        %v2860 = vld [vmem:[#allocation17 + $0x70] sm:$0xff]
        %v2861 = vld [vmem:[#allocation17 + $0x78] sm:$0xff]
        %v2862 = vld [vmem:[#allocation17 + $0x80] sm:$0xff]
        %v2863 = vld [vmem:[#allocation17 + $0x88] sm:$0xff]
        %v2864 = vld [vmem:[#allocation17 + $0x90] sm:$0xff]
        %v2865 = vld [vmem:[#allocation17 + $0x98] sm:$0xff]
        %v2866 = vld [vmem:[#allocation17 + $0xa0] sm:$0xff]
        %v2867 = vld [vmem:[#allocation17 + $0xa8] sm:$0xff]
        %v2868 = vld [vmem:[#allocation17 + $0xb0] sm:$0xff]
        %v2869 = vld [vmem:[#allocation17 + $0xb8] sm:$0xff]
        %v2870 = vld [vmem:[#allocation17 + $0xc0] sm:$0xff]
        %v2871 = vld [vmem:[#allocation17 + $0xc8] sm:$0xff]
        %v2872 = vld [vmem:[#allocation17 + $0xd0] sm:$0xff]
        %v2873 = vld [vmem:[#allocation17 + $0xd8] sm:$0xff]
        %v2874 = vld [vmem:[#allocation17 + $0xe0] sm:$0xff]
        %v2875 = vld [vmem:[#allocation17 + $0xe8] sm:$0xff]
        %v2876 = vld [vmem:[#allocation17 + $0xf0] sm:$0xff]
        %v2877 = vld [vmem:[#allocation17 + $0xf8] sm:$0xff]
        %v2878 = vld [vmem:[%s22] sm:$0x3]
        %v2880 = vlaneseq
        %v2881 = vshrl.u32 %v2880, 7
        %v2882 = vsub.s32 0, %v2881
        %v2883 = vrot.slane %v2878, %v2882
        %v2884 = vlaneseq
        %v2885 = vshrl.u32 %v2884, 7
        %v2886 = vsub.s32 1, %v2885
        %v2887 = vrot.slane %v2878, %v2886
        %v2922 = vunpack.c.l.b16 %v2846
        %v2923 = vunpack.c.h.b16 %v2846
        %v2924 = vunpack.c.l.b16 %v2847
        %v2925 = vunpack.c.h.b16 %v2847
        %v2926 = vunpack.c.l.b16 %v2848
        %v2927 = vunpack.c.h.b16 %v2848
        %v2928 = vunpack.c.l.b16 %v2849
        %v2929 = vunpack.c.h.b16 %v2849
        %v2930 = vunpack.c.l.b16 %v2850
        %v2931 = vunpack.c.h.b16 %v2850
        %v2932 = vunpack.c.l.b16 %v2851
        %v2933 = vunpack.c.h.b16 %v2851
        %v2934 = vunpack.c.l.b16 %v2852
        %v2935 = vunpack.c.h.b16 %v2852
        %v2936 = vunpack.c.l.b16 %v2853
        %v2937 = vunpack.c.h.b16 %v2853
        %v2938 = vunpack.c.l.b16 %v2854
        %v2939 = vunpack.c.h.b16 %v2854
        %v2940 = vunpack.c.l.b16 %v2855
        %v2941 = vunpack.c.h.b16 %v2855
        %v2942 = vunpack.c.l.b16 %v2856
        %v2943 = vunpack.c.h.b16 %v2856
        %v2944 = vunpack.c.l.b16 %v2857
        %v2945 = vunpack.c.h.b16 %v2857
        %v2946 = vunpack.c.l.b16 %v2858
        %v2947 = vunpack.c.h.b16 %v2858
        %v2948 = vunpack.c.l.b16 %v2859
        %v2949 = vunpack.c.h.b16 %v2859
        %v2950 = vunpack.c.l.b16 %v2860
        %v2951 = vunpack.c.h.b16 %v2860
        %v2952 = vunpack.c.l.b16 %v2861
        %v2953 = vunpack.c.h.b16 %v2861
        %v2954 = vunpack.c.l.b16 %v2862
        %v2955 = vunpack.c.h.b16 %v2862
        %v2956 = vunpack.c.l.b16 %v2863
        %v2957 = vunpack.c.h.b16 %v2863
        %v2958 = vunpack.c.l.b16 %v2864
        %v2959 = vunpack.c.h.b16 %v2864
        %v2960 = vunpack.c.l.b16 %v2865
        %v2961 = vunpack.c.h.b16 %v2865
        %v2962 = vunpack.c.l.b16 %v2866
        %v2963 = vunpack.c.h.b16 %v2866
        %v2964 = vunpack.c.l.b16 %v2867
        %v2965 = vunpack.c.h.b16 %v2867
        %v2966 = vunpack.c.l.b16 %v2868
        %v2967 = vunpack.c.h.b16 %v2868
        %v2968 = vunpack.c.l.b16 %v2869
        %v2969 = vunpack.c.h.b16 %v2869
        %v2970 = vunpack.c.l.b16 %v2870
        %v2971 = vunpack.c.h.b16 %v2870
        %v2972 = vunpack.c.l.b16 %v2871
        %v2973 = vunpack.c.h.b16 %v2871
        %v2974 = vunpack.c.l.b16 %v2872
        %v2975 = vunpack.c.h.b16 %v2872
        %v2976 = vunpack.c.l.b16 %v2873
        %v2977 = vunpack.c.h.b16 %v2873
        %v2978 = vunpack.c.l.b16 %v2874
        %v2979 = vunpack.c.h.b16 %v2874
        %v2980 = vunpack.c.l.b16 %v2875
        %v2981 = vunpack.c.h.b16 %v2875
        %v2982 = vunpack.c.l.b16 %v2876
        %v2983 = vunpack.c.h.b16 %v2876
        %v2984 = vunpack.c.l.b16 %v2877
        %v2985 = vunpack.c.h.b16 %v2877
        %v2986 = vpack.c.b16 %v2924, %v2922
        %v2987 = vpack.c.b16 %v2925, %v2923
        %v2988 = vpack.c.b16 %v2928, %v2926
        %v2989 = vpack.c.b16 %v2929, %v2927
        %v2990 = vpack.c.b16 %v2932, %v2930
        %v2991 = vpack.c.b16 %v2933, %v2931
        %v2992 = vpack.c.b16 %v2936, %v2934
        %v2993 = vpack.c.b16 %v2937, %v2935
        %v2994 = vpack.c.b16 %v2940, %v2938
        %v2995 = vpack.c.b16 %v2941, %v2939
        %v2996 = vpack.c.b16 %v2944, %v2942
        %v2997 = vpack.c.b16 %v2945, %v2943
        %v2998 = vpack.c.b16 %v2948, %v2946
        %v2999 = vpack.c.b16 %v2949, %v2947
        %v3000 = vpack.c.b16 %v2952, %v2950
        %v3001 = vpack.c.b16 %v2953, %v2951
        %v3002 = vpack.c.b16 %v2956, %v2954
        %v3003 = vpack.c.b16 %v2957, %v2955
        %v3004 = vpack.c.b16 %v2960, %v2958
        %v3005 = vpack.c.b16 %v2961, %v2959
        %v3006 = vpack.c.b16 %v2964, %v2962
        %v3007 = vpack.c.b16 %v2965, %v2963
        %v3008 = vpack.c.b16 %v2968, %v2966
        %v3009 = vpack.c.b16 %v2969, %v2967
        %v3010 = vpack.c.b16 %v2972, %v2970
        %v3011 = vpack.c.b16 %v2973, %v2971
        %v3012 = vpack.c.b16 %v2976, %v2974
        %v3013 = vpack.c.b16 %v2977, %v2975
        %v3014 = vpack.c.b16 %v2980, %v2978
        %v3015 = vpack.c.b16 %v2981, %v2979
        %v3016 = vpack.c.b16 %v2984, %v2982
        %v3017 = vpack.c.b16 %v2985, %v2983
        %3050 = vmatprep.subr.bf16.mxu0 %v3001
        %3051 = vmatpush1.bf16.msra.mxu0 %v3000
        %3052 = vmatprep.subr.bf16.mxu0 %v2999
        %3053 = vmatpush1.bf16.msra.mxu0 %v2998
        %3054 = vmatprep.subr.bf16.mxu0 %v2997
        %3055 = vmatpush1.bf16.msra.mxu0 %v2996
        %3056 = vmatprep.subr.bf16.mxu0 %v2995
        %3057 = vmatpush1.bf16.msra.mxu0 %v2994
        %3058 = vmatprep.subr.bf16.mxu0 %v2993
        %3059 = vmatpush1.bf16.msra.mxu0 %v2992
        %3060 = vmatprep.subr.bf16.mxu0 %v2991
        %3061 = vmatpush1.bf16.msra.mxu0 %v2990
        %3062 = vmatprep.subr.bf16.mxu0 %v2989
        %3063 = vmatpush1.bf16.msra.mxu0 %v2988
        %3064 = vmatprep.subr.bf16.mxu0 %v2987
        %3065 = vmatpush1.bf16.msra.mxu0 %v2986
        %3066 = vmatprep.subr.bf16.mxu0 %v3017
        %3067 = vmatpush2.bf16.msra.mxu0 %v3016
        %3068 = vmatprep.subr.bf16.mxu0 %v3015
        %3069 = vmatpush2.bf16.msra.mxu0 %v3014
        %3070 = vmatprep.subr.bf16.mxu0 %v3013
        %3071 = vmatpush2.bf16.msra.mxu0 %v3012
        %3072 = vmatprep.subr.bf16.mxu0 %v3011
        %3073 = vmatpush2.bf16.msra.mxu0 %v3010
        %3074 = vmatprep.subr.bf16.mxu0 %v3009
        %3075 = vmatpush2.bf16.msra.mxu0 %v3008
        %3076 = vmatprep.subr.bf16.mxu0 %v3007
        %3077 = vmatpush2.bf16.msra.mxu0 %v3006
        %3078 = vmatprep.subr.bf16.mxu0 %v3005
        %3079 = vmatpush2.bf16.msra.mxu0 %v3004
        %3080 = vmatprep.subr.bf16.mxu0 %v3003
        %3081 = vmatpush2.bf16.msra.mxu0 %v3002
        %3082 = vmatprep.mubr.bf16.mxu0 %v2598
        %3083 = vmatmul.mubr.bf16.gmra.mxu0 %v2597
        %v3084 = vpop.f32.mrf.mxu0
        %v3085 = vadd.f32 %v2883, %v3084
        %v3086 = vpop.f32.mrf.mxu0
        %v3087 = vadd.f32 %v2887, %v3086
        %v3088 = vpop.f32.mrf.mxu0
        %v3089 = vadd.f32 %v2883, %v3088
        %v3090 = vpop.f32.mrf.mxu0
        %v3091 = vadd.f32 %v2887, %v3090
        %3092 = vdwg.mxu0
        %v3093 = vmul.f32 %v1435, %v2838
        %v3094 = vmul.f32 %v1437, %v2840
        %v3095 = vmul.f32 %v1439, %v2842
        %v3096 = vmul.f32 %v1441, %v2844
        %3097 = vadd.xlane.f32.xlu0 %v3093
        %v3098 = vpop.xlane.xlu0 %3097
        %3099 = vadd.xlane.f32.xlu0 %v3095
        %v3100 = vpop.xlane.xlu0 %3099
        %v3101 = vmul.f32 %v3098, 0.088388346
        %v3102 = vmul.f32 %v3100, 0.088388346
        %3103 = vadd.xlane.f32.xlu0 %v3094
        %v3104 = vpop.xlane.xlu0 %3103
        %3105 = vadd.xlane.f32.xlu0 %v3096
        %v3106 = vpop.xlane.xlu0 %3105
        %v3107 = vmul.f32 %v3104, 0.088388346
        %v3108 = vmul.f32 %v3106, 0.088388346
        %s3109 = scalar_lea.vmem %s870, 8 [#allocation5]
        %v3110 = vld [vmem:[%s3109] sm:$0xf]
        %v3111 = vld [vmem:[%s3109 + $0x4] sm:$0xf]
        %v3114 = vunpack.c.l.b16 %v3110
        %v3115 = vunpack.c.l.b16 %v3111
        %v3116 = vpack.c.b16 %v3115, %v3114
        %3118 = vmatprep.subr.bf16.mxu0 %v1542
        %3119 = vmatpush1.bf16.msra.mxu0 %v1541
        %3120 = vmatprep.subr.bf16.mxu0 %v1540
        %3121 = vmatpush1.bf16.msra.mxu0 %v1539
        %3122 = vmatprep.subr.bf16.mxu0 %v1538
        %3123 = vmatpush1.bf16.msra.mxu0 %v1537
        %3124 = vmatprep.subr.bf16.mxu0 %v1536
        %3125 = vmatpush1.bf16.msra.mxu0 %v1535
        %3126 = vmatprep.subr.bf16.mxu0 %v1534
        %3127 = vmatpush1.bf16.msra.mxu0 %v1533
        %3128 = vmatprep.subr.bf16.mxu0 %v1532
        %3129 = vmatpush1.bf16.msra.mxu0 %v1531
        %3130 = vmatprep.subr.bf16.mxu0 %v1530
        %3131 = vmatpush1.bf16.msra.mxu0 %v1529
        %3132 = vmatprep.subr.bf16.mxu0 %v1528
        %3133 = vmatpush1.bf16.msra.mxu0 %v1527
        %3134 = vmatprep.subr.bf16.mxu0 0
        %3135 = vmatpush2.bf16.msra.mxu0 0
        %3136 = vmatprep.subr.bf16.mxu0 0
        %3137 = vmatpush2.bf16.msra.mxu0 0
        %3138 = vmatprep.subr.bf16.mxu0 0
        %3139 = vmatpush2.bf16.msra.mxu0 0
        %3140 = vmatprep.subr.bf16.mxu0 0
        %3141 = vmatpush2.bf16.msra.mxu0 0
        %3142 = vmatprep.subr.bf16.mxu0 0
        %3143 = vmatpush2.bf16.msra.mxu0 0
        %3144 = vmatprep.subr.bf16.mxu0 0
        %3145 = vmatpush2.bf16.msra.mxu0 0
        %3146 = vmatprep.subr.bf16.mxu0 0
        %3147 = vmatpush2.bf16.msra.mxu0 0
        %3148 = vmatprep.subr.bf16.mxu0 0
        %3149 = vmatpush2.bf16.msra.mxu0 0
        %3150 = vmatprep.mubr.bf16.mxu0 0
        %3151 = vmatmul.mubr.bf16.gmra.mxu0 %v3116
        %v3152 = vpop.f32.mrf.mxu0
        %v3153 = vadd.f32 %v1466, %v3152
        %v3154 = vpop.f32.mrf.mxu0
        %v3155 = vadd.f32 %v1470, %v3154
        %v3156 = vpop.f32.mrf.mxu0
        %v3157 = vadd.f32 %v1466, %v3156
        %v3158 = vpop.f32.mrf.mxu0
        %v3159 = vadd.f32 %v1470, %v3158
        %3160 = vdwg.mxu0
        %v3161 = vmul.f32 %v3153, 0.5
        %v3162 = vmul.f32 %v3155, 0.5
        %v3163 = vmul.f32 %v3157, 0.5
        %v3164 = vmul.f32 %v3159, 0.5
        %v3165 = vmul.f32 %v3153, 0.70710677
        %v3166 = vmul.f32 %v3155, 0.70710677
        %v3167 = vmul.f32 %v3157, 0.70710677
        %v3168 = vmul.f32 %v3159, 0.70710677
        %v3169 = vand.u32 2147483647, %v3165
        %v3170 = vand.u32 2147483647, %v3166
        %v3171 = vand.u32 2147483647, %v3167
        %v3172 = vand.u32 2147483647, %v3168
        %v3173 = vmul.f32 %v3169, 0.3275911
        %v3174 = vmul.f32 %v3170, 0.3275911
        %v3175 = vmul.f32 %v3171, 0.3275911
        %v3176 = vmul.f32 %v3172, 0.3275911
        %v3177 = vadd.f32 %v3173, 1.0
        %v3178 = vadd.f32 %v3174, 1.0
        %v3179 = vadd.f32 %v3175, 1.0
        %v3180 = vadd.f32 %v3176, 1.0
        %v3181 = vrcp.pop %v3177
        %v3182 = vmul.f32 1.0, %v3181
        %v3183 = vrcp.pop %v3178
        %v3184 = vmul.f32 1.0, %v3183
        %v3185 = vrcp.pop %v3179
        %v3186 = vmul.f32 1.0, %v3185
        %v3187 = vrcp.pop %v3180
        %v3188 = vmul.f32 1.0, %v3187
        %v3189 = vmul.f32 %v3182, 1.0614054
        %v3190 = vmul.f32 %v3184, 1.0614054
        %v3191 = vmul.f32 %v3186, 1.0614054
        %v3192 = vmul.f32 %v3188, 1.0614054
        %v3193 = vadd.f32 %v3189, -1.4531521
        %v3194 = vadd.f32 %v3190, -1.4531521
        %v3195 = vadd.f32 %v3191, -1.4531521
        %v3196 = vadd.f32 %v3192, -1.4531521
        %v3197 = vmul.f32 %v3193, %v3182
        %v3198 = vmul.f32 %v3194, %v3184
        %v3199 = vmul.f32 %v3195, %v3186
        %v3200 = vmul.f32 %v3196, %v3188
        %v3201 = vadd.f32 %v3197, 1.4214138
        %v3202 = vadd.f32 %v3198, 1.4214138
        %v3203 = vadd.f32 %v3199, 1.4214138
        %v3204 = vadd.f32 %v3200, 1.4214138
        %v3205 = vmul.f32 %v3201, %v3182
        %v3206 = vmul.f32 %v3202, %v3184
        %v3207 = vmul.f32 %v3203, %v3186
        %v3208 = vmul.f32 %v3204, %v3188
        %v3209 = vadd.f32 %v3205, -0.28449672
        %v3210 = vadd.f32 %v3206, -0.28449672
        %v3211 = vadd.f32 %v3207, -0.28449672
        %v3212 = vadd.f32 %v3208, -0.28449672
        %v3213 = vmul.f32 %v3209, %v3182
        %v3214 = vmul.f32 %v3210, %v3184
        %v3215 = vmul.f32 %v3211, %v3186
        %v3216 = vmul.f32 %v3212, %v3188
        %v3217 = vadd.f32 %v3213, 0.2548296
        %v3218 = vadd.f32 %v3214, 0.2548296
        %v3219 = vadd.f32 %v3215, 0.2548296
        %v3220 = vadd.f32 %v3216, 0.2548296
        %v3221 = vmul.f32 %v3217, %v3182
        %v3222 = vmul.f32 %v3218, %v3184
        %v3223 = vmul.f32 %v3219, %v3186
        %v3224 = vmul.f32 %v3220, %v3188
        %v3225 = vsub.f32 0.0, %v3169
        %v3226 = vsub.f32 0.0, %v3170
        %v3227 = vsub.f32 0.0, %v3171
        %v3228 = vsub.f32 0.0, %v3172
        %v3229 = vmul.f32 %v3225, %v3169
        %v3230 = vmul.f32 %v3226, %v3170
        %v3231 = vmul.f32 %v3227, %v3171
        %v3232 = vmul.f32 %v3228, %v3172
        %v3233 = vmul.f32 %v3229, 1.442695
        %v3234 = vpow.pop %v3233
        %v3235 = vmul.f32 %v3230, 1.442695
        %v3236 = vpow.pop %v3235
        %v3237 = vmul.f32 %v3231, 1.442695
        %v3238 = vpow.pop %v3237
        %v3239 = vmul.f32 %v3232, 1.442695
        %v3240 = vpow.pop %v3239
        %v3241 = vmul.f32 %v3221, %v3234
        %v3242 = vmul.f32 %v3222, %v3236
        %v3243 = vmul.f32 %v3223, %v3238
        %v3244 = vmul.f32 %v3224, %v3240
        %v3245 = vsub.f32 1.0, %v3241
        %v3246 = vsub.f32 1.0, %v3242
        %v3247 = vsub.f32 1.0, %v3243
        %v3248 = vsub.f32 1.0, %v3244
        %vm3249 = vcmp.lt.f32.partialorder %v3165, 0.0
        %vm3250 = vcmp.lt.f32.partialorder %v3166, 0.0
        %vm3251 = vcmp.lt.f32.partialorder %v3167, 0.0
        %vm3252 = vcmp.lt.f32.partialorder %v3168, 0.0
        %v3253 = vsub.f32 0.0, %v3245
        %v3254 = vsub.f32 0.0, %v3246
        %v3255 = vsub.f32 0.0, %v3247
        %v3256 = vsub.f32 0.0, %v3248
        %v3257 = vsel %vm3249, %v3253, %v3245
        %v3258 = vsel %vm3250, %v3254, %v3246
        %v3259 = vsel %vm3251, %v3255, %v3247
        %v3260 = vsel %vm3252, %v3256, %v3248
        %v3261 = vadd.f32 %v3257, 1.0
        %v3262 = vadd.f32 %v3258, 1.0
        %v3263 = vadd.f32 %v3259, 1.0
        %v3264 = vadd.f32 %v3260, 1.0
        %v3265 = vmul.f32 %v3161, %v3261
        %v3266 = vmul.f32 %v3162, %v3262
        %v3267 = vmul.f32 %v3163, %v3263
        %v3268 = vmul.f32 %v3164, %v3264
        %v3269 = vpack.c.bf16 %v3267, %v3265
        %v3270 = vpack.c.bf16 %v3268, %v3266
        %3271 = vmatprep.subr.bf16.mxu0 %v1867
        %3272 = vmatpush1.bf16.msra.mxu0 %v1866
        %3273 = vmatprep.subr.bf16.mxu0 %v1865
        %3274 = vmatpush1.bf16.msra.mxu0 %v1864
        %3275 = vmatprep.subr.bf16.mxu0 %v1863
        %3276 = vmatpush1.bf16.msra.mxu0 %v1862
        %3277 = vmatprep.subr.bf16.mxu0 %v1861
        %3278 = vmatpush1.bf16.msra.mxu0 %v1860
        %3279 = vmatprep.subr.bf16.mxu0 %v1859
        %3280 = vmatpush1.bf16.msra.mxu0 %v1858
        %3281 = vmatprep.subr.bf16.mxu0 %v1857
        %3282 = vmatpush1.bf16.msra.mxu0 %v1856
        %3283 = vmatprep.subr.bf16.mxu0 %v1855
        %3284 = vmatpush1.bf16.msra.mxu0 %v1854
        %3285 = vmatprep.subr.bf16.mxu0 %v1853
        %3286 = vmatpush1.bf16.msra.mxu0 %v1852
        %3287 = vmatprep.subr.bf16.mxu0 %v1883
        %3288 = vmatpush2.bf16.msra.mxu0 %v1882
        %3289 = vmatprep.subr.bf16.mxu0 %v1881
        %3290 = vmatpush2.bf16.msra.mxu0 %v1880
        %3291 = vmatprep.subr.bf16.mxu0 %v1879
        %3292 = vmatpush2.bf16.msra.mxu0 %v1878
        %3293 = vmatprep.subr.bf16.mxu0 %v1877
        %3294 = vmatpush2.bf16.msra.mxu0 %v1876
        %3295 = vmatprep.subr.bf16.mxu0 %v1875
        %3296 = vmatpush2.bf16.msra.mxu0 %v1874
        %3297 = vmatprep.subr.bf16.mxu0 %v1873
        %3298 = vmatpush2.bf16.msra.mxu0 %v1872
        %3299 = vmatprep.subr.bf16.mxu0 %v1871
        %3300 = vmatpush2.bf16.msra.mxu0 %v1870
        %3301 = vmatprep.subr.bf16.mxu0 %v1869
        %3302 = vmatpush2.bf16.msra.mxu0 %v1868
        %3303 = vmatprep.mubr.bf16.mxu0 %v3270
        %3304 = vmatmul.mubr.bf16.gmra.mxu0 %v3269
        %v3305 = vpop.f32.mrf.mxu0
        %v3306 = vadd.f32 %v1749, %v3305
        %v3307 = vpop.f32.mrf.mxu0
        %v3308 = vadd.f32 %v1753, %v3307
        %v3309 = vpop.f32.mrf.mxu0
        %v3310 = vadd.f32 %v1749, %v3309
        %v3311 = vpop.f32.mrf.mxu0
        %v3312 = vadd.f32 %v1753, %v3311
        %3313 = vdwg.mxu0
        %v3314 = vadd.f32 %v3306, %v3308
        %3315 = vadd.xlane.f32.xlu0 %v3314
        %v3316 = vpop.xlane.xlu0 %3315
        %v3317 = vadd.f32 %v3310, %v3312
        %3318 = vadd.xlane.f32.xlu0 %v3317
        %v3319 = vpop.xlane.xlu0 %3318
        %v3320 = vmul.f32 %v3316, %v1137
        %v3321 = vmul.f32 %v3319, %v1137
        %v3322 = vsub.f32 %v3306, %v3320
        %v3323 = vsub.f32 %v3308, %v3320
        %v3324 = vsub.f32 %v3310, %v3321
        %v3325 = vsub.f32 %v3312, %v3321
        %v3326 = vmul.f32 %v3322, %v3322
        %v3327 = vmul.f32 %v3323, %v3323
        %v3328 = vmul.f32 %v3324, %v3324
        %v3329 = vmul.f32 %v3325, %v3325
        %v3330 = vadd.f32 %v3326, %v3327
        %3331 = vadd.xlane.f32.xlu0 %v3330
        %v3332 = vpop.xlane.xlu0 %3331
        %v3333 = vadd.f32 %v3328, %v3329
        %3334 = vadd.xlane.f32.xlu0 %v3333
        %v3335 = vpop.xlane.xlu0 %3334
        %v3336 = vmul.f32 %v3332, %v1137
        %v3337 = vmul.f32 %v3335, %v1137
        %v3338 = vadd.f32 %v3336, 1e-06
        %v3339 = vadd.f32 %v3337, 1e-06
        %v3340 = vrsqrt.pop %v3338
        %v3341 = vrsqrt.pop %v3339
        %v3342 = vmul.f32 %v3322, %v3340
        %v3343 = vmul.f32 %v3323, %v3340
        %v3344 = vmul.f32 %v3324, %v3341
        %v3345 = vmul.f32 %v3325, %v3341
        %v3346 = vmul.f32 %v3342, %v1997
        %v3347 = vmul.f32 %v3343, %v2001
        %v3348 = vmul.f32 %v3344, %v1997
        %v3349 = vmul.f32 %v3345, %v2001
        %v3350 = vadd.f32 %v3346, %v2012
        %v3351 = vadd.f32 %v3347, %v2016
        %v3352 = vadd.f32 %v3348, %v2012
        %v3353 = vadd.f32 %v3349, %v2016
        %v3354 = vpack.c.bf16 %v3352, %v3350
        %v3355 = vpack.c.bf16 %v3353, %v3351
        %3356 = vmatprep.subr.bf16.mxu0 %v2116
        %3357 = vmatpush1.bf16.msra.mxu0 %v2115
        %3358 = vmatprep.subr.bf16.mxu0 %v2114
        %3359 = vmatpush1.bf16.msra.mxu0 %v2113
        %3360 = vmatprep.subr.bf16.mxu0 %v2112
        %3361 = vmatpush1.bf16.msra.mxu0 %v2111
        %3362 = vmatprep.subr.bf16.mxu0 %v2110
        %3363 = vmatpush1.bf16.msra.mxu0 %v2109
        %3364 = vmatprep.subr.bf16.mxu0 %v2108
        %3365 = vmatpush1.bf16.msra.mxu0 %v2107
        %3366 = vmatprep.subr.bf16.mxu0 %v2106
        %3367 = vmatpush1.bf16.msra.mxu0 %v2105
        %3368 = vmatprep.subr.bf16.mxu0 %v2104
        %3369 = vmatpush1.bf16.msra.mxu0 %v2103
        %3370 = vmatprep.subr.bf16.mxu0 %v2102
        %3371 = vmatpush1.bf16.msra.mxu0 %v2101
        %3372 = vmatprep.subr.bf16.mxu0 0
        %3373 = vmatpush2.bf16.msra.mxu0 0
        %3374 = vmatprep.subr.bf16.mxu0 0
        %3375 = vmatpush2.bf16.msra.mxu0 0
        %3376 = vmatprep.subr.bf16.mxu0 0
        %3377 = vmatpush2.bf16.msra.mxu0 0
        %3378 = vmatprep.subr.bf16.mxu0 0
        %3379 = vmatpush2.bf16.msra.mxu0 0
        %3380 = vmatprep.subr.bf16.mxu0 0
        %3381 = vmatpush2.bf16.msra.mxu0 0
        %3382 = vmatprep.subr.bf16.mxu0 0
        %3383 = vmatpush2.bf16.msra.mxu0 0
        %3384 = vmatprep.subr.bf16.mxu0 0
        %3385 = vmatpush2.bf16.msra.mxu0 0
        %3386 = vmatprep.subr.bf16.mxu0 0
        %3387 = vmatpush2.bf16.msra.mxu0 0
        %3388 = vmatprep.mubr.bf16.mxu0 0
        %3389 = vmatmul.mubr.bf16.gmra.mxu0 %v3116
        %v3390 = vpop.f32.mrf.mxu0
        %v3391 = vadd.f32 %v2046, %v3390
        %v3392 = vpop.f32.mrf.mxu0
        %v3393 = vadd.f32 %v2050, %v3392
        %v3394 = vpop.f32.mrf.mxu0
        %v3395 = vadd.f32 %v2046, %v3394
        %v3396 = vpop.f32.mrf.mxu0
        %v3397 = vadd.f32 %v2050, %v3396
        %3398 = vdwg.mxu0
        %v3399 = vmul.f32 %v3391, 0.5
        %v3400 = vmul.f32 %v3393, 0.5
        %v3401 = vmul.f32 %v3395, 0.5
        %v3402 = vmul.f32 %v3397, 0.5
        %v3403 = vmul.f32 %v3391, 0.70710677
        %v3404 = vmul.f32 %v3393, 0.70710677
        %v3405 = vmul.f32 %v3395, 0.70710677
        %v3406 = vmul.f32 %v3397, 0.70710677
        %v3407 = vand.u32 2147483647, %v3403
        %v3408 = vand.u32 2147483647, %v3404
        %v3409 = vand.u32 2147483647, %v3405
        %v3410 = vand.u32 2147483647, %v3406
        %v3411 = vmul.f32 %v3407, 0.3275911
        %v3412 = vmul.f32 %v3408, 0.3275911
        %v3413 = vmul.f32 %v3409, 0.3275911
        %v3414 = vmul.f32 %v3410, 0.3275911
        %v3415 = vadd.f32 %v3411, 1.0
        %v3416 = vadd.f32 %v3412, 1.0
        %v3417 = vadd.f32 %v3413, 1.0
        %v3418 = vadd.f32 %v3414, 1.0
        %v3419 = vrcp.pop %v3415
        %v3420 = vmul.f32 1.0, %v3419
        %v3421 = vrcp.pop %v3416
        %v3422 = vmul.f32 1.0, %v3421
        %v3423 = vrcp.pop %v3417
        %v3424 = vmul.f32 1.0, %v3423
        %v3425 = vrcp.pop %v3418
        %v3426 = vmul.f32 1.0, %v3425
        %v3427 = vmul.f32 %v3420, 1.0614054
        %v3428 = vmul.f32 %v3422, 1.0614054
        %v3429 = vmul.f32 %v3424, 1.0614054
        %v3430 = vmul.f32 %v3426, 1.0614054
        %v3431 = vadd.f32 %v3427, -1.4531521
        %v3432 = vadd.f32 %v3428, -1.4531521
        %v3433 = vadd.f32 %v3429, -1.4531521
        %v3434 = vadd.f32 %v3430, -1.4531521
        %v3435 = vmul.f32 %v3431, %v3420
        %v3436 = vmul.f32 %v3432, %v3422
        %v3437 = vmul.f32 %v3433, %v3424
        %v3438 = vmul.f32 %v3434, %v3426
        %v3439 = vadd.f32 %v3435, 1.4214138
        %v3440 = vadd.f32 %v3436, 1.4214138
        %v3441 = vadd.f32 %v3437, 1.4214138
        %v3442 = vadd.f32 %v3438, 1.4214138
        %v3443 = vmul.f32 %v3439, %v3420
        %v3444 = vmul.f32 %v3440, %v3422
        %v3445 = vmul.f32 %v3441, %v3424
        %v3446 = vmul.f32 %v3442, %v3426
        %v3447 = vadd.f32 %v3443, -0.28449672
        %v3448 = vadd.f32 %v3444, -0.28449672
        %v3449 = vadd.f32 %v3445, -0.28449672
        %v3450 = vadd.f32 %v3446, -0.28449672
        %v3451 = vmul.f32 %v3447, %v3420
        %v3452 = vmul.f32 %v3448, %v3422
        %v3453 = vmul.f32 %v3449, %v3424
        %v3454 = vmul.f32 %v3450, %v3426
        %v3455 = vadd.f32 %v3451, 0.2548296
        %v3456 = vadd.f32 %v3452, 0.2548296
        %v3457 = vadd.f32 %v3453, 0.2548296
        %v3458 = vadd.f32 %v3454, 0.2548296
        %v3459 = vmul.f32 %v3455, %v3420
        %v3460 = vmul.f32 %v3456, %v3422
        %v3461 = vmul.f32 %v3457, %v3424
        %v3462 = vmul.f32 %v3458, %v3426
        %v3463 = vsub.f32 0.0, %v3407
        %v3464 = vsub.f32 0.0, %v3408
        %v3465 = vsub.f32 0.0, %v3409
        %v3466 = vsub.f32 0.0, %v3410
        %v3467 = vmul.f32 %v3463, %v3407
        %v3468 = vmul.f32 %v3464, %v3408
        %v3469 = vmul.f32 %v3465, %v3409
        %v3470 = vmul.f32 %v3466, %v3410
        %v3471 = vmul.f32 %v3467, 1.442695
        %v3472 = vpow.pop %v3471
        %v3473 = vmul.f32 %v3468, 1.442695
        %v3474 = vpow.pop %v3473
        %v3475 = vmul.f32 %v3469, 1.442695
        %v3476 = vpow.pop %v3475
        %v3477 = vmul.f32 %v3470, 1.442695
        %v3478 = vpow.pop %v3477
        %v3479 = vmul.f32 %v3459, %v3472
        %v3480 = vmul.f32 %v3460, %v3474
        %v3481 = vmul.f32 %v3461, %v3476
        %v3482 = vmul.f32 %v3462, %v3478
        %v3483 = vsub.f32 1.0, %v3479
        %v3484 = vsub.f32 1.0, %v3480
        %v3485 = vsub.f32 1.0, %v3481
        %v3486 = vsub.f32 1.0, %v3482
        %vm3487 = vcmp.lt.f32.partialorder %v3403, 0.0
        %vm3488 = vcmp.lt.f32.partialorder %v3404, 0.0
        %vm3489 = vcmp.lt.f32.partialorder %v3405, 0.0
        %vm3490 = vcmp.lt.f32.partialorder %v3406, 0.0
        %v3491 = vsub.f32 0.0, %v3483
        %v3492 = vsub.f32 0.0, %v3484
        %v3493 = vsub.f32 0.0, %v3485
        %v3494 = vsub.f32 0.0, %v3486
        %v3495 = vsel %vm3487, %v3491, %v3483
        %v3496 = vsel %vm3488, %v3492, %v3484
        %v3497 = vsel %vm3489, %v3493, %v3485
        %v3498 = vsel %vm3490, %v3494, %v3486
        %v3499 = vadd.f32 %v3495, 1.0
        %v3500 = vadd.f32 %v3496, 1.0
        %v3501 = vadd.f32 %v3497, 1.0
        %v3502 = vadd.f32 %v3498, 1.0
        %v3503 = vmul.f32 %v3399, %v3499
        %v3504 = vmul.f32 %v3400, %v3500
        %v3505 = vmul.f32 %v3401, %v3501
        %v3506 = vmul.f32 %v3402, %v3502
        %v3507 = vpack.c.bf16 %v3505, %v3503
        %v3508 = vpack.c.bf16 %v3506, %v3504
        %3509 = vmatprep.subr.bf16.mxu0 %v2441
        %3510 = vmatpush1.bf16.msra.mxu0 %v2440
        %3511 = vmatprep.subr.bf16.mxu0 %v2439
        %3512 = vmatpush1.bf16.msra.mxu0 %v2438
        %3513 = vmatprep.subr.bf16.mxu0 %v2437
        %3514 = vmatpush1.bf16.msra.mxu0 %v2436
        %3515 = vmatprep.subr.bf16.mxu0 %v2435
        %3516 = vmatpush1.bf16.msra.mxu0 %v2434
        %3517 = vmatprep.subr.bf16.mxu0 %v2433
        %3518 = vmatpush1.bf16.msra.mxu0 %v2432
        %3519 = vmatprep.subr.bf16.mxu0 %v2431
        %3520 = vmatpush1.bf16.msra.mxu0 %v2430
        %3521 = vmatprep.subr.bf16.mxu0 %v2429
        %3522 = vmatpush1.bf16.msra.mxu0 %v2428
        %3523 = vmatprep.subr.bf16.mxu0 %v2427
        %3524 = vmatpush1.bf16.msra.mxu0 %v2426
        %3525 = vmatprep.subr.bf16.mxu0 %v2457
        %3526 = vmatpush2.bf16.msra.mxu0 %v2456
        %3527 = vmatprep.subr.bf16.mxu0 %v2455
        %3528 = vmatpush2.bf16.msra.mxu0 %v2454
        %3529 = vmatprep.subr.bf16.mxu0 %v2453
        %3530 = vmatpush2.bf16.msra.mxu0 %v2452
        %3531 = vmatprep.subr.bf16.mxu0 %v2451
        %3532 = vmatpush2.bf16.msra.mxu0 %v2450
        %3533 = vmatprep.subr.bf16.mxu0 %v2449
        %3534 = vmatpush2.bf16.msra.mxu0 %v2448
        %3535 = vmatprep.subr.bf16.mxu0 %v2447
        %3536 = vmatpush2.bf16.msra.mxu0 %v2446
        %3537 = vmatprep.subr.bf16.mxu0 %v2445
        %3538 = vmatpush2.bf16.msra.mxu0 %v2444
        %3539 = vmatprep.subr.bf16.mxu0 %v2443
        %3540 = vmatpush2.bf16.msra.mxu0 %v2442
        %3541 = vmatprep.mubr.bf16.mxu0 %v3508
        %3542 = vmatmul.mubr.bf16.gmra.mxu0 %v3507
        %v3543 = vpop.f32.mrf.mxu0
        %v3544 = vadd.f32 %v2323, %v3543
        %v3545 = vpop.f32.mrf.mxu0
        %v3546 = vadd.f32 %v2327, %v3545
        %v3547 = vpop.f32.mrf.mxu0
        %v3548 = vadd.f32 %v2323, %v3547
        %v3549 = vpop.f32.mrf.mxu0
        %v3550 = vadd.f32 %v2327, %v3549
        %3551 = vdwg.mxu0
        %v3552 = vadd.f32 %v3544, %v3546
        %3553 = vadd.xlane.f32.xlu0 %v3552
        %v3554 = vpop.xlane.xlu0 %3553
        %v3555 = vadd.f32 %v3548, %v3550
        %3556 = vadd.xlane.f32.xlu0 %v3555
        %v3557 = vpop.xlane.xlu0 %3556
        %v3558 = vmul.f32 %v3554, %v1137
        %v3559 = vmul.f32 %v3557, %v1137
        %v3560 = vsub.f32 %v3544, %v3558
        %v3561 = vsub.f32 %v3546, %v3558
        %v3562 = vsub.f32 %v3548, %v3559
        %v3563 = vsub.f32 %v3550, %v3559
        %v3564 = vmul.f32 %v3560, %v3560
        %v3565 = vmul.f32 %v3561, %v3561
        %v3566 = vmul.f32 %v3562, %v3562
        %v3567 = vmul.f32 %v3563, %v3563
        %v3568 = vadd.f32 %v3564, %v3565
        %3569 = vadd.xlane.f32.xlu0 %v3568
        %v3570 = vpop.xlane.xlu0 %3569
        %v3571 = vadd.f32 %v3566, %v3567
        %3572 = vadd.xlane.f32.xlu0 %v3571
        %v3573 = vpop.xlane.xlu0 %3572
        %v3574 = vmul.f32 %v3570, %v1137
        %v3575 = vmul.f32 %v3573, %v1137
        %v3576 = vadd.f32 %v3574, 1e-06
        %v3577 = vadd.f32 %v3575, 1e-06
        %v3578 = vrsqrt.pop %v3576
        %v3579 = vrsqrt.pop %v3577
        %v3580 = vmul.f32 %v3560, %v3578
        %v3581 = vmul.f32 %v3561, %v3578
        %v3582 = vmul.f32 %v3562, %v3579
        %v3583 = vmul.f32 %v3563, %v3579
        %v3584 = vmul.f32 %v3580, %v2571
        %v3585 = vmul.f32 %v3581, %v2575
        %v3586 = vmul.f32 %v3582, %v2571
        %v3587 = vmul.f32 %v3583, %v2575
        %v3588 = vadd.f32 %v3584, %v2586
        %v3589 = vadd.f32 %v3585, %v2590
        %v3590 = vadd.f32 %v3586, %v2586
        %v3591 = vadd.f32 %v3587, %v2590
        %v3592 = vpack.c.bf16 %v3590, %v3588
        %v3593 = vpack.c.bf16 %v3591, %v3589
        %3594 = vmatprep.subr.bf16.mxu0 %v2754
        %3595 = vmatpush1.bf16.msra.mxu0 %v2753
        %3596 = vmatprep.subr.bf16.mxu0 %v2752
        %3597 = vmatpush1.bf16.msra.mxu0 %v2751
        %3598 = vmatprep.subr.bf16.mxu0 %v2750
        %3599 = vmatpush1.bf16.msra.mxu0 %v2749
        %3600 = vmatprep.subr.bf16.mxu0 %v2748
        %3601 = vmatpush1.bf16.msra.mxu0 %v2747
        %3602 = vmatprep.subr.bf16.mxu0 %v2746
        %3603 = vmatpush1.bf16.msra.mxu0 %v2745
        %3604 = vmatprep.subr.bf16.mxu0 %v2744
        %3605 = vmatpush1.bf16.msra.mxu0 %v2743
        %3606 = vmatprep.subr.bf16.mxu0 %v2742
        %3607 = vmatpush1.bf16.msra.mxu0 %v2741
        %3608 = vmatprep.subr.bf16.mxu0 %v2740
        %3609 = vmatpush1.bf16.msra.mxu0 %v2739
        %3610 = vmatprep.subr.bf16.mxu0 %v2770
        %3611 = vmatpush2.bf16.msra.mxu0 %v2769
        %3612 = vmatprep.subr.bf16.mxu0 %v2768
        %3613 = vmatpush2.bf16.msra.mxu0 %v2767
        %3614 = vmatprep.subr.bf16.mxu0 %v2766
        %3615 = vmatpush2.bf16.msra.mxu0 %v2765
        %3616 = vmatprep.subr.bf16.mxu0 %v2764
        %3617 = vmatpush2.bf16.msra.mxu0 %v2763
        %3618 = vmatprep.subr.bf16.mxu0 %v2762
        %3619 = vmatpush2.bf16.msra.mxu0 %v2761
        %3620 = vmatprep.subr.bf16.mxu0 %v2760
        %3621 = vmatpush2.bf16.msra.mxu0 %v2759
        %3622 = vmatprep.subr.bf16.mxu0 %v2758
        %3623 = vmatpush2.bf16.msra.mxu0 %v2757
        %3624 = vmatprep.subr.bf16.mxu0 %v2756
        %3625 = vmatpush2.bf16.msra.mxu0 %v2755
        %3626 = vmatprep.mubr.bf16.mxu0 %v3355
        %3627 = vmatmul.mubr.bf16.gmra.mxu0 %v3354
        %v3628 = vpop.f32.mrf.mxu0
        %v3629 = vadd.f32 %v2636, %v3628
        %v3630 = vpop.f32.mrf.mxu0
        %v3631 = vadd.f32 %v2640, %v3630
        %v3632 = vpop.f32.mrf.mxu0
        %v3633 = vadd.f32 %v2636, %v3632
        %v3634 = vpop.f32.mrf.mxu0
        %v3635 = vadd.f32 %v2640, %v3634
        %3636 = vdwg.mxu0
        %3637 = vmatprep.subr.bf16.mxu0 %v3001
        %3638 = vmatpush1.bf16.msra.mxu0 %v3000
        %3639 = vmatprep.subr.bf16.mxu0 %v2999
        %3640 = vmatpush1.bf16.msra.mxu0 %v2998
        %3641 = vmatprep.subr.bf16.mxu0 %v2997
        %3642 = vmatpush1.bf16.msra.mxu0 %v2996
        %3643 = vmatprep.subr.bf16.mxu0 %v2995
        %3644 = vmatpush1.bf16.msra.mxu0 %v2994
        %3645 = vmatprep.subr.bf16.mxu0 %v2993
        %3646 = vmatpush1.bf16.msra.mxu0 %v2992
        %3647 = vmatprep.subr.bf16.mxu0 %v2991
        %3648 = vmatpush1.bf16.msra.mxu0 %v2990
        %3649 = vmatprep.subr.bf16.mxu0 %v2989
        %3650 = vmatpush1.bf16.msra.mxu0 %v2988
        %3651 = vmatprep.subr.bf16.mxu0 %v2987
        %3652 = vmatpush1.bf16.msra.mxu0 %v2986
        %3653 = vmatprep.subr.bf16.mxu0 %v3017
        %3654 = vmatpush2.bf16.msra.mxu0 %v3016
        %3655 = vmatprep.subr.bf16.mxu0 %v3015
        %3656 = vmatpush2.bf16.msra.mxu0 %v3014
        %3657 = vmatprep.subr.bf16.mxu0 %v3013
        %3658 = vmatpush2.bf16.msra.mxu0 %v3012
        %3659 = vmatprep.subr.bf16.mxu0 %v3011
        %3660 = vmatpush2.bf16.msra.mxu0 %v3010
        %3661 = vmatprep.subr.bf16.mxu0 %v3009
        %3662 = vmatpush2.bf16.msra.mxu0 %v3008
        %3663 = vmatprep.subr.bf16.mxu0 %v3007
        %3664 = vmatpush2.bf16.msra.mxu0 %v3006
        %3665 = vmatprep.subr.bf16.mxu0 %v3005
        %3666 = vmatpush2.bf16.msra.mxu0 %v3004
        %3667 = vmatprep.subr.bf16.mxu0 %v3003
        %3668 = vmatpush2.bf16.msra.mxu0 %v3002
        %3669 = vmatprep.mubr.bf16.mxu0 %v3593
        %3670 = vmatmul.mubr.bf16.gmra.mxu0 %v3592
        %v3671 = vpop.f32.mrf.mxu0
        %v3672 = vadd.f32 %v2883, %v3671
        %v3673 = vpop.f32.mrf.mxu0
        %v3674 = vadd.f32 %v2887, %v3673
        %v3675 = vpop.f32.mrf.mxu0
        %v3676 = vadd.f32 %v2883, %v3675
        %v3677 = vpop.f32.mrf.mxu0
        %v3678 = vadd.f32 %v2887, %v3677
        %3679 = vdwg.mxu0
        %v3680 = vmul.f32 %v1435, %v3629
        %v3681 = vmul.f32 %v1437, %v3631
        %v3682 = vmul.f32 %v1439, %v3633
        %v3683 = vmul.f32 %v1441, %v3635
        %3684 = vadd.xlane.f32.xlu0 %v3680
        %v3685 = vpop.xlane.xlu0 %3684
        %3686 = vadd.xlane.f32.xlu0 %v3682
        %v3687 = vpop.xlane.xlu0 %3686
        %v3688 = vmul.f32 %v3685, 0.088388346
        %v3689 = vmul.f32 %v3687, 0.088388346
        %3690 = vadd.xlane.f32.xlu0 %v3681
        %v3691 = vpop.xlane.xlu0 %3690
        %3692 = vadd.xlane.f32.xlu0 %v3683
        %v3693 = vpop.xlane.xlu0 %3692
        %v3694 = vmul.f32 %v3691, 0.088388346
        %v3695 = vmul.f32 %v3693, 0.088388346
        %v3696 = vmax.f32 %v3101, %v3688
        %v3697 = vmax.f32 %v3102, %v3689
        %v3698 = vsub.f32 %v3101, %v3696
        %v3699 = vsub.f32 %v3102, %v3697
        %v3700 = vmul.f32 %v3698, 1.442695
        %v3701 = vpow.pop %v3700
        %v3702 = vmul.f32 %v3699, 1.442695
        %v3703 = vpow.pop %v3702
        %v3704 = vsub.f32 %v3688, %v3696
        %v3705 = vsub.f32 %v3689, %v3697
        %v3706 = vmul.f32 %v3704, 1.442695
        %v3707 = vpow.pop %v3706
        %v3708 = vmul.f32 %v3705, 1.442695
        %v3709 = vpow.pop %v3708
        %v3710 = vadd.f32 %v3701, %v3707
        %v3711 = vadd.f32 %v3703, %v3709
        %v3712 = vmul.f32 %v3085, %v3701
        %v3713 = vmul.f32 %v3089, %v3703
        %v3714 = vmul.f32 %v3672, %v3707
        %v3715 = vmul.f32 %v3676, %v3709
        %v3716 = vadd.f32 %v3712, %v3714
        %v3717 = vadd.f32 %v3713, %v3715
        %v3718 = vmax.f32 %v3107, %v3694
        %v3719 = vmax.f32 %v3108, %v3695
        %v3720 = vsub.f32 %v3107, %v3718
        %v3721 = vsub.f32 %v3108, %v3719
        %v3722 = vmul.f32 %v3720, 1.442695
        %v3723 = vpow.pop %v3722
        %v3724 = vmul.f32 %v3721, 1.442695
        %v3725 = vpow.pop %v3724
        %v3726 = vsub.f32 %v3694, %v3718
        %v3727 = vsub.f32 %v3695, %v3719
        %v3728 = vmul.f32 %v3726, 1.442695
        %v3729 = vpow.pop %v3728
        %v3730 = vmul.f32 %v3727, 1.442695
        %v3731 = vpow.pop %v3730
        %v3732 = vadd.f32 %v3723, %v3729
        %v3733 = vadd.f32 %v3725, %v3731
        %v3734 = vmul.f32 %v3087, %v3723
        %v3735 = vmul.f32 %v3091, %v3725
        %v3736 = vmul.f32 %v3674, %v3729
        %v3737 = vmul.f32 %v3678, %v3731
        %v3738 = vadd.f32 %v3734, %v3736
        %v3739 = vadd.f32 %v3735, %v3737
        %s3740 = scalar_lea.vmem %s870, 16 [#allocation5]
        %v3741 = vld [vmem:[%s3740] sm:$0xf]
        %v3742 = vld [vmem:[%s3740 + $0x4] sm:$0xf]
        %v3745 = vunpack.c.l.b16 %v3741
        %v3746 = vunpack.c.l.b16 %v3742
        %v3747 = vpack.c.b16 %v3746, %v3745
        %3749 = vmatprep.subr.bf16.mxu0 %v1542
        %3750 = vmatpush1.bf16.msra.mxu0 %v1541
        %3751 = vmatprep.subr.bf16.mxu0 %v1540
        %3752 = vmatpush1.bf16.msra.mxu0 %v1539
        %3753 = vmatprep.subr.bf16.mxu0 %v1538
        %3754 = vmatpush1.bf16.msra.mxu0 %v1537
        %3755 = vmatprep.subr.bf16.mxu0 %v1536
        %3756 = vmatpush1.bf16.msra.mxu0 %v1535
        %3757 = vmatprep.subr.bf16.mxu0 %v1534
        %3758 = vmatpush1.bf16.msra.mxu0 %v1533
        %3759 = vmatprep.subr.bf16.mxu0 %v1532
        %3760 = vmatpush1.bf16.msra.mxu0 %v1531
        %3761 = vmatprep.subr.bf16.mxu0 %v1530
        %3762 = vmatpush1.bf16.msra.mxu0 %v1529
        %3763 = vmatprep.subr.bf16.mxu0 %v1528
        %3764 = vmatpush1.bf16.msra.mxu0 %v1527
        %3765 = vmatprep.subr.bf16.mxu0 0
        %3766 = vmatpush2.bf16.msra.mxu0 0
        %3767 = vmatprep.subr.bf16.mxu0 0
        %3768 = vmatpush2.bf16.msra.mxu0 0
        %3769 = vmatprep.subr.bf16.mxu0 0
        %3770 = vmatpush2.bf16.msra.mxu0 0
        %3771 = vmatprep.subr.bf16.mxu0 0
        %3772 = vmatpush2.bf16.msra.mxu0 0
        %3773 = vmatprep.subr.bf16.mxu0 0
        %3774 = vmatpush2.bf16.msra.mxu0 0
        %3775 = vmatprep.subr.bf16.mxu0 0
        %3776 = vmatpush2.bf16.msra.mxu0 0
        %3777 = vmatprep.subr.bf16.mxu0 0
        %3778 = vmatpush2.bf16.msra.mxu0 0
        %3779 = vmatprep.subr.bf16.mxu0 0
        %3780 = vmatpush2.bf16.msra.mxu0 0
        %3781 = vmatprep.mubr.bf16.mxu0 0
        %3782 = vmatmul.mubr.bf16.gmra.mxu0 %v3747
        %v3783 = vpop.f32.mrf.mxu0
        %v3784 = vadd.f32 %v1466, %v3783
        %v3785 = vpop.f32.mrf.mxu0
        %v3786 = vadd.f32 %v1470, %v3785
        %v3787 = vpop.f32.mrf.mxu0
        %v3788 = vadd.f32 %v1466, %v3787
        %v3789 = vpop.f32.mrf.mxu0
        %v3790 = vadd.f32 %v1470, %v3789
        %3791 = vdwg.mxu0
        %v3792 = vmul.f32 %v3784, 0.5
        %v3793 = vmul.f32 %v3786, 0.5
        %v3794 = vmul.f32 %v3788, 0.5
        %v3795 = vmul.f32 %v3790, 0.5
        %v3796 = vmul.f32 %v3784, 0.70710677
        %v3797 = vmul.f32 %v3786, 0.70710677
        %v3798 = vmul.f32 %v3788, 0.70710677
        %v3799 = vmul.f32 %v3790, 0.70710677
        %v3800 = vand.u32 2147483647, %v3796
        %v3801 = vand.u32 2147483647, %v3797
        %v3802 = vand.u32 2147483647, %v3798
        %v3803 = vand.u32 2147483647, %v3799
        %v3804 = vmul.f32 %v3800, 0.3275911
        %v3805 = vmul.f32 %v3801, 0.3275911
        %v3806 = vmul.f32 %v3802, 0.3275911
        %v3807 = vmul.f32 %v3803, 0.3275911
        %v3808 = vadd.f32 %v3804, 1.0
        %v3809 = vadd.f32 %v3805, 1.0
        %v3810 = vadd.f32 %v3806, 1.0
        %v3811 = vadd.f32 %v3807, 1.0
        %v3812 = vrcp.pop %v3808
        %v3813 = vmul.f32 1.0, %v3812
        %v3814 = vrcp.pop %v3809
        %v3815 = vmul.f32 1.0, %v3814
        %v3816 = vrcp.pop %v3810
        %v3817 = vmul.f32 1.0, %v3816
        %v3818 = vrcp.pop %v3811
        %v3819 = vmul.f32 1.0, %v3818
        %v3820 = vmul.f32 %v3813, 1.0614054
        %v3821 = vmul.f32 %v3815, 1.0614054
        %v3822 = vmul.f32 %v3817, 1.0614054
        %v3823 = vmul.f32 %v3819, 1.0614054
        %v3824 = vadd.f32 %v3820, -1.4531521
        %v3825 = vadd.f32 %v3821, -1.4531521
        %v3826 = vadd.f32 %v3822, -1.4531521
        %v3827 = vadd.f32 %v3823, -1.4531521
        %v3828 = vmul.f32 %v3824, %v3813
        %v3829 = vmul.f32 %v3825, %v3815
        %v3830 = vmul.f32 %v3826, %v3817
        %v3831 = vmul.f32 %v3827, %v3819
        %v3832 = vadd.f32 %v3828, 1.4214138
        %v3833 = vadd.f32 %v3829, 1.4214138
        %v3834 = vadd.f32 %v3830, 1.4214138
        %v3835 = vadd.f32 %v3831, 1.4214138
        %v3836 = vmul.f32 %v3832, %v3813
        %v3837 = vmul.f32 %v3833, %v3815
        %v3838 = vmul.f32 %v3834, %v3817
        %v3839 = vmul.f32 %v3835, %v3819
        %v3840 = vadd.f32 %v3836, -0.28449672
        %v3841 = vadd.f32 %v3837, -0.28449672
        %v3842 = vadd.f32 %v3838, -0.28449672
        %v3843 = vadd.f32 %v3839, -0.28449672
        %v3844 = vmul.f32 %v3840, %v3813
        %v3845 = vmul.f32 %v3841, %v3815
        %v3846 = vmul.f32 %v3842, %v3817
        %v3847 = vmul.f32 %v3843, %v3819
        %v3848 = vadd.f32 %v3844, 0.2548296
        %v3849 = vadd.f32 %v3845, 0.2548296
        %v3850 = vadd.f32 %v3846, 0.2548296
        %v3851 = vadd.f32 %v3847, 0.2548296
        %v3852 = vmul.f32 %v3848, %v3813
        %v3853 = vmul.f32 %v3849, %v3815
        %v3854 = vmul.f32 %v3850, %v3817
        %v3855 = vmul.f32 %v3851, %v3819
        %v3856 = vsub.f32 0.0, %v3800
        %v3857 = vsub.f32 0.0, %v3801
        %v3858 = vsub.f32 0.0, %v3802
        %v3859 = vsub.f32 0.0, %v3803
        %v3860 = vmul.f32 %v3856, %v3800
        %v3861 = vmul.f32 %v3857, %v3801
        %v3862 = vmul.f32 %v3858, %v3802
        %v3863 = vmul.f32 %v3859, %v3803
        %v3864 = vmul.f32 %v3860, 1.442695
        %v3865 = vpow.pop %v3864
        %v3866 = vmul.f32 %v3861, 1.442695
        %v3867 = vpow.pop %v3866
        %v3868 = vmul.f32 %v3862, 1.442695
        %v3869 = vpow.pop %v3868
        %v3870 = vmul.f32 %v3863, 1.442695
        %v3871 = vpow.pop %v3870
        %v3872 = vmul.f32 %v3852, %v3865
        %v3873 = vmul.f32 %v3853, %v3867
        %v3874 = vmul.f32 %v3854, %v3869
        %v3875 = vmul.f32 %v3855, %v3871
        %v3876 = vsub.f32 1.0, %v3872
        %v3877 = vsub.f32 1.0, %v3873
        %v3878 = vsub.f32 1.0, %v3874
        %v3879 = vsub.f32 1.0, %v3875
        %vm3880 = vcmp.lt.f32.partialorder %v3796, 0.0
        %vm3881 = vcmp.lt.f32.partialorder %v3797, 0.0
        %vm3882 = vcmp.lt.f32.partialorder %v3798, 0.0
        %vm3883 = vcmp.lt.f32.partialorder %v3799, 0.0
        %v3884 = vsub.f32 0.0, %v3876
        %v3885 = vsub.f32 0.0, %v3877
        %v3886 = vsub.f32 0.0, %v3878
        %v3887 = vsub.f32 0.0, %v3879
        %v3888 = vsel %vm3880, %v3884, %v3876
        %v3889 = vsel %vm3881, %v3885, %v3877
        %v3890 = vsel %vm3882, %v3886, %v3878
        %v3891 = vsel %vm3883, %v3887, %v3879
        %v3892 = vadd.f32 %v3888, 1.0
        %v3893 = vadd.f32 %v3889, 1.0
        %v3894 = vadd.f32 %v3890, 1.0
        %v3895 = vadd.f32 %v3891, 1.0
        %v3896 = vmul.f32 %v3792, %v3892
        %v3897 = vmul.f32 %v3793, %v3893
        %v3898 = vmul.f32 %v3794, %v3894
        %v3899 = vmul.f32 %v3795, %v3895
        %v3900 = vpack.c.bf16 %v3898, %v3896
        %v3901 = vpack.c.bf16 %v3899, %v3897
        %3902 = vmatprep.subr.bf16.mxu0 %v1867
        %3903 = vmatpush1.bf16.msra.mxu0 %v1866
        %3904 = vmatprep.subr.bf16.mxu0 %v1865
        %3905 = vmatpush1.bf16.msra.mxu0 %v1864
        %3906 = vmatprep.subr.bf16.mxu0 %v1863
        %3907 = vmatpush1.bf16.msra.mxu0 %v1862
        %3908 = vmatprep.subr.bf16.mxu0 %v1861
        %3909 = vmatpush1.bf16.msra.mxu0 %v1860
        %3910 = vmatprep.subr.bf16.mxu0 %v1859
        %3911 = vmatpush1.bf16.msra.mxu0 %v1858
        %3912 = vmatprep.subr.bf16.mxu0 %v1857
        %3913 = vmatpush1.bf16.msra.mxu0 %v1856
        %3914 = vmatprep.subr.bf16.mxu0 %v1855
        %3915 = vmatpush1.bf16.msra.mxu0 %v1854
        %3916 = vmatprep.subr.bf16.mxu0 %v1853
        %3917 = vmatpush1.bf16.msra.mxu0 %v1852
        %3918 = vmatprep.subr.bf16.mxu0 %v1883
        %3919 = vmatpush2.bf16.msra.mxu0 %v1882
        %3920 = vmatprep.subr.bf16.mxu0 %v1881
        %3921 = vmatpush2.bf16.msra.mxu0 %v1880
        %3922 = vmatprep.subr.bf16.mxu0 %v1879
        %3923 = vmatpush2.bf16.msra.mxu0 %v1878
        %3924 = vmatprep.subr.bf16.mxu0 %v1877
        %3925 = vmatpush2.bf16.msra.mxu0 %v1876
        %3926 = vmatprep.subr.bf16.mxu0 %v1875
        %3927 = vmatpush2.bf16.msra.mxu0 %v1874
        %3928 = vmatprep.subr.bf16.mxu0 %v1873
        %3929 = vmatpush2.bf16.msra.mxu0 %v1872
        %3930 = vmatprep.subr.bf16.mxu0 %v1871
        %3931 = vmatpush2.bf16.msra.mxu0 %v1870
        %3932 = vmatprep.subr.bf16.mxu0 %v1869
        %3933 = vmatpush2.bf16.msra.mxu0 %v1868
        %3934 = vmatprep.mubr.bf16.mxu0 %v3901
        %3935 = vmatmul.mubr.bf16.gmra.mxu0 %v3900
        %v3936 = vpop.f32.mrf.mxu0
        %v3937 = vadd.f32 %v1749, %v3936
        %v3938 = vpop.f32.mrf.mxu0
        %v3939 = vadd.f32 %v1753, %v3938
        %v3940 = vpop.f32.mrf.mxu0
        %v3941 = vadd.f32 %v1749, %v3940
        %v3942 = vpop.f32.mrf.mxu0
        %v3943 = vadd.f32 %v1753, %v3942
        %3944 = vdwg.mxu0
        %v3945 = vadd.f32 %v3937, %v3939
        %3946 = vadd.xlane.f32.xlu0 %v3945
        %v3947 = vpop.xlane.xlu0 %3946
        %v3948 = vadd.f32 %v3941, %v3943
        %3949 = vadd.xlane.f32.xlu0 %v3948
        %v3950 = vpop.xlane.xlu0 %3949
        %v3951 = vmul.f32 %v3947, %v1137
        %v3952 = vmul.f32 %v3950, %v1137
        %v3953 = vsub.f32 %v3937, %v3951
        %v3954 = vsub.f32 %v3939, %v3951
        %v3955 = vsub.f32 %v3941, %v3952
        %v3956 = vsub.f32 %v3943, %v3952
        %v3957 = vmul.f32 %v3953, %v3953
        %v3958 = vmul.f32 %v3954, %v3954
        %v3959 = vmul.f32 %v3955, %v3955
        %v3960 = vmul.f32 %v3956, %v3956
        %v3961 = vadd.f32 %v3957, %v3958
        %3962 = vadd.xlane.f32.xlu0 %v3961
        %v3963 = vpop.xlane.xlu0 %3962
        %v3964 = vadd.f32 %v3959, %v3960
        %3965 = vadd.xlane.f32.xlu0 %v3964
        %v3966 = vpop.xlane.xlu0 %3965
        %v3967 = vmul.f32 %v3963, %v1137
        %v3968 = vmul.f32 %v3966, %v1137
        %v3969 = vadd.f32 %v3967, 1e-06
        %v3970 = vadd.f32 %v3968, 1e-06
        %v3971 = vrsqrt.pop %v3969
        %v3972 = vrsqrt.pop %v3970
        %v3973 = vmul.f32 %v3953, %v3971
        %v3974 = vmul.f32 %v3954, %v3971
        %v3975 = vmul.f32 %v3955, %v3972
        %v3976 = vmul.f32 %v3956, %v3972
        %v3977 = vmul.f32 %v3973, %v1997
        %v3978 = vmul.f32 %v3974, %v2001
        %v3979 = vmul.f32 %v3975, %v1997
        %v3980 = vmul.f32 %v3976, %v2001
        %v3981 = vadd.f32 %v3977, %v2012
        %v3982 = vadd.f32 %v3978, %v2016
        %v3983 = vadd.f32 %v3979, %v2012
        %v3984 = vadd.f32 %v3980, %v2016
        %v3985 = vpack.c.bf16 %v3983, %v3981
        %v3986 = vpack.c.bf16 %v3984, %v3982
        %3987 = vmatprep.subr.bf16.mxu0 %v2116
        %3988 = vmatpush1.bf16.msra.mxu0 %v2115
        %3989 = vmatprep.subr.bf16.mxu0 %v2114
        %3990 = vmatpush1.bf16.msra.mxu0 %v2113
        %3991 = vmatprep.subr.bf16.mxu0 %v2112
        %3992 = vmatpush1.bf16.msra.mxu0 %v2111
        %3993 = vmatprep.subr.bf16.mxu0 %v2110
        %3994 = vmatpush1.bf16.msra.mxu0 %v2109
        %3995 = vmatprep.subr.bf16.mxu0 %v2108
        %3996 = vmatpush1.bf16.msra.mxu0 %v2107
        %3997 = vmatprep.subr.bf16.mxu0 %v2106
        %3998 = vmatpush1.bf16.msra.mxu0 %v2105
        %3999 = vmatprep.subr.bf16.mxu0 %v2104
        %4000 = vmatpush1.bf16.msra.mxu0 %v2103
        %4001 = vmatprep.subr.bf16.mxu0 %v2102
        %4002 = vmatpush1.bf16.msra.mxu0 %v2101
        %4003 = vmatprep.subr.bf16.mxu0 0
        %4004 = vmatpush2.bf16.msra.mxu0 0
        %4005 = vmatprep.subr.bf16.mxu0 0
        %4006 = vmatpush2.bf16.msra.mxu0 0
        %4007 = vmatprep.subr.bf16.mxu0 0
        %4008 = vmatpush2.bf16.msra.mxu0 0
        %4009 = vmatprep.subr.bf16.mxu0 0
        %4010 = vmatpush2.bf16.msra.mxu0 0
        %4011 = vmatprep.subr.bf16.mxu0 0
        %4012 = vmatpush2.bf16.msra.mxu0 0
        %4013 = vmatprep.subr.bf16.mxu0 0
        %4014 = vmatpush2.bf16.msra.mxu0 0
        %4015 = vmatprep.subr.bf16.mxu0 0
        %4016 = vmatpush2.bf16.msra.mxu0 0
        %4017 = vmatprep.subr.bf16.mxu0 0
        %4018 = vmatpush2.bf16.msra.mxu0 0
        %4019 = vmatprep.mubr.bf16.mxu0 0
        %4020 = vmatmul.mubr.bf16.gmra.mxu0 %v3747
        %v4021 = vpop.f32.mrf.mxu0
        %v4022 = vadd.f32 %v2046, %v4021
        %v4023 = vpop.f32.mrf.mxu0
        %v4024 = vadd.f32 %v2050, %v4023
        %v4025 = vpop.f32.mrf.mxu0
        %v4026 = vadd.f32 %v2046, %v4025
        %v4027 = vpop.f32.mrf.mxu0
        %v4028 = vadd.f32 %v2050, %v4027
        %4029 = vdwg.mxu0
        %v4030 = vmul.f32 %v4022, 0.5
        %v4031 = vmul.f32 %v4024, 0.5
        %v4032 = vmul.f32 %v4026, 0.5
        %v4033 = vmul.f32 %v4028, 0.5
        %v4034 = vmul.f32 %v4022, 0.70710677
        %v4035 = vmul.f32 %v4024, 0.70710677
        %v4036 = vmul.f32 %v4026, 0.70710677
        %v4037 = vmul.f32 %v4028, 0.70710677
        %v4038 = vand.u32 2147483647, %v4034
        %v4039 = vand.u32 2147483647, %v4035
        %v4040 = vand.u32 2147483647, %v4036
        %v4041 = vand.u32 2147483647, %v4037
        %v4042 = vmul.f32 %v4038, 0.3275911
        %v4043 = vmul.f32 %v4039, 0.3275911
        %v4044 = vmul.f32 %v4040, 0.3275911
        %v4045 = vmul.f32 %v4041, 0.3275911
        %v4046 = vadd.f32 %v4042, 1.0
        %v4047 = vadd.f32 %v4043, 1.0
        %v4048 = vadd.f32 %v4044, 1.0
        %v4049 = vadd.f32 %v4045, 1.0
        %v4050 = vrcp.pop %v4046
        %v4051 = vmul.f32 1.0, %v4050
        %v4052 = vrcp.pop %v4047
        %v4053 = vmul.f32 1.0, %v4052
        %v4054 = vrcp.pop %v4048
        %v4055 = vmul.f32 1.0, %v4054
        %v4056 = vrcp.pop %v4049
        %v4057 = vmul.f32 1.0, %v4056
        %v4058 = vmul.f32 %v4051, 1.0614054
        %v4059 = vmul.f32 %v4053, 1.0614054
        %v4060 = vmul.f32 %v4055, 1.0614054
        %v4061 = vmul.f32 %v4057, 1.0614054
        %v4062 = vadd.f32 %v4058, -1.4531521
        %v4063 = vadd.f32 %v4059, -1.4531521
        %v4064 = vadd.f32 %v4060, -1.4531521
        %v4065 = vadd.f32 %v4061, -1.4531521
        %v4066 = vmul.f32 %v4062, %v4051
        %v4067 = vmul.f32 %v4063, %v4053
        %v4068 = vmul.f32 %v4064, %v4055
        %v4069 = vmul.f32 %v4065, %v4057
        %v4070 = vadd.f32 %v4066, 1.4214138
        %v4071 = vadd.f32 %v4067, 1.4214138
        %v4072 = vadd.f32 %v4068, 1.4214138
        %v4073 = vadd.f32 %v4069, 1.4214138
        %v4074 = vmul.f32 %v4070, %v4051
        %v4075 = vmul.f32 %v4071, %v4053
        %v4076 = vmul.f32 %v4072, %v4055
        %v4077 = vmul.f32 %v4073, %v4057
        %v4078 = vadd.f32 %v4074, -0.28449672
        %v4079 = vadd.f32 %v4075, -0.28449672
        %v4080 = vadd.f32 %v4076, -0.28449672
        %v4081 = vadd.f32 %v4077, -0.28449672
        %v4082 = vmul.f32 %v4078, %v4051
        %v4083 = vmul.f32 %v4079, %v4053
        %v4084 = vmul.f32 %v4080, %v4055
        %v4085 = vmul.f32 %v4081, %v4057
        %v4086 = vadd.f32 %v4082, 0.2548296
        %v4087 = vadd.f32 %v4083, 0.2548296
        %v4088 = vadd.f32 %v4084, 0.2548296
        %v4089 = vadd.f32 %v4085, 0.2548296
        %v4090 = vmul.f32 %v4086, %v4051
        %v4091 = vmul.f32 %v4087, %v4053
        %v4092 = vmul.f32 %v4088, %v4055
        %v4093 = vmul.f32 %v4089, %v4057
        %v4094 = vsub.f32 0.0, %v4038
        %v4095 = vsub.f32 0.0, %v4039
        %v4096 = vsub.f32 0.0, %v4040
        %v4097 = vsub.f32 0.0, %v4041
        %v4098 = vmul.f32 %v4094, %v4038
        %v4099 = vmul.f32 %v4095, %v4039
        %v4100 = vmul.f32 %v4096, %v4040
        %v4101 = vmul.f32 %v4097, %v4041
        %v4102 = vmul.f32 %v4098, 1.442695
        %v4103 = vpow.pop %v4102
        %v4104 = vmul.f32 %v4099, 1.442695
        %v4105 = vpow.pop %v4104
        %v4106 = vmul.f32 %v4100, 1.442695
        %v4107 = vpow.pop %v4106
        %v4108 = vmul.f32 %v4101, 1.442695
        %v4109 = vpow.pop %v4108
        %v4110 = vmul.f32 %v4090, %v4103
        %v4111 = vmul.f32 %v4091, %v4105
        %v4112 = vmul.f32 %v4092, %v4107
        %v4113 = vmul.f32 %v4093, %v4109
        %v4114 = vsub.f32 1.0, %v4110
        %v4115 = vsub.f32 1.0, %v4111
        %v4116 = vsub.f32 1.0, %v4112
        %v4117 = vsub.f32 1.0, %v4113
        %vm4118 = vcmp.lt.f32.partialorder %v4034, 0.0
        %vm4119 = vcmp.lt.f32.partialorder %v4035, 0.0
        %vm4120 = vcmp.lt.f32.partialorder %v4036, 0.0
        %vm4121 = vcmp.lt.f32.partialorder %v4037, 0.0
        %v4122 = vsub.f32 0.0, %v4114
        %v4123 = vsub.f32 0.0, %v4115
        %v4124 = vsub.f32 0.0, %v4116
        %v4125 = vsub.f32 0.0, %v4117
        %v4126 = vsel %vm4118, %v4122, %v4114
        %v4127 = vsel %vm4119, %v4123, %v4115
        %v4128 = vsel %vm4120, %v4124, %v4116
        %v4129 = vsel %vm4121, %v4125, %v4117
        %v4130 = vadd.f32 %v4126, 1.0
        %v4131 = vadd.f32 %v4127, 1.0
        %v4132 = vadd.f32 %v4128, 1.0
        %v4133 = vadd.f32 %v4129, 1.0
        %v4134 = vmul.f32 %v4030, %v4130
        %v4135 = vmul.f32 %v4031, %v4131
        %v4136 = vmul.f32 %v4032, %v4132
        %v4137 = vmul.f32 %v4033, %v4133
        %v4138 = vpack.c.bf16 %v4136, %v4134
        %v4139 = vpack.c.bf16 %v4137, %v4135
        %4140 = vmatprep.subr.bf16.mxu0 %v2441
        %4141 = vmatpush1.bf16.msra.mxu0 %v2440
        %4142 = vmatprep.subr.bf16.mxu0 %v2439
        %4143 = vmatpush1.bf16.msra.mxu0 %v2438
        %4144 = vmatprep.subr.bf16.mxu0 %v2437
        %4145 = vmatpush1.bf16.msra.mxu0 %v2436
        %4146 = vmatprep.subr.bf16.mxu0 %v2435
        %4147 = vmatpush1.bf16.msra.mxu0 %v2434
        %4148 = vmatprep.subr.bf16.mxu0 %v2433
        %4149 = vmatpush1.bf16.msra.mxu0 %v2432
        %4150 = vmatprep.subr.bf16.mxu0 %v2431
        %4151 = vmatpush1.bf16.msra.mxu0 %v2430
        %4152 = vmatprep.subr.bf16.mxu0 %v2429
        %4153 = vmatpush1.bf16.msra.mxu0 %v2428
        %4154 = vmatprep.subr.bf16.mxu0 %v2427
        %4155 = vmatpush1.bf16.msra.mxu0 %v2426
        %4156 = vmatprep.subr.bf16.mxu0 %v2457
        %4157 = vmatpush2.bf16.msra.mxu0 %v2456
        %4158 = vmatprep.subr.bf16.mxu0 %v2455
        %4159 = vmatpush2.bf16.msra.mxu0 %v2454
        %4160 = vmatprep.subr.bf16.mxu0 %v2453
        %4161 = vmatpush2.bf16.msra.mxu0 %v2452
        %4162 = vmatprep.subr.bf16.mxu0 %v2451
        %4163 = vmatpush2.bf16.msra.mxu0 %v2450
        %4164 = vmatprep.subr.bf16.mxu0 %v2449
        %4165 = vmatpush2.bf16.msra.mxu0 %v2448
        %4166 = vmatprep.subr.bf16.mxu0 %v2447
        %4167 = vmatpush2.bf16.msra.mxu0 %v2446
        %4168 = vmatprep.subr.bf16.mxu0 %v2445
        %4169 = vmatpush2.bf16.msra.mxu0 %v2444
        %4170 = vmatprep.subr.bf16.mxu0 %v2443
        %4171 = vmatpush2.bf16.msra.mxu0 %v2442
        %4172 = vmatprep.mubr.bf16.mxu0 %v4139
        %4173 = vmatmul.mubr.bf16.gmra.mxu0 %v4138
        %v4174 = vpop.f32.mrf.mxu0
        %v4175 = vadd.f32 %v2323, %v4174
        %v4176 = vpop.f32.mrf.mxu0
        %v4177 = vadd.f32 %v2327, %v4176
        %v4178 = vpop.f32.mrf.mxu0
        %v4179 = vadd.f32 %v2323, %v4178
        %v4180 = vpop.f32.mrf.mxu0
        %v4181 = vadd.f32 %v2327, %v4180
        %4182 = vdwg.mxu0
        %v4183 = vadd.f32 %v4175, %v4177
        %4184 = vadd.xlane.f32.xlu0 %v4183
        %v4185 = vpop.xlane.xlu0 %4184
        %v4186 = vadd.f32 %v4179, %v4181
        %4187 = vadd.xlane.f32.xlu0 %v4186
        %v4188 = vpop.xlane.xlu0 %4187
        %v4189 = vmul.f32 %v4185, %v1137
        %v4190 = vmul.f32 %v4188, %v1137
        %v4191 = vsub.f32 %v4175, %v4189
        %v4192 = vsub.f32 %v4177, %v4189
        %v4193 = vsub.f32 %v4179, %v4190
        %v4194 = vsub.f32 %v4181, %v4190
        %v4195 = vmul.f32 %v4191, %v4191
        %v4196 = vmul.f32 %v4192, %v4192
        %v4197 = vmul.f32 %v4193, %v4193
        %v4198 = vmul.f32 %v4194, %v4194
        %v4199 = vadd.f32 %v4195, %v4196
        %4200 = vadd.xlane.f32.xlu0 %v4199
        %v4201 = vpop.xlane.xlu0 %4200
        %v4202 = vadd.f32 %v4197, %v4198
        %4203 = vadd.xlane.f32.xlu0 %v4202
        %v4204 = vpop.xlane.xlu0 %4203
        %v4205 = vmul.f32 %v4201, %v1137
        %v4206 = vmul.f32 %v4204, %v1137
        %v4207 = vadd.f32 %v4205, 1e-06
        %v4208 = vadd.f32 %v4206, 1e-06
        %v4209 = vrsqrt.pop %v4207
        %v4210 = vrsqrt.pop %v4208
        %v4211 = vmul.f32 %v4191, %v4209
        %v4212 = vmul.f32 %v4192, %v4209
        %v4213 = vmul.f32 %v4193, %v4210
        %v4214 = vmul.f32 %v4194, %v4210
        %v4215 = vmul.f32 %v4211, %v2571
        %v4216 = vmul.f32 %v4212, %v2575
        %v4217 = vmul.f32 %v4213, %v2571
        %v4218 = vmul.f32 %v4214, %v2575
        %v4219 = vadd.f32 %v4215, %v2586
        %v4220 = vadd.f32 %v4216, %v2590
        %v4221 = vadd.f32 %v4217, %v2586
        %v4222 = vadd.f32 %v4218, %v2590
        %v4223 = vpack.c.bf16 %v4221, %v4219
        %v4224 = vpack.c.bf16 %v4222, %v4220
        %4225 = vmatprep.subr.bf16.mxu0 %v2754
        %4226 = vmatpush1.bf16.msra.mxu0 %v2753
        %4227 = vmatprep.subr.bf16.mxu0 %v2752
        %4228 = vmatpush1.bf16.msra.mxu0 %v2751
        %4229 = vmatprep.subr.bf16.mxu0 %v2750
        %4230 = vmatpush1.bf16.msra.mxu0 %v2749
        %4231 = vmatprep.subr.bf16.mxu0 %v2748
        %4232 = vmatpush1.bf16.msra.mxu0 %v2747
        %4233 = vmatprep.subr.bf16.mxu0 %v2746
        %4234 = vmatpush1.bf16.msra.mxu0 %v2745
        %4235 = vmatprep.subr.bf16.mxu0 %v2744
        %4236 = vmatpush1.bf16.msra.mxu0 %v2743
        %4237 = vmatprep.subr.bf16.mxu0 %v2742
        %4238 = vmatpush1.bf16.msra.mxu0 %v2741
        %4239 = vmatprep.subr.bf16.mxu0 %v2740
        %4240 = vmatpush1.bf16.msra.mxu0 %v2739
        %4241 = vmatprep.subr.bf16.mxu0 %v2770
        %4242 = vmatpush2.bf16.msra.mxu0 %v2769
        %4243 = vmatprep.subr.bf16.mxu0 %v2768
        %4244 = vmatpush2.bf16.msra.mxu0 %v2767
        %4245 = vmatprep.subr.bf16.mxu0 %v2766
        %4246 = vmatpush2.bf16.msra.mxu0 %v2765
        %4247 = vmatprep.subr.bf16.mxu0 %v2764
        %4248 = vmatpush2.bf16.msra.mxu0 %v2763
        %4249 = vmatprep.subr.bf16.mxu0 %v2762
        %4250 = vmatpush2.bf16.msra.mxu0 %v2761
        %4251 = vmatprep.subr.bf16.mxu0 %v2760
        %4252 = vmatpush2.bf16.msra.mxu0 %v2759
        %4253 = vmatprep.subr.bf16.mxu0 %v2758
        %4254 = vmatpush2.bf16.msra.mxu0 %v2757
        %4255 = vmatprep.subr.bf16.mxu0 %v2756
        %4256 = vmatpush2.bf16.msra.mxu0 %v2755
        %4257 = vmatprep.mubr.bf16.mxu0 %v3986
        %4258 = vmatmul.mubr.bf16.gmra.mxu0 %v3985
        %v4259 = vpop.f32.mrf.mxu0
        %v4260 = vadd.f32 %v2636, %v4259
        %v4261 = vpop.f32.mrf.mxu0
        %v4262 = vadd.f32 %v2640, %v4261
        %v4263 = vpop.f32.mrf.mxu0
        %v4264 = vadd.f32 %v2636, %v4263
        %v4265 = vpop.f32.mrf.mxu0
        %v4266 = vadd.f32 %v2640, %v4265
        %4267 = vdwg.mxu0
        %4268 = vmatprep.subr.bf16.mxu0 %v3001
        %4269 = vmatpush1.bf16.msra.mxu0 %v3000
        %4270 = vmatprep.subr.bf16.mxu0 %v2999
        %4271 = vmatpush1.bf16.msra.mxu0 %v2998
        %4272 = vmatprep.subr.bf16.mxu0 %v2997
        %4273 = vmatpush1.bf16.msra.mxu0 %v2996
        %4274 = vmatprep.subr.bf16.mxu0 %v2995
        %4275 = vmatpush1.bf16.msra.mxu0 %v2994
        %4276 = vmatprep.subr.bf16.mxu0 %v2993
        %4277 = vmatpush1.bf16.msra.mxu0 %v2992
        %4278 = vmatprep.subr.bf16.mxu0 %v2991
        %4279 = vmatpush1.bf16.msra.mxu0 %v2990
        %4280 = vmatprep.subr.bf16.mxu0 %v2989
        %4281 = vmatpush1.bf16.msra.mxu0 %v2988
        %4282 = vmatprep.subr.bf16.mxu0 %v2987
        %4283 = vmatpush1.bf16.msra.mxu0 %v2986
        %4284 = vmatprep.subr.bf16.mxu0 %v3017
        %4285 = vmatpush2.bf16.msra.mxu0 %v3016
        %4286 = vmatprep.subr.bf16.mxu0 %v3015
        %4287 = vmatpush2.bf16.msra.mxu0 %v3014
        %4288 = vmatprep.subr.bf16.mxu0 %v3013
        %4289 = vmatpush2.bf16.msra.mxu0 %v3012
        %4290 = vmatprep.subr.bf16.mxu0 %v3011
        %4291 = vmatpush2.bf16.msra.mxu0 %v3010
        %4292 = vmatprep.subr.bf16.mxu0 %v3009
        %4293 = vmatpush2.bf16.msra.mxu0 %v3008
        %4294 = vmatprep.subr.bf16.mxu0 %v3007
        %4295 = vmatpush2.bf16.msra.mxu0 %v3006
        %4296 = vmatprep.subr.bf16.mxu0 %v3005
        %4297 = vmatpush2.bf16.msra.mxu0 %v3004
        %4298 = vmatprep.subr.bf16.mxu0 %v3003
        %4299 = vmatpush2.bf16.msra.mxu0 %v3002
        %4300 = vmatprep.mubr.bf16.mxu0 %v4224
        %4301 = vmatmul.mubr.bf16.gmra.mxu0 %v4223
        %v4302 = vpop.f32.mrf.mxu0
        %v4303 = vadd.f32 %v2883, %v4302
        %v4304 = vpop.f32.mrf.mxu0
        %v4305 = vadd.f32 %v2887, %v4304
        %v4306 = vpop.f32.mrf.mxu0
        %v4307 = vadd.f32 %v2883, %v4306
        %v4308 = vpop.f32.mrf.mxu0
        %v4309 = vadd.f32 %v2887, %v4308
        %4310 = vdwg.mxu0
        %v4311 = vmul.f32 %v1435, %v4260
        %v4312 = vmul.f32 %v1437, %v4262
        %v4313 = vmul.f32 %v1439, %v4264
        %v4314 = vmul.f32 %v1441, %v4266
        %4315 = vadd.xlane.f32.xlu0 %v4311
        %v4316 = vpop.xlane.xlu0 %4315
        %4317 = vadd.xlane.f32.xlu0 %v4313
        %v4318 = vpop.xlane.xlu0 %4317
        %v4319 = vmul.f32 %v4316, 0.088388346
        %v4320 = vmul.f32 %v4318, 0.088388346
        %4321 = vadd.xlane.f32.xlu0 %v4312
        %v4322 = vpop.xlane.xlu0 %4321
        %4323 = vadd.xlane.f32.xlu0 %v4314
        %v4324 = vpop.xlane.xlu0 %4323
        %v4325 = vmul.f32 %v4322, 0.088388346
        %v4326 = vmul.f32 %v4324, 0.088388346
        %v4327 = vmax.f32 %v3696, %v4319
        %v4328 = vmax.f32 %v3697, %v4320
        %v4329 = vsub.f32 %v3696, %v4327
        %v4330 = vsub.f32 %v3697, %v4328
        %v4331 = vmul.f32 %v4329, 1.442695
        %v4332 = vpow.pop %v4331
        %v4333 = vmul.f32 %v4330, 1.442695
        %v4334 = vpow.pop %v4333
        %v4335 = vsub.f32 %v4319, %v4327
        %v4336 = vsub.f32 %v4320, %v4328
        %v4337 = vmul.f32 %v4335, 1.442695
        %v4338 = vpow.pop %v4337
        %v4339 = vmul.f32 %v4336, 1.442695
        %v4340 = vpow.pop %v4339
        %v4341 = vmul.f32 %v3710, %v4332
        %v4342 = vmul.f32 %v3711, %v4334
        %v4343 = vadd.f32 %v4341, %v4338
        %v4344 = vadd.f32 %v4342, %v4340
        %v4345 = vmul.f32 %v3716, %v4332
        %v4346 = vmul.f32 %v3717, %v4334
        %v4347 = vmul.f32 %v4303, %v4338
        %v4348 = vmul.f32 %v4307, %v4340
        %v4349 = vadd.f32 %v4345, %v4347
        %v4350 = vadd.f32 %v4346, %v4348
        %v4351 = vmax.f32 %v3718, %v4325
        %v4352 = vmax.f32 %v3719, %v4326
        %v4353 = vsub.f32 %v3718, %v4351
        %v4354 = vsub.f32 %v3719, %v4352
        %v4355 = vmul.f32 %v4353, 1.442695
        %v4356 = vpow.pop %v4355
        %v4357 = vmul.f32 %v4354, 1.442695
        %v4358 = vpow.pop %v4357
        %v4359 = vsub.f32 %v4325, %v4351
        %v4360 = vsub.f32 %v4326, %v4352
        %v4361 = vmul.f32 %v4359, 1.442695
        %v4362 = vpow.pop %v4361
        %v4363 = vmul.f32 %v4360, 1.442695
        %v4364 = vpow.pop %v4363
        %v4365 = vmul.f32 %v3732, %v4356
        %v4366 = vmul.f32 %v3733, %v4358
        %v4367 = vadd.f32 %v4365, %v4362
        %v4368 = vadd.f32 %v4366, %v4364
        %v4369 = vmul.f32 %v3738, %v4356
        %v4370 = vmul.f32 %v3739, %v4358
        %v4371 = vmul.f32 %v4305, %v4362
        %v4372 = vmul.f32 %v4309, %v4364
        %v4373 = vadd.f32 %v4369, %v4371
        %v4374 = vadd.f32 %v4370, %v4372
        %s4375 = scalar_lea.vmem %s870, 24 [#allocation5]
        %v4376 = vld [vmem:[%s4375] sm:$0xf]
        %v4377 = vld [vmem:[%s4375 + $0x4] sm:$0xf]
        %v4380 = vunpack.c.l.b16 %v4376
        %v4381 = vunpack.c.l.b16 %v4377
        %v4382 = vpack.c.b16 %v4381, %v4380
        %4384 = vmatprep.subr.bf16.mxu0 %v1542
        %4385 = vmatpush1.bf16.msra.mxu0 %v1541
        %4386 = vmatprep.subr.bf16.mxu0 %v1540
        %4387 = vmatpush1.bf16.msra.mxu0 %v1539
        %4388 = vmatprep.subr.bf16.mxu0 %v1538
        %4389 = vmatpush1.bf16.msra.mxu0 %v1537
        %4390 = vmatprep.subr.bf16.mxu0 %v1536
        %4391 = vmatpush1.bf16.msra.mxu0 %v1535
        %4392 = vmatprep.subr.bf16.mxu0 %v1534
        %4393 = vmatpush1.bf16.msra.mxu0 %v1533
        %4394 = vmatprep.subr.bf16.mxu0 %v1532
        %4395 = vmatpush1.bf16.msra.mxu0 %v1531
        %4396 = vmatprep.subr.bf16.mxu0 %v1530
        %4397 = vmatpush1.bf16.msra.mxu0 %v1529
        %4398 = vmatprep.subr.bf16.mxu0 %v1528
        %4399 = vmatpush1.bf16.msra.mxu0 %v1527
        %4400 = vmatprep.subr.bf16.mxu0 0
        %4401 = vmatpush2.bf16.msra.mxu0 0
        %4402 = vmatprep.subr.bf16.mxu0 0
        %4403 = vmatpush2.bf16.msra.mxu0 0
        %4404 = vmatprep.subr.bf16.mxu0 0
        %4405 = vmatpush2.bf16.msra.mxu0 0
        %4406 = vmatprep.subr.bf16.mxu0 0
        %4407 = vmatpush2.bf16.msra.mxu0 0
        %4408 = vmatprep.subr.bf16.mxu0 0
        %4409 = vmatpush2.bf16.msra.mxu0 0
        %4410 = vmatprep.subr.bf16.mxu0 0
        %4411 = vmatpush2.bf16.msra.mxu0 0
        %4412 = vmatprep.subr.bf16.mxu0 0
        %4413 = vmatpush2.bf16.msra.mxu0 0
        %4414 = vmatprep.subr.bf16.mxu0 0
        %4415 = vmatpush2.bf16.msra.mxu0 0
        %4416 = vmatprep.mubr.bf16.mxu0 0
        %4417 = vmatmul.mubr.bf16.gmra.mxu0 %v4382
        %v4418 = vpop.f32.mrf.mxu0
        %v4419 = vadd.f32 %v1466, %v4418
        %v4420 = vpop.f32.mrf.mxu0
        %v4421 = vadd.f32 %v1470, %v4420
        %v4422 = vpop.f32.mrf.mxu0
        %v4423 = vadd.f32 %v1466, %v4422
        %v4424 = vpop.f32.mrf.mxu0
        %v4425 = vadd.f32 %v1470, %v4424
        %4426 = vdwg.mxu0
        %v4427 = vmul.f32 %v4419, 0.5
        %v4428 = vmul.f32 %v4421, 0.5
        %v4429 = vmul.f32 %v4423, 0.5
        %v4430 = vmul.f32 %v4425, 0.5
        %v4431 = vmul.f32 %v4419, 0.70710677
        %v4432 = vmul.f32 %v4421, 0.70710677
        %v4433 = vmul.f32 %v4423, 0.70710677
        %v4434 = vmul.f32 %v4425, 0.70710677
        %v4435 = vand.u32 2147483647, %v4431
        %v4436 = vand.u32 2147483647, %v4432
        %v4437 = vand.u32 2147483647, %v4433
        %v4438 = vand.u32 2147483647, %v4434
        %v4439 = vmul.f32 %v4435, 0.3275911
        %v4440 = vmul.f32 %v4436, 0.3275911
        %v4441 = vmul.f32 %v4437, 0.3275911
        %v4442 = vmul.f32 %v4438, 0.3275911
        %v4443 = vadd.f32 %v4439, 1.0
        %v4444 = vadd.f32 %v4440, 1.0
        %v4445 = vadd.f32 %v4441, 1.0
        %v4446 = vadd.f32 %v4442, 1.0
        %v4447 = vrcp.pop %v4443
        %v4448 = vmul.f32 1.0, %v4447
        %v4449 = vrcp.pop %v4444
        %v4450 = vmul.f32 1.0, %v4449
        %v4451 = vrcp.pop %v4445
        %v4452 = vmul.f32 1.0, %v4451
        %v4453 = vrcp.pop %v4446
        %v4454 = vmul.f32 1.0, %v4453
        %v4455 = vmul.f32 %v4448, 1.0614054
        %v4456 = vmul.f32 %v4450, 1.0614054
        %v4457 = vmul.f32 %v4452, 1.0614054
        %v4458 = vmul.f32 %v4454, 1.0614054
        %v4459 = vadd.f32 %v4455, -1.4531521
        %v4460 = vadd.f32 %v4456, -1.4531521
        %v4461 = vadd.f32 %v4457, -1.4531521
        %v4462 = vadd.f32 %v4458, -1.4531521
        %v4463 = vmul.f32 %v4459, %v4448
        %v4464 = vmul.f32 %v4460, %v4450
        %v4465 = vmul.f32 %v4461, %v4452
        %v4466 = vmul.f32 %v4462, %v4454
        %v4467 = vadd.f32 %v4463, 1.4214138
        %v4468 = vadd.f32 %v4464, 1.4214138
        %v4469 = vadd.f32 %v4465, 1.4214138
        %v4470 = vadd.f32 %v4466, 1.4214138
        %v4471 = vmul.f32 %v4467, %v4448
        %v4472 = vmul.f32 %v4468, %v4450
        %v4473 = vmul.f32 %v4469, %v4452
        %v4474 = vmul.f32 %v4470, %v4454
        %v4475 = vadd.f32 %v4471, -0.28449672
        %v4476 = vadd.f32 %v4472, -0.28449672
        %v4477 = vadd.f32 %v4473, -0.28449672
        %v4478 = vadd.f32 %v4474, -0.28449672
        %v4479 = vmul.f32 %v4475, %v4448
        %v4480 = vmul.f32 %v4476, %v4450
        %v4481 = vmul.f32 %v4477, %v4452
        %v4482 = vmul.f32 %v4478, %v4454
        %v4483 = vadd.f32 %v4479, 0.2548296
        %v4484 = vadd.f32 %v4480, 0.2548296
        %v4485 = vadd.f32 %v4481, 0.2548296
        %v4486 = vadd.f32 %v4482, 0.2548296
        %v4487 = vmul.f32 %v4483, %v4448
        %v4488 = vmul.f32 %v4484, %v4450
        %v4489 = vmul.f32 %v4485, %v4452
        %v4490 = vmul.f32 %v4486, %v4454
        %v4491 = vsub.f32 0.0, %v4435
        %v4492 = vsub.f32 0.0, %v4436
        %v4493 = vsub.f32 0.0, %v4437
        %v4494 = vsub.f32 0.0, %v4438
        %v4495 = vmul.f32 %v4491, %v4435
        %v4496 = vmul.f32 %v4492, %v4436
        %v4497 = vmul.f32 %v4493, %v4437
        %v4498 = vmul.f32 %v4494, %v4438
        %v4499 = vmul.f32 %v4495, 1.442695
        %v4500 = vpow.pop %v4499
        %v4501 = vmul.f32 %v4496, 1.442695
        %v4502 = vpow.pop %v4501
        %v4503 = vmul.f32 %v4497, 1.442695
        %v4504 = vpow.pop %v4503
        %v4505 = vmul.f32 %v4498, 1.442695
        %v4506 = vpow.pop %v4505
        %v4507 = vmul.f32 %v4487, %v4500
        %v4508 = vmul.f32 %v4488, %v4502
        %v4509 = vmul.f32 %v4489, %v4504
        %v4510 = vmul.f32 %v4490, %v4506
        %v4511 = vsub.f32 1.0, %v4507
        %v4512 = vsub.f32 1.0, %v4508
        %v4513 = vsub.f32 1.0, %v4509
        %v4514 = vsub.f32 1.0, %v4510
        %vm4515 = vcmp.lt.f32.partialorder %v4431, 0.0
        %vm4516 = vcmp.lt.f32.partialorder %v4432, 0.0
        %vm4517 = vcmp.lt.f32.partialorder %v4433, 0.0
        %vm4518 = vcmp.lt.f32.partialorder %v4434, 0.0
        %v4519 = vsub.f32 0.0, %v4511
        %v4520 = vsub.f32 0.0, %v4512
        %v4521 = vsub.f32 0.0, %v4513
        %v4522 = vsub.f32 0.0, %v4514
        %v4523 = vsel %vm4515, %v4519, %v4511
        %v4524 = vsel %vm4516, %v4520, %v4512
        %v4525 = vsel %vm4517, %v4521, %v4513
        %v4526 = vsel %vm4518, %v4522, %v4514
        %v4527 = vadd.f32 %v4523, 1.0
        %v4528 = vadd.f32 %v4524, 1.0
        %v4529 = vadd.f32 %v4525, 1.0
        %v4530 = vadd.f32 %v4526, 1.0
        %v4531 = vmul.f32 %v4427, %v4527
        %v4532 = vmul.f32 %v4428, %v4528
        %v4533 = vmul.f32 %v4429, %v4529
        %v4534 = vmul.f32 %v4430, %v4530
        %v4535 = vpack.c.bf16 %v4533, %v4531
        %v4536 = vpack.c.bf16 %v4534, %v4532
        %4537 = vmatprep.subr.bf16.mxu0 %v1867
        %4538 = vmatpush1.bf16.msra.mxu0 %v1866
        %4539 = vmatprep.subr.bf16.mxu0 %v1865
        %4540 = vmatpush1.bf16.msra.mxu0 %v1864
        %4541 = vmatprep.subr.bf16.mxu0 %v1863
        %4542 = vmatpush1.bf16.msra.mxu0 %v1862
        %4543 = vmatprep.subr.bf16.mxu0 %v1861
        %4544 = vmatpush1.bf16.msra.mxu0 %v1860
        %4545 = vmatprep.subr.bf16.mxu0 %v1859
        %4546 = vmatpush1.bf16.msra.mxu0 %v1858
        %4547 = vmatprep.subr.bf16.mxu0 %v1857
        %4548 = vmatpush1.bf16.msra.mxu0 %v1856
        %4549 = vmatprep.subr.bf16.mxu0 %v1855
        %4550 = vmatpush1.bf16.msra.mxu0 %v1854
        %4551 = vmatprep.subr.bf16.mxu0 %v1853
        %4552 = vmatpush1.bf16.msra.mxu0 %v1852
        %4553 = vmatprep.subr.bf16.mxu0 %v1883
        %4554 = vmatpush2.bf16.msra.mxu0 %v1882
        %4555 = vmatprep.subr.bf16.mxu0 %v1881
        %4556 = vmatpush2.bf16.msra.mxu0 %v1880
        %4557 = vmatprep.subr.bf16.mxu0 %v1879
        %4558 = vmatpush2.bf16.msra.mxu0 %v1878
        %4559 = vmatprep.subr.bf16.mxu0 %v1877
        %4560 = vmatpush2.bf16.msra.mxu0 %v1876
        %4561 = vmatprep.subr.bf16.mxu0 %v1875
        %4562 = vmatpush2.bf16.msra.mxu0 %v1874
        %4563 = vmatprep.subr.bf16.mxu0 %v1873
        %4564 = vmatpush2.bf16.msra.mxu0 %v1872
        %4565 = vmatprep.subr.bf16.mxu0 %v1871
        %4566 = vmatpush2.bf16.msra.mxu0 %v1870
        %4567 = vmatprep.subr.bf16.mxu0 %v1869
        %4568 = vmatpush2.bf16.msra.mxu0 %v1868
        %4569 = vmatprep.mubr.bf16.mxu0 %v4536
        %4570 = vmatmul.mubr.bf16.gmra.mxu0 %v4535
        %v4571 = vpop.f32.mrf.mxu0
        %v4572 = vadd.f32 %v1749, %v4571
        %v4573 = vpop.f32.mrf.mxu0
        %v4574 = vadd.f32 %v1753, %v4573
        %v4575 = vpop.f32.mrf.mxu0
        %v4576 = vadd.f32 %v1749, %v4575
        %v4577 = vpop.f32.mrf.mxu0
        %v4578 = vadd.f32 %v1753, %v4577
        %4579 = vdwg.mxu0
        %v4580 = vadd.f32 %v4572, %v4574
        %4581 = vadd.xlane.f32.xlu0 %v4580
        %v4582 = vpop.xlane.xlu0 %4581
        %v4583 = vadd.f32 %v4576, %v4578
        %4584 = vadd.xlane.f32.xlu0 %v4583
        %v4585 = vpop.xlane.xlu0 %4584
        %v4586 = vmul.f32 %v4582, %v1137
        %v4587 = vmul.f32 %v4585, %v1137
        %v4588 = vsub.f32 %v4572, %v4586
        %v4589 = vsub.f32 %v4574, %v4586
        %v4590 = vsub.f32 %v4576, %v4587
        %v4591 = vsub.f32 %v4578, %v4587
        %v4592 = vmul.f32 %v4588, %v4588
        %v4593 = vmul.f32 %v4589, %v4589
        %v4594 = vmul.f32 %v4590, %v4590
        %v4595 = vmul.f32 %v4591, %v4591
        %v4596 = vadd.f32 %v4592, %v4593
        %4597 = vadd.xlane.f32.xlu0 %v4596
        %v4598 = vpop.xlane.xlu0 %4597
        %v4599 = vadd.f32 %v4594, %v4595
        %4600 = vadd.xlane.f32.xlu0 %v4599
        %v4601 = vpop.xlane.xlu0 %4600
        %v4602 = vmul.f32 %v4598, %v1137
        %v4603 = vmul.f32 %v4601, %v1137
        %v4604 = vadd.f32 %v4602, 1e-06
        %v4605 = vadd.f32 %v4603, 1e-06
        %v4606 = vrsqrt.pop %v4604
        %v4607 = vrsqrt.pop %v4605
        %v4608 = vmul.f32 %v4588, %v4606
        %v4609 = vmul.f32 %v4589, %v4606
        %v4610 = vmul.f32 %v4590, %v4607
        %v4611 = vmul.f32 %v4591, %v4607
        %v4612 = vmul.f32 %v4608, %v1997
        %v4613 = vmul.f32 %v4609, %v2001
        %v4614 = vmul.f32 %v4610, %v1997
        %v4615 = vmul.f32 %v4611, %v2001
        %v4616 = vadd.f32 %v4612, %v2012
        %v4617 = vadd.f32 %v4613, %v2016
        %v4618 = vadd.f32 %v4614, %v2012
        %v4619 = vadd.f32 %v4615, %v2016
        %v4620 = vpack.c.bf16 %v4618, %v4616
        %v4621 = vpack.c.bf16 %v4619, %v4617
        %4622 = vmatprep.subr.bf16.mxu0 %v2116
        %4623 = vmatpush1.bf16.msra.mxu0 %v2115
        %4624 = vmatprep.subr.bf16.mxu0 %v2114
        %4625 = vmatpush1.bf16.msra.mxu0 %v2113
        %4626 = vmatprep.subr.bf16.mxu0 %v2112
        %4627 = vmatpush1.bf16.msra.mxu0 %v2111
        %4628 = vmatprep.subr.bf16.mxu0 %v2110
        %4629 = vmatpush1.bf16.msra.mxu0 %v2109
        %4630 = vmatprep.subr.bf16.mxu0 %v2108
        %4631 = vmatpush1.bf16.msra.mxu0 %v2107
        %4632 = vmatprep.subr.bf16.mxu0 %v2106
        %4633 = vmatpush1.bf16.msra.mxu0 %v2105
        %4634 = vmatprep.subr.bf16.mxu0 %v2104
        %4635 = vmatpush1.bf16.msra.mxu0 %v2103
        %4636 = vmatprep.subr.bf16.mxu0 %v2102
        %4637 = vmatpush1.bf16.msra.mxu0 %v2101
        %4638 = vmatprep.subr.bf16.mxu0 0
        %4639 = vmatpush2.bf16.msra.mxu0 0
        %4640 = vmatprep.subr.bf16.mxu0 0
        %4641 = vmatpush2.bf16.msra.mxu0 0
        %4642 = vmatprep.subr.bf16.mxu0 0
        %4643 = vmatpush2.bf16.msra.mxu0 0
        %4644 = vmatprep.subr.bf16.mxu0 0
        %4645 = vmatpush2.bf16.msra.mxu0 0
        %4646 = vmatprep.subr.bf16.mxu0 0
        %4647 = vmatpush2.bf16.msra.mxu0 0
        %4648 = vmatprep.subr.bf16.mxu0 0
        %4649 = vmatpush2.bf16.msra.mxu0 0
        %4650 = vmatprep.subr.bf16.mxu0 0
        %4651 = vmatpush2.bf16.msra.mxu0 0
        %4652 = vmatprep.subr.bf16.mxu0 0
        %4653 = vmatpush2.bf16.msra.mxu0 0
        %4654 = vmatprep.mubr.bf16.mxu0 0
        %4655 = vmatmul.mubr.bf16.gmra.mxu0 %v4382
        %v4656 = vpop.f32.mrf.mxu0
        %v4657 = vadd.f32 %v2046, %v4656
        %v4658 = vpop.f32.mrf.mxu0
        %v4659 = vadd.f32 %v2050, %v4658
        %v4660 = vpop.f32.mrf.mxu0
        %v4661 = vadd.f32 %v2046, %v4660
        %v4662 = vpop.f32.mrf.mxu0
        %v4663 = vadd.f32 %v2050, %v4662
        %4664 = vdwg.mxu0
        %v4665 = vmul.f32 %v4657, 0.5
        %v4666 = vmul.f32 %v4659, 0.5
        %v4667 = vmul.f32 %v4661, 0.5
        %v4668 = vmul.f32 %v4663, 0.5
        %v4669 = vmul.f32 %v4657, 0.70710677
        %v4670 = vmul.f32 %v4659, 0.70710677
        %v4671 = vmul.f32 %v4661, 0.70710677
        %v4672 = vmul.f32 %v4663, 0.70710677
        %v4673 = vand.u32 2147483647, %v4669
        %v4674 = vand.u32 2147483647, %v4670
        %v4675 = vand.u32 2147483647, %v4671
        %v4676 = vand.u32 2147483647, %v4672
        %v4677 = vmul.f32 %v4673, 0.3275911
        %v4678 = vmul.f32 %v4674, 0.3275911
        %v4679 = vmul.f32 %v4675, 0.3275911
        %v4680 = vmul.f32 %v4676, 0.3275911
        %v4681 = vadd.f32 %v4677, 1.0
        %v4682 = vadd.f32 %v4678, 1.0
        %v4683 = vadd.f32 %v4679, 1.0
        %v4684 = vadd.f32 %v4680, 1.0
        %v4685 = vrcp.pop %v4681
        %v4686 = vmul.f32 1.0, %v4685
        %v4687 = vrcp.pop %v4682
        %v4688 = vmul.f32 1.0, %v4687
        %v4689 = vrcp.pop %v4683
        %v4690 = vmul.f32 1.0, %v4689
        %v4691 = vrcp.pop %v4684
        %v4692 = vmul.f32 1.0, %v4691
        %v4693 = vmul.f32 %v4686, 1.0614054
        %v4694 = vmul.f32 %v4688, 1.0614054
        %v4695 = vmul.f32 %v4690, 1.0614054
        %v4696 = vmul.f32 %v4692, 1.0614054
        %v4697 = vadd.f32 %v4693, -1.4531521
        %v4698 = vadd.f32 %v4694, -1.4531521
        %v4699 = vadd.f32 %v4695, -1.4531521
        %v4700 = vadd.f32 %v4696, -1.4531521
        %v4701 = vmul.f32 %v4697, %v4686
        %v4702 = vmul.f32 %v4698, %v4688
        %v4703 = vmul.f32 %v4699, %v4690
        %v4704 = vmul.f32 %v4700, %v4692
        %v4705 = vadd.f32 %v4701, 1.4214138
        %v4706 = vadd.f32 %v4702, 1.4214138
        %v4707 = vadd.f32 %v4703, 1.4214138
        %v4708 = vadd.f32 %v4704, 1.4214138
        %v4709 = vmul.f32 %v4705, %v4686
        %v4710 = vmul.f32 %v4706, %v4688
        %v4711 = vmul.f32 %v4707, %v4690
        %v4712 = vmul.f32 %v4708, %v4692
        %v4713 = vadd.f32 %v4709, -0.28449672
        %v4714 = vadd.f32 %v4710, -0.28449672
        %v4715 = vadd.f32 %v4711, -0.28449672
        %v4716 = vadd.f32 %v4712, -0.28449672
        %v4717 = vmul.f32 %v4713, %v4686
        %v4718 = vmul.f32 %v4714, %v4688
        %v4719 = vmul.f32 %v4715, %v4690
        %v4720 = vmul.f32 %v4716, %v4692
        %v4721 = vadd.f32 %v4717, 0.2548296
        %v4722 = vadd.f32 %v4718, 0.2548296
        %v4723 = vadd.f32 %v4719, 0.2548296
        %v4724 = vadd.f32 %v4720, 0.2548296
        %v4725 = vmul.f32 %v4721, %v4686
        %v4726 = vmul.f32 %v4722, %v4688
        %v4727 = vmul.f32 %v4723, %v4690
        %v4728 = vmul.f32 %v4724, %v4692
        %v4729 = vsub.f32 0.0, %v4673
        %v4730 = vsub.f32 0.0, %v4674
        %v4731 = vsub.f32 0.0, %v4675
        %v4732 = vsub.f32 0.0, %v4676
        %v4733 = vmul.f32 %v4729, %v4673
        %v4734 = vmul.f32 %v4730, %v4674
        %v4735 = vmul.f32 %v4731, %v4675
        %v4736 = vmul.f32 %v4732, %v4676
        %v4737 = vmul.f32 %v4733, 1.442695
        %v4738 = vpow.pop %v4737
        %v4739 = vmul.f32 %v4734, 1.442695
        %v4740 = vpow.pop %v4739
        %v4741 = vmul.f32 %v4735, 1.442695
        %v4742 = vpow.pop %v4741
        %v4743 = vmul.f32 %v4736, 1.442695
        %v4744 = vpow.pop %v4743
        %v4745 = vmul.f32 %v4725, %v4738
        %v4746 = vmul.f32 %v4726, %v4740
        %v4747 = vmul.f32 %v4727, %v4742
        %v4748 = vmul.f32 %v4728, %v4744
        %v4749 = vsub.f32 1.0, %v4745
        %v4750 = vsub.f32 1.0, %v4746
        %v4751 = vsub.f32 1.0, %v4747
        %v4752 = vsub.f32 1.0, %v4748
        %vm4753 = vcmp.lt.f32.partialorder %v4669, 0.0
        %vm4754 = vcmp.lt.f32.partialorder %v4670, 0.0
        %vm4755 = vcmp.lt.f32.partialorder %v4671, 0.0
        %vm4756 = vcmp.lt.f32.partialorder %v4672, 0.0
        %v4757 = vsub.f32 0.0, %v4749
        %v4758 = vsub.f32 0.0, %v4750
        %v4759 = vsub.f32 0.0, %v4751
        %v4760 = vsub.f32 0.0, %v4752
        %v4761 = vsel %vm4753, %v4757, %v4749
        %v4762 = vsel %vm4754, %v4758, %v4750
        %v4763 = vsel %vm4755, %v4759, %v4751
        %v4764 = vsel %vm4756, %v4760, %v4752
        %v4765 = vadd.f32 %v4761, 1.0
        %v4766 = vadd.f32 %v4762, 1.0
        %v4767 = vadd.f32 %v4763, 1.0
        %v4768 = vadd.f32 %v4764, 1.0
        %v4769 = vmul.f32 %v4665, %v4765
        %v4770 = vmul.f32 %v4666, %v4766
        %v4771 = vmul.f32 %v4667, %v4767
        %v4772 = vmul.f32 %v4668, %v4768
        %v4773 = vpack.c.bf16 %v4771, %v4769
        %v4774 = vpack.c.bf16 %v4772, %v4770
        %4775 = vmatprep.subr.bf16.mxu0 %v2441
        %4776 = vmatpush1.bf16.msra.mxu0 %v2440
        %4777 = vmatprep.subr.bf16.mxu0 %v2439
        %4778 = vmatpush1.bf16.msra.mxu0 %v2438
        %4779 = vmatprep.subr.bf16.mxu0 %v2437
        %4780 = vmatpush1.bf16.msra.mxu0 %v2436
        %4781 = vmatprep.subr.bf16.mxu0 %v2435
        %4782 = vmatpush1.bf16.msra.mxu0 %v2434
        %4783 = vmatprep.subr.bf16.mxu0 %v2433
        %4784 = vmatpush1.bf16.msra.mxu0 %v2432
        %4785 = vmatprep.subr.bf16.mxu0 %v2431
        %4786 = vmatpush1.bf16.msra.mxu0 %v2430
        %4787 = vmatprep.subr.bf16.mxu0 %v2429
        %4788 = vmatpush1.bf16.msra.mxu0 %v2428
        %4789 = vmatprep.subr.bf16.mxu0 %v2427
        %4790 = vmatpush1.bf16.msra.mxu0 %v2426
        %4791 = vmatprep.subr.bf16.mxu0 %v2457
        %4792 = vmatpush2.bf16.msra.mxu0 %v2456
        %4793 = vmatprep.subr.bf16.mxu0 %v2455
        %4794 = vmatpush2.bf16.msra.mxu0 %v2454
        %4795 = vmatprep.subr.bf16.mxu0 %v2453
        %4796 = vmatpush2.bf16.msra.mxu0 %v2452
        %4797 = vmatprep.subr.bf16.mxu0 %v2451
        %4798 = vmatpush2.bf16.msra.mxu0 %v2450
        %4799 = vmatprep.subr.bf16.mxu0 %v2449
        %4800 = vmatpush2.bf16.msra.mxu0 %v2448
        %4801 = vmatprep.subr.bf16.mxu0 %v2447
        %4802 = vmatpush2.bf16.msra.mxu0 %v2446
        %4803 = vmatprep.subr.bf16.mxu0 %v2445
        %4804 = vmatpush2.bf16.msra.mxu0 %v2444
        %4805 = vmatprep.subr.bf16.mxu0 %v2443
        %4806 = vmatpush2.bf16.msra.mxu0 %v2442
        %4807 = vmatprep.mubr.bf16.mxu0 %v4774
        %4808 = vmatmul.mubr.bf16.gmra.mxu0 %v4773
        %v4809 = vpop.f32.mrf.mxu0
        %v4810 = vadd.f32 %v2323, %v4809
        %v4811 = vpop.f32.mrf.mxu0
        %v4812 = vadd.f32 %v2327, %v4811
        %v4813 = vpop.f32.mrf.mxu0
        %v4814 = vadd.f32 %v2323, %v4813
        %v4815 = vpop.f32.mrf.mxu0
        %v4816 = vadd.f32 %v2327, %v4815
        %4817 = vdwg.mxu0
        %v4818 = vadd.f32 %v4810, %v4812
        %4819 = vadd.xlane.f32.xlu0 %v4818
        %v4820 = vpop.xlane.xlu0 %4819
        %v4821 = vadd.f32 %v4814, %v4816
        %4822 = vadd.xlane.f32.xlu0 %v4821
        %v4823 = vpop.xlane.xlu0 %4822
        %v4824 = vmul.f32 %v4820, %v1137
        %v4825 = vmul.f32 %v4823, %v1137
        %v4826 = vsub.f32 %v4810, %v4824
        %v4827 = vsub.f32 %v4812, %v4824
        %v4828 = vsub.f32 %v4814, %v4825
        %v4829 = vsub.f32 %v4816, %v4825
        %v4830 = vmul.f32 %v4826, %v4826
        %v4831 = vmul.f32 %v4827, %v4827
        %v4832 = vmul.f32 %v4828, %v4828
        %v4833 = vmul.f32 %v4829, %v4829
        %v4834 = vadd.f32 %v4830, %v4831
        %4835 = vadd.xlane.f32.xlu0 %v4834
        %v4836 = vpop.xlane.xlu0 %4835
        %v4837 = vadd.f32 %v4832, %v4833
        %4838 = vadd.xlane.f32.xlu0 %v4837
        %v4839 = vpop.xlane.xlu0 %4838
        %v4840 = vmul.f32 %v4836, %v1137
        %v4841 = vmul.f32 %v4839, %v1137
        %v4842 = vadd.f32 %v4840, 1e-06
        %v4843 = vadd.f32 %v4841, 1e-06
        %v4844 = vrsqrt.pop %v4842
        %v4845 = vrsqrt.pop %v4843
        %v4846 = vmul.f32 %v4826, %v4844
        %v4847 = vmul.f32 %v4827, %v4844
        %v4848 = vmul.f32 %v4828, %v4845
        %v4849 = vmul.f32 %v4829, %v4845
        %v4850 = vmul.f32 %v4846, %v2571
        %v4851 = vmul.f32 %v4847, %v2575
        %v4852 = vmul.f32 %v4848, %v2571
        %v4853 = vmul.f32 %v4849, %v2575
        %v4854 = vadd.f32 %v4850, %v2586
        %v4855 = vadd.f32 %v4851, %v2590
        %v4856 = vadd.f32 %v4852, %v2586
        %v4857 = vadd.f32 %v4853, %v2590
        %v4858 = vpack.c.bf16 %v4856, %v4854
        %v4859 = vpack.c.bf16 %v4857, %v4855
        %4860 = vmatprep.subr.bf16.mxu0 %v2754
        %4861 = vmatpush1.bf16.msra.mxu0 %v2753
        %4862 = vmatprep.subr.bf16.mxu0 %v2752
        %4863 = vmatpush1.bf16.msra.mxu0 %v2751
        %4864 = vmatprep.subr.bf16.mxu0 %v2750
        %4865 = vmatpush1.bf16.msra.mxu0 %v2749
        %4866 = vmatprep.subr.bf16.mxu0 %v2748
        %4867 = vmatpush1.bf16.msra.mxu0 %v2747
        %4868 = vmatprep.subr.bf16.mxu0 %v2746
        %4869 = vmatpush1.bf16.msra.mxu0 %v2745
        %4870 = vmatprep.subr.bf16.mxu0 %v2744
        %4871 = vmatpush1.bf16.msra.mxu0 %v2743
        %4872 = vmatprep.subr.bf16.mxu0 %v2742
        %4873 = vmatpush1.bf16.msra.mxu0 %v2741
        %4874 = vmatprep.subr.bf16.mxu0 %v2740
        %4875 = vmatpush1.bf16.msra.mxu0 %v2739
        %4876 = vmatprep.subr.bf16.mxu0 %v2770
        %4877 = vmatpush2.bf16.msra.mxu0 %v2769
        %4878 = vmatprep.subr.bf16.mxu0 %v2768
        %4879 = vmatpush2.bf16.msra.mxu0 %v2767
        %4880 = vmatprep.subr.bf16.mxu0 %v2766
        %4881 = vmatpush2.bf16.msra.mxu0 %v2765
        %4882 = vmatprep.subr.bf16.mxu0 %v2764
        %4883 = vmatpush2.bf16.msra.mxu0 %v2763
        %4884 = vmatprep.subr.bf16.mxu0 %v2762
        %4885 = vmatpush2.bf16.msra.mxu0 %v2761
        %4886 = vmatprep.subr.bf16.mxu0 %v2760
        %4887 = vmatpush2.bf16.msra.mxu0 %v2759
        %4888 = vmatprep.subr.bf16.mxu0 %v2758
        %4889 = vmatpush2.bf16.msra.mxu0 %v2757
        %4890 = vmatprep.subr.bf16.mxu0 %v2756
        %4891 = vmatpush2.bf16.msra.mxu0 %v2755
        %4892 = vmatprep.mubr.bf16.mxu0 %v4621
        %4893 = vmatmul.mubr.bf16.gmra.mxu0 %v4620
        %v4894 = vpop.f32.mrf.mxu0
        %v4895 = vadd.f32 %v2636, %v4894
        %v4896 = vpop.f32.mrf.mxu0
        %v4897 = vadd.f32 %v2640, %v4896
        %v4898 = vpop.f32.mrf.mxu0
        %v4899 = vadd.f32 %v2636, %v4898
        %v4900 = vpop.f32.mrf.mxu0
        %v4901 = vadd.f32 %v2640, %v4900
        %4902 = vdwg.mxu0
        %4903 = vmatprep.subr.bf16.mxu0 %v3001
        %4904 = vmatpush1.bf16.msra.mxu0 %v3000
        %4905 = vmatprep.subr.bf16.mxu0 %v2999
        %4906 = vmatpush1.bf16.msra.mxu0 %v2998
        %4907 = vmatprep.subr.bf16.mxu0 %v2997
        %4908 = vmatpush1.bf16.msra.mxu0 %v2996
        %4909 = vmatprep.subr.bf16.mxu0 %v2995
        %4910 = vmatpush1.bf16.msra.mxu0 %v2994
        %4911 = vmatprep.subr.bf16.mxu0 %v2993
        %4912 = vmatpush1.bf16.msra.mxu0 %v2992
        %4913 = vmatprep.subr.bf16.mxu0 %v2991
        %4914 = vmatpush1.bf16.msra.mxu0 %v2990
        %4915 = vmatprep.subr.bf16.mxu0 %v2989
        %4916 = vmatpush1.bf16.msra.mxu0 %v2988
        %4917 = vmatprep.subr.bf16.mxu0 %v2987
        %4918 = vmatpush1.bf16.msra.mxu0 %v2986
        %4919 = vmatprep.subr.bf16.mxu0 %v3017
        %4920 = vmatpush2.bf16.msra.mxu0 %v3016
        %4921 = vmatprep.subr.bf16.mxu0 %v3015
        %4922 = vmatpush2.bf16.msra.mxu0 %v3014
        %4923 = vmatprep.subr.bf16.mxu0 %v3013
        %4924 = vmatpush2.bf16.msra.mxu0 %v3012
        %4925 = vmatprep.subr.bf16.mxu0 %v3011
        %4926 = vmatpush2.bf16.msra.mxu0 %v3010
        %4927 = vmatprep.subr.bf16.mxu0 %v3009
        %4928 = vmatpush2.bf16.msra.mxu0 %v3008
        %4929 = vmatprep.subr.bf16.mxu0 %v3007
        %4930 = vmatpush2.bf16.msra.mxu0 %v3006
        %4931 = vmatprep.subr.bf16.mxu0 %v3005
        %4932 = vmatpush2.bf16.msra.mxu0 %v3004
        %4933 = vmatprep.subr.bf16.mxu0 %v3003
        %4934 = vmatpush2.bf16.msra.mxu0 %v3002
        %4935 = vmatprep.mubr.bf16.mxu0 %v4859
        %4936 = vmatmul.mubr.bf16.gmra.mxu0 %v4858
        %v4937 = vpop.f32.mrf.mxu0
        %v4938 = vadd.f32 %v2883, %v4937
        %v4939 = vpop.f32.mrf.mxu0
        %v4940 = vadd.f32 %v2887, %v4939
        %v4941 = vpop.f32.mrf.mxu0
        %v4942 = vadd.f32 %v2883, %v4941
        %v4943 = vpop.f32.mrf.mxu0
        %v4944 = vadd.f32 %v2887, %v4943
        %4945 = vdwg.mxu0
        %v4946 = vmul.f32 %v1435, %v4895
        %v4947 = vmul.f32 %v1437, %v4897
        %v4948 = vmul.f32 %v1439, %v4899
        %v4949 = vmul.f32 %v1441, %v4901
        %4950 = vadd.xlane.f32.xlu0 %v4946
        %v4951 = vpop.xlane.xlu0 %4950
        %4952 = vadd.xlane.f32.xlu0 %v4948
        %v4953 = vpop.xlane.xlu0 %4952
        %v4954 = vmul.f32 %v4951, 0.088388346
        %v4955 = vmul.f32 %v4953, 0.088388346
        %4956 = vadd.xlane.f32.xlu0 %v4947
        %v4957 = vpop.xlane.xlu0 %4956
        %4958 = vadd.xlane.f32.xlu0 %v4949
        %v4959 = vpop.xlane.xlu0 %4958
        %v4960 = vmul.f32 %v4957, 0.088388346
        %v4961 = vmul.f32 %v4959, 0.088388346
        %v4962 = vmax.f32 %v4327, %v4954
        %v4963 = vmax.f32 %v4328, %v4955
        %v4964 = vsub.f32 %v4327, %v4962
        %v4965 = vsub.f32 %v4328, %v4963
        %v4966 = vmul.f32 %v4964, 1.442695
        %v4967 = vpow.pop %v4966
        %v4968 = vmul.f32 %v4965, 1.442695
        %v4969 = vpow.pop %v4968
        %v4970 = vsub.f32 %v4954, %v4962
        %v4971 = vsub.f32 %v4955, %v4963
        %v4972 = vmul.f32 %v4970, 1.442695
        %v4973 = vpow.pop %v4972
        %v4974 = vmul.f32 %v4971, 1.442695
        %v4975 = vpow.pop %v4974
        %v4976 = vmul.f32 %v4343, %v4967
        %v4977 = vmul.f32 %v4344, %v4969
        %v4978 = vadd.f32 %v4976, %v4973
        %v4979 = vadd.f32 %v4977, %v4975
        %v4980 = vmul.f32 %v4349, %v4967
        %v4981 = vmul.f32 %v4350, %v4969
        %v4982 = vmul.f32 %v4938, %v4973
        %v4983 = vmul.f32 %v4942, %v4975
        %v4984 = vadd.f32 %v4980, %v4982
        %v4985 = vadd.f32 %v4981, %v4983
        %v4986 = vmax.f32 %v4351, %v4960
        %v4987 = vmax.f32 %v4352, %v4961
        %v4988 = vsub.f32 %v4351, %v4986
        %v4989 = vsub.f32 %v4352, %v4987
        %v4990 = vmul.f32 %v4988, 1.442695
        %v4991 = vpow.pop %v4990
        %v4992 = vmul.f32 %v4989, 1.442695
        %v4993 = vpow.pop %v4992
        %v4994 = vsub.f32 %v4960, %v4986
        %v4995 = vsub.f32 %v4961, %v4987
        %v4996 = vmul.f32 %v4994, 1.442695
        %v4997 = vpow.pop %v4996
        %v4998 = vmul.f32 %v4995, 1.442695
        %v4999 = vpow.pop %v4998
        %v5000 = vmul.f32 %v4367, %v4991
        %v5001 = vmul.f32 %v4368, %v4993
        %v5002 = vadd.f32 %v5000, %v4997
        %v5003 = vadd.f32 %v5001, %v4999
        %v5004 = vmul.f32 %v4373, %v4991
        %v5005 = vmul.f32 %v4374, %v4993
        %v5006 = vmul.f32 %v4940, %v4997
        %v5007 = vmul.f32 %v4944, %v4999
        %v5008 = vadd.f32 %v5004, %v5006
        %v5009 = vadd.f32 %v5005, %v5007
        %v5010 = vld [vmem:[%s24] sm:$0x3]
        %v5011 = vrcp.pop %v4978
        %v5012 = vrcp.pop %v4979
        %v5013 = vmul.f32 %v4984, %v5011
        %v5014 = vmul.f32 %v4985, %v5012
        %v5015 = vpack.c.bf16 %v5014, %v5013
        %v5016 = vld [vmem:[#allocation19] sm:$0xff]
        %v5017 = vld [vmem:[#allocation19 + $0x8] sm:$0xff]
        %v5018 = vld [vmem:[#allocation19 + $0x10] sm:$0xff]
        %v5019 = vld [vmem:[#allocation19 + $0x18] sm:$0xff]
        %v5020 = vld [vmem:[#allocation19 + $0x20] sm:$0xff]
        %v5021 = vld [vmem:[#allocation19 + $0x28] sm:$0xff]
        %v5022 = vld [vmem:[#allocation19 + $0x30] sm:$0xff]
        %v5023 = vld [vmem:[#allocation19 + $0x38] sm:$0xff]
        %v5024 = vld [vmem:[#allocation19 + $0x40] sm:$0xff]
        %v5025 = vld [vmem:[#allocation19 + $0x48] sm:$0xff]
        %v5026 = vld [vmem:[#allocation19 + $0x50] sm:$0xff]
        %v5027 = vld [vmem:[#allocation19 + $0x58] sm:$0xff]
        %v5028 = vld [vmem:[#allocation19 + $0x60] sm:$0xff]
        %v5029 = vld [vmem:[#allocation19 + $0x68] sm:$0xff]
        %v5030 = vld [vmem:[#allocation19 + $0x70] sm:$0xff]
        %v5031 = vld [vmem:[#allocation19 + $0x78] sm:$0xff]
        %v5048 = vunpack.c.l.b16 %v5016
        %v5049 = vunpack.c.h.b16 %v5016
        %v5050 = vunpack.c.l.b16 %v5017
        %v5051 = vunpack.c.h.b16 %v5017
        %v5052 = vunpack.c.l.b16 %v5018
        %v5053 = vunpack.c.h.b16 %v5018
        %v5054 = vunpack.c.l.b16 %v5019
        %v5055 = vunpack.c.h.b16 %v5019
        %v5056 = vunpack.c.l.b16 %v5020
        %v5057 = vunpack.c.h.b16 %v5020
        %v5058 = vunpack.c.l.b16 %v5021
        %v5059 = vunpack.c.h.b16 %v5021
        %v5060 = vunpack.c.l.b16 %v5022
        %v5061 = vunpack.c.h.b16 %v5022
        %v5062 = vunpack.c.l.b16 %v5023
        %v5063 = vunpack.c.h.b16 %v5023
        %v5064 = vunpack.c.l.b16 %v5024
        %v5065 = vunpack.c.h.b16 %v5024
        %v5066 = vunpack.c.l.b16 %v5025
        %v5067 = vunpack.c.h.b16 %v5025
        %v5068 = vunpack.c.l.b16 %v5026
        %v5069 = vunpack.c.h.b16 %v5026
        %v5070 = vunpack.c.l.b16 %v5027
        %v5071 = vunpack.c.h.b16 %v5027
        %v5072 = vunpack.c.l.b16 %v5028
        %v5073 = vunpack.c.h.b16 %v5028
        %v5074 = vunpack.c.l.b16 %v5029
        %v5075 = vunpack.c.h.b16 %v5029
        %v5076 = vunpack.c.l.b16 %v5030
        %v5077 = vunpack.c.h.b16 %v5030
        %v5078 = vunpack.c.l.b16 %v5031
        %v5079 = vunpack.c.h.b16 %v5031
        %v5080 = vpack.c.b16 %v5050, %v5048
        %v5081 = vpack.c.b16 %v5051, %v5049
        %v5082 = vpack.c.b16 %v5054, %v5052
        %v5083 = vpack.c.b16 %v5055, %v5053
        %v5084 = vpack.c.b16 %v5058, %v5056
        %v5085 = vpack.c.b16 %v5059, %v5057
        %v5086 = vpack.c.b16 %v5062, %v5060
        %v5087 = vpack.c.b16 %v5063, %v5061
        %v5088 = vpack.c.b16 %v5066, %v5064
        %v5089 = vpack.c.b16 %v5067, %v5065
        %v5090 = vpack.c.b16 %v5070, %v5068
        %v5091 = vpack.c.b16 %v5071, %v5069
        %v5092 = vpack.c.b16 %v5074, %v5072
        %v5093 = vpack.c.b16 %v5075, %v5073
        %v5094 = vpack.c.b16 %v5078, %v5076
        %v5095 = vpack.c.b16 %v5079, %v5077
        %5112 = vmatprep.subr.bf16.mxu0 %v5095
        %5113 = vmatpush1.bf16.msra.mxu0 %v5094
        %5114 = vmatprep.subr.bf16.mxu0 %v5093
        %5115 = vmatpush1.bf16.msra.mxu0 %v5092
        %5116 = vmatprep.subr.bf16.mxu0 %v5091
        %5117 = vmatpush1.bf16.msra.mxu0 %v5090
        %5118 = vmatprep.subr.bf16.mxu0 %v5089
        %5119 = vmatpush1.bf16.msra.mxu0 %v5088
        %5120 = vmatprep.subr.bf16.mxu0 %v5087
        %5121 = vmatpush1.bf16.msra.mxu0 %v5086
        %5122 = vmatprep.subr.bf16.mxu0 %v5085
        %5123 = vmatpush1.bf16.msra.mxu0 %v5084
        %5124 = vmatprep.subr.bf16.mxu0 %v5083
        %5125 = vmatpush1.bf16.msra.mxu0 %v5082
        %5126 = vmatprep.subr.bf16.mxu0 %v5081
        %5127 = vmatpush1.bf16.msra.mxu0 %v5080
        %5128 = vmatprep.subr.bf16.mxu0 0
        %5129 = vmatpush2.bf16.msra.mxu0 0
        %5130 = vmatprep.subr.bf16.mxu0 0
        %5131 = vmatpush2.bf16.msra.mxu0 0
        %5132 = vmatprep.subr.bf16.mxu0 0
        %5133 = vmatpush2.bf16.msra.mxu0 0
        %5134 = vmatprep.subr.bf16.mxu0 0
        %5135 = vmatpush2.bf16.msra.mxu0 0
        %5136 = vmatprep.subr.bf16.mxu0 0
        %5137 = vmatpush2.bf16.msra.mxu0 0
        %5138 = vmatprep.subr.bf16.mxu0 0
        %5139 = vmatpush2.bf16.msra.mxu0 0
        %5140 = vmatprep.subr.bf16.mxu0 0
        %5141 = vmatpush2.bf16.msra.mxu0 0
        %5142 = vmatprep.subr.bf16.mxu0 0
        %5143 = vmatpush2.bf16.msra.mxu0 0
        %5144 = vmatprep.mubr.bf16.mxu0 0
        %5145 = vmatmul.mubr.bf16.gmra.mxu0 %v5015
        %v5146 = vpop.f32.mrf.mxu0
        %v5147 = vadd.f32 0.0, %v5146
        %v5148 = vpop.f32.mrf.mxu0
        %v5149 = vadd.f32 0.0, %v5148
        %v5150 = vpop.f32.mrf.mxu0
        %v5151 = vadd.f32 0.0, %v5150
        %v5152 = vpop.f32.mrf.mxu0
        %v5153 = vadd.f32 0.0, %v5152
        %5154 = vdwg.mxu0
        %v5156 = vlaneseq
        %v5157 = vshrl.u32 %v5156, 7
        %v5158 = vsub.s32 0, %v5157
        %v5159 = vrot.slane %v5010, %v5158
        %v5160 = vlaneseq
        %v5161 = vshrl.u32 %v5160, 7
        %v5162 = vsub.s32 1, %v5161
        %v5163 = vrot.slane %v5010, %v5162
        %v5166 = vadd.f32 %v5159, %v5147
        %v5167 = vadd.f32 %v5163, %v5149
        %v5168 = vadd.f32 %v5159, %v5151
        %v5169 = vadd.f32 %v5163, %v5153
        %v5170 = vrcp.pop %v5002
        %v5171 = vrcp.pop %v5003
        %v5172 = vmul.f32 %v5008, %v5170
        %v5173 = vmul.f32 %v5009, %v5171
        %v5174 = vpack.c.bf16 %v5173, %v5172
        %v5175 = vld [vmem:[#allocation19 + $0x80] sm:$0xff]
        %v5176 = vld [vmem:[#allocation19 + $0x88] sm:$0xff]
        %v5177 = vld [vmem:[#allocation19 + $0x90] sm:$0xff]
        %v5178 = vld [vmem:[#allocation19 + $0x98] sm:$0xff]
        %v5179 = vld [vmem:[#allocation19 + $0xa0] sm:$0xff]
        %v5180 = vld [vmem:[#allocation19 + $0xa8] sm:$0xff]
        %v5181 = vld [vmem:[#allocation19 + $0xb0] sm:$0xff]
        %v5182 = vld [vmem:[#allocation19 + $0xb8] sm:$0xff]
        %v5183 = vld [vmem:[#allocation19 + $0xc0] sm:$0xff]
        %v5184 = vld [vmem:[#allocation19 + $0xc8] sm:$0xff]
        %v5185 = vld [vmem:[#allocation19 + $0xd0] sm:$0xff]
        %v5186 = vld [vmem:[#allocation19 + $0xd8] sm:$0xff]
        %v5187 = vld [vmem:[#allocation19 + $0xe0] sm:$0xff]
        %v5188 = vld [vmem:[#allocation19 + $0xe8] sm:$0xff]
        %v5189 = vld [vmem:[#allocation19 + $0xf0] sm:$0xff]
        %v5190 = vld [vmem:[#allocation19 + $0xf8] sm:$0xff]
        %v5207 = vunpack.c.l.b16 %v5175
        %v5208 = vunpack.c.h.b16 %v5175
        %v5209 = vunpack.c.l.b16 %v5176
        %v5210 = vunpack.c.h.b16 %v5176
        %v5211 = vunpack.c.l.b16 %v5177
        %v5212 = vunpack.c.h.b16 %v5177
        %v5213 = vunpack.c.l.b16 %v5178
        %v5214 = vunpack.c.h.b16 %v5178
        %v5215 = vunpack.c.l.b16 %v5179
        %v5216 = vunpack.c.h.b16 %v5179
        %v5217 = vunpack.c.l.b16 %v5180
        %v5218 = vunpack.c.h.b16 %v5180
        %v5219 = vunpack.c.l.b16 %v5181
        %v5220 = vunpack.c.h.b16 %v5181
        %v5221 = vunpack.c.l.b16 %v5182
        %v5222 = vunpack.c.h.b16 %v5182
        %v5223 = vunpack.c.l.b16 %v5183
        %v5224 = vunpack.c.h.b16 %v5183
        %v5225 = vunpack.c.l.b16 %v5184
        %v5226 = vunpack.c.h.b16 %v5184
        %v5227 = vunpack.c.l.b16 %v5185
        %v5228 = vunpack.c.h.b16 %v5185
        %v5229 = vunpack.c.l.b16 %v5186
        %v5230 = vunpack.c.h.b16 %v5186
        %v5231 = vunpack.c.l.b16 %v5187
        %v5232 = vunpack.c.h.b16 %v5187
        %v5233 = vunpack.c.l.b16 %v5188
        %v5234 = vunpack.c.h.b16 %v5188
        %v5235 = vunpack.c.l.b16 %v5189
        %v5236 = vunpack.c.h.b16 %v5189
        %v5237 = vunpack.c.l.b16 %v5190
        %v5238 = vunpack.c.h.b16 %v5190
        %v5239 = vpack.c.b16 %v5209, %v5207
        %v5240 = vpack.c.b16 %v5210, %v5208
        %v5241 = vpack.c.b16 %v5213, %v5211
        %v5242 = vpack.c.b16 %v5214, %v5212
        %v5243 = vpack.c.b16 %v5217, %v5215
        %v5244 = vpack.c.b16 %v5218, %v5216
        %v5245 = vpack.c.b16 %v5221, %v5219
        %v5246 = vpack.c.b16 %v5222, %v5220
        %v5247 = vpack.c.b16 %v5225, %v5223
        %v5248 = vpack.c.b16 %v5226, %v5224
        %v5249 = vpack.c.b16 %v5229, %v5227
        %v5250 = vpack.c.b16 %v5230, %v5228
        %v5251 = vpack.c.b16 %v5233, %v5231
        %v5252 = vpack.c.b16 %v5234, %v5232
        %v5253 = vpack.c.b16 %v5237, %v5235
        %v5254 = vpack.c.b16 %v5238, %v5236
        %5271 = vmatprep.subr.bf16.mxu0 %v5254
        %5272 = vmatpush1.bf16.msra.mxu0 %v5253
        %5273 = vmatprep.subr.bf16.mxu0 %v5252
        %5274 = vmatpush1.bf16.msra.mxu0 %v5251
        %5275 = vmatprep.subr.bf16.mxu0 %v5250
        %5276 = vmatpush1.bf16.msra.mxu0 %v5249
        %5277 = vmatprep.subr.bf16.mxu0 %v5248
        %5278 = vmatpush1.bf16.msra.mxu0 %v5247
        %5279 = vmatprep.subr.bf16.mxu0 %v5246
        %5280 = vmatpush1.bf16.msra.mxu0 %v5245
        %5281 = vmatprep.subr.bf16.mxu0 %v5244
        %5282 = vmatpush1.bf16.msra.mxu0 %v5243
        %5283 = vmatprep.subr.bf16.mxu0 %v5242
        %5284 = vmatpush1.bf16.msra.mxu0 %v5241
        %5285 = vmatprep.subr.bf16.mxu0 %v5240
        %5286 = vmatpush1.bf16.msra.mxu0 %v5239
        %5287 = vmatprep.subr.bf16.mxu0 0
        %5288 = vmatpush2.bf16.msra.mxu0 0
        %5289 = vmatprep.subr.bf16.mxu0 0
        %5290 = vmatpush2.bf16.msra.mxu0 0
        %5291 = vmatprep.subr.bf16.mxu0 0
        %5292 = vmatpush2.bf16.msra.mxu0 0
        %5293 = vmatprep.subr.bf16.mxu0 0
        %5294 = vmatpush2.bf16.msra.mxu0 0
        %5295 = vmatprep.subr.bf16.mxu0 0
        %5296 = vmatpush2.bf16.msra.mxu0 0
        %5297 = vmatprep.subr.bf16.mxu0 0
        %5298 = vmatpush2.bf16.msra.mxu0 0
        %5299 = vmatprep.subr.bf16.mxu0 0
        %5300 = vmatpush2.bf16.msra.mxu0 0
        %5301 = vmatprep.subr.bf16.mxu0 0
        %5302 = vmatpush2.bf16.msra.mxu0 0
        %5303 = vmatprep.mubr.bf16.mxu0 0
        %5304 = vmatmul.mubr.bf16.gmra.mxu0 %v5174
        %v5305 = vpop.f32.mrf.mxu0
        %v5306 = vadd.f32 0.0, %v5305
        %v5307 = vpop.f32.mrf.mxu0
        %v5308 = vadd.f32 0.0, %v5307
        %v5309 = vpop.f32.mrf.mxu0
        %v5310 = vadd.f32 0.0, %v5309
        %v5311 = vpop.f32.mrf.mxu0
        %v5312 = vadd.f32 0.0, %v5311
        %5313 = vdwg.mxu0
        %v5314 = vadd.f32 %v5166, %v5306
        %v5315 = vadd.f32 %v5167, %v5308
        %v5316 = vadd.f32 %v5168, %v5310
        %v5317 = vadd.f32 %v5169, %v5312
        %5318 = vst [vmem:[%s977] sm:$0xff] %v5314
        %5319 = vst [vmem:[%s977 + $0x8] sm:$0xff] %v5315
        %5320 = vst [vmem:[%s977 + $0x10] sm:$0xff] %v5316
        %5321 = vst [vmem:[%s977 + $0x18] sm:$0xff] %v5317
        %s5322 = sand.u32 %s592, 1
        %s5323 = scalar_lea.sflag [#allocation4], %s5322
        %s5324 = sand.u32 %s592, 1
        %s5325 = smul.addr %s5324, 32
        %s5326 = scalar_lea.vmem [#allocation20], %s5325
        // Predicated region
        $region165: #{tpu_custom_call.1} parent=119 // pred_check
          %p5327 = pneg %p602
        $region166: #{tpu_custom_call.1} parent=119 // pred_check_branch
          %5329 = sbr.rel (%p5327) target = $region168
        $region167: #{tpu_custom_call.1} parent=119 // pred_region
          %s5330 = smul.u32 2, %s49
          %s5332 = ssub.s32 512, 512
          %5333 = vsyncadd %s5323, %s5332
          %s5334 = smul.addr %s5330, 2
          %s5335 = smul.addr %s5334, 128
          %s5336 = scalar_lea.hbm %s25, %s5335
          %s5337 = sshll.u32 %s5326, 4
          %s5338 = int_to_ptr.vmem [resolvable:$true] %s5337
          %5343 = dma.vmem_to_hbm [thread:$0]  %s5338, 512, %s5336, %s5323, 256, 256, 16
        $region168: #{tpu_custom_call.1} parent=119 // pred_fallthru
          _
      $region120: #{tpu_custom_call.1} parent=5 // pred_fallthru
        _
      %p5344 = scmp.le.s32.totalorder 2, %s44
      // Predicated region
      $region169: #{tpu_custom_call.1} parent=5 // pred_check
        %p5345 = pneg %p5344
      $region170: #{tpu_custom_call.1} parent=5 // pred_check_branch
        %5347 = sbr.rel (%p5345) target = $region172
      $region171: #{tpu_custom_call.1} parent=5 // pred_region
        %s5348 = ssub.s32 %s44, 2
        // Predicated region
        $region173: #{tpu_custom_call.1} parent=171 // pred_check
          %p5349 = pneg %p608
        $region174: #{tpu_custom_call.1} parent=171 // pred_check_branch
          %5351 = sbr.rel (%p5349) target = $region176
        $region175: #{tpu_custom_call.1} parent=171 // pred_region
          %s5352 = sand.u32 %s593, 1
          %s5353 = scalar_lea.sflag [#allocation4], %s5352
          %s5354 = sand.u32 %s593, 1
          %s5355 = smul.addr %s5354, 32
          %s5356 = scalar_lea.vmem [#allocation20], %s5355
          %5357 = dma.done %s5353, 512
        $region176: #{tpu_custom_call.1} parent=171 // pred_fallthru
          _
      $region172: #{tpu_custom_call.1} parent=5 // pred_fallthru
        _
    $region6: #{tpu_custom_call.1} parent=1 // loop_footer
      %s48 = sadd.s32 1, %s44
    $region7: #{tpu_custom_call.1} parent=1 // loop_footer_branch
      %43 = sbr.rel target = $region3
    $region8: #{tpu_custom_call.1} parent=1 // loop_exit
      _
    %5358 = vsyncpa [#allocation3], 1
    %s5359 = scalar_lea.sflag [#allocation3], 1
    %5360 = vsyncpa %s5359, 1
    %5361 = vsyncpa [#allocation6], 1
    %s5362 = scalar_lea.sflag [#allocation6], 1
    %5363 = vsyncpa %s5362, 1
    %5364 = vsyncpa [#allocation9], 1
    %5365 = vsyncpa [#allocation12], 1
    %5366 = vsyncpa [#allocation15], 1
    %5367 = vsyncpa [#allocation18], 1
    %5368 = vsyncpa [#allocation4], 1
    %s5369 = scalar_lea.sflag [#allocation4], 1
    %5370 = vsyncpa %s5369, 1

</llo_original>
